<compile_context>
chip_gen: v6e
topology: v6e:2x2x1
jax: 0.10.0
libtpu: 0.0.40
codegen_flags: <defaults>
</compile_context>

<pallas_src>
import functools

import numpy as np
import jax
import jax.numpy as jnp
from jax.experimental import pallas as pl
from jax.experimental.pallas import tpu as pltpu

LN_EPS = 1e-5  # nn.LayerNorm default


def _layer_norm_2d(x2d, gamma, beta):
    """LayerNorm over the last dim of a (rows, D) array. gamma/beta are (1, D)."""
    mu = jnp.mean(x2d, axis=-1, keepdims=True)
    xc = x2d - mu
    var = jnp.mean(xc * xc, axis=-1, keepdims=True)
    return xc * jax.lax.rsqrt(var + LN_EPS) * gamma + beta


def bhoi_kernel(x_ref, mask_ref, ln_ref, wqkv_ref, wproj_ref, bproj_ref,
                w1_ref, b1_ref, w2_ref, b2_ref, out_ref, *, num_heads):
    # x_ref    : (B, N, D)   input tokens (resident: constant index_map)
    # mask_ref : (N, N)      additive attention mask (resident)
    # ln_ref   : (1, 4, D)   [gamma1, beta1, gamma2, beta2] for this layer
    # wqkv_ref : (1, D, 3D)  qkv projection (qkv_bias=False)
    # wproj_ref: (1, D, D)   attention output projection
    # bproj_ref: (1, 1, D)
    # w1_ref   : (1, D, H)   MLP fc1
    # b1_ref   : (1, 1, H)
    # w2_ref   : (1, H, D)   MLP fc2
    # b2_ref   : (1, 1, D)
    # out_ref  : (B, N, D)   layer carry + final output (resident)
    layer = pl.program_id(0)
    B, N, D = x_ref.shape
    BN = B * N
    hd = D // num_heads
    scale = float(hd) ** -0.5

    @pl.when(layer == 0)
    def _():
        out_ref[...] = x_ref[...]

    x = out_ref[...].astype(jnp.float32).reshape(BN, D)

    lnp = ln_ref[0]                       # (4, D)
    g1 = lnp[0:1, :]
    be1 = lnp[1:2, :]
    g2 = lnp[2:3, :]
    be2 = lnp[3:4, :]

    # ---------------- multi-head self-attention (pre-norm) ----------------
    xn = _layer_norm_2d(x, g1, be1)
    qkv = jnp.dot(xn, wqkv_ref[0], preferred_element_type=jnp.float32)   # (BN, 3D)
    mask = mask_ref[...]                                                 # (N, N)

    head_outs = []
    for h in range(num_heads):  # static loop; head slices are lane-aligned (hd=128)
        qh = qkv[:, h * hd:(h + 1) * hd].reshape(B, N, hd)
        kh = qkv[:, D + h * hd:D + (h + 1) * hd].reshape(B, N, hd)
        vh = qkv[:, 2 * D + h * hd:2 * D + (h + 1) * hd].reshape(B, N, hd)

        s = jnp.einsum('bnd,bmd->bnm', qh, kh,
                       preferred_element_type=jnp.float32) * scale
        s = s + mask[None, :, :]
        s = s - jnp.max(s, axis=-1, keepdims=True)
        p = jnp.exp(s)
        p = p / jnp.sum(p, axis=-1, keepdims=True)
        oh = jnp.einsum('bnm,bmd->bnd', p, vh,
                        preferred_element_type=jnp.float32)
        head_outs.append(oh.reshape(BN, hd))

    attn = jnp.concatenate(head_outs, axis=-1)                            # (BN, D)
    attn = jnp.dot(attn, wproj_ref[0],
                   preferred_element_type=jnp.float32) + bproj_ref[0]
    x = x + attn                                                          # residual 1

    # ---------------------------- MLP (pre-norm) ---------------------------
    xn2 = _layer_norm_2d(x, g2, be2)
    h1 = jnp.dot(xn2, w1_ref[0], preferred_element_type=jnp.float32) + b1_ref[0]
    h1 = jax.nn.gelu(h1, approximate=True)
    h2 = jnp.dot(h1, w2_ref[0], preferred_element_type=jnp.float32) + b2_ref[0]
    x = x + h2                                                            # residual 2

    out_ref[...] = x.reshape(B, N, D).astype(out_ref.dtype)


def bhoi_module_forward(x, attn_mask, params, num_heads):
    """JAX/Pallas equivalent of BHOI_Module.forward (eval path)."""
    B, N, D = x.shape
    L = params['wqkv'].shape[0]
    H = params['w1'].shape[-1]

    kernel = functools.partial(bhoi_kernel, num_heads=num_heads)

    out = pl.pallas_call(
        kernel,
        out_shape=jax.ShapeDtypeStruct((B, N, D), x.dtype),
        grid_spec=pltpu.PrefetchScalarGridSpec(
            num_scalar_prefetch=0,
            grid=(L,),
            in_specs=[
                pl.BlockSpec((B, N, D), lambda l: (0, 0, 0)),        # x (resident)
                pl.BlockSpec((N, N), lambda l: (0, 0)),              # mask (resident)
                pl.BlockSpec((1, 4, D), lambda l: (l, 0, 0)),        # LN params
                pl.BlockSpec((1, D, 3 * D), lambda l: (l, 0, 0)),    # Wqkv
                pl.BlockSpec((1, D, D), lambda l: (l, 0, 0)),        # Wproj
                pl.BlockSpec((1, 1, D), lambda l: (l, 0, 0)),        # bproj
                pl.BlockSpec((1, D, H), lambda l: (l, 0, 0)),        # W1
                pl.BlockSpec((1, 1, H), lambda l: (l, 0, 0)),        # b1
                pl.BlockSpec((1, H, D), lambda l: (l, 0, 0)),        # W2
                pl.BlockSpec((1, 1, D), lambda l: (l, 0, 0)),        # b2
            ],
            out_specs=pl.BlockSpec((B, N, D), lambda l: (0, 0, 0)),  # carry + output
        ),
        compiler_params=pltpu.CompilerParams(
            dimension_semantics=("arbitrary",),   # layers are sequentially dependent
        ),
    )(x, attn_mask, params['ln'], params['wqkv'], params['wproj'],
      params['bproj'], params['w1'], params['b1'], params['w2'], params['b2'])
    return out


# ---------------------------------------------------------------------------
# Pure-JAX reference reproducing the PyTorch forward (same weight convention:
# y = x @ W + b, i.e. W is the transpose of nn.Linear.weight).
# ---------------------------------------------------------------------------
def _ref_forward(x, attn_mask, params, num_heads):
    B, N, D = x.shape
    hd = D // num_heads
    scale = hd ** -0.5
    L = params['wqkv'].shape[0]

    def ln(v, g, b):
        mu = v.mean(-1, keepdims=True)
        var = ((v - mu) ** 2).mean(-1, keepdims=True)
        return (v - mu) / jnp.sqrt(var + LN_EPS) * g + b

    for l in range(L):
        g1, be1 = params['ln'][l, 0], params['ln'][l, 1]
        g2, be2 = params['ln'][l, 2], params['ln'][l, 3]

        xn = ln(x, g1, be1)
        qkv = xn @ params['wqkv'][l]
        qkv = qkv.reshape(B, N, 3, num_heads, hd).transpose(2, 0, 3, 1, 4)
        q, k, v = qkv[0], qkv[1], qkv[2]
        s = jnp.einsum('bhnd,bhmd->bhnm', q, k) * scale + attn_mask[None, None]
        p = jax.nn.softmax(s, axis=-1)
        o = jnp.einsum('bhnm,bhmd->bhnd', p, v).transpose(0, 2, 1, 3).reshape(B, N, D)
        x = x + (o @ params['wproj'][l] + params['bproj'][l])

        xn2 = ln(x, g2, be2)
        h = jax.nn.gelu(xn2 @ params['w1'][l] + params['b1'][l], approximate=True)
        x = x + (h @ params['w2'][l] + params['b2'][l])
    return x


if __name__ == "__main__":
    # Small instantiation: BHOI_Module(deepth=3, num_head=2, dims=256, mlp_ratio=4)
    B, N, D = 2, 128, 256
    num_heads = 2            # head_dim = 128 (lane-aligned)
    depth = 3
    H = 4 * D

    key = jax.random.PRNGKey(0)
    ks = jax.random.split(key, 10)

    def w(k, shape, s=0.02):
        return (s * jax.random.normal(k, shape)).astype(jnp.float32)

    x = jax.random.normal(ks[0], (B, N, D), dtype=jnp.float32)

    # Additive attention mask (causal), shared across batch/heads/layers.
    causal = jnp.tril(jnp.ones((N, N), dtype=jnp.bool_))
    attn_mask = jnp.where(causal, 0.0, -1e9).astype(jnp.float32)

    gammas = 1.0 + 0.05 * jax.random.normal(ks[1], (depth, 2, D))
    betas = 0.05 * jax.random.normal(ks[2], (depth, 2, D))
    ln_params = jnp.stack(
        [gammas[:, 0], betas[:, 0], gammas[:, 1], betas[:, 1]], axis=1
    ).astype(jnp.float32)                                   # (depth, 4, D)

    params = dict(
        ln=ln_params,
        wqkv=w(ks[3], (depth, D, 3 * D)),
        wproj=w(ks[4], (depth, D, D)),
        bproj=w(ks[5], (depth, 1, D)),
        w1=w(ks[6], (depth, D, H)),
        b1=w(ks[7], (depth, 1, H)),
        w2=w(ks[8], (depth, H, D)),
        b2=w(ks[9], (depth, 1, D)),
    )

    out = bhoi_module_forward(x, attn_mask, params, num_heads)
    out = jax.block_until_ready(out)

    ref = jax.block_until_ready(_ref_forward(x, attn_mask, params, num_heads))
    np.testing.assert_allclose(np.asarray(out), np.asarray(ref), rtol=1e-3, atol=1e-3)

    print("KERNEL_OK")
</pallas_src>

<mosaic_0001>
module attributes {stable_mosaic.version = 11 : i64} {
  func.func @bhoi_kernel(%arg0: i32, %arg1: memref<2x128x256xf32, #tpu.memory_space<vmem>>, %arg2: memref<128x128xf32, #tpu.memory_space<vmem>>, %arg3: memref<1x4x256xf32, #tpu.memory_space<vmem>>, %arg4: memref<1x256x768xf32, #tpu.memory_space<vmem>>, %arg5: memref<1x256x256xf32, #tpu.memory_space<vmem>>, %arg6: memref<1x1x256xf32, #tpu.memory_space<vmem>>, %arg7: memref<1x256x1024xf32, #tpu.memory_space<vmem>>, %arg8: memref<1x1x1024xf32, #tpu.memory_space<vmem>>, %arg9: memref<1x1024x256xf32, #tpu.memory_space<vmem>>, %arg10: memref<1x1x256xf32, #tpu.memory_space<vmem>>, %arg11: memref<2x128x256xf32, #tpu.memory_space<vmem>>) attributes {dimension_semantics = [#tpu.dimension_semantics<arbitrary>], iteration_bounds = array<i64: 3>, scalar_prefetch = 0 : i64, scratch_operands = 0 : i64, tpu.core_type = #tpu.core_type<tc>, window_params = [{pipeline_mode = #tpu.pipeline_mode<synchronous>, transform_indices = @transform_0, window_bounds = array<i64: 2, 128, 256>}, {pipeline_mode = #tpu.pipeline_mode<synchronous>, transform_indices = @transform_1, window_bounds = array<i64: 128, 128>}, {transform_indices = @transform_2, window_bounds = array<i64: 1, 4, 256>}, {transform_indices = @transform_3, window_bounds = array<i64: 1, 256, 768>}, {transform_indices = @transform_4, window_bounds = array<i64: 1, 256, 256>}, {transform_indices = @transform_5, window_bounds = array<i64: 1, 1, 256>}, {transform_indices = @transform_6, window_bounds = array<i64: 1, 256, 1024>}, {transform_indices = @transform_7, window_bounds = array<i64: 1, 1, 1024>}, {transform_indices = @transform_8, window_bounds = array<i64: 1, 1024, 256>}, {transform_indices = @transform_9, window_bounds = array<i64: 1, 1, 256>}, {pipeline_mode = #tpu.pipeline_mode<synchronous>, transform_indices = @transform_10, window_bounds = array<i64: 2, 128, 256>}]} {
    %c0_i32 = arith.constant 0 : i32
    %0 = arith.cmpi eq, %arg0, %c0_i32 : i32
    %1 = arith.extui %0 : i1 to i32
    %c0_i32_0 = arith.constant 0 : i32
    %2 = arith.cmpi ne, %1, %c0_i32_0 : i32
    scf.if %2 {
      %c0_59 = arith.constant 0 : index
      %c0_60 = arith.constant 0 : index
      %c0_61 = arith.constant 0 : index
      %140 = vector.load %arg1[%c0_59, %c0_60, %c0_61] : memref<2x128x256xf32, #tpu.memory_space<vmem>>, vector<2x128x256xf32>
      %c0_62 = arith.constant 0 : index
      %c0_63 = arith.constant 0 : index
      %c0_64 = arith.constant 0 : index
      %141 = vector.load %arg11[%c0_62, %c0_63, %c0_64] : memref<2x128x256xf32, #tpu.memory_space<vmem>>, vector<2x128x256xf32>
      tpu.vector_store %arg11[%c0_62, %c0_63, %c0_64], %140 {strides = array<i32>} : memref<2x128x256xf32, #tpu.memory_space<vmem>>, vector<2x128x256xf32>,
    } else {
    }
    %c0 = arith.constant 0 : index
    %c0_1 = arith.constant 0 : index
    %c0_2 = arith.constant 0 : index
    %3 = vector.load %arg11[%c0, %c0_1, %c0_2] : memref<2x128x256xf32, #tpu.memory_space<vmem>>, vector<2x128x256xf32>
    %4 = vector.shape_cast %3 : vector<2x128x256xf32> to vector<256x256xf32>
    %c0_3 = arith.constant 0 : index
    %c0_4 = arith.constant 0 : index
    %c0_5 = arith.constant 0 : index
    %5 = vector.load %arg3[%c0_3, %c0_4, %c0_5] : memref<1x4x256xf32, #tpu.memory_space<vmem>>, vector<1x4x256xf32>
    %6 = vector.shape_cast %5 : vector<1x4x256xf32> to vector<4x256xf32>
    %7 = vector.extract_strided_slice %6 {offsets = [0, 0], sizes = [1, 256], strides = [1, 1]} : vector<4x256xf32> to vector<1x256xf32>
    %8 = vector.extract_strided_slice %6 {offsets = [1, 0], sizes = [1, 256], strides = [1, 1]} : vector<4x256xf32> to vector<1x256xf32>
    %9 = vector.extract_strided_slice %6 {offsets = [2, 0], sizes = [1, 256], strides = [1, 1]} : vector<4x256xf32> to vector<1x256xf32>
    %10 = vector.extract_strided_slice %6 {offsets = [3, 0], sizes = [1, 256], strides = [1, 1]} : vector<4x256xf32> to vector<1x256xf32>
    %cst = arith.constant dense<0.000000e+00> : vector<256xf32>
    %11 = vector.multi_reduction <add>, %4, %cst [1] : vector<256x256xf32> to vector<256xf32>
    %12 = vector.shape_cast %11 : vector<256xf32> to vector<256x1xf32>
    %cst_6 = arith.constant 2.560000e+02 : f32
    %13 = vector.broadcast %cst_6 : f32 to vector<256x1xf32>
    %14 = arith.divf %12, %13 : vector<256x1xf32>
    %15 = vector.broadcast %14 : vector<256x1xf32> to vector<256x256xf32>
    %16 = arith.subf %4, %15 : vector<256x256xf32>
    %17 = arith.mulf %16, %16 : vector<256x256xf32>
    %cst_7 = arith.constant dense<0.000000e+00> : vector<256xf32>
    %18 = vector.multi_reduction <add>, %17, %cst_7 [1] : vector<256x256xf32> to vector<256xf32>
    %19 = vector.shape_cast %18 : vector<256xf32> to vector<256x1xf32>
    %cst_8 = arith.constant 2.560000e+02 : f32
    %20 = vector.broadcast %cst_8 : f32 to vector<256x1xf32>
    %21 = arith.divf %19, %20 : vector<256x1xf32>
    %cst_9 = arith.constant 9.99999974E-6 : f32
    %22 = vector.broadcast %cst_9 : f32 to vector<256x1xf32>
    %23 = arith.addf %21, %22 : vector<256x1xf32>
    %24 = math.rsqrt %23 : vector<256x1xf32>
    %25 = vector.broadcast %24 : vector<256x1xf32> to vector<256x256xf32>
    %26 = arith.mulf %16, %25 : vector<256x256xf32>
    %27 = vector.broadcast %7 : vector<1x256xf32> to vector<256x256xf32>
    %28 = arith.mulf %26, %27 : vector<256x256xf32>
    %29 = vector.broadcast %8 : vector<1x256xf32> to vector<256x256xf32>
    %30 = arith.addf %28, %29 : vector<256x256xf32>
    %c0_10 = arith.constant 0 : index
    %c0_11 = arith.constant 0 : index
    %c0_12 = arith.constant 0 : index
    %31 = vector.load %arg4[%c0_10, %c0_11, %c0_12] : memref<1x256x768xf32, #tpu.memory_space<vmem>>, vector<1x256x768xf32>
    %32 = vector.shape_cast %31 : vector<1x256x768xf32> to vector<256x768xf32>
    %cst_13 = arith.constant dense<0.000000e+00> : vector<256x768xf32>
    %33 = tpu.matmul %30, %32, %cst_13 {dimension_numbers = #tpu.dot_dimension_numbers<[1], [0], [0], [1], [0, 0, 1, 1], [], []>} : vector<256x256xf32>, vector<256x768xf32>, vector<256x768xf32> -> vector<256x768xf32>
    %c0_14 = arith.constant 0 : index
    %c0_15 = arith.constant 0 : index
    %34 = vector.load %arg2[%c0_14, %c0_15] : memref<128x128xf32, #tpu.memory_space<vmem>>, vector<128x128xf32>
    %35 = vector.extract_strided_slice %33 {offsets = [0, 0], sizes = [256, 128], strides = [1, 1]} : vector<256x768xf32> to vector<256x128xf32>
    %36 = vector.shape_cast %35 : vector<256x128xf32> to vector<2x128x128xf32>
    %37 = vector.extract_strided_slice %33 {offsets = [0, 256], sizes = [256, 128], strides = [1, 1]} : vector<256x768xf32> to vector<256x128xf32>
    %38 = vector.shape_cast %37 : vector<256x128xf32> to vector<2x128x128xf32>
    %39 = vector.extract_strided_slice %33 {offsets = [0, 512], sizes = [256, 128], strides = [1, 1]} : vector<256x768xf32> to vector<256x128xf32>
    %40 = vector.shape_cast %39 : vector<256x128xf32> to vector<2x128x128xf32>
    "tpu.trace_start"() <{level = 10 : i32, message = "bnd,bmd->bnm"}> : () -> ()
    %cst_16 = arith.constant dense<0.000000e+00> : vector<2x128x128xf32>
    %41 = tpu.matmul %36, %38, %cst_16 {dimension_numbers = #tpu.dot_dimension_numbers<[2], [2], [1], [1], [0, 0, 0, 1, 1, 1], [0], [0]>} : vector<2x128x128xf32>, vector<2x128x128xf32>, vector<2x128x128xf32> -> vector<2x128x128xf32>
    "tpu.trace_stop"() : () -> ()
    %cst_17 = arith.constant 0.0883883461 : f32
    %42 = vector.broadcast %cst_17 : f32 to vector<2x128x128xf32>
    %43 = arith.mulf %41, %42 : vector<2x128x128xf32>
    %44 = vector.shape_cast %34 : vector<128x128xf32> to vector<1x128x128xf32>
    %45 = vector.broadcast %44 : vector<1x128x128xf32> to vector<2x128x128xf32>
    %46 = arith.addf %43, %45 : vector<2x128x128xf32>
    %cst_18 = arith.constant dense<0xFF800000> : vector<2x128xf32>
    %47 = vector.multi_reduction <maximumf>, %46, %cst_18 [2] : vector<2x128x128xf32> to vector<2x128xf32>
    %48 = vector.shape_cast %47 : vector<2x128xf32> to vector<2x128x1xf32>
    %49 = vector.broadcast %48 : vector<2x128x1xf32> to vector<2x128x128xf32>
    %50 = arith.subf %46, %49 : vector<2x128x128xf32>
    %51 = math.exp %50 : vector<2x128x128xf32>
    %cst_19 = arith.constant dense<0.000000e+00> : vector<2x128xf32>
    %52 = vector.multi_reduction <add>, %51, %cst_19 [2] : vector<2x128x128xf32> to vector<2x128xf32>
    %53 = vector.shape_cast %52 : vector<2x128xf32> to vector<2x128x1xf32>
    %54 = vector.broadcast %53 : vector<2x128x1xf32> to vector<2x128x128xf32>
    %55 = arith.divf %51, %54 : vector<2x128x128xf32>
    "tpu.trace_start"() <{level = 10 : i32, message = "bnm,bmd->bnd"}> : () -> ()
    %cst_20 = arith.constant dense<0.000000e+00> : vector<2x128x128xf32>
    %56 = tpu.matmul %55, %40, %cst_20 {dimension_numbers = #tpu.dot_dimension_numbers<[2], [1], [1], [2], [0, 0, 0, 1, 1, 2], [0], [0]>} : vector<2x128x128xf32>, vector<2x128x128xf32>, vector<2x128x128xf32> -> vector<2x128x128xf32>
    "tpu.trace_stop"() : () -> ()
    %57 = vector.shape_cast %56 : vector<2x128x128xf32> to vector<256x128xf32>
    %58 = vector.extract_strided_slice %33 {offsets = [0, 128], sizes = [256, 128], strides = [1, 1]} : vector<256x768xf32> to vector<256x128xf32>
    %59 = vector.shape_cast %58 : vector<256x128xf32> to vector<2x128x128xf32>
    %60 = vector.extract_strided_slice %33 {offsets = [0, 384], sizes = [256, 128], strides = [1, 1]} : vector<256x768xf32> to vector<256x128xf32>
    %61 = vector.shape_cast %60 : vector<256x128xf32> to vector<2x128x128xf32>
    %62 = vector.extract_strided_slice %33 {offsets = [0, 640], sizes = [256, 128], strides = [1, 1]} : vector<256x768xf32> to vector<256x128xf32>
    %63 = vector.shape_cast %62 : vector<256x128xf32> to vector<2x128x128xf32>
    "tpu.trace_start"() <{level = 10 : i32, message = "bnd,bmd->bnm"}> : () -> ()
    %cst_21 = arith.constant dense<0.000000e+00> : vector<2x128x128xf32>
    %64 = tpu.matmul %59, %61, %cst_21 {dimension_numbers = #tpu.dot_dimension_numbers<[2], [2], [1], [1], [0, 0, 0, 1, 1, 1], [0], [0]>} : vector<2x128x128xf32>, vector<2x128x128xf32>, vector<2x128x128xf32> -> vector<2x128x128xf32>
    "tpu.trace_stop"() : () -> ()
    %cst_22 = arith.constant 0.0883883461 : f32
    %65 = vector.broadcast %cst_22 : f32 to vector<2x128x128xf32>
    %66 = arith.mulf %64, %65 : vector<2x128x128xf32>
    %67 = vector.shape_cast %34 : vector<128x128xf32> to vector<1x128x128xf32>
    %68 = vector.broadcast %67 : vector<1x128x128xf32> to vector<2x128x128xf32>
    %69 = arith.addf %66, %68 : vector<2x128x128xf32>
    %cst_23 = arith.constant dense<0xFF800000> : vector<2x128xf32>
    %70 = vector.multi_reduction <maximumf>, %69, %cst_23 [2] : vector<2x128x128xf32> to vector<2x128xf32>
    %71 = vector.shape_cast %70 : vector<2x128xf32> to vector<2x128x1xf32>
    %72 = vector.broadcast %71 : vector<2x128x1xf32> to vector<2x128x128xf32>
    %73 = arith.subf %69, %72 : vector<2x128x128xf32>
    %74 = math.exp %73 : vector<2x128x128xf32>
    %cst_24 = arith.constant dense<0.000000e+00> : vector<2x128xf32>
    %75 = vector.multi_reduction <add>, %74, %cst_24 [2] : vector<2x128x128xf32> to vector<2x128xf32>
    %76 = vector.shape_cast %75 : vector<2x128xf32> to vector<2x128x1xf32>
    %77 = vector.broadcast %76 : vector<2x128x1xf32> to vector<2x128x128xf32>
    %78 = arith.divf %74, %77 : vector<2x128x128xf32>
    "tpu.trace_start"() <{level = 10 : i32, message = "bnm,bmd->bnd"}> : () -> ()
    %cst_25 = arith.constant dense<0.000000e+00> : vector<2x128x128xf32>
    %79 = tpu.matmul %78, %63, %cst_25 {dimension_numbers = #tpu.dot_dimension_numbers<[2], [1], [1], [2], [0, 0, 0, 1, 1, 2], [0], [0]>} : vector<2x128x128xf32>, vector<2x128x128xf32>, vector<2x128x128xf32> -> vector<2x128x128xf32>
    "tpu.trace_stop"() : () -> ()
    %80 = vector.shape_cast %79 : vector<2x128x128xf32> to vector<256x128xf32>
    %81 = tpu.concatenate %57, %80 in 1 : vector<256x128xf32>, vector<256x128xf32> -> vector<256x256xf32>
    %c0_26 = arith.constant 0 : index
    %c0_27 = arith.constant 0 : index
    %c0_28 = arith.constant 0 : index
    %82 = vector.load %arg5[%c0_26, %c0_27, %c0_28] : memref<1x256x256xf32, #tpu.memory_space<vmem>>, vector<1x256x256xf32>
    %83 = vector.shape_cast %82 : vector<1x256x256xf32> to vector<256x256xf32>
    %cst_29 = arith.constant dense<0.000000e+00> : vector<256x256xf32>
    %84 = tpu.matmul %81, %83, %cst_29 {dimension_numbers = #tpu.dot_dimension_numbers<[1], [0], [0], [1], [0, 0, 1, 1], [], []>} : vector<256x256xf32>, vector<256x256xf32>, vector<256x256xf32> -> vector<256x256xf32>
    %c0_30 = arith.constant 0 : index
    %c0_31 = arith.constant 0 : index
    %c0_32 = arith.constant 0 : index
    %85 = vector.load %arg6[%c0_30, %c0_31, %c0_32] : memref<1x1x256xf32, #tpu.memory_space<vmem>>, vector<1x1x256xf32>
    %86 = vector.shape_cast %85 : vector<1x1x256xf32> to vector<1x256xf32>
    %87 = vector.broadcast %86 : vector<1x256xf32> to vector<256x256xf32>
    %88 = arith.addf %84, %87 : vector<256x256xf32>
    %89 = arith.addf %4, %88 : vector<256x256xf32>
    %cst_33 = arith.constant dense<0.000000e+00> : vector<256xf32>
    %90 = vector.multi_reduction <add>, %89, %cst_33 [1] : vector<256x256xf32> to vector<256xf32>
    %91 = vector.shape_cast %90 : vector<256xf32> to vector<256x1xf32>
    %cst_34 = arith.constant 2.560000e+02 : f32
    %92 = vector.broadcast %cst_34 : f32 to vector<256x1xf32>
    %93 = arith.divf %91, %92 : vector<256x1xf32>
    %94 = vector.broadcast %93 : vector<256x1xf32> to vector<256x256xf32>
    %95 = arith.subf %89, %94 : vector<256x256xf32>
    %96 = arith.mulf %95, %95 : vector<256x256xf32>
    %cst_35 = arith.constant dense<0.000000e+00> : vector<256xf32>
    %97 = vector.multi_reduction <add>, %96, %cst_35 [1] : vector<256x256xf32> to vector<256xf32>
    %98 = vector.shape_cast %97 : vector<256xf32> to vector<256x1xf32>
    %cst_36 = arith.constant 2.560000e+02 : f32
    %99 = vector.broadcast %cst_36 : f32 to vector<256x1xf32>
    %100 = arith.divf %98, %99 : vector<256x1xf32>
    %cst_37 = arith.constant 9.99999974E-6 : f32
    %101 = vector.broadcast %cst_37 : f32 to vector<256x1xf32>
    %102 = arith.addf %100, %101 : vector<256x1xf32>
    %103 = math.rsqrt %102 : vector<256x1xf32>
    %104 = vector.broadcast %103 : vector<256x1xf32> to vector<256x256xf32>
    %105 = arith.mulf %95, %104 : vector<256x256xf32>
    %106 = vector.broadcast %9 : vector<1x256xf32> to vector<256x256xf32>
    %107 = arith.mulf %105, %106 : vector<256x256xf32>
    %108 = vector.broadcast %10 : vector<1x256xf32> to vector<256x256xf32>
    %109 = arith.addf %107, %108 : vector<256x256xf32>
    %c0_38 = arith.constant 0 : index
    %c0_39 = arith.constant 0 : index
    %c0_40 = arith.constant 0 : index
    %110 = vector.load %arg7[%c0_38, %c0_39, %c0_40] : memref<1x256x1024xf32, #tpu.memory_space<vmem>>, vector<1x256x1024xf32>
    %111 = vector.shape_cast %110 : vector<1x256x1024xf32> to vector<256x1024xf32>
    %cst_41 = arith.constant dense<0.000000e+00> : vector<256x1024xf32>
    %112 = tpu.matmul %109, %111, %cst_41 {dimension_numbers = #tpu.dot_dimension_numbers<[1], [0], [0], [1], [0, 0, 1, 1], [], []>} : vector<256x256xf32>, vector<256x1024xf32>, vector<256x1024xf32> -> vector<256x1024xf32>
    %c0_42 = arith.constant 0 : index
    %c0_43 = arith.constant 0 : index
    %c0_44 = arith.constant 0 : index
    %113 = vector.load %arg8[%c0_42, %c0_43, %c0_44] : memref<1x1x1024xf32, #tpu.memory_space<vmem>>, vector<1x1x1024xf32>
    %114 = vector.shape_cast %113 : vector<1x1x1024xf32> to vector<1x1024xf32>
    %115 = vector.broadcast %114 : vector<1x1024xf32> to vector<256x1024xf32>
    %116 = arith.addf %112, %115 : vector<256x1024xf32>
    %117 = arith.mulf %116, %116 : vector<256x1024xf32>
    %118 = arith.mulf %116, %117 : vector<256x1024xf32>
    %cst_45 = arith.constant 4.471500e-02 : f32
    %119 = vector.broadcast %cst_45 : f32 to vector<256x1024xf32>
    %120 = arith.mulf %119, %118 : vector<256x1024xf32>
    %121 = arith.addf %116, %120 : vector<256x1024xf32>
    %cst_46 = arith.constant 0.797884583 : f32
    %122 = vector.broadcast %cst_46 : f32 to vector<256x1024xf32>
    %123 = arith.mulf %122, %121 : vector<256x1024xf32>
    %124 = math.tanh %123 : vector<256x1024xf32>
    %cst_47 = arith.constant 1.000000e+00 : f32
    %125 = vector.broadcast %cst_47 : f32 to vector<256x1024xf32>
    %126 = arith.addf %125, %124 : vector<256x1024xf32>
    %cst_48 = arith.constant 5.000000e-01 : f32
    %127 = vector.broadcast %cst_48 : f32 to vector<256x1024xf32>
    %128 = arith.mulf %127, %126 : vector<256x1024xf32>
    %129 = arith.mulf %116, %128 : vector<256x1024xf32>
    %c0_49 = arith.constant 0 : index
    %c0_50 = arith.constant 0 : index
    %c0_51 = arith.constant 0 : index
    %130 = vector.load %arg9[%c0_49, %c0_50, %c0_51] : memref<1x1024x256xf32, #tpu.memory_space<vmem>>, vector<1x1024x256xf32>
    %131 = vector.shape_cast %130 : vector<1x1024x256xf32> to vector<1024x256xf32>
    %cst_52 = arith.constant dense<0.000000e+00> : vector<256x256xf32>
    %132 = tpu.matmul %129, %131, %cst_52 {dimension_numbers = #tpu.dot_dimension_numbers<[1], [0], [0], [1], [0, 0, 1, 1], [], []>} : vector<256x1024xf32>, vector<1024x256xf32>, vector<256x256xf32> -> vector<256x256xf32>
    %c0_53 = arith.constant 0 : index
    %c0_54 = arith.constant 0 : index
    %c0_55 = arith.constant 0 : index
    %133 = vector.load %arg10[%c0_53, %c0_54, %c0_55] : memref<1x1x256xf32, #tpu.memory_space<vmem>>, vector<1x1x256xf32>
    %134 = vector.shape_cast %133 : vector<1x1x256xf32> to vector<1x256xf32>
    %135 = vector.broadcast %134 : vector<1x256xf32> to vector<256x256xf32>
    %136 = arith.addf %132, %135 : vector<256x256xf32>
    %137 = arith.addf %89, %136 : vector<256x256xf32>
    %138 = vector.shape_cast %137 : vector<256x256xf32> to vector<2x128x256xf32>
    %c0_56 = arith.constant 0 : index
    %c0_57 = arith.constant 0 : index
    %c0_58 = arith.constant 0 : index
    %139 = vector.load %arg11[%c0_56, %c0_57, %c0_58] : memref<2x128x256xf32, #tpu.memory_space<vmem>>, vector<2x128x256xf32>
    tpu.vector_store %arg11[%c0_56, %c0_57, %c0_58], %138 {strides = array<i32>} : memref<2x128x256xf32, #tpu.memory_space<vmem>>, vector<2x128x256xf32>,
    return
  }
  func.func @transform_0(%arg0: i32) -> (i32, i32, i32) {
    %c0_i32 = arith.constant 0 : i32
    %c0_i32_0 = arith.constant 0 : i32
    %c0_i32_1 = arith.constant 0 : i32
    %c0_i32_2 = arith.constant 0 : i32
    return %c0_i32, %c0_i32_0, %c0_i32_1 : i32, i32, i32
  }
  func.func @transform_1(%arg0: i32) -> (i32, i32) {
    %c0_i32 = arith.constant 0 : i32
    %c0_i32_0 = arith.constant 0 : i32
    %c0_i32_1 = arith.constant 0 : i32
    return %c0_i32, %c0_i32_0 : i32, i32
  }
  func.func @transform_2(%arg0: i32) -> (i32, i32, i32) {
    %c0_i32 = arith.constant 0 : i32
    %c0_i32_0 = arith.constant 0 : i32
    %c0_i32_1 = arith.constant 0 : i32
    return %arg0, %c0_i32, %c0_i32_0 : i32, i32, i32
  }
  func.func @transform_3(%arg0: i32) -> (i32, i32, i32) {
    %c0_i32 = arith.constant 0 : i32
    %c0_i32_0 = arith.constant 0 : i32
    %c0_i32_1 = arith.constant 0 : i32
    return %arg0, %c0_i32, %c0_i32_0 : i32, i32, i32
  }
  func.func @transform_4(%arg0: i32) -> (i32, i32, i32) {
    %c0_i32 = arith.constant 0 : i32
    %c0_i32_0 = arith.constant 0 : i32
    %c0_i32_1 = arith.constant 0 : i32
    return %arg0, %c0_i32, %c0_i32_0 : i32, i32, i32
  }
  func.func @transform_5(%arg0: i32) -> (i32, i32, i32) {
    %c0_i32 = arith.constant 0 : i32
    %c0_i32_0 = arith.constant 0 : i32
    %c0_i32_1 = arith.constant 0 : i32
    return %arg0, %c0_i32, %c0_i32_0 : i32, i32, i32
  }
  func.func @transform_6(%arg0: i32) -> (i32, i32, i32) {
    %c0_i32 = arith.constant 0 : i32
    %c0_i32_0 = arith.constant 0 : i32
    %c0_i32_1 = arith.constant 0 : i32
    return %arg0, %c0_i32, %c0_i32_0 : i32, i32, i32
  }
  func.func @transform_7(%arg0: i32) -> (i32, i32, i32) {
    %c0_i32 = arith.constant 0 : i32
    %c0_i32_0 = arith.constant 0 : i32
    %c0_i32_1 = arith.constant 0 : i32
    return %arg0, %c0_i32, %c0_i32_0 : i32, i32, i32
  }
  func.func @transform_8(%arg0: i32) -> (i32, i32, i32) {
    %c0_i32 = arith.constant 0 : i32
    %c0_i32_0 = arith.constant 0 : i32
    %c0_i32_1 = arith.constant 0 : i32
    return %arg0, %c0_i32, %c0_i32_0 : i32, i32, i32
  }
  func.func @transform_9(%arg0: i32) -> (i32, i32, i32) {
    %c0_i32 = arith.constant 0 : i32
    %c0_i32_0 = arith.constant 0 : i32
    %c0_i32_1 = arith.constant 0 : i32
    return %arg0, %c0_i32, %c0_i32_0 : i32, i32, i32
  }
  func.func @transform_10(%arg0: i32) -> (i32, i32, i32) {
    %c0_i32 = arith.constant 0 : i32
    %c0_i32_0 = arith.constant 0 : i32
    %c0_i32_1 = arith.constant 0 : i32
    %c0_i32_2 = arith.constant 0 : i32
    return %c0_i32, %c0_i32_0, %c0_i32_1 : i32, i32, i32
  }
}

</mosaic_0001>

<llo_original>
// kernel: tpu_custom_call.1
$region0: #{tpu_custom_call.1}
  #allocation0 [shape = 'u32[]', space=smem, size = 0x4, offset = 0x4, fixed_abs, tag = 'smem constant byte address 0x4 - core index']
  #allocation1 [shape = 'u32[144,128]{1,0:T(1,128)}', space=vmem, size = 0x12000, scoped, tag = 'internal scratch']
  %s0 = inlined_call_operand.hbm [shape: f32[2,128,256], index: 0, kind: input, shape index: {}]
  %s1 = inlined_call_operand.hbm [shape: f32[128,128], index: 1, kind: input, shape index: {}]
  %s2 = inlined_call_operand.hbm [shape: f32[3,4,256], index: 2, kind: input, shape index: {}]
  %s3 = inlined_call_operand.hbm [shape: f32[3,256,768], index: 3, kind: input, shape index: {}]
  %s4 = inlined_call_operand.hbm [shape: f32[3,256,256], index: 4, kind: input, shape index: {}]
  %s5 = inlined_call_operand.hbm [shape: f32[3,1,256], index: 5, kind: input, shape index: {}]
  %s6 = inlined_call_operand.hbm [shape: f32[3,256,1024], index: 6, kind: input, shape index: {}]
  %s7 = inlined_call_operand.hbm [shape: f32[3,1,1024], index: 7, kind: input, shape index: {}]
  %s8 = inlined_call_operand.hbm [shape: f32[3,1024,256], index: 8, kind: input, shape index: {}]
  %s9 = inlined_call_operand.hbm [shape: f32[3,1,256], index: 9, kind: input, shape index: {}]
  %s10 = inlined_call_operand.hbm [shape: f32[2,128,256], index: 10, kind: output, shape index: {}]
  %s11 = sld [smem:[#allocation0]]
  $region117: #{tpu_custom_call.1} parent=0
    _
  %s13 = ssub.s32 1, %s11
  %s14 = scalar_select 0, %s13, %s11
  $region1: #{tpu_custom_call.1} parent=0
    #allocation2 [shape = 'u8[262144]{0}', space=vmem, size = 0x40000, scoped, tag = 'input window, operand 0, single buffered']
    #allocation3 [shape = 's32[2]{0}', space=sflag, size = 0x8, scoped, tag = 'scoped memory for tpu_custom_call.1']
    #allocation4 [shape = 's32[2]{0}', space=sflag, size = 0x8, scoped, tag = 'scoped memory for tpu_custom_call.1']
    #allocation5 [shape = 'u8[65536]{0}', space=vmem, size = 0x10000, scoped, tag = 'input window, operand 1, single buffered']
    #allocation6 [shape = 's32[1]{0}', space=sflag, size = 0x4, scoped, tag = 'scoped memory for tpu_custom_call.1']
    #allocation7 [shape = 'u8[8192]{0}', space=vmem, size = 0x2000, scoped, tag = 'input window, operand 2']
    #allocation8 [shape = 'u8[1572864]{0}', space=vmem, size = 0x180000, scoped, tag = 'input window, operand 3']
    #allocation9 [shape = 'u8[524288]{0}', space=vmem, size = 0x80000, scoped, tag = 'input window, operand 4']
    #allocation10 [shape = 'u8[2048]{0}', space=vmem, size = 0x800, scoped, tag = 'input window, operand 5']
    #allocation11 [shape = 'u8[2097152]{0}', space=vmem, size = 0x200000, scoped, tag = 'input window, operand 6']
    #allocation12 [shape = 'u8[8192]{0}', space=vmem, size = 0x2000, scoped, tag = 'input window, operand 7']
    #allocation13 [shape = 'u8[2097152]{0}', space=vmem, size = 0x200000, scoped, tag = 'input window, operand 8']
    #allocation14 [shape = 'u8[2048]{0}', space=vmem, size = 0x800, scoped, tag = 'input window, operand 9']
    #allocation15 [shape = 'u8[262144]{0}', space=vmem, size = 0x40000, scoped, tag = 'output window, operand 0, single buffered']
    %15 = vsyncpa [#allocation3], 0
    %16 = vsyncpa [#allocation6], 0
    %17 = vsyncpa [#allocation4], 0
    loop: start=0, step=1, limit=5
    $region2: #{tpu_custom_call.1} parent=1 // loop_pre_header
      _
    $region3: #{tpu_custom_call.1} parent=1 // loop_header
      %s19 = sphi 0, %s23
      %p20 = scmp.ge.s32.totalorder %s19, 5
      %s27 = sphi 0, %s27
      %s29 = sphi 0, %s27
      %s30 = sphi 0, %s29
      %s44 = sphi 0, %s30
      %s48 = sphi 0, %s48
      %s50 = sphi 0, %s48
      %s51 = sphi 0, %s50
      %s65 = sphi 0, %s51
      %s71 = sphi 0, %s73
      %s74 = sphi 0, %s71
      %s75 = sphi 0, %s74
      %s91 = sphi 0, %s75
      %s97 = sphi 0, %s99
      %s100 = sphi 0, %s97
      %s101 = sphi 0, %s100
      %s117 = sphi 0, %s101
      %s123 = sphi 0, %s125
      %s126 = sphi 0, %s123
      %s127 = sphi 0, %s126
      %s143 = sphi 0, %s127
      %s149 = sphi 0, %s151
      %s152 = sphi 0, %s149
      %s153 = sphi 0, %s152
      %s169 = sphi 0, %s153
      %s175 = sphi 0, %s177
      %s178 = sphi 0, %s175
      %s179 = sphi 0, %s178
      %s195 = sphi 0, %s179
      %s201 = sphi 0, %s203
      %s204 = sphi 0, %s201
      %s205 = sphi 0, %s204
      %s221 = sphi 0, %s205
      %s227 = sphi 0, %s229
      %s230 = sphi 0, %s227
      %s231 = sphi 0, %s230
      %s247 = sphi 0, %s231
      %s253 = sphi 0, %s255
      %s256 = sphi 0, %s253
      %s257 = sphi 0, %s256
      %s273 = sphi 0, %s257
      %s277 = sphi 0, %s277
      %s279 = sphi 0, %s277
      %s280 = sphi 0, %s279
      %s294 = sphi 0, %s280
    $region4: #{tpu_custom_call.1} parent=1 // loop_header_branch
      %22 = sbr.rel (%p20) target = $region8
    $region5: #{tpu_custom_call.1} parent=1 // loop_body
      %s24 = ssub.s32 %s19, 1
      %s25 = ssub.s32 %s19, 2
      %s26 = sadd.s32 %s19, 1
      %s28 = sadd.s32 %s27, 1
      %p31 = scmp.eq.s32.totalorder %s19, 2
      %p32 = scmp.ne.s32.totalorder %s27, %s29
      %p33 = scmp.eq.s32.totalorder %s19, 0
      %p34 = por %p32, %p33
      %p35 = scmp.ne.s32.totalorder %s27, %s29
      %p36 = scmp.eq.s32.totalorder %s24, 2
      %p37 = por %p35, %p36
      %p38 = scmp.ne.s32.totalorder %s29, %s30
      %p39 = scmp.eq.s32.totalorder %s24, 0
      %p40 = por %p38, %p39
      %p41 = scmp.ne.s32.totalorder %s29, %s30
      %p42 = scmp.eq.s32.totalorder %s25, 2
      %p43 = por %p41, %p42
      %p45 = scmp.ne.s32.totalorder %s30, %s44
      %p46 = scmp.eq.s32.totalorder %s25, 0
      %p47 = por %p45, %p46
      %s49 = sadd.s32 %s48, 1
      %p52 = scmp.eq.s32.totalorder %s19, 2
      %p53 = scmp.ne.s32.totalorder %s48, %s50
      %p54 = scmp.eq.s32.totalorder %s19, 0
      %p55 = por %p53, %p54
      %p56 = scmp.ne.s32.totalorder %s48, %s50
      %p57 = scmp.eq.s32.totalorder %s24, 2
      %p58 = por %p56, %p57
      %p59 = scmp.ne.s32.totalorder %s50, %s51
      %p60 = scmp.eq.s32.totalorder %s24, 0
      %p61 = por %p59, %p60
      %p62 = scmp.ne.s32.totalorder %s50, %s51
      %p63 = scmp.eq.s32.totalorder %s25, 2
      %p64 = por %p62, %p63
      %p66 = scmp.ne.s32.totalorder %s51, %s65
      %p67 = scmp.eq.s32.totalorder %s25, 0
      %p68 = por %p66, %p67
      %s69 = ssub.s32 %s19, %s26
      %p70 = scmp.eq.s32.totalorder %s69, 0
      %s72 = sadd.s32 %s71, 1
      %s73 = scalar_select %p70, %s71, %s72
      %p76 = pneg %p70
      %p77 = scmp.eq.s32.totalorder %s19, 2
      %p78 = por %p76, %p77
      %p79 = scmp.ne.s32.totalorder %s71, %s74
      %p80 = scmp.eq.s32.totalorder %s19, 0
      %p81 = por %p79, %p80
      %p82 = scmp.ne.s32.totalorder %s71, %s74
      %p83 = scmp.eq.s32.totalorder %s24, 2
      %p84 = por %p82, %p83
      %p85 = scmp.ne.s32.totalorder %s74, %s75
      %p86 = scmp.eq.s32.totalorder %s24, 0
      %p87 = por %p85, %p86
      %p88 = scmp.ne.s32.totalorder %s74, %s75
      %p89 = scmp.eq.s32.totalorder %s25, 2
      %p90 = por %p88, %p89
      %p92 = scmp.ne.s32.totalorder %s75, %s91
      %p93 = scmp.eq.s32.totalorder %s25, 0
      %p94 = por %p92, %p93
      %s95 = ssub.s32 %s19, %s26
      %p96 = scmp.eq.s32.totalorder %s95, 0
      %s98 = sadd.s32 %s97, 1
      %s99 = scalar_select %p96, %s97, %s98
      %p102 = pneg %p96
      %p103 = scmp.eq.s32.totalorder %s19, 2
      %p104 = por %p102, %p103
      %p105 = scmp.ne.s32.totalorder %s97, %s100
      %p106 = scmp.eq.s32.totalorder %s19, 0
      %p107 = por %p105, %p106
      %p108 = scmp.ne.s32.totalorder %s97, %s100
      %p109 = scmp.eq.s32.totalorder %s24, 2
      %p110 = por %p108, %p109
      %p111 = scmp.ne.s32.totalorder %s100, %s101
      %p112 = scmp.eq.s32.totalorder %s24, 0
      %p113 = por %p111, %p112
      %p114 = scmp.ne.s32.totalorder %s100, %s101
      %p115 = scmp.eq.s32.totalorder %s25, 2
      %p116 = por %p114, %p115
      %p118 = scmp.ne.s32.totalorder %s101, %s117
      %p119 = scmp.eq.s32.totalorder %s25, 0
      %p120 = por %p118, %p119
      %s121 = ssub.s32 %s19, %s26
      %p122 = scmp.eq.s32.totalorder %s121, 0
      %s124 = sadd.s32 %s123, 1
      %s125 = scalar_select %p122, %s123, %s124
      %p128 = pneg %p122
      %p129 = scmp.eq.s32.totalorder %s19, 2
      %p130 = por %p128, %p129
      %p131 = scmp.ne.s32.totalorder %s123, %s126
      %p132 = scmp.eq.s32.totalorder %s19, 0
      %p133 = por %p131, %p132
      %p134 = scmp.ne.s32.totalorder %s123, %s126
      %p135 = scmp.eq.s32.totalorder %s24, 2
      %p136 = por %p134, %p135
      %p137 = scmp.ne.s32.totalorder %s126, %s127
      %p138 = scmp.eq.s32.totalorder %s24, 0
      %p139 = por %p137, %p138
      %p140 = scmp.ne.s32.totalorder %s126, %s127
      %p141 = scmp.eq.s32.totalorder %s25, 2
      %p142 = por %p140, %p141
      %p144 = scmp.ne.s32.totalorder %s127, %s143
      %p145 = scmp.eq.s32.totalorder %s25, 0
      %p146 = por %p144, %p145
      %s147 = ssub.s32 %s19, %s26
      %p148 = scmp.eq.s32.totalorder %s147, 0
      %s150 = sadd.s32 %s149, 1
      %s151 = scalar_select %p148, %s149, %s150
      %p154 = pneg %p148
      %p155 = scmp.eq.s32.totalorder %s19, 2
      %p156 = por %p154, %p155
      %p157 = scmp.ne.s32.totalorder %s149, %s152
      %p158 = scmp.eq.s32.totalorder %s19, 0
      %p159 = por %p157, %p158
      %p160 = scmp.ne.s32.totalorder %s149, %s152
      %p161 = scmp.eq.s32.totalorder %s24, 2
      %p162 = por %p160, %p161
      %p163 = scmp.ne.s32.totalorder %s152, %s153
      %p164 = scmp.eq.s32.totalorder %s24, 0
      %p165 = por %p163, %p164
      %p166 = scmp.ne.s32.totalorder %s152, %s153
      %p167 = scmp.eq.s32.totalorder %s25, 2
      %p168 = por %p166, %p167
      %p170 = scmp.ne.s32.totalorder %s153, %s169
      %p171 = scmp.eq.s32.totalorder %s25, 0
      %p172 = por %p170, %p171
      %s173 = ssub.s32 %s19, %s26
      %p174 = scmp.eq.s32.totalorder %s173, 0
      %s176 = sadd.s32 %s175, 1
      %s177 = scalar_select %p174, %s175, %s176
      %p180 = pneg %p174
      %p181 = scmp.eq.s32.totalorder %s19, 2
      %p182 = por %p180, %p181
      %p183 = scmp.ne.s32.totalorder %s175, %s178
      %p184 = scmp.eq.s32.totalorder %s19, 0
      %p185 = por %p183, %p184
      %p186 = scmp.ne.s32.totalorder %s175, %s178
      %p187 = scmp.eq.s32.totalorder %s24, 2
      %p188 = por %p186, %p187
      %p189 = scmp.ne.s32.totalorder %s178, %s179
      %p190 = scmp.eq.s32.totalorder %s24, 0
      %p191 = por %p189, %p190
      %p192 = scmp.ne.s32.totalorder %s178, %s179
      %p193 = scmp.eq.s32.totalorder %s25, 2
      %p194 = por %p192, %p193
      %p196 = scmp.ne.s32.totalorder %s179, %s195
      %p197 = scmp.eq.s32.totalorder %s25, 0
      %p198 = por %p196, %p197
      %s199 = ssub.s32 %s19, %s26
      %p200 = scmp.eq.s32.totalorder %s199, 0
      %s202 = sadd.s32 %s201, 1
      %s203 = scalar_select %p200, %s201, %s202
      %p206 = pneg %p200
      %p207 = scmp.eq.s32.totalorder %s19, 2
      %p208 = por %p206, %p207
      %p209 = scmp.ne.s32.totalorder %s201, %s204
      %p210 = scmp.eq.s32.totalorder %s19, 0
      %p211 = por %p209, %p210
      %p212 = scmp.ne.s32.totalorder %s201, %s204
      %p213 = scmp.eq.s32.totalorder %s24, 2
      %p214 = por %p212, %p213
      %p215 = scmp.ne.s32.totalorder %s204, %s205
      %p216 = scmp.eq.s32.totalorder %s24, 0
      %p217 = por %p215, %p216
      %p218 = scmp.ne.s32.totalorder %s204, %s205
      %p219 = scmp.eq.s32.totalorder %s25, 2
      %p220 = por %p218, %p219
      %p222 = scmp.ne.s32.totalorder %s205, %s221
      %p223 = scmp.eq.s32.totalorder %s25, 0
      %p224 = por %p222, %p223
      %s225 = ssub.s32 %s19, %s26
      %p226 = scmp.eq.s32.totalorder %s225, 0
      %s228 = sadd.s32 %s227, 1
      %s229 = scalar_select %p226, %s227, %s228
      %p232 = pneg %p226
      %p233 = scmp.eq.s32.totalorder %s19, 2
      %p234 = por %p232, %p233
      %p235 = scmp.ne.s32.totalorder %s227, %s230
      %p236 = scmp.eq.s32.totalorder %s19, 0
      %p237 = por %p235, %p236
      %p238 = scmp.ne.s32.totalorder %s227, %s230
      %p239 = scmp.eq.s32.totalorder %s24, 2
      %p240 = por %p238, %p239
      %p241 = scmp.ne.s32.totalorder %s230, %s231
      %p242 = scmp.eq.s32.totalorder %s24, 0
      %p243 = por %p241, %p242
      %p244 = scmp.ne.s32.totalorder %s230, %s231
      %p245 = scmp.eq.s32.totalorder %s25, 2
      %p246 = por %p244, %p245
      %p248 = scmp.ne.s32.totalorder %s231, %s247
      %p249 = scmp.eq.s32.totalorder %s25, 0
      %p250 = por %p248, %p249
      %s251 = ssub.s32 %s19, %s26
      %p252 = scmp.eq.s32.totalorder %s251, 0
      %s254 = sadd.s32 %s253, 1
      %s255 = scalar_select %p252, %s253, %s254
      %p258 = pneg %p252
      %p259 = scmp.eq.s32.totalorder %s19, 2
      %p260 = por %p258, %p259
      %p261 = scmp.ne.s32.totalorder %s253, %s256
      %p262 = scmp.eq.s32.totalorder %s19, 0
      %p263 = por %p261, %p262
      %p264 = scmp.ne.s32.totalorder %s253, %s256
      %p265 = scmp.eq.s32.totalorder %s24, 2
      %p266 = por %p264, %p265
      %p267 = scmp.ne.s32.totalorder %s256, %s257
      %p268 = scmp.eq.s32.totalorder %s24, 0
      %p269 = por %p267, %p268
      %p270 = scmp.ne.s32.totalorder %s256, %s257
      %p271 = scmp.eq.s32.totalorder %s25, 2
      %p272 = por %p270, %p271
      %p274 = scmp.ne.s32.totalorder %s257, %s273
      %p275 = scmp.eq.s32.totalorder %s25, 0
      %p276 = por %p274, %p275
      %s278 = sadd.s32 %s277, 1
      %p281 = scmp.eq.s32.totalorder %s19, 2
      %p282 = scmp.ne.s32.totalorder %s277, %s279
      %p283 = scmp.eq.s32.totalorder %s19, 0
      %p284 = por %p282, %p283
      %p285 = scmp.ne.s32.totalorder %s277, %s279
      %p286 = scmp.eq.s32.totalorder %s24, 2
      %p287 = por %p285, %p286
      %p288 = scmp.ne.s32.totalorder %s279, %s280
      %p289 = scmp.eq.s32.totalorder %s24, 0
      %p290 = por %p288, %p289
      %p291 = scmp.ne.s32.totalorder %s279, %s280
      %p292 = scmp.eq.s32.totalorder %s25, 2
      %p293 = por %p291, %p292
      %p295 = scmp.ne.s32.totalorder %s280, %s294
      %p296 = scmp.eq.s32.totalorder %s25, 0
      %p297 = por %p295, %p296
      %p298 = scmp.le.s32.totalorder 1, %s19
      %p299 = scmp.lt.s32.totalorder %s19, 4
      %p300 = pnand %p298, %p299
      %p301 = pneg %p300
      // Predicated region
      $region9: #{tpu_custom_call.1} parent=5 // pred_check
        _
      $region10: #{tpu_custom_call.1} parent=5 // pred_check_branch
        %303 = sbr.rel (%p300) target = $region12
      $region11: #{tpu_custom_call.1} parent=5 // pred_region
        %s304 = ssub.s32 %s19, 1
        // Predicated region
        $region13: #{tpu_custom_call.1} parent=11 // pred_check
          %p305 = pneg %p40
        $region14: #{tpu_custom_call.1} parent=11 // pred_check_branch
          %307 = sbr.rel (%p305) target = $region16
        $region15: #{tpu_custom_call.1} parent=11 // pred_region
          %s309 = ssub.s32 8192, 8192
          %310 = vsyncadd [#allocation3], %s309
          %s311 = sshll.u32 [#allocation2], 4
          %s312 = int_to_ptr.vmem [resolvable:$true] %s311
          %317 = dma.hbm_to_vmem [thread:$0]  %s0, 8192, %s312, [#allocation3], 256, 256, 16
        $region16: #{tpu_custom_call.1} parent=11 // pred_fallthru
          _
        // Predicated region
        $region17: #{tpu_custom_call.1} parent=11 // pred_check
          %p318 = pneg %p61
        $region18: #{tpu_custom_call.1} parent=11 // pred_check_branch
          %320 = sbr.rel (%p318) target = $region20
        $region19: #{tpu_custom_call.1} parent=11 // pred_region
          %s322 = ssub.s32 2048, 2048
          %323 = vsyncadd [#allocation6], %s322
          %s324 = sshll.u32 [#allocation5], 4
          %s325 = int_to_ptr.vmem [resolvable:$true] %s324
          %330 = dma.hbm_to_vmem [thread:$0]  %s1, 2048, %s325, [#allocation6], 128, 128, 8
        $region20: #{tpu_custom_call.1} parent=11 // pred_fallthru
          _
      $region12: #{tpu_custom_call.1} parent=5 // pred_fallthru
        _
      %p331 = scmp.lt.s32.totalorder %s19, 3
      // Predicated region
      $region21: #{tpu_custom_call.1} parent=5 // pred_check
        %p332 = pneg %p331
      $region22: #{tpu_custom_call.1} parent=5 // pred_check_branch
        %334 = sbr.rel (%p332) target = $region24
      $region23: #{tpu_custom_call.1} parent=5 // pred_region
        // Predicated region
        $region25: #{tpu_custom_call.1} parent=23 // pred_check
          %p335 = pneg %p81
        $region26: #{tpu_custom_call.1} parent=23 // pred_check_branch
          %337 = sbr.rel (%p335) target = $region28
        $region27: #{tpu_custom_call.1} parent=23 // pred_region
          %s338 = sand.u32 %s19, 1
          %s339 = scalar_lea.sflag [#allocation3], %s338
          %s340 = sand.u32 %s71, 1
          %s341 = smul.addr %s340, 8
          %s342 = scalar_lea.vmem [#allocation7], %s341
          %s344 = ssub.s32 128, 128
          %345 = vsyncadd %s339, %s344
          %s346 = smul.addr %s19, 2
          %s347 = smul.addr %s346, 64
          %s348 = scalar_lea.hbm %s2, %s347
          %s350 = sshll.u32 %s342, 4
          %s351 = int_to_ptr.vmem [resolvable:$true] %s350
          %353 = dma.hbm_to_vmem [thread:$0]  %s348, 128, %s351, %s339
        $region28: #{tpu_custom_call.1} parent=23 // pred_fallthru
          _
        // Predicated region
        $region29: #{tpu_custom_call.1} parent=23 // pred_check
          %p354 = pneg %p107
        $region30: #{tpu_custom_call.1} parent=23 // pred_check_branch
          %356 = sbr.rel (%p354) target = $region32
        $region31: #{tpu_custom_call.1} parent=23 // pred_region
          %s357 = sand.u32 %s19, 1
          %s358 = scalar_lea.sflag [#allocation3], %s357
          %s359 = sand.u32 %s97, 1
          %s360 = smul.addr %s359, 1536
          %s361 = scalar_lea.vmem [#allocation8], %s360
          %s363 = ssub.s32 24576, 24576
          %364 = vsyncadd %s358, %s363
          %s365 = smul.addr %s19, 192
          %s366 = smul.addr %s365, 128
          %s367 = scalar_lea.hbm %s3, %s366
          %s368 = sshll.u32 %s361, 4
          %s369 = int_to_ptr.vmem [resolvable:$true] %s368
          %374 = dma.hbm_to_vmem [thread:$0]  %s367, 24576, %s369, %s358, 768, 768, 48
        $region32: #{tpu_custom_call.1} parent=23 // pred_fallthru
          _
        // Predicated region
        $region33: #{tpu_custom_call.1} parent=23 // pred_check
          %p375 = pneg %p133
        $region34: #{tpu_custom_call.1} parent=23 // pred_check_branch
          %377 = sbr.rel (%p375) target = $region36
        $region35: #{tpu_custom_call.1} parent=23 // pred_region
          %s378 = sand.u32 %s19, 1
          %s379 = scalar_lea.sflag [#allocation3], %s378
          %s380 = sand.u32 %s123, 1
          %s381 = smul.addr %s380, 512
          %s382 = scalar_lea.vmem [#allocation9], %s381
          %s384 = ssub.s32 8192, 8192
          %385 = vsyncadd %s379, %s384
          %s386 = smul.addr %s19, 64
          %s387 = smul.addr %s386, 128
          %s388 = scalar_lea.hbm %s4, %s387
          %s389 = sshll.u32 %s382, 4
          %s390 = int_to_ptr.vmem [resolvable:$true] %s389
          %395 = dma.hbm_to_vmem [thread:$0]  %s388, 8192, %s390, %s379, 256, 256, 16
        $region36: #{tpu_custom_call.1} parent=23 // pred_fallthru
          _
        // Predicated region
        $region37: #{tpu_custom_call.1} parent=23 // pred_check
          %p396 = pneg %p159
        $region38: #{tpu_custom_call.1} parent=23 // pred_check_branch
          %398 = sbr.rel (%p396) target = $region40
        $region39: #{tpu_custom_call.1} parent=23 // pred_region
          %s399 = sand.u32 %s19, 1
          %s400 = scalar_lea.sflag [#allocation3], %s399
          %s401 = sand.u32 %s149, 1
          %s402 = smul.addr %s401, 2
          %s403 = scalar_lea.vmem [#allocation10], %s402
          %s405 = ssub.s32 32, 32
          %406 = vsyncadd %s400, %s405
          %s407 = smul.addr %s19, 2
          %s408 = smul.addr %s407, 16
          %s409 = scalar_lea.hbm %s5, %s408
          %s411 = sshll.u32 %s403, 4
          %s412 = int_to_ptr.vmem [resolvable:$true] %s411
          %414 = dma.hbm_to_vmem [thread:$0]  %s409, 32, %s412, %s400
        $region40: #{tpu_custom_call.1} parent=23 // pred_fallthru
          _
        // Predicated region
        $region41: #{tpu_custom_call.1} parent=23 // pred_check
          %p415 = pneg %p185
        $region42: #{tpu_custom_call.1} parent=23 // pred_check_branch
          %417 = sbr.rel (%p415) target = $region44
        $region43: #{tpu_custom_call.1} parent=23 // pred_region
          %s418 = sand.u32 %s19, 1
          %s419 = scalar_lea.sflag [#allocation3], %s418
          %s420 = sand.u32 %s175, 1
          %s421 = smul.addr %s420, 2048
          %s422 = scalar_lea.vmem [#allocation11], %s421
          %s424 = ssub.s32 32768, 32768
          %425 = vsyncadd %s419, %s424
          %s426 = smul.addr %s19, 256
          %s427 = smul.addr %s426, 128
          %s428 = scalar_lea.hbm %s6, %s427
          %s429 = sshll.u32 %s422, 4
          %s430 = int_to_ptr.vmem [resolvable:$true] %s429
          %435 = dma.hbm_to_vmem [thread:$0]  %s428, 32768, %s430, %s419, 1024, 1024, 64
        $region44: #{tpu_custom_call.1} parent=23 // pred_fallthru
          _
        // Predicated region
        $region45: #{tpu_custom_call.1} parent=23 // pred_check
          %p436 = pneg %p211
        $region46: #{tpu_custom_call.1} parent=23 // pred_check_branch
          %438 = sbr.rel (%p436) target = $region48
        $region47: #{tpu_custom_call.1} parent=23 // pred_region
          %s439 = sand.u32 %s19, 1
          %s440 = scalar_lea.sflag [#allocation3], %s439
          %s441 = sand.u32 %s201, 1
          %s442 = smul.addr %s441, 8
          %s443 = scalar_lea.vmem [#allocation12], %s442
          %s445 = ssub.s32 128, 128
          %446 = vsyncadd %s440, %s445
          %s447 = smul.addr %s19, 8
          %s448 = smul.addr %s447, 16
          %s449 = scalar_lea.hbm %s7, %s448
          %s451 = sshll.u32 %s443, 4
          %s452 = int_to_ptr.vmem [resolvable:$true] %s451
          %454 = dma.hbm_to_vmem [thread:$0]  %s449, 128, %s452, %s440
        $region48: #{tpu_custom_call.1} parent=23 // pred_fallthru
          _
        // Predicated region
        $region49: #{tpu_custom_call.1} parent=23 // pred_check
          %p455 = pneg %p237
        $region50: #{tpu_custom_call.1} parent=23 // pred_check_branch
          %457 = sbr.rel (%p455) target = $region52
        $region51: #{tpu_custom_call.1} parent=23 // pred_region
          %s458 = sand.u32 %s19, 1
          %s459 = scalar_lea.sflag [#allocation3], %s458
          %s460 = sand.u32 %s227, 1
          %s461 = smul.addr %s460, 2048
          %s462 = scalar_lea.vmem [#allocation13], %s461
          %s464 = ssub.s32 32768, 32768
          %465 = vsyncadd %s459, %s464
          %s466 = smul.addr %s19, 256
          %s467 = smul.addr %s466, 128
          %s468 = scalar_lea.hbm %s8, %s467
          %s469 = sshll.u32 %s462, 4
          %s470 = int_to_ptr.vmem [resolvable:$true] %s469
          %475 = dma.hbm_to_vmem [thread:$0]  %s468, 32768, %s470, %s459, 256, 256, 16
        $region52: #{tpu_custom_call.1} parent=23 // pred_fallthru
          _
        // Predicated region
        $region53: #{tpu_custom_call.1} parent=23 // pred_check
          %p476 = pneg %p263
        $region54: #{tpu_custom_call.1} parent=23 // pred_check_branch
          %478 = sbr.rel (%p476) target = $region56
        $region55: #{tpu_custom_call.1} parent=23 // pred_region
          %s479 = sand.u32 %s19, 1
          %s480 = scalar_lea.sflag [#allocation3], %s479
          %s481 = sand.u32 %s253, 1
          %s482 = smul.addr %s481, 2
          %s483 = scalar_lea.vmem [#allocation14], %s482
          %s485 = ssub.s32 32, 32
          %486 = vsyncadd %s480, %s485
          %s487 = smul.addr %s19, 2
          %s488 = smul.addr %s487, 16
          %s489 = scalar_lea.hbm %s9, %s488
          %s491 = sshll.u32 %s483, 4
          %s492 = int_to_ptr.vmem [resolvable:$true] %s491
          %494 = dma.hbm_to_vmem [thread:$0]  %s489, 32, %s492, %s480
        $region56: #{tpu_custom_call.1} parent=23 // pred_fallthru
          _
      $region24: #{tpu_custom_call.1} parent=5 // pred_fallthru
        _
      %p495 = scmp.le.s32.totalorder 1, %s19
      %p496 = scmp.lt.s32.totalorder %s19, 4
      %p497 = pnand %p495, %p496
      %p498 = pneg %p497
      // Predicated region
      $region57: #{tpu_custom_call.1} parent=5 // pred_check
        _
      $region58: #{tpu_custom_call.1} parent=5 // pred_check_branch
        %500 = sbr.rel (%p497) target = $region60
      $region59: #{tpu_custom_call.1} parent=5 // pred_region
        %s501 = ssub.s32 %s19, 1
        // Predicated region
        $region61: #{tpu_custom_call.1} parent=59 // pred_check
          %p502 = pneg %p40
        $region62: #{tpu_custom_call.1} parent=59 // pred_check_branch
          %504 = sbr.rel (%p502) target = $region64
        $region63: #{tpu_custom_call.1} parent=59 // pred_region
          %505 = dma.done [#allocation3], 8192
        $region64: #{tpu_custom_call.1} parent=59 // pred_fallthru
          _
        // Predicated region
        $region65: #{tpu_custom_call.1} parent=59 // pred_check
          %p506 = pneg %p61
        $region66: #{tpu_custom_call.1} parent=59 // pred_check_branch
          %508 = sbr.rel (%p506) target = $region68
        $region67: #{tpu_custom_call.1} parent=59 // pred_region
          %509 = dma.done [#allocation6], 2048
        $region68: #{tpu_custom_call.1} parent=59 // pred_fallthru
          _
        %s510 = sand.u32 %s24, 1
        %s511 = scalar_lea.sflag [#allocation3], %s510
        %s512 = sand.u32 %s74, 1
        %s513 = smul.addr %s512, 8
        %s514 = scalar_lea.vmem [#allocation7], %s513
        // Predicated region
        $region69: #{tpu_custom_call.1} parent=59 // pred_check
          %p515 = pneg %p87
        $region70: #{tpu_custom_call.1} parent=59 // pred_check_branch
          %517 = sbr.rel (%p515) target = $region72
        $region71: #{tpu_custom_call.1} parent=59 // pred_region
          %518 = dma.done %s511, 128
        $region72: #{tpu_custom_call.1} parent=59 // pred_fallthru
          _
        %s519 = sand.u32 %s24, 1
        %s520 = scalar_lea.sflag [#allocation3], %s519
        %s521 = sand.u32 %s100, 1
        %s522 = smul.addr %s521, 1536
        %s523 = scalar_lea.vmem [#allocation8], %s522
        // Predicated region
        $region73: #{tpu_custom_call.1} parent=59 // pred_check
          %p524 = pneg %p113
        $region74: #{tpu_custom_call.1} parent=59 // pred_check_branch
          %526 = sbr.rel (%p524) target = $region76
        $region75: #{tpu_custom_call.1} parent=59 // pred_region
          %527 = dma.done %s520, 24576
        $region76: #{tpu_custom_call.1} parent=59 // pred_fallthru
          _
        %s528 = sand.u32 %s24, 1
        %s529 = scalar_lea.sflag [#allocation3], %s528
        %s530 = sand.u32 %s126, 1
        %s531 = smul.addr %s530, 512
        %s532 = scalar_lea.vmem [#allocation9], %s531
        // Predicated region
        $region77: #{tpu_custom_call.1} parent=59 // pred_check
          %p533 = pneg %p139
        $region78: #{tpu_custom_call.1} parent=59 // pred_check_branch
          %535 = sbr.rel (%p533) target = $region80
        $region79: #{tpu_custom_call.1} parent=59 // pred_region
          %536 = dma.done %s529, 8192
        $region80: #{tpu_custom_call.1} parent=59 // pred_fallthru
          _
        %s537 = sand.u32 %s24, 1
        %s538 = scalar_lea.sflag [#allocation3], %s537
        %s539 = sand.u32 %s152, 1
        %s540 = smul.addr %s539, 2
        %s541 = scalar_lea.vmem [#allocation10], %s540
        // Predicated region
        $region81: #{tpu_custom_call.1} parent=59 // pred_check
          %p542 = pneg %p165
        $region82: #{tpu_custom_call.1} parent=59 // pred_check_branch
          %544 = sbr.rel (%p542) target = $region84
        $region83: #{tpu_custom_call.1} parent=59 // pred_region
          %545 = dma.done %s538, 32
        $region84: #{tpu_custom_call.1} parent=59 // pred_fallthru
          _
        %s546 = sand.u32 %s24, 1
        %s547 = scalar_lea.sflag [#allocation3], %s546
        %s548 = sand.u32 %s178, 1
        %s549 = smul.addr %s548, 2048
        %s550 = scalar_lea.vmem [#allocation11], %s549
        // Predicated region
        $region85: #{tpu_custom_call.1} parent=59 // pred_check
          %p551 = pneg %p191
        $region86: #{tpu_custom_call.1} parent=59 // pred_check_branch
          %553 = sbr.rel (%p551) target = $region88
        $region87: #{tpu_custom_call.1} parent=59 // pred_region
          %554 = dma.done %s547, 32768
        $region88: #{tpu_custom_call.1} parent=59 // pred_fallthru
          _
        %s555 = sand.u32 %s24, 1
        %s556 = scalar_lea.sflag [#allocation3], %s555
        %s557 = sand.u32 %s204, 1
        %s558 = smul.addr %s557, 8
        %s559 = scalar_lea.vmem [#allocation12], %s558
        // Predicated region
        $region89: #{tpu_custom_call.1} parent=59 // pred_check
          %p560 = pneg %p217
        $region90: #{tpu_custom_call.1} parent=59 // pred_check_branch
          %562 = sbr.rel (%p560) target = $region92
        $region91: #{tpu_custom_call.1} parent=59 // pred_region
          %563 = dma.done %s556, 128
        $region92: #{tpu_custom_call.1} parent=59 // pred_fallthru
          _
        %s564 = sand.u32 %s24, 1
        %s565 = scalar_lea.sflag [#allocation3], %s564
        %s566 = sand.u32 %s230, 1
        %s567 = smul.addr %s566, 2048
        %s568 = scalar_lea.vmem [#allocation13], %s567
        // Predicated region
        $region93: #{tpu_custom_call.1} parent=59 // pred_check
          %p569 = pneg %p243
        $region94: #{tpu_custom_call.1} parent=59 // pred_check_branch
          %571 = sbr.rel (%p569) target = $region96
        $region95: #{tpu_custom_call.1} parent=59 // pred_region
          %572 = dma.done %s565, 32768
        $region96: #{tpu_custom_call.1} parent=59 // pred_fallthru
          _
        %s573 = sand.u32 %s24, 1
        %s574 = scalar_lea.sflag [#allocation3], %s573
        %s575 = sand.u32 %s256, 1
        %s576 = smul.addr %s575, 2
        %s577 = scalar_lea.vmem [#allocation14], %s576
        // Predicated region
        $region97: #{tpu_custom_call.1} parent=59 // pred_check
          %p578 = pneg %p269
        $region98: #{tpu_custom_call.1} parent=59 // pred_check_branch
          %580 = sbr.rel (%p578) target = $region100
        $region99: #{tpu_custom_call.1} parent=59 // pred_region
          %581 = dma.done %s574, 32
        $region100: #{tpu_custom_call.1} parent=59 // pred_fallthru
          _
        %p582 = pneg %p40
        %p583 = pneg %p37
        %p584 = pneg %p61
        %p585 = pneg %p58
        %s586 = sand.u32 %s24, 1
        %s587 = scalar_lea.sflag [#allocation3], %s586
        %s588 = sand.u32 %s74, 1
        %s589 = smul.addr %s588, 8
        %s590 = scalar_lea.vmem [#allocation7], %s589
        %p591 = pneg %p87
        %p592 = pneg %p84
        %s593 = sand.u32 %s24, 1
        %s594 = scalar_lea.sflag [#allocation3], %s593
        %s595 = sand.u32 %s100, 1
        %s596 = smul.addr %s595, 1536
        %s597 = scalar_lea.vmem [#allocation8], %s596
        %p598 = pneg %p113
        %p599 = pneg %p110
        %s600 = sand.u32 %s24, 1
        %s601 = scalar_lea.sflag [#allocation3], %s600
        %s602 = sand.u32 %s126, 1
        %s603 = smul.addr %s602, 512
        %s604 = scalar_lea.vmem [#allocation9], %s603
        %p605 = pneg %p139
        %p606 = pneg %p136
        %s607 = sand.u32 %s24, 1
        %s608 = scalar_lea.sflag [#allocation3], %s607
        %s609 = sand.u32 %s152, 1
        %s610 = smul.addr %s609, 2
        %s611 = scalar_lea.vmem [#allocation10], %s610
        %p612 = pneg %p165
        %p613 = pneg %p162
        %s614 = sand.u32 %s24, 1
        %s615 = scalar_lea.sflag [#allocation3], %s614
        %s616 = sand.u32 %s178, 1
        %s617 = smul.addr %s616, 2048
        %s618 = scalar_lea.vmem [#allocation11], %s617
        %p619 = pneg %p191
        %p620 = pneg %p188
        %s621 = sand.u32 %s24, 1
        %s622 = scalar_lea.sflag [#allocation3], %s621
        %s623 = sand.u32 %s204, 1
        %s624 = smul.addr %s623, 8
        %s625 = scalar_lea.vmem [#allocation12], %s624
        %p626 = pneg %p217
        %p627 = pneg %p214
        %s628 = sand.u32 %s24, 1
        %s629 = scalar_lea.sflag [#allocation3], %s628
        %s630 = sand.u32 %s230, 1
        %s631 = smul.addr %s630, 2048
        %s632 = scalar_lea.vmem [#allocation13], %s631
        %p633 = pneg %p243
        %p634 = pneg %p240
        %s635 = sand.u32 %s24, 1
        %s636 = scalar_lea.sflag [#allocation3], %s635
        %s637 = sand.u32 %s256, 1
        %s638 = smul.addr %s637, 2
        %s639 = scalar_lea.vmem [#allocation14], %s638
        %p640 = pneg %p269
        %p641 = pneg %p266
        %p642 = pneg %p290
        %p643 = pneg %p287
        %p644 = scmp.eq.s32.totalorder %s24, 0
        // Predicated region
        $region101: #{tpu_custom_call.1} parent=59 // pred_check
          %p645 = pneg %p644
        $region102: #{tpu_custom_call.1} parent=59 // pred_check_branch
          %647 = sbr.rel (%p645) target = $region104
        $region103: #{tpu_custom_call.1} parent=59 // pred_region
          %v648 = vld [vmem:[#allocation2] sm:$0xff]
          %v649 = vld [vmem:[#allocation2 + $0x8] sm:$0xff]
          %v650 = vld [vmem:[#allocation2 + $0x10] sm:$0xff]
          %v651 = vld [vmem:[#allocation2 + $0x18] sm:$0xff]
          %v652 = vld [vmem:[#allocation2 + $0x20] sm:$0xff]
          %v653 = vld [vmem:[#allocation2 + $0x28] sm:$0xff]
          %v654 = vld [vmem:[#allocation2 + $0x30] sm:$0xff]
          %v655 = vld [vmem:[#allocation2 + $0x38] sm:$0xff]
          %v656 = vld [vmem:[#allocation2 + $0x40] sm:$0xff]
          %v657 = vld [vmem:[#allocation2 + $0x48] sm:$0xff]
          %v658 = vld [vmem:[#allocation2 + $0x50] sm:$0xff]
          %v659 = vld [vmem:[#allocation2 + $0x58] sm:$0xff]
          %v660 = vld [vmem:[#allocation2 + $0x60] sm:$0xff]
          %v661 = vld [vmem:[#allocation2 + $0x68] sm:$0xff]
          %v662 = vld [vmem:[#allocation2 + $0x70] sm:$0xff]
          %v663 = vld [vmem:[#allocation2 + $0x78] sm:$0xff]
          %v664 = vld [vmem:[#allocation2 + $0x80] sm:$0xff]
          %v665 = vld [vmem:[#allocation2 + $0x88] sm:$0xff]
          %v666 = vld [vmem:[#allocation2 + $0x90] sm:$0xff]
          %v667 = vld [vmem:[#allocation2 + $0x98] sm:$0xff]
          %v668 = vld [vmem:[#allocation2 + $0xa0] sm:$0xff]
          %v669 = vld [vmem:[#allocation2 + $0xa8] sm:$0xff]
          %v670 = vld [vmem:[#allocation2 + $0xb0] sm:$0xff]
          %v671 = vld [vmem:[#allocation2 + $0xb8] sm:$0xff]
          %v672 = vld [vmem:[#allocation2 + $0xc0] sm:$0xff]
          %v673 = vld [vmem:[#allocation2 + $0xc8] sm:$0xff]
          %v674 = vld [vmem:[#allocation2 + $0xd0] sm:$0xff]
          %v675 = vld [vmem:[#allocation2 + $0xd8] sm:$0xff]
          %v676 = vld [vmem:[#allocation2 + $0xe0] sm:$0xff]
          %v677 = vld [vmem:[#allocation2 + $0xe8] sm:$0xff]
          %v678 = vld [vmem:[#allocation2 + $0xf0] sm:$0xff]
          %v679 = vld [vmem:[#allocation2 + $0xf8] sm:$0xff]
          %v680 = vld [vmem:[#allocation2 + $0x100] sm:$0xff]
          %v681 = vld [vmem:[#allocation2 + $0x108] sm:$0xff]
          %v682 = vld [vmem:[#allocation2 + $0x110] sm:$0xff]
          %v683 = vld [vmem:[#allocation2 + $0x118] sm:$0xff]
          %v684 = vld [vmem:[#allocation2 + $0x120] sm:$0xff]
          %v685 = vld [vmem:[#allocation2 + $0x128] sm:$0xff]
          %v686 = vld [vmem:[#allocation2 + $0x130] sm:$0xff]
          %v687 = vld [vmem:[#allocation2 + $0x138] sm:$0xff]
          %v688 = vld [vmem:[#allocation2 + $0x140] sm:$0xff]
          %v689 = vld [vmem:[#allocation2 + $0x148] sm:$0xff]
          %v690 = vld [vmem:[#allocation2 + $0x150] sm:$0xff]
          %v691 = vld [vmem:[#allocation2 + $0x158] sm:$0xff]
          %v692 = vld [vmem:[#allocation2 + $0x160] sm:$0xff]
          %v693 = vld [vmem:[#allocation2 + $0x168] sm:$0xff]
          %v694 = vld [vmem:[#allocation2 + $0x170] sm:$0xff]
          %v695 = vld [vmem:[#allocation2 + $0x178] sm:$0xff]
          %v696 = vld [vmem:[#allocation2 + $0x180] sm:$0xff]
          %v697 = vld [vmem:[#allocation2 + $0x188] sm:$0xff]
          %v698 = vld [vmem:[#allocation2 + $0x190] sm:$0xff]
          %v699 = vld [vmem:[#allocation2 + $0x198] sm:$0xff]
          %v700 = vld [vmem:[#allocation2 + $0x1a0] sm:$0xff]
          %v701 = vld [vmem:[#allocation2 + $0x1a8] sm:$0xff]
          %v702 = vld [vmem:[#allocation2 + $0x1b0] sm:$0xff]
          %v703 = vld [vmem:[#allocation2 + $0x1b8] sm:$0xff]
          %v704 = vld [vmem:[#allocation2 + $0x1c0] sm:$0xff]
          %v705 = vld [vmem:[#allocation2 + $0x1c8] sm:$0xff]
          %v706 = vld [vmem:[#allocation2 + $0x1d0] sm:$0xff]
          %v707 = vld [vmem:[#allocation2 + $0x1d8] sm:$0xff]
          %v708 = vld [vmem:[#allocation2 + $0x1e0] sm:$0xff]
          %v709 = vld [vmem:[#allocation2 + $0x1e8] sm:$0xff]
          %v710 = vld [vmem:[#allocation2 + $0x1f0] sm:$0xff]
          %v711 = vld [vmem:[#allocation2 + $0x1f8] sm:$0xff]
          %712 = vst [vmem:[#allocation15] sm:$0xff] %v648
          %713 = vst [vmem:[#allocation15 + $0x8] sm:$0xff] %v649
          %714 = vst [vmem:[#allocation15 + $0x10] sm:$0xff] %v650
          %715 = vst [vmem:[#allocation15 + $0x18] sm:$0xff] %v651
          %716 = vst [vmem:[#allocation15 + $0x20] sm:$0xff] %v652
          %717 = vst [vmem:[#allocation15 + $0x28] sm:$0xff] %v653
          %718 = vst [vmem:[#allocation15 + $0x30] sm:$0xff] %v654
          %719 = vst [vmem:[#allocation15 + $0x38] sm:$0xff] %v655
          %720 = vst [vmem:[#allocation15 + $0x40] sm:$0xff] %v656
          %721 = vst [vmem:[#allocation15 + $0x48] sm:$0xff] %v657
          %722 = vst [vmem:[#allocation15 + $0x50] sm:$0xff] %v658
          %723 = vst [vmem:[#allocation15 + $0x58] sm:$0xff] %v659
          %724 = vst [vmem:[#allocation15 + $0x60] sm:$0xff] %v660
          %725 = vst [vmem:[#allocation15 + $0x68] sm:$0xff] %v661
          %726 = vst [vmem:[#allocation15 + $0x70] sm:$0xff] %v662
          %727 = vst [vmem:[#allocation15 + $0x78] sm:$0xff] %v663
          %728 = vst [vmem:[#allocation15 + $0x80] sm:$0xff] %v664
          %729 = vst [vmem:[#allocation15 + $0x88] sm:$0xff] %v665
          %730 = vst [vmem:[#allocation15 + $0x90] sm:$0xff] %v666
          %731 = vst [vmem:[#allocation15 + $0x98] sm:$0xff] %v667
          %732 = vst [vmem:[#allocation15 + $0xa0] sm:$0xff] %v668
          %733 = vst [vmem:[#allocation15 + $0xa8] sm:$0xff] %v669
          %734 = vst [vmem:[#allocation15 + $0xb0] sm:$0xff] %v670
          %735 = vst [vmem:[#allocation15 + $0xb8] sm:$0xff] %v671
          %736 = vst [vmem:[#allocation15 + $0xc0] sm:$0xff] %v672
          %737 = vst [vmem:[#allocation15 + $0xc8] sm:$0xff] %v673
          %738 = vst [vmem:[#allocation15 + $0xd0] sm:$0xff] %v674
          %739 = vst [vmem:[#allocation15 + $0xd8] sm:$0xff] %v675
          %740 = vst [vmem:[#allocation15 + $0xe0] sm:$0xff] %v676
          %741 = vst [vmem:[#allocation15 + $0xe8] sm:$0xff] %v677
          %742 = vst [vmem:[#allocation15 + $0xf0] sm:$0xff] %v678
          %743 = vst [vmem:[#allocation15 + $0xf8] sm:$0xff] %v679
          %744 = vst [vmem:[#allocation15 + $0x100] sm:$0xff] %v680
          %745 = vst [vmem:[#allocation15 + $0x108] sm:$0xff] %v681
          %746 = vst [vmem:[#allocation15 + $0x110] sm:$0xff] %v682
          %747 = vst [vmem:[#allocation15 + $0x118] sm:$0xff] %v683
          %748 = vst [vmem:[#allocation15 + $0x120] sm:$0xff] %v684
          %749 = vst [vmem:[#allocation15 + $0x128] sm:$0xff] %v685
          %750 = vst [vmem:[#allocation15 + $0x130] sm:$0xff] %v686
          %751 = vst [vmem:[#allocation15 + $0x138] sm:$0xff] %v687
          %752 = vst [vmem:[#allocation15 + $0x140] sm:$0xff] %v688
          %753 = vst [vmem:[#allocation15 + $0x148] sm:$0xff] %v689
          %754 = vst [vmem:[#allocation15 + $0x150] sm:$0xff] %v690
          %755 = vst [vmem:[#allocation15 + $0x158] sm:$0xff] %v691
          %756 = vst [vmem:[#allocation15 + $0x160] sm:$0xff] %v692
          %757 = vst [vmem:[#allocation15 + $0x168] sm:$0xff] %v693
          %758 = vst [vmem:[#allocation15 + $0x170] sm:$0xff] %v694
          %759 = vst [vmem:[#allocation15 + $0x178] sm:$0xff] %v695
          %760 = vst [vmem:[#allocation15 + $0x180] sm:$0xff] %v696
          %761 = vst [vmem:[#allocation15 + $0x188] sm:$0xff] %v697
          %762 = vst [vmem:[#allocation15 + $0x190] sm:$0xff] %v698
          %763 = vst [vmem:[#allocation15 + $0x198] sm:$0xff] %v699
          %764 = vst [vmem:[#allocation15 + $0x1a0] sm:$0xff] %v700
          %765 = vst [vmem:[#allocation15 + $0x1a8] sm:$0xff] %v701
          %766 = vst [vmem:[#allocation15 + $0x1b0] sm:$0xff] %v702
          %767 = vst [vmem:[#allocation15 + $0x1b8] sm:$0xff] %v703
          %768 = vst [vmem:[#allocation15 + $0x1c0] sm:$0xff] %v704
          %769 = vst [vmem:[#allocation15 + $0x1c8] sm:$0xff] %v705
          %770 = vst [vmem:[#allocation15 + $0x1d0] sm:$0xff] %v706
          %771 = vst [vmem:[#allocation15 + $0x1d8] sm:$0xff] %v707
          %772 = vst [vmem:[#allocation15 + $0x1e0] sm:$0xff] %v708
          %773 = vst [vmem:[#allocation15 + $0x1e8] sm:$0xff] %v709
          %774 = vst [vmem:[#allocation15 + $0x1f0] sm:$0xff] %v710
          %775 = vst [vmem:[#allocation15 + $0x1f8] sm:$0xff] %v711
        $region104: #{tpu_custom_call.1} parent=59 // pred_fallthru
          _
        %v776 = vld [vmem:[#allocation15] sm:$0xff]
        %v777 = vld [vmem:[#allocation15 + $0x8] sm:$0xff]
        %v778 = vld [vmem:[#allocation15 + $0x10] sm:$0xff]
        %v779 = vld [vmem:[#allocation15 + $0x18] sm:$0xff]
        %v780 = vld [vmem:[#allocation15 + $0x20] sm:$0xff]
        %v781 = vld [vmem:[#allocation15 + $0x28] sm:$0xff]
        %v782 = vld [vmem:[#allocation15 + $0x30] sm:$0xff]
        %v783 = vld [vmem:[#allocation15 + $0x38] sm:$0xff]
        %v784 = vld [vmem:[#allocation15 + $0x40] sm:$0xff]
        %v785 = vld [vmem:[#allocation15 + $0x48] sm:$0xff]
        %v786 = vld [vmem:[#allocation15 + $0x50] sm:$0xff]
        %v787 = vld [vmem:[#allocation15 + $0x58] sm:$0xff]
        %v788 = vld [vmem:[#allocation15 + $0x60] sm:$0xff]
        %v789 = vld [vmem:[#allocation15 + $0x68] sm:$0xff]
        %v790 = vld [vmem:[#allocation15 + $0x70] sm:$0xff]
        %v791 = vld [vmem:[#allocation15 + $0x78] sm:$0xff]
        %v792 = vld [vmem:[#allocation15 + $0x80] sm:$0xff]
        %v793 = vld [vmem:[#allocation15 + $0x88] sm:$0xff]
        %v794 = vld [vmem:[#allocation15 + $0x90] sm:$0xff]
        %v795 = vld [vmem:[#allocation15 + $0x98] sm:$0xff]
        %v796 = vld [vmem:[#allocation15 + $0xa0] sm:$0xff]
        %v797 = vld [vmem:[#allocation15 + $0xa8] sm:$0xff]
        %v798 = vld [vmem:[#allocation15 + $0xb0] sm:$0xff]
        %v799 = vld [vmem:[#allocation15 + $0xb8] sm:$0xff]
        %v800 = vld [vmem:[#allocation15 + $0xc0] sm:$0xff]
        %v801 = vld [vmem:[#allocation15 + $0xc8] sm:$0xff]
        %v802 = vld [vmem:[#allocation15 + $0xd0] sm:$0xff]
        %v803 = vld [vmem:[#allocation15 + $0xd8] sm:$0xff]
        %v804 = vld [vmem:[#allocation15 + $0xe0] sm:$0xff]
        %v805 = vld [vmem:[#allocation15 + $0xe8] sm:$0xff]
        %v806 = vld [vmem:[#allocation15 + $0xf0] sm:$0xff]
        %v807 = vld [vmem:[#allocation15 + $0xf8] sm:$0xff]
        %v808 = vld [vmem:[#allocation15 + $0x100] sm:$0xff]
        %v809 = vld [vmem:[#allocation15 + $0x108] sm:$0xff]
        %v810 = vld [vmem:[#allocation15 + $0x110] sm:$0xff]
        %v811 = vld [vmem:[#allocation15 + $0x118] sm:$0xff]
        %v812 = vld [vmem:[#allocation15 + $0x120] sm:$0xff]
        %v813 = vld [vmem:[#allocation15 + $0x128] sm:$0xff]
        %v814 = vld [vmem:[#allocation15 + $0x130] sm:$0xff]
        %v815 = vld [vmem:[#allocation15 + $0x138] sm:$0xff]
        %v816 = vld [vmem:[#allocation15 + $0x140] sm:$0xff]
        %v817 = vld [vmem:[#allocation15 + $0x148] sm:$0xff]
        %v818 = vld [vmem:[#allocation15 + $0x150] sm:$0xff]
        %v819 = vld [vmem:[#allocation15 + $0x158] sm:$0xff]
        %v820 = vld [vmem:[#allocation15 + $0x160] sm:$0xff]
        %v821 = vld [vmem:[#allocation15 + $0x168] sm:$0xff]
        %v822 = vld [vmem:[#allocation15 + $0x170] sm:$0xff]
        %v823 = vld [vmem:[#allocation15 + $0x178] sm:$0xff]
        %v824 = vld [vmem:[#allocation15 + $0x180] sm:$0xff]
        %v825 = vld [vmem:[#allocation15 + $0x188] sm:$0xff]
        %v826 = vld [vmem:[#allocation15 + $0x190] sm:$0xff]
        %v827 = vld [vmem:[#allocation15 + $0x198] sm:$0xff]
        %v828 = vld [vmem:[#allocation15 + $0x1a0] sm:$0xff]
        %v829 = vld [vmem:[#allocation15 + $0x1a8] sm:$0xff]
        %v830 = vld [vmem:[#allocation15 + $0x1b0] sm:$0xff]
        %v831 = vld [vmem:[#allocation15 + $0x1b8] sm:$0xff]
        %v832 = vld [vmem:[#allocation15 + $0x1c0] sm:$0xff]
        %v833 = vld [vmem:[#allocation15 + $0x1c8] sm:$0xff]
        %v834 = vld [vmem:[#allocation15 + $0x1d0] sm:$0xff]
        %v835 = vld [vmem:[#allocation15 + $0x1d8] sm:$0xff]
        %v836 = vld [vmem:[#allocation15 + $0x1e0] sm:$0xff]
        %v837 = vld [vmem:[#allocation15 + $0x1e8] sm:$0xff]
        %v838 = vld [vmem:[#allocation15 + $0x1f0] sm:$0xff]
        %v839 = vld [vmem:[#allocation15 + $0x1f8] sm:$0xff]
        %v840 = vld [vmem:[%s514] sm:$0xff]
        %v841 = vadd.f32 %v776, %v777
        %842 = vadd.xlane.f32.xlu0 %v841
        %v843 = vpop.xlane.xlu0 %842
        %v844 = vadd.f32 %v778, %v779
        %845 = vadd.xlane.f32.xlu0 %v844
        %v846 = vpop.xlane.xlu0 %845
        %v847 = vadd.f32 %v780, %v781
        %848 = vadd.xlane.f32.xlu0 %v847
        %v849 = vpop.xlane.xlu0 %848
        %v850 = vadd.f32 %v782, %v783
        %851 = vadd.xlane.f32.xlu0 %v850
        %v852 = vpop.xlane.xlu0 %851
        %v853 = vadd.f32 %v784, %v785
        %854 = vadd.xlane.f32.xlu0 %v853
        %v855 = vpop.xlane.xlu0 %854
        %v856 = vadd.f32 %v786, %v787
        %857 = vadd.xlane.f32.xlu0 %v856
        %v858 = vpop.xlane.xlu0 %857
        %v859 = vadd.f32 %v788, %v789
        %860 = vadd.xlane.f32.xlu0 %v859
        %v861 = vpop.xlane.xlu0 %860
        %v862 = vadd.f32 %v790, %v791
        %863 = vadd.xlane.f32.xlu0 %v862
        %v864 = vpop.xlane.xlu0 %863
        %v865 = vadd.f32 %v792, %v793
        %866 = vadd.xlane.f32.xlu0 %v865
        %v867 = vpop.xlane.xlu0 %866
        %v868 = vadd.f32 %v794, %v795
        %869 = vadd.xlane.f32.xlu0 %v868
        %v870 = vpop.xlane.xlu0 %869
        %v871 = vadd.f32 %v796, %v797
        %872 = vadd.xlane.f32.xlu0 %v871
        %v873 = vpop.xlane.xlu0 %872
        %v874 = vadd.f32 %v798, %v799
        %875 = vadd.xlane.f32.xlu0 %v874
        %v876 = vpop.xlane.xlu0 %875
        %v877 = vadd.f32 %v800, %v801
        %878 = vadd.xlane.f32.xlu0 %v877
        %v879 = vpop.xlane.xlu0 %878
        %v880 = vadd.f32 %v802, %v803
        %881 = vadd.xlane.f32.xlu0 %v880
        %v882 = vpop.xlane.xlu0 %881
        %v883 = vadd.f32 %v804, %v805
        %884 = vadd.xlane.f32.xlu0 %v883
        %v885 = vpop.xlane.xlu0 %884
        %v886 = vadd.f32 %v806, %v807
        %887 = vadd.xlane.f32.xlu0 %v886
        %v888 = vpop.xlane.xlu0 %887
        %v889 = vadd.f32 %v808, %v809
        %890 = vadd.xlane.f32.xlu0 %v889
        %v891 = vpop.xlane.xlu0 %890
        %v892 = vadd.f32 %v810, %v811
        %893 = vadd.xlane.f32.xlu0 %v892
        %v894 = vpop.xlane.xlu0 %893
        %v895 = vadd.f32 %v812, %v813
        %896 = vadd.xlane.f32.xlu0 %v895
        %v897 = vpop.xlane.xlu0 %896
        %v898 = vadd.f32 %v814, %v815
        %899 = vadd.xlane.f32.xlu0 %v898
        %v900 = vpop.xlane.xlu0 %899
        %v901 = vadd.f32 %v816, %v817
        %902 = vadd.xlane.f32.xlu0 %v901
        %v903 = vpop.xlane.xlu0 %902
        %v904 = vadd.f32 %v818, %v819
        %905 = vadd.xlane.f32.xlu0 %v904
        %v906 = vpop.xlane.xlu0 %905
        %v907 = vadd.f32 %v820, %v821
        %908 = vadd.xlane.f32.xlu0 %v907
        %v909 = vpop.xlane.xlu0 %908
        %v910 = vadd.f32 %v822, %v823
        %911 = vadd.xlane.f32.xlu0 %v910
        %v912 = vpop.xlane.xlu0 %911
        %v913 = vadd.f32 %v824, %v825
        %914 = vadd.xlane.f32.xlu0 %v913
        %v915 = vpop.xlane.xlu0 %914
        %v916 = vadd.f32 %v826, %v827
        %917 = vadd.xlane.f32.xlu0 %v916
        %v918 = vpop.xlane.xlu0 %917
        %v919 = vadd.f32 %v828, %v829
        %920 = vadd.xlane.f32.xlu0 %v919
        %v921 = vpop.xlane.xlu0 %920
        %v922 = vadd.f32 %v830, %v831
        %923 = vadd.xlane.f32.xlu0 %v922
        %v924 = vpop.xlane.xlu0 %923
        %v925 = vadd.f32 %v832, %v833
        %926 = vadd.xlane.f32.xlu0 %v925
        %v927 = vpop.xlane.xlu0 %926
        %v928 = vadd.f32 %v834, %v835
        %929 = vadd.xlane.f32.xlu0 %v928
        %v930 = vpop.xlane.xlu0 %929
        %v931 = vadd.f32 %v836, %v837
        %932 = vadd.xlane.f32.xlu0 %v931
        %v933 = vpop.xlane.xlu0 %932
        %v934 = vadd.f32 %v838, %v839
        %935 = vadd.xlane.f32.xlu0 %v934
        %v936 = vpop.xlane.xlu0 %935
        %v937 = vrcp.pop 256.0
        %v938 = vmul.f32 %v843, %v937
        %v939 = vmul.f32 %v846, %v937
        %v940 = vmul.f32 %v849, %v937
        %v941 = vmul.f32 %v852, %v937
        %v942 = vmul.f32 %v855, %v937
        %v943 = vmul.f32 %v858, %v937
        %v944 = vmul.f32 %v861, %v937
        %v945 = vmul.f32 %v864, %v937
        %v946 = vmul.f32 %v867, %v937
        %v947 = vmul.f32 %v870, %v937
        %v948 = vmul.f32 %v873, %v937
        %v949 = vmul.f32 %v876, %v937
        %v950 = vmul.f32 %v879, %v937
        %v951 = vmul.f32 %v882, %v937
        %v952 = vmul.f32 %v885, %v937
        %v953 = vmul.f32 %v888, %v937
        %v954 = vmul.f32 %v891, %v937
        %v955 = vmul.f32 %v894, %v937
        %v956 = vmul.f32 %v897, %v937
        %v957 = vmul.f32 %v900, %v937
        %v958 = vmul.f32 %v903, %v937
        %v959 = vmul.f32 %v906, %v937
        %v960 = vmul.f32 %v909, %v937
        %v961 = vmul.f32 %v912, %v937
        %v962 = vmul.f32 %v915, %v937
        %v963 = vmul.f32 %v918, %v937
        %v964 = vmul.f32 %v921, %v937
        %v965 = vmul.f32 %v924, %v937
        %v966 = vmul.f32 %v927, %v937
        %v967 = vmul.f32 %v930, %v937
        %v968 = vmul.f32 %v933, %v937
        %v969 = vmul.f32 %v936, %v937
        %v970 = vsub.f32 %v776, %v938
        %v971 = vsub.f32 %v777, %v938
        %v972 = vsub.f32 %v778, %v939
        %v973 = vsub.f32 %v779, %v939
        %v974 = vsub.f32 %v780, %v940
        %v975 = vsub.f32 %v781, %v940
        %v976 = vsub.f32 %v782, %v941
        %v977 = vsub.f32 %v783, %v941
        %v978 = vsub.f32 %v784, %v942
        %v979 = vsub.f32 %v785, %v942
        %v980 = vsub.f32 %v786, %v943
        %v981 = vsub.f32 %v787, %v943
        %v982 = vsub.f32 %v788, %v944
        %v983 = vsub.f32 %v789, %v944
        %v984 = vsub.f32 %v790, %v945
        %v985 = vsub.f32 %v791, %v945
        %v986 = vsub.f32 %v792, %v946
        %v987 = vsub.f32 %v793, %v946
        %v988 = vsub.f32 %v794, %v947
        %v989 = vsub.f32 %v795, %v947
        %v990 = vsub.f32 %v796, %v948
        %v991 = vsub.f32 %v797, %v948
        %v992 = vsub.f32 %v798, %v949
        %v993 = vsub.f32 %v799, %v949
        %v994 = vsub.f32 %v800, %v950
        %v995 = vsub.f32 %v801, %v950
        %v996 = vsub.f32 %v802, %v951
        %v997 = vsub.f32 %v803, %v951
        %v998 = vsub.f32 %v804, %v952
        %v999 = vsub.f32 %v805, %v952
        %v1000 = vsub.f32 %v806, %v953
        %v1001 = vsub.f32 %v807, %v953
        %v1002 = vsub.f32 %v808, %v954
        %v1003 = vsub.f32 %v809, %v954
        %v1004 = vsub.f32 %v810, %v955
        %v1005 = vsub.f32 %v811, %v955
        %v1006 = vsub.f32 %v812, %v956
        %v1007 = vsub.f32 %v813, %v956
        %v1008 = vsub.f32 %v814, %v957
        %v1009 = vsub.f32 %v815, %v957
        %v1010 = vsub.f32 %v816, %v958
        %v1011 = vsub.f32 %v817, %v958
        %v1012 = vsub.f32 %v818, %v959
        %v1013 = vsub.f32 %v819, %v959
        %v1014 = vsub.f32 %v820, %v960
        %v1015 = vsub.f32 %v821, %v960
        %v1016 = vsub.f32 %v822, %v961
        %v1017 = vsub.f32 %v823, %v961
        %v1018 = vsub.f32 %v824, %v962
        %v1019 = vsub.f32 %v825, %v962
        %v1020 = vsub.f32 %v826, %v963
        %v1021 = vsub.f32 %v827, %v963
        %v1022 = vsub.f32 %v828, %v964
        %v1023 = vsub.f32 %v829, %v964
        %v1024 = vsub.f32 %v830, %v965
        %v1025 = vsub.f32 %v831, %v965
        %v1026 = vsub.f32 %v832, %v966
        %v1027 = vsub.f32 %v833, %v966
        %v1028 = vsub.f32 %v834, %v967
        %v1029 = vsub.f32 %v835, %v967
        %v1030 = vsub.f32 %v836, %v968
        %v1031 = vsub.f32 %v837, %v968
        %v1032 = vsub.f32 %v838, %v969
        %v1033 = vsub.f32 %v839, %v969
        %v1034 = vmul.f32 %v970, %v970
        %v1035 = vmul.f32 %v971, %v971
        %v1036 = vmul.f32 %v972, %v972
        %v1037 = vmul.f32 %v973, %v973
        %v1038 = vmul.f32 %v974, %v974
        %v1039 = vmul.f32 %v975, %v975
        %v1040 = vmul.f32 %v976, %v976
        %v1041 = vmul.f32 %v977, %v977
        %v1042 = vmul.f32 %v978, %v978
        %v1043 = vmul.f32 %v979, %v979
        %v1044 = vmul.f32 %v980, %v980
        %v1045 = vmul.f32 %v981, %v981
        %v1046 = vmul.f32 %v982, %v982
        %v1047 = vmul.f32 %v983, %v983
        %v1048 = vmul.f32 %v984, %v984
        %v1049 = vmul.f32 %v985, %v985
        %v1050 = vmul.f32 %v986, %v986
        %v1051 = vmul.f32 %v987, %v987
        %v1052 = vmul.f32 %v988, %v988
        %v1053 = vmul.f32 %v989, %v989
        %v1054 = vmul.f32 %v990, %v990
        %v1055 = vmul.f32 %v991, %v991
        %v1056 = vmul.f32 %v992, %v992
        %v1057 = vmul.f32 %v993, %v993
        %v1058 = vmul.f32 %v994, %v994
        %v1059 = vmul.f32 %v995, %v995
        %v1060 = vmul.f32 %v996, %v996
        %v1061 = vmul.f32 %v997, %v997
        %v1062 = vmul.f32 %v998, %v998
        %v1063 = vmul.f32 %v999, %v999
        %v1064 = vmul.f32 %v1000, %v1000
        %v1065 = vmul.f32 %v1001, %v1001
        %v1066 = vmul.f32 %v1002, %v1002
        %v1067 = vmul.f32 %v1003, %v1003
        %v1068 = vmul.f32 %v1004, %v1004
        %v1069 = vmul.f32 %v1005, %v1005
        %v1070 = vmul.f32 %v1006, %v1006
        %v1071 = vmul.f32 %v1007, %v1007
        %v1072 = vmul.f32 %v1008, %v1008
        %v1073 = vmul.f32 %v1009, %v1009
        %v1074 = vmul.f32 %v1010, %v1010
        %v1075 = vmul.f32 %v1011, %v1011
        %v1076 = vmul.f32 %v1012, %v1012
        %v1077 = vmul.f32 %v1013, %v1013
        %v1078 = vmul.f32 %v1014, %v1014
        %v1079 = vmul.f32 %v1015, %v1015
        %v1080 = vmul.f32 %v1016, %v1016
        %v1081 = vmul.f32 %v1017, %v1017
        %v1082 = vmul.f32 %v1018, %v1018
        %v1083 = vmul.f32 %v1019, %v1019
        %v1084 = vmul.f32 %v1020, %v1020
        %v1085 = vmul.f32 %v1021, %v1021
        %v1086 = vmul.f32 %v1022, %v1022
        %v1087 = vmul.f32 %v1023, %v1023
        %v1088 = vmul.f32 %v1024, %v1024
        %v1089 = vmul.f32 %v1025, %v1025
        %v1090 = vmul.f32 %v1026, %v1026
        %v1091 = vmul.f32 %v1027, %v1027
        %v1092 = vmul.f32 %v1028, %v1028
        %v1093 = vmul.f32 %v1029, %v1029
        %v1094 = vmul.f32 %v1030, %v1030
        %v1095 = vmul.f32 %v1031, %v1031
        %v1096 = vmul.f32 %v1032, %v1032
        %v1097 = vmul.f32 %v1033, %v1033
        %v1098 = vadd.f32 %v1034, %v1035
        %1099 = vadd.xlane.f32.xlu0 %v1098
        %v1100 = vpop.xlane.xlu0 %1099
        %v1101 = vadd.f32 %v1036, %v1037
        %1102 = vadd.xlane.f32.xlu0 %v1101
        %v1103 = vpop.xlane.xlu0 %1102
        %v1104 = vadd.f32 %v1038, %v1039
        %1105 = vadd.xlane.f32.xlu0 %v1104
        %v1106 = vpop.xlane.xlu0 %1105
        %v1107 = vadd.f32 %v1040, %v1041
        %1108 = vadd.xlane.f32.xlu0 %v1107
        %v1109 = vpop.xlane.xlu0 %1108
        %v1110 = vadd.f32 %v1042, %v1043
        %1111 = vadd.xlane.f32.xlu0 %v1110
        %v1112 = vpop.xlane.xlu0 %1111
        %v1113 = vadd.f32 %v1044, %v1045
        %1114 = vadd.xlane.f32.xlu0 %v1113
        %v1115 = vpop.xlane.xlu0 %1114
        %v1116 = vadd.f32 %v1046, %v1047
        %1117 = vadd.xlane.f32.xlu0 %v1116
        %v1118 = vpop.xlane.xlu0 %1117
        %v1119 = vadd.f32 %v1048, %v1049
        %1120 = vadd.xlane.f32.xlu0 %v1119
        %v1121 = vpop.xlane.xlu0 %1120
        %v1122 = vadd.f32 %v1050, %v1051
        %1123 = vadd.xlane.f32.xlu0 %v1122
        %v1124 = vpop.xlane.xlu0 %1123
        %v1125 = vadd.f32 %v1052, %v1053
        %1126 = vadd.xlane.f32.xlu0 %v1125
        %v1127 = vpop.xlane.xlu0 %1126
        %v1128 = vadd.f32 %v1054, %v1055
        %1129 = vadd.xlane.f32.xlu0 %v1128
        %v1130 = vpop.xlane.xlu0 %1129
        %v1131 = vadd.f32 %v1056, %v1057
        %1132 = vadd.xlane.f32.xlu0 %v1131
        %v1133 = vpop.xlane.xlu0 %1132
        %v1134 = vadd.f32 %v1058, %v1059
        %1135 = vadd.xlane.f32.xlu0 %v1134
        %v1136 = vpop.xlane.xlu0 %1135
        %v1137 = vadd.f32 %v1060, %v1061
        %1138 = vadd.xlane.f32.xlu0 %v1137
        %v1139 = vpop.xlane.xlu0 %1138
        %v1140 = vadd.f32 %v1062, %v1063
        %1141 = vadd.xlane.f32.xlu0 %v1140
        %v1142 = vpop.xlane.xlu0 %1141
        %v1143 = vadd.f32 %v1064, %v1065
        %1144 = vadd.xlane.f32.xlu0 %v1143
        %v1145 = vpop.xlane.xlu0 %1144
        %v1146 = vadd.f32 %v1066, %v1067
        %1147 = vadd.xlane.f32.xlu0 %v1146
        %v1148 = vpop.xlane.xlu0 %1147
        %v1149 = vadd.f32 %v1068, %v1069
        %1150 = vadd.xlane.f32.xlu0 %v1149
        %v1151 = vpop.xlane.xlu0 %1150
        %v1152 = vadd.f32 %v1070, %v1071
        %1153 = vadd.xlane.f32.xlu0 %v1152
        %v1154 = vpop.xlane.xlu0 %1153
        %v1155 = vadd.f32 %v1072, %v1073
        %1156 = vadd.xlane.f32.xlu0 %v1155
        %v1157 = vpop.xlane.xlu0 %1156
        %v1158 = vadd.f32 %v1074, %v1075
        %1159 = vadd.xlane.f32.xlu0 %v1158
        %v1160 = vpop.xlane.xlu0 %1159
        %v1161 = vadd.f32 %v1076, %v1077
        %1162 = vadd.xlane.f32.xlu0 %v1161
        %v1163 = vpop.xlane.xlu0 %1162
        %v1164 = vadd.f32 %v1078, %v1079
        %1165 = vadd.xlane.f32.xlu0 %v1164
        %v1166 = vpop.xlane.xlu0 %1165
        %v1167 = vadd.f32 %v1080, %v1081
        %1168 = vadd.xlane.f32.xlu0 %v1167
        %v1169 = vpop.xlane.xlu0 %1168
        %v1170 = vadd.f32 %v1082, %v1083
        %1171 = vadd.xlane.f32.xlu0 %v1170
        %v1172 = vpop.xlane.xlu0 %1171
        %v1173 = vadd.f32 %v1084, %v1085
        %1174 = vadd.xlane.f32.xlu0 %v1173
        %v1175 = vpop.xlane.xlu0 %1174
        %v1176 = vadd.f32 %v1086, %v1087
        %1177 = vadd.xlane.f32.xlu0 %v1176
        %v1178 = vpop.xlane.xlu0 %1177
        %v1179 = vadd.f32 %v1088, %v1089
        %1180 = vadd.xlane.f32.xlu0 %v1179
        %v1181 = vpop.xlane.xlu0 %1180
        %v1182 = vadd.f32 %v1090, %v1091
        %1183 = vadd.xlane.f32.xlu0 %v1182
        %v1184 = vpop.xlane.xlu0 %1183
        %v1185 = vadd.f32 %v1092, %v1093
        %1186 = vadd.xlane.f32.xlu0 %v1185
        %v1187 = vpop.xlane.xlu0 %1186
        %v1188 = vadd.f32 %v1094, %v1095
        %1189 = vadd.xlane.f32.xlu0 %v1188
        %v1190 = vpop.xlane.xlu0 %1189
        %v1191 = vadd.f32 %v1096, %v1097
        %1192 = vadd.xlane.f32.xlu0 %v1191
        %v1193 = vpop.xlane.xlu0 %1192
        %v1194 = vmul.f32 %v1100, %v937
        %v1195 = vmul.f32 %v1103, %v937
        %v1196 = vmul.f32 %v1106, %v937
        %v1197 = vmul.f32 %v1109, %v937
        %v1198 = vmul.f32 %v1112, %v937
        %v1199 = vmul.f32 %v1115, %v937
        %v1200 = vmul.f32 %v1118, %v937
        %v1201 = vmul.f32 %v1121, %v937
        %v1202 = vmul.f32 %v1124, %v937
        %v1203 = vmul.f32 %v1127, %v937
        %v1204 = vmul.f32 %v1130, %v937
        %v1205 = vmul.f32 %v1133, %v937
        %v1206 = vmul.f32 %v1136, %v937
        %v1207 = vmul.f32 %v1139, %v937
        %v1208 = vmul.f32 %v1142, %v937
        %v1209 = vmul.f32 %v1145, %v937
        %v1210 = vmul.f32 %v1148, %v937
        %v1211 = vmul.f32 %v1151, %v937
        %v1212 = vmul.f32 %v1154, %v937
        %v1213 = vmul.f32 %v1157, %v937
        %v1214 = vmul.f32 %v1160, %v937
        %v1215 = vmul.f32 %v1163, %v937
        %v1216 = vmul.f32 %v1166, %v937
        %v1217 = vmul.f32 %v1169, %v937
        %v1218 = vmul.f32 %v1172, %v937
        %v1219 = vmul.f32 %v1175, %v937
        %v1220 = vmul.f32 %v1178, %v937
        %v1221 = vmul.f32 %v1181, %v937
        %v1222 = vmul.f32 %v1184, %v937
        %v1223 = vmul.f32 %v1187, %v937
        %v1224 = vmul.f32 %v1190, %v937
        %v1225 = vmul.f32 %v1193, %v937
        %v1226 = vadd.f32 %v1194, 1e-05
        %v1227 = vadd.f32 %v1195, 1e-05
        %v1228 = vadd.f32 %v1196, 1e-05
        %v1229 = vadd.f32 %v1197, 1e-05
        %v1230 = vadd.f32 %v1198, 1e-05
        %v1231 = vadd.f32 %v1199, 1e-05
        %v1232 = vadd.f32 %v1200, 1e-05
        %v1233 = vadd.f32 %v1201, 1e-05
        %v1234 = vadd.f32 %v1202, 1e-05
        %v1235 = vadd.f32 %v1203, 1e-05
        %v1236 = vadd.f32 %v1204, 1e-05
        %v1237 = vadd.f32 %v1205, 1e-05
        %v1238 = vadd.f32 %v1206, 1e-05
        %v1239 = vadd.f32 %v1207, 1e-05
        %v1240 = vadd.f32 %v1208, 1e-05
        %v1241 = vadd.f32 %v1209, 1e-05
        %v1242 = vadd.f32 %v1210, 1e-05
        %v1243 = vadd.f32 %v1211, 1e-05
        %v1244 = vadd.f32 %v1212, 1e-05
        %v1245 = vadd.f32 %v1213, 1e-05
        %v1246 = vadd.f32 %v1214, 1e-05
        %v1247 = vadd.f32 %v1215, 1e-05
        %v1248 = vadd.f32 %v1216, 1e-05
        %v1249 = vadd.f32 %v1217, 1e-05
        %v1250 = vadd.f32 %v1218, 1e-05
        %v1251 = vadd.f32 %v1219, 1e-05
        %v1252 = vadd.f32 %v1220, 1e-05
        %v1253 = vadd.f32 %v1221, 1e-05
        %v1254 = vadd.f32 %v1222, 1e-05
        %v1255 = vadd.f32 %v1223, 1e-05
        %v1256 = vadd.f32 %v1224, 1e-05
        %v1257 = vadd.f32 %v1225, 1e-05
        %v1258 = vrsqrt.pop %v1226
        %v1259 = vrsqrt.pop %v1227
        %v1260 = vrsqrt.pop %v1228
        %v1261 = vrsqrt.pop %v1229
        %v1262 = vrsqrt.pop %v1230
        %v1263 = vrsqrt.pop %v1231
        %v1264 = vrsqrt.pop %v1232
        %v1265 = vrsqrt.pop %v1233
        %v1266 = vrsqrt.pop %v1234
        %v1267 = vrsqrt.pop %v1235
        %v1268 = vrsqrt.pop %v1236
        %v1269 = vrsqrt.pop %v1237
        %v1270 = vrsqrt.pop %v1238
        %v1271 = vrsqrt.pop %v1239
        %v1272 = vrsqrt.pop %v1240
        %v1273 = vrsqrt.pop %v1241
        %v1274 = vrsqrt.pop %v1242
        %v1275 = vrsqrt.pop %v1243
        %v1276 = vrsqrt.pop %v1244
        %v1277 = vrsqrt.pop %v1245
        %v1278 = vrsqrt.pop %v1246
        %v1279 = vrsqrt.pop %v1247
        %v1280 = vrsqrt.pop %v1248
        %v1281 = vrsqrt.pop %v1249
        %v1282 = vrsqrt.pop %v1250
        %v1283 = vrsqrt.pop %v1251
        %v1284 = vrsqrt.pop %v1252
        %v1285 = vrsqrt.pop %v1253
        %v1286 = vrsqrt.pop %v1254
        %v1287 = vrsqrt.pop %v1255
        %v1288 = vrsqrt.pop %v1256
        %v1289 = vrsqrt.pop %v1257
        %v1290 = vmul.f32 %v970, %v1258
        %v1291 = vmul.f32 %v971, %v1258
        %v1292 = vmul.f32 %v972, %v1259
        %v1293 = vmul.f32 %v973, %v1259
        %v1294 = vmul.f32 %v974, %v1260
        %v1295 = vmul.f32 %v975, %v1260
        %v1296 = vmul.f32 %v976, %v1261
        %v1297 = vmul.f32 %v977, %v1261
        %v1298 = vmul.f32 %v978, %v1262
        %v1299 = vmul.f32 %v979, %v1262
        %v1300 = vmul.f32 %v980, %v1263
        %v1301 = vmul.f32 %v981, %v1263
        %v1302 = vmul.f32 %v982, %v1264
        %v1303 = vmul.f32 %v983, %v1264
        %v1304 = vmul.f32 %v984, %v1265
        %v1305 = vmul.f32 %v985, %v1265
        %v1306 = vmul.f32 %v986, %v1266
        %v1307 = vmul.f32 %v987, %v1266
        %v1308 = vmul.f32 %v988, %v1267
        %v1309 = vmul.f32 %v989, %v1267
        %v1310 = vmul.f32 %v990, %v1268
        %v1311 = vmul.f32 %v991, %v1268
        %v1312 = vmul.f32 %v992, %v1269
        %v1313 = vmul.f32 %v993, %v1269
        %v1314 = vmul.f32 %v994, %v1270
        %v1315 = vmul.f32 %v995, %v1270
        %v1316 = vmul.f32 %v996, %v1271
        %v1317 = vmul.f32 %v997, %v1271
        %v1318 = vmul.f32 %v998, %v1272
        %v1319 = vmul.f32 %v999, %v1272
        %v1320 = vmul.f32 %v1000, %v1273
        %v1321 = vmul.f32 %v1001, %v1273
        %v1322 = vmul.f32 %v1002, %v1274
        %v1323 = vmul.f32 %v1003, %v1274
        %v1324 = vmul.f32 %v1004, %v1275
        %v1325 = vmul.f32 %v1005, %v1275
        %v1326 = vmul.f32 %v1006, %v1276
        %v1327 = vmul.f32 %v1007, %v1276
        %v1328 = vmul.f32 %v1008, %v1277
        %v1329 = vmul.f32 %v1009, %v1277
        %v1330 = vmul.f32 %v1010, %v1278
        %v1331 = vmul.f32 %v1011, %v1278
        %v1332 = vmul.f32 %v1012, %v1279
        %v1333 = vmul.f32 %v1013, %v1279
        %v1334 = vmul.f32 %v1014, %v1280
        %v1335 = vmul.f32 %v1015, %v1280
        %v1336 = vmul.f32 %v1016, %v1281
        %v1337 = vmul.f32 %v1017, %v1281
        %v1338 = vmul.f32 %v1018, %v1282
        %v1339 = vmul.f32 %v1019, %v1282
        %v1340 = vmul.f32 %v1020, %v1283
        %v1341 = vmul.f32 %v1021, %v1283
        %v1342 = vmul.f32 %v1022, %v1284
        %v1343 = vmul.f32 %v1023, %v1284
        %v1344 = vmul.f32 %v1024, %v1285
        %v1345 = vmul.f32 %v1025, %v1285
        %v1346 = vmul.f32 %v1026, %v1286
        %v1347 = vmul.f32 %v1027, %v1286
        %v1348 = vmul.f32 %v1028, %v1287
        %v1349 = vmul.f32 %v1029, %v1287
        %v1350 = vmul.f32 %v1030, %v1288
        %v1351 = vmul.f32 %v1031, %v1288
        %v1352 = vmul.f32 %v1032, %v1289
        %v1353 = vmul.f32 %v1033, %v1289
        %v1355 = vlaneseq
        %v1356 = vshrl.u32 %v1355, 7
        %v1357 = vsub.s32 0, %v1356
        %v1358 = vrot.slane %v840, %v1357
        %v1359 = vlaneseq
        %v1360 = vshrl.u32 %v1359, 7
        %v1361 = vsub.s32 4, %v1360
        %v1362 = vrot.slane %v840, %v1361
        %v1365 = vlaneseq
        %v1366 = vshrl.u32 %v1365, 7
        %v1367 = vsub.s32 0, %v1366
        %v1368 = vrot.slane %v1358, %v1367
        %v1369 = vlaneseq
        %v1370 = vshrl.u32 %v1369, 7
        %v1371 = vsub.s32 0, %v1370
        %v1372 = vrot.slane %v1362, %v1371
        %v1373 = vmul.f32 %v1290, %v1368
        %v1374 = vmul.f32 %v1291, %v1372
        %v1375 = vmul.f32 %v1292, %v1368
        %v1376 = vmul.f32 %v1293, %v1372
        %v1377 = vmul.f32 %v1294, %v1368
        %v1378 = vmul.f32 %v1295, %v1372
        %v1379 = vmul.f32 %v1296, %v1368
        %v1380 = vmul.f32 %v1297, %v1372
        %v1381 = vmul.f32 %v1298, %v1368
        %v1382 = vmul.f32 %v1299, %v1372
        %v1383 = vmul.f32 %v1300, %v1368
        %v1384 = vmul.f32 %v1301, %v1372
        %v1385 = vmul.f32 %v1302, %v1368
        %v1386 = vmul.f32 %v1303, %v1372
        %v1387 = vmul.f32 %v1304, %v1368
        %v1388 = vmul.f32 %v1305, %v1372
        %v1389 = vmul.f32 %v1306, %v1368
        %v1390 = vmul.f32 %v1307, %v1372
        %v1391 = vmul.f32 %v1308, %v1368
        %v1392 = vmul.f32 %v1309, %v1372
        %v1393 = vmul.f32 %v1310, %v1368
        %v1394 = vmul.f32 %v1311, %v1372
        %v1395 = vmul.f32 %v1312, %v1368
        %v1396 = vmul.f32 %v1313, %v1372
        %v1397 = vmul.f32 %v1314, %v1368
        %v1398 = vmul.f32 %v1315, %v1372
        %v1399 = vmul.f32 %v1316, %v1368
        %v1400 = vmul.f32 %v1317, %v1372
        %v1401 = vmul.f32 %v1318, %v1368
        %v1402 = vmul.f32 %v1319, %v1372
        %v1403 = vmul.f32 %v1320, %v1368
        %v1404 = vmul.f32 %v1321, %v1372
        %v1405 = vmul.f32 %v1322, %v1368
        %v1406 = vmul.f32 %v1323, %v1372
        %v1407 = vmul.f32 %v1324, %v1368
        %v1408 = vmul.f32 %v1325, %v1372
        %v1409 = vmul.f32 %v1326, %v1368
        %v1410 = vmul.f32 %v1327, %v1372
        %v1411 = vmul.f32 %v1328, %v1368
        %v1412 = vmul.f32 %v1329, %v1372
        %v1413 = vmul.f32 %v1330, %v1368
        %v1414 = vmul.f32 %v1331, %v1372
        %v1415 = vmul.f32 %v1332, %v1368
        %v1416 = vmul.f32 %v1333, %v1372
        %v1417 = vmul.f32 %v1334, %v1368
        %v1418 = vmul.f32 %v1335, %v1372
        %v1419 = vmul.f32 %v1336, %v1368
        %v1420 = vmul.f32 %v1337, %v1372
        %v1421 = vmul.f32 %v1338, %v1368
        %v1422 = vmul.f32 %v1339, %v1372
        %v1423 = vmul.f32 %v1340, %v1368
        %v1424 = vmul.f32 %v1341, %v1372
        %v1425 = vmul.f32 %v1342, %v1368
        %v1426 = vmul.f32 %v1343, %v1372
        %v1427 = vmul.f32 %v1344, %v1368
        %v1428 = vmul.f32 %v1345, %v1372
        %v1429 = vmul.f32 %v1346, %v1368
        %v1430 = vmul.f32 %v1347, %v1372
        %v1431 = vmul.f32 %v1348, %v1368
        %v1432 = vmul.f32 %v1349, %v1372
        %v1433 = vmul.f32 %v1350, %v1368
        %v1434 = vmul.f32 %v1351, %v1372
        %v1435 = vmul.f32 %v1352, %v1368
        %v1436 = vmul.f32 %v1353, %v1372
        %v1437 = vlaneseq
        %v1438 = vshrl.u32 %v1437, 7
        %v1439 = vsub.s32 1, %v1438
        %v1440 = vrot.slane %v840, %v1439
        %v1441 = vlaneseq
        %v1442 = vshrl.u32 %v1441, 7
        %v1443 = vsub.s32 5, %v1442
        %v1444 = vrot.slane %v840, %v1443
        %v1447 = vlaneseq
        %v1448 = vshrl.u32 %v1447, 7
        %v1449 = vsub.s32 1, %v1448
        %v1450 = vrot.slane %v1440, %v1449
        %v1451 = vlaneseq
        %v1452 = vshrl.u32 %v1451, 7
        %v1453 = vsub.s32 1, %v1452
        %v1454 = vrot.slane %v1444, %v1453
        %v1455 = vadd.f32 %v1373, %v1450
        %v1456 = vadd.f32 %v1374, %v1454
        %v1457 = vadd.f32 %v1375, %v1450
        %v1458 = vadd.f32 %v1376, %v1454
        %v1459 = vadd.f32 %v1377, %v1450
        %v1460 = vadd.f32 %v1378, %v1454
        %v1461 = vadd.f32 %v1379, %v1450
        %v1462 = vadd.f32 %v1380, %v1454
        %v1463 = vadd.f32 %v1381, %v1450
        %v1464 = vadd.f32 %v1382, %v1454
        %v1465 = vadd.f32 %v1383, %v1450
        %v1466 = vadd.f32 %v1384, %v1454
        %v1467 = vadd.f32 %v1385, %v1450
        %v1468 = vadd.f32 %v1386, %v1454
        %v1469 = vadd.f32 %v1387, %v1450
        %v1470 = vadd.f32 %v1388, %v1454
        %v1471 = vadd.f32 %v1389, %v1450
        %v1472 = vadd.f32 %v1390, %v1454
        %v1473 = vadd.f32 %v1391, %v1450
        %v1474 = vadd.f32 %v1392, %v1454
        %v1475 = vadd.f32 %v1393, %v1450
        %v1476 = vadd.f32 %v1394, %v1454
        %v1477 = vadd.f32 %v1395, %v1450
        %v1478 = vadd.f32 %v1396, %v1454
        %v1479 = vadd.f32 %v1397, %v1450
        %v1480 = vadd.f32 %v1398, %v1454
        %v1481 = vadd.f32 %v1399, %v1450
        %v1482 = vadd.f32 %v1400, %v1454
        %v1483 = vadd.f32 %v1401, %v1450
        %v1484 = vadd.f32 %v1402, %v1454
        %v1485 = vadd.f32 %v1403, %v1450
        %v1486 = vadd.f32 %v1404, %v1454
        %v1487 = vadd.f32 %v1405, %v1450
        %v1488 = vadd.f32 %v1406, %v1454
        %v1489 = vadd.f32 %v1407, %v1450
        %v1490 = vadd.f32 %v1408, %v1454
        %v1491 = vadd.f32 %v1409, %v1450
        %v1492 = vadd.f32 %v1410, %v1454
        %v1493 = vadd.f32 %v1411, %v1450
        %v1494 = vadd.f32 %v1412, %v1454
        %v1495 = vadd.f32 %v1413, %v1450
        %v1496 = vadd.f32 %v1414, %v1454
        %v1497 = vadd.f32 %v1415, %v1450
        %v1498 = vadd.f32 %v1416, %v1454
        %v1499 = vadd.f32 %v1417, %v1450
        %v1500 = vadd.f32 %v1418, %v1454
        %v1501 = vadd.f32 %v1419, %v1450
        %v1502 = vadd.f32 %v1420, %v1454
        %v1503 = vadd.f32 %v1421, %v1450
        %v1504 = vadd.f32 %v1422, %v1454
        %v1505 = vadd.f32 %v1423, %v1450
        %v1506 = vadd.f32 %v1424, %v1454
        %v1507 = vadd.f32 %v1425, %v1450
        %v1508 = vadd.f32 %v1426, %v1454
        %v1509 = vadd.f32 %v1427, %v1450
        %v1510 = vadd.f32 %v1428, %v1454
        %v1511 = vadd.f32 %v1429, %v1450
        %v1512 = vadd.f32 %v1430, %v1454
        %v1513 = vadd.f32 %v1431, %v1450
        %v1514 = vadd.f32 %v1432, %v1454
        %v1515 = vadd.f32 %v1433, %v1450
        %v1516 = vadd.f32 %v1434, %v1454
        %v1517 = vadd.f32 %v1435, %v1450
        %v1518 = vadd.f32 %v1436, %v1454
        %v1519 = vld [vmem:[%s523] sm:$0xff]
        %v1520 = vld [vmem:[%s523 + $0x8] sm:$0xff]
        %v1521 = vld [vmem:[%s523 + $0x10] sm:$0xff]
        %v1522 = vld [vmem:[%s523 + $0x18] sm:$0xff]
        %v1523 = vld [vmem:[%s523 + $0x20] sm:$0xff]
        %v1524 = vld [vmem:[%s523 + $0x28] sm:$0xff]
        %v1525 = vld [vmem:[%s523 + $0x30] sm:$0xff]
        %v1526 = vld [vmem:[%s523 + $0x38] sm:$0xff]
        %v1527 = vld [vmem:[%s523 + $0x40] sm:$0xff]
        %v1528 = vld [vmem:[%s523 + $0x48] sm:$0xff]
        %v1529 = vld [vmem:[%s523 + $0x50] sm:$0xff]
        %v1530 = vld [vmem:[%s523 + $0x58] sm:$0xff]
        %v1531 = vld [vmem:[%s523 + $0x60] sm:$0xff]
        %v1532 = vld [vmem:[%s523 + $0x68] sm:$0xff]
        %v1533 = vld [vmem:[%s523 + $0x70] sm:$0xff]
        %v1534 = vld [vmem:[%s523 + $0x78] sm:$0xff]
        %v1535 = vld [vmem:[%s523 + $0x80] sm:$0xff]
        %v1536 = vld [vmem:[%s523 + $0x88] sm:$0xff]
        %v1537 = vld [vmem:[%s523 + $0x90] sm:$0xff]
        %v1538 = vld [vmem:[%s523 + $0x98] sm:$0xff]
        %v1539 = vld [vmem:[%s523 + $0xa0] sm:$0xff]
        %v1540 = vld [vmem:[%s523 + $0xa8] sm:$0xff]
        %v1541 = vld [vmem:[%s523 + $0xb0] sm:$0xff]
        %v1542 = vld [vmem:[%s523 + $0xb8] sm:$0xff]
        %v1543 = vld [vmem:[%s523 + $0xc0] sm:$0xff]
        %v1544 = vld [vmem:[%s523 + $0xc8] sm:$0xff]
        %v1545 = vld [vmem:[%s523 + $0xd0] sm:$0xff]
        %v1546 = vld [vmem:[%s523 + $0xd8] sm:$0xff]
        %v1547 = vld [vmem:[%s523 + $0xe0] sm:$0xff]
        %v1548 = vld [vmem:[%s523 + $0xe8] sm:$0xff]
        %v1549 = vld [vmem:[%s523 + $0xf0] sm:$0xff]
        %v1550 = vld [vmem:[%s523 + $0xf8] sm:$0xff]
        %v1551 = vld [vmem:[%s523 + $0x100] sm:$0xff]
        %v1552 = vld [vmem:[%s523 + $0x108] sm:$0xff]
        %v1553 = vld [vmem:[%s523 + $0x110] sm:$0xff]
        %v1554 = vld [vmem:[%s523 + $0x118] sm:$0xff]
        %v1555 = vld [vmem:[%s523 + $0x120] sm:$0xff]
        %v1556 = vld [vmem:[%s523 + $0x128] sm:$0xff]
        %v1557 = vld [vmem:[%s523 + $0x130] sm:$0xff]
        %v1558 = vld [vmem:[%s523 + $0x138] sm:$0xff]
        %v1559 = vld [vmem:[%s523 + $0x140] sm:$0xff]
        %v1560 = vld [vmem:[%s523 + $0x148] sm:$0xff]
        %v1561 = vld [vmem:[%s523 + $0x150] sm:$0xff]
        %v1562 = vld [vmem:[%s523 + $0x158] sm:$0xff]
        %v1563 = vld [vmem:[%s523 + $0x160] sm:$0xff]
        %v1564 = vld [vmem:[%s523 + $0x168] sm:$0xff]
        %v1565 = vld [vmem:[%s523 + $0x170] sm:$0xff]
        %v1566 = vld [vmem:[%s523 + $0x178] sm:$0xff]
        %v1567 = vld [vmem:[%s523 + $0x180] sm:$0xff]
        %v1568 = vld [vmem:[%s523 + $0x188] sm:$0xff]
        %v1569 = vld [vmem:[%s523 + $0x190] sm:$0xff]
        %v1570 = vld [vmem:[%s523 + $0x198] sm:$0xff]
        %v1571 = vld [vmem:[%s523 + $0x1a0] sm:$0xff]
        %v1572 = vld [vmem:[%s523 + $0x1a8] sm:$0xff]
        %v1573 = vld [vmem:[%s523 + $0x1b0] sm:$0xff]
        %v1574 = vld [vmem:[%s523 + $0x1b8] sm:$0xff]
        %v1575 = vld [vmem:[%s523 + $0x1c0] sm:$0xff]
        %v1576 = vld [vmem:[%s523 + $0x1c8] sm:$0xff]
        %v1577 = vld [vmem:[%s523 + $0x1d0] sm:$0xff]
        %v1578 = vld [vmem:[%s523 + $0x1d8] sm:$0xff]
        %v1579 = vld [vmem:[%s523 + $0x1e0] sm:$0xff]
        %v1580 = vld [vmem:[%s523 + $0x1e8] sm:$0xff]
        %v1581 = vld [vmem:[%s523 + $0x1f0] sm:$0xff]
        %v1582 = vld [vmem:[%s523 + $0x1f8] sm:$0xff]
        %v1583 = vld [vmem:[%s523 + $0x200] sm:$0xff]
        %v1584 = vld [vmem:[%s523 + $0x208] sm:$0xff]
        %v1585 = vld [vmem:[%s523 + $0x210] sm:$0xff]
        %v1586 = vld [vmem:[%s523 + $0x218] sm:$0xff]
        %v1587 = vld [vmem:[%s523 + $0x220] sm:$0xff]
        %v1588 = vld [vmem:[%s523 + $0x228] sm:$0xff]
        %v1589 = vld [vmem:[%s523 + $0x230] sm:$0xff]
        %v1590 = vld [vmem:[%s523 + $0x238] sm:$0xff]
        %v1591 = vld [vmem:[%s523 + $0x240] sm:$0xff]
        %v1592 = vld [vmem:[%s523 + $0x248] sm:$0xff]
        %v1593 = vld [vmem:[%s523 + $0x250] sm:$0xff]
        %v1594 = vld [vmem:[%s523 + $0x258] sm:$0xff]
        %v1595 = vld [vmem:[%s523 + $0x260] sm:$0xff]
        %v1596 = vld [vmem:[%s523 + $0x268] sm:$0xff]
        %v1597 = vld [vmem:[%s523 + $0x270] sm:$0xff]
        %v1598 = vld [vmem:[%s523 + $0x278] sm:$0xff]
        %v1599 = vld [vmem:[%s523 + $0x280] sm:$0xff]
        %v1600 = vld [vmem:[%s523 + $0x288] sm:$0xff]
        %v1601 = vld [vmem:[%s523 + $0x290] sm:$0xff]
        %v1602 = vld [vmem:[%s523 + $0x298] sm:$0xff]
        %v1603 = vld [vmem:[%s523 + $0x2a0] sm:$0xff]
        %v1604 = vld [vmem:[%s523 + $0x2a8] sm:$0xff]
        %v1605 = vld [vmem:[%s523 + $0x2b0] sm:$0xff]
        %v1606 = vld [vmem:[%s523 + $0x2b8] sm:$0xff]
        %v1607 = vld [vmem:[%s523 + $0x2c0] sm:$0xff]
        %v1608 = vld [vmem:[%s523 + $0x2c8] sm:$0xff]
        %v1609 = vld [vmem:[%s523 + $0x2d0] sm:$0xff]
        %v1610 = vld [vmem:[%s523 + $0x2d8] sm:$0xff]
        %v1611 = vld [vmem:[%s523 + $0x2e0] sm:$0xff]
        %v1612 = vld [vmem:[%s523 + $0x2e8] sm:$0xff]
        %v1613 = vld [vmem:[%s523 + $0x2f0] sm:$0xff]
        %v1614 = vld [vmem:[%s523 + $0x2f8] sm:$0xff]
        %v1615 = vld [vmem:[%s523 + $0x300] sm:$0xff]
        %v1616 = vld [vmem:[%s523 + $0x308] sm:$0xff]
        %v1617 = vld [vmem:[%s523 + $0x310] sm:$0xff]
        %v1618 = vld [vmem:[%s523 + $0x318] sm:$0xff]
        %v1619 = vld [vmem:[%s523 + $0x320] sm:$0xff]
        %v1620 = vld [vmem:[%s523 + $0x328] sm:$0xff]
        %v1621 = vld [vmem:[%s523 + $0x330] sm:$0xff]
        %v1622 = vld [vmem:[%s523 + $0x338] sm:$0xff]
        %v1623 = vld [vmem:[%s523 + $0x340] sm:$0xff]
        %v1624 = vld [vmem:[%s523 + $0x348] sm:$0xff]
        %v1625 = vld [vmem:[%s523 + $0x350] sm:$0xff]
        %v1626 = vld [vmem:[%s523 + $0x358] sm:$0xff]
        %v1627 = vld [vmem:[%s523 + $0x360] sm:$0xff]
        %v1628 = vld [vmem:[%s523 + $0x368] sm:$0xff]
        %v1629 = vld [vmem:[%s523 + $0x370] sm:$0xff]
        %v1630 = vld [vmem:[%s523 + $0x378] sm:$0xff]
        %v1631 = vld [vmem:[%s523 + $0x380] sm:$0xff]
        %v1632 = vld [vmem:[%s523 + $0x388] sm:$0xff]
        %v1633 = vld [vmem:[%s523 + $0x390] sm:$0xff]
        %v1634 = vld [vmem:[%s523 + $0x398] sm:$0xff]
        %v1635 = vld [vmem:[%s523 + $0x3a0] sm:$0xff]
        %v1636 = vld [vmem:[%s523 + $0x3a8] sm:$0xff]
        %v1637 = vld [vmem:[%s523 + $0x3b0] sm:$0xff]
        %v1638 = vld [vmem:[%s523 + $0x3b8] sm:$0xff]
        %v1639 = vld [vmem:[%s523 + $0x3c0] sm:$0xff]
        %v1640 = vld [vmem:[%s523 + $0x3c8] sm:$0xff]
        %v1641 = vld [vmem:[%s523 + $0x3d0] sm:$0xff]
        %v1642 = vld [vmem:[%s523 + $0x3d8] sm:$0xff]
        %v1643 = vld [vmem:[%s523 + $0x3e0] sm:$0xff]
        %v1644 = vld [vmem:[%s523 + $0x3e8] sm:$0xff]
        %v1645 = vld [vmem:[%s523 + $0x3f0] sm:$0xff]
        %v1646 = vld [vmem:[%s523 + $0x3f8] sm:$0xff]
        %v1647 = vld [vmem:[%s523 + $0x400] sm:$0xff]
        %v1648 = vld [vmem:[%s523 + $0x408] sm:$0xff]
        %v1649 = vld [vmem:[%s523 + $0x410] sm:$0xff]
        %v1650 = vld [vmem:[%s523 + $0x418] sm:$0xff]
        %v1651 = vld [vmem:[%s523 + $0x420] sm:$0xff]
        %v1652 = vld [vmem:[%s523 + $0x428] sm:$0xff]
        %v1653 = vld [vmem:[%s523 + $0x430] sm:$0xff]
        %v1654 = vld [vmem:[%s523 + $0x438] sm:$0xff]
        %v1655 = vld [vmem:[%s523 + $0x440] sm:$0xff]
        %v1656 = vld [vmem:[%s523 + $0x448] sm:$0xff]
        %v1657 = vld [vmem:[%s523 + $0x450] sm:$0xff]
        %v1658 = vld [vmem:[%s523 + $0x458] sm:$0xff]
        %v1659 = vld [vmem:[%s523 + $0x460] sm:$0xff]
        %v1660 = vld [vmem:[%s523 + $0x468] sm:$0xff]
        %v1661 = vld [vmem:[%s523 + $0x470] sm:$0xff]
        %v1662 = vld [vmem:[%s523 + $0x478] sm:$0xff]
        %v1663 = vld [vmem:[%s523 + $0x480] sm:$0xff]
        %v1664 = vld [vmem:[%s523 + $0x488] sm:$0xff]
        %v1665 = vld [vmem:[%s523 + $0x490] sm:$0xff]
        %v1666 = vld [vmem:[%s523 + $0x498] sm:$0xff]
        %v1667 = vld [vmem:[%s523 + $0x4a0] sm:$0xff]
        %v1668 = vld [vmem:[%s523 + $0x4a8] sm:$0xff]
        %v1669 = vld [vmem:[%s523 + $0x4b0] sm:$0xff]
        %v1670 = vld [vmem:[%s523 + $0x4b8] sm:$0xff]
        %v1671 = vld [vmem:[%s523 + $0x4c0] sm:$0xff]
        %v1672 = vld [vmem:[%s523 + $0x4c8] sm:$0xff]
        %v1673 = vld [vmem:[%s523 + $0x4d0] sm:$0xff]
        %v1674 = vld [vmem:[%s523 + $0x4d8] sm:$0xff]
        %v1675 = vld [vmem:[%s523 + $0x4e0] sm:$0xff]
        %v1676 = vld [vmem:[%s523 + $0x4e8] sm:$0xff]
        %v1677 = vld [vmem:[%s523 + $0x4f0] sm:$0xff]
        %v1678 = vld [vmem:[%s523 + $0x4f8] sm:$0xff]
        %v1679 = vld [vmem:[%s523 + $0x500] sm:$0xff]
        %v1680 = vld [vmem:[%s523 + $0x508] sm:$0xff]
        %v1681 = vld [vmem:[%s523 + $0x510] sm:$0xff]
        %v1682 = vld [vmem:[%s523 + $0x518] sm:$0xff]
        %v1683 = vld [vmem:[%s523 + $0x520] sm:$0xff]
        %v1684 = vld [vmem:[%s523 + $0x528] sm:$0xff]
        %v1685 = vld [vmem:[%s523 + $0x530] sm:$0xff]
        %v1686 = vld [vmem:[%s523 + $0x538] sm:$0xff]
        %v1687 = vld [vmem:[%s523 + $0x540] sm:$0xff]
        %v1688 = vld [vmem:[%s523 + $0x548] sm:$0xff]
        %v1689 = vld [vmem:[%s523 + $0x550] sm:$0xff]
        %v1690 = vld [vmem:[%s523 + $0x558] sm:$0xff]
        %v1691 = vld [vmem:[%s523 + $0x560] sm:$0xff]
        %v1692 = vld [vmem:[%s523 + $0x568] sm:$0xff]
        %v1693 = vld [vmem:[%s523 + $0x570] sm:$0xff]
        %v1694 = vld [vmem:[%s523 + $0x578] sm:$0xff]
        %v1695 = vld [vmem:[%s523 + $0x580] sm:$0xff]
        %v1696 = vld [vmem:[%s523 + $0x588] sm:$0xff]
        %v1697 = vld [vmem:[%s523 + $0x590] sm:$0xff]
        %v1698 = vld [vmem:[%s523 + $0x598] sm:$0xff]
        %v1699 = vld [vmem:[%s523 + $0x5a0] sm:$0xff]
        %v1700 = vld [vmem:[%s523 + $0x5a8] sm:$0xff]
        %v1701 = vld [vmem:[%s523 + $0x5b0] sm:$0xff]
        %v1702 = vld [vmem:[%s523 + $0x5b8] sm:$0xff]
        %v1703 = vld [vmem:[%s523 + $0x5c0] sm:$0xff]
        %v1704 = vld [vmem:[%s523 + $0x5c8] sm:$0xff]
        %v1705 = vld [vmem:[%s523 + $0x5d0] sm:$0xff]
        %v1706 = vld [vmem:[%s523 + $0x5d8] sm:$0xff]
        %v1707 = vld [vmem:[%s523 + $0x5e0] sm:$0xff]
        %v1708 = vld [vmem:[%s523 + $0x5e8] sm:$0xff]
        %v1709 = vld [vmem:[%s523 + $0x5f0] sm:$0xff]
        %v1710 = vld [vmem:[%s523 + $0x5f8] sm:$0xff]
        %1711 = vmatprep.subr.mxu0 %v1610
        %1712 = vmatpush1.msra.mxu0 %v1609
        %1713 = vmatprep.subr.mxu0 %v1604
        %1714 = vmatpush1.msra.mxu0 %v1603
        %1715 = vmatprep.subr.mxu0 %v1598
        %1716 = vmatpush1.msra.mxu0 %v1597
        %1717 = vmatprep.subr.mxu0 %v1592
        %1718 = vmatpush1.msra.mxu0 %v1591
        %1719 = vmatprep.subr.mxu0 %v1586
        %1720 = vmatpush1.msra.mxu0 %v1585
        %1721 = vmatprep.subr.mxu0 %v1580
        %1722 = vmatpush1.msra.mxu0 %v1579
        %1723 = vmatprep.subr.mxu0 %v1574
        %1724 = vmatpush1.msra.mxu0 %v1573
        %1725 = vmatprep.subr.mxu0 %v1568
        %1726 = vmatpush1.msra.mxu0 %v1567
        %1727 = vmatprep.subr.mxu0 %v1562
        %1728 = vmatpush1.msra.mxu0 %v1561
        %1729 = vmatprep.subr.mxu0 %v1556
        %1730 = vmatpush1.msra.mxu0 %v1555
        %1731 = vmatprep.subr.mxu0 %v1550
        %1732 = vmatpush1.msra.mxu0 %v1549
        %1733 = vmatprep.subr.mxu0 %v1544
        %1734 = vmatpush1.msra.mxu0 %v1543
        %1735 = vmatprep.subr.mxu0 %v1538
        %1736 = vmatpush1.msra.mxu0 %v1537
        %1737 = vmatprep.subr.mxu0 %v1532
        %1738 = vmatpush1.msra.mxu0 %v1531
        %1739 = vmatprep.subr.mxu0 %v1526
        %1740 = vmatpush1.msra.mxu0 %v1525
        %1741 = vmatprep.subr.mxu0 %v1520
        %1742 = vmatpush1.msra.mxu0 %v1519
        %1743 = vmatprep.subr.mxu0 %v1706
        %1744 = vmatpush2.msra.mxu0 %v1705
        %1745 = vmatprep.subr.mxu0 %v1700
        %1746 = vmatpush2.msra.mxu0 %v1699
        %1747 = vmatprep.subr.mxu0 %v1694
        %1748 = vmatpush2.msra.mxu0 %v1693
        %1749 = vmatprep.subr.mxu0 %v1688
        %1750 = vmatpush2.msra.mxu0 %v1687
        %1751 = vmatprep.subr.mxu0 %v1682
        %1752 = vmatpush2.msra.mxu0 %v1681
        %1753 = vmatprep.subr.mxu0 %v1676
        %1754 = vmatpush2.msra.mxu0 %v1675
        %1755 = vmatprep.subr.mxu0 %v1670
        %1756 = vmatpush2.msra.mxu0 %v1669
        %1757 = vmatprep.subr.mxu0 %v1664
        %1758 = vmatpush2.msra.mxu0 %v1663
        %1759 = vmatprep.subr.mxu0 %v1658
        %1760 = vmatpush2.msra.mxu0 %v1657
        %1761 = vmatprep.subr.mxu0 %v1652
        %1762 = vmatpush2.msra.mxu0 %v1651
        %1763 = vmatprep.subr.mxu0 %v1646
        %1764 = vmatpush2.msra.mxu0 %v1645
        %1765 = vmatprep.subr.mxu0 %v1640
        %1766 = vmatpush2.msra.mxu0 %v1639
        %1767 = vmatprep.subr.mxu0 %v1634
        %1768 = vmatpush2.msra.mxu0 %v1633
        %1769 = vmatprep.subr.mxu0 %v1628
        %1770 = vmatpush2.msra.mxu0 %v1627
        %1771 = vmatprep.subr.mxu0 %v1622
        %1772 = vmatpush2.msra.mxu0 %v1621
        %1773 = vmatprep.subr.mxu0 %v1616
        %1774 = vmatpush2.msra.mxu0 %v1615
        %1775 = vmatprep.mubr.f32.mxu0 %v1456
        %1776 = vmatmul.mubr.f32.gmra.mxu0 %v1455
        %v1777 = vpop.f32.mrf.mxu0
        %v1778 = vadd.f32 0.0, %v1777
        %v1779 = vpop.f32.mrf.mxu0
        %v1780 = vadd.f32 0.0, %v1779
        %1781 = vmatprep.mubr.f32.mxu0 %v1458
        %1782 = vmatmul.mubr.f32.gmra.mxu0 %v1457
        %v1783 = vpop.f32.mrf.mxu0
        %v1784 = vadd.f32 0.0, %v1783
        %v1785 = vpop.f32.mrf.mxu0
        %v1786 = vadd.f32 0.0, %v1785
        %1787 = vmatprep.mubr.f32.mxu0 %v1460
        %1788 = vmatmul.mubr.f32.gmra.mxu0 %v1459
        %v1789 = vpop.f32.mrf.mxu0
        %v1790 = vadd.f32 0.0, %v1789
        %v1791 = vpop.f32.mrf.mxu0
        %v1792 = vadd.f32 0.0, %v1791
        %1793 = vmatprep.mubr.f32.mxu0 %v1462
        %1794 = vmatmul.mubr.f32.gmra.mxu0 %v1461
        %v1795 = vpop.f32.mrf.mxu0
        %v1796 = vadd.f32 0.0, %v1795
        %v1797 = vpop.f32.mrf.mxu0
        %v1798 = vadd.f32 0.0, %v1797
        %1799 = vmatprep.mubr.f32.mxu0 %v1464
        %1800 = vmatmul.mubr.f32.gmra.mxu0 %v1463
        %v1801 = vpop.f32.mrf.mxu0
        %v1802 = vadd.f32 0.0, %v1801
        %v1803 = vpop.f32.mrf.mxu0
        %v1804 = vadd.f32 0.0, %v1803
        %1805 = vmatprep.mubr.f32.mxu0 %v1466
        %1806 = vmatmul.mubr.f32.gmra.mxu0 %v1465
        %v1807 = vpop.f32.mrf.mxu0
        %v1808 = vadd.f32 0.0, %v1807
        %v1809 = vpop.f32.mrf.mxu0
        %v1810 = vadd.f32 0.0, %v1809
        %1811 = vmatprep.mubr.f32.mxu0 %v1468
        %1812 = vmatmul.mubr.f32.gmra.mxu0 %v1467
        %v1813 = vpop.f32.mrf.mxu0
        %v1814 = vadd.f32 0.0, %v1813
        %v1815 = vpop.f32.mrf.mxu0
        %v1816 = vadd.f32 0.0, %v1815
        %1817 = vmatprep.mubr.f32.mxu0 %v1470
        %1818 = vmatmul.mubr.f32.gmra.mxu0 %v1469
        %v1819 = vpop.f32.mrf.mxu0
        %v1820 = vadd.f32 0.0, %v1819
        %v1821 = vpop.f32.mrf.mxu0
        %v1822 = vadd.f32 0.0, %v1821
        %1823 = vmatprep.mubr.f32.mxu0 %v1472
        %1824 = vmatmul.mubr.f32.gmra.mxu0 %v1471
        %v1825 = vpop.f32.mrf.mxu0
        %v1826 = vadd.f32 0.0, %v1825
        %v1827 = vpop.f32.mrf.mxu0
        %v1828 = vadd.f32 0.0, %v1827
        %1829 = vmatprep.mubr.f32.mxu0 %v1474
        %1830 = vmatmul.mubr.f32.gmra.mxu0 %v1473
        %v1831 = vpop.f32.mrf.mxu0
        %v1832 = vadd.f32 0.0, %v1831
        %v1833 = vpop.f32.mrf.mxu0
        %v1834 = vadd.f32 0.0, %v1833
        %1835 = vmatprep.mubr.f32.mxu0 %v1476
        %1836 = vmatmul.mubr.f32.gmra.mxu0 %v1475
        %v1837 = vpop.f32.mrf.mxu0
        %v1838 = vadd.f32 0.0, %v1837
        %v1839 = vpop.f32.mrf.mxu0
        %v1840 = vadd.f32 0.0, %v1839
        %1841 = vmatprep.mubr.f32.mxu0 %v1478
        %1842 = vmatmul.mubr.f32.gmra.mxu0 %v1477
        %v1843 = vpop.f32.mrf.mxu0
        %v1844 = vadd.f32 0.0, %v1843
        %v1845 = vpop.f32.mrf.mxu0
        %v1846 = vadd.f32 0.0, %v1845
        %1847 = vmatprep.mubr.f32.mxu0 %v1480
        %1848 = vmatmul.mubr.f32.gmra.mxu0 %v1479
        %v1849 = vpop.f32.mrf.mxu0
        %v1850 = vadd.f32 0.0, %v1849
        %v1851 = vpop.f32.mrf.mxu0
        %v1852 = vadd.f32 0.0, %v1851
        %1853 = vmatprep.mubr.f32.mxu0 %v1482
        %1854 = vmatmul.mubr.f32.gmra.mxu0 %v1481
        %v1855 = vpop.f32.mrf.mxu0
        %v1856 = vadd.f32 0.0, %v1855
        %v1857 = vpop.f32.mrf.mxu0
        %v1858 = vadd.f32 0.0, %v1857
        %1859 = vmatprep.mubr.f32.mxu0 %v1484
        %1860 = vmatmul.mubr.f32.gmra.mxu0 %v1483
        %v1861 = vpop.f32.mrf.mxu0
        %v1862 = vadd.f32 0.0, %v1861
        %v1863 = vpop.f32.mrf.mxu0
        %v1864 = vadd.f32 0.0, %v1863
        %1865 = vmatprep.mubr.f32.mxu0 %v1486
        %1866 = vmatmul.mubr.f32.gmra.mxu0 %v1485
        %v1867 = vpop.f32.mrf.mxu0
        %v1868 = vadd.f32 0.0, %v1867
        %v1869 = vpop.f32.mrf.mxu0
        %v1870 = vadd.f32 0.0, %v1869
        %1871 = vmatprep.mubr.f32.mxu0 %v1488
        %1872 = vmatmul.mubr.f32.gmra.mxu0 %v1487
        %v1873 = vpop.f32.mrf.mxu0
        %v1874 = vadd.f32 0.0, %v1873
        %v1875 = vpop.f32.mrf.mxu0
        %v1876 = vadd.f32 0.0, %v1875
        %1877 = vmatprep.mubr.f32.mxu0 %v1490
        %1878 = vmatmul.mubr.f32.gmra.mxu0 %v1489
        %v1879 = vpop.f32.mrf.mxu0
        %v1880 = vadd.f32 0.0, %v1879
        %v1881 = vpop.f32.mrf.mxu0
        %v1882 = vadd.f32 0.0, %v1881
        %1883 = vmatprep.mubr.f32.mxu0 %v1492
        %1884 = vmatmul.mubr.f32.gmra.mxu0 %v1491
        %v1885 = vpop.f32.mrf.mxu0
        %v1886 = vadd.f32 0.0, %v1885
        %v1887 = vpop.f32.mrf.mxu0
        %v1888 = vadd.f32 0.0, %v1887
        %1889 = vmatprep.mubr.f32.mxu0 %v1494
        %1890 = vmatmul.mubr.f32.gmra.mxu0 %v1493
        %v1891 = vpop.f32.mrf.mxu0
        %v1892 = vadd.f32 0.0, %v1891
        %v1893 = vpop.f32.mrf.mxu0
        %v1894 = vadd.f32 0.0, %v1893
        %1895 = vmatprep.mubr.f32.mxu0 %v1496
        %1896 = vmatmul.mubr.f32.gmra.mxu0 %v1495
        %v1897 = vpop.f32.mrf.mxu0
        %v1898 = vadd.f32 0.0, %v1897
        %v1899 = vpop.f32.mrf.mxu0
        %v1900 = vadd.f32 0.0, %v1899
        %1901 = vmatprep.mubr.f32.mxu0 %v1498
        %1902 = vmatmul.mubr.f32.gmra.mxu0 %v1497
        %v1903 = vpop.f32.mrf.mxu0
        %v1904 = vadd.f32 0.0, %v1903
        %v1905 = vpop.f32.mrf.mxu0
        %v1906 = vadd.f32 0.0, %v1905
        %1907 = vmatprep.mubr.f32.mxu0 %v1500
        %1908 = vmatmul.mubr.f32.gmra.mxu0 %v1499
        %v1909 = vpop.f32.mrf.mxu0
        %v1910 = vadd.f32 0.0, %v1909
        %v1911 = vpop.f32.mrf.mxu0
        %v1912 = vadd.f32 0.0, %v1911
        %1913 = vmatprep.mubr.f32.mxu0 %v1502
        %1914 = vmatmul.mubr.f32.gmra.mxu0 %v1501
        %v1915 = vpop.f32.mrf.mxu0
        %v1916 = vadd.f32 0.0, %v1915
        %v1917 = vpop.f32.mrf.mxu0
        %v1918 = vadd.f32 0.0, %v1917
        %1919 = vmatprep.mubr.f32.mxu0 %v1504
        %1920 = vmatmul.mubr.f32.gmra.mxu0 %v1503
        %v1921 = vpop.f32.mrf.mxu0
        %v1922 = vadd.f32 0.0, %v1921
        %v1923 = vpop.f32.mrf.mxu0
        %v1924 = vadd.f32 0.0, %v1923
        %1925 = vmatprep.mubr.f32.mxu0 %v1506
        %1926 = vmatmul.mubr.f32.gmra.mxu0 %v1505
        %v1927 = vpop.f32.mrf.mxu0
        %v1928 = vadd.f32 0.0, %v1927
        %v1929 = vpop.f32.mrf.mxu0
        %v1930 = vadd.f32 0.0, %v1929
        %1931 = vmatprep.mubr.f32.mxu0 %v1508
        %1932 = vmatmul.mubr.f32.gmra.mxu0 %v1507
        %v1933 = vpop.f32.mrf.mxu0
        %v1934 = vadd.f32 0.0, %v1933
        %v1935 = vpop.f32.mrf.mxu0
        %v1936 = vadd.f32 0.0, %v1935
        %1937 = vmatprep.mubr.f32.mxu0 %v1510
        %1938 = vmatmul.mubr.f32.gmra.mxu0 %v1509
        %v1939 = vpop.f32.mrf.mxu0
        %v1940 = vadd.f32 0.0, %v1939
        %v1941 = vpop.f32.mrf.mxu0
        %v1942 = vadd.f32 0.0, %v1941
        %1943 = vmatprep.mubr.f32.mxu0 %v1512
        %1944 = vmatmul.mubr.f32.gmra.mxu0 %v1511
        %v1945 = vpop.f32.mrf.mxu0
        %v1946 = vadd.f32 0.0, %v1945
        %v1947 = vpop.f32.mrf.mxu0
        %v1948 = vadd.f32 0.0, %v1947
        %1949 = vmatprep.mubr.f32.mxu0 %v1514
        %1950 = vmatmul.mubr.f32.gmra.mxu0 %v1513
        %v1951 = vpop.f32.mrf.mxu0
        %v1952 = vadd.f32 0.0, %v1951
        %v1953 = vpop.f32.mrf.mxu0
        %v1954 = vadd.f32 0.0, %v1953
        %1955 = vmatprep.mubr.f32.mxu0 %v1516
        %1956 = vmatmul.mubr.f32.gmra.mxu0 %v1515
        %v1957 = vpop.f32.mrf.mxu0
        %v1958 = vadd.f32 0.0, %v1957
        %v1959 = vpop.f32.mrf.mxu0
        %v1960 = vadd.f32 0.0, %v1959
        %1961 = vmatprep.mubr.f32.mxu0 %v1518
        %1962 = vmatmul.mubr.f32.gmra.mxu0 %v1517
        %v1963 = vpop.f32.mrf.mxu0
        %v1964 = vadd.f32 0.0, %v1963
        %v1965 = vpop.f32.mrf.mxu0
        %v1966 = vadd.f32 0.0, %v1965
        %1967 = vdwg.mxu0
        %1968 = vmatprep.subr.mxu0 %v1612
        %1969 = vmatpush1.msra.mxu0 %v1611
        %1970 = vmatprep.subr.mxu0 %v1606
        %1971 = vmatpush1.msra.mxu0 %v1605
        %1972 = vmatprep.subr.mxu0 %v1600
        %1973 = vmatpush1.msra.mxu0 %v1599
        %1974 = vmatprep.subr.mxu0 %v1594
        %1975 = vmatpush1.msra.mxu0 %v1593
        %1976 = vmatprep.subr.mxu0 %v1588
        %1977 = vmatpush1.msra.mxu0 %v1587
        %1978 = vmatprep.subr.mxu0 %v1582
        %1979 = vmatpush1.msra.mxu0 %v1581
        %1980 = vmatprep.subr.mxu0 %v1576
        %1981 = vmatpush1.msra.mxu0 %v1575
        %1982 = vmatprep.subr.mxu0 %v1570
        %1983 = vmatpush1.msra.mxu0 %v1569
        %1984 = vmatprep.subr.mxu0 %v1564
        %1985 = vmatpush1.msra.mxu0 %v1563
        %1986 = vmatprep.subr.mxu0 %v1558
        %1987 = vmatpush1.msra.mxu0 %v1557
        %1988 = vmatprep.subr.mxu0 %v1552
        %1989 = vmatpush1.msra.mxu0 %v1551
        %1990 = vmatprep.subr.mxu0 %v1546
        %1991 = vmatpush1.msra.mxu0 %v1545
        %1992 = vmatprep.subr.mxu0 %v1540
        %1993 = vmatpush1.msra.mxu0 %v1539
        %1994 = vmatprep.subr.mxu0 %v1534
        %1995 = vmatpush1.msra.mxu0 %v1533
        %1996 = vmatprep.subr.mxu0 %v1528
        %1997 = vmatpush1.msra.mxu0 %v1527
        %1998 = vmatprep.subr.mxu0 %v1522
        %1999 = vmatpush1.msra.mxu0 %v1521
        %2000 = vmatprep.subr.mxu0 %v1708
        %2001 = vmatpush2.msra.mxu0 %v1707
        %2002 = vmatprep.subr.mxu0 %v1702
        %2003 = vmatpush2.msra.mxu0 %v1701
        %2004 = vmatprep.subr.mxu0 %v1696
        %2005 = vmatpush2.msra.mxu0 %v1695
        %2006 = vmatprep.subr.mxu0 %v1690
        %2007 = vmatpush2.msra.mxu0 %v1689
        %2008 = vmatprep.subr.mxu0 %v1684
        %2009 = vmatpush2.msra.mxu0 %v1683
        %2010 = vmatprep.subr.mxu0 %v1678
        %2011 = vmatpush2.msra.mxu0 %v1677
        %2012 = vmatprep.subr.mxu0 %v1672
        %2013 = vmatpush2.msra.mxu0 %v1671
        %2014 = vmatprep.subr.mxu0 %v1666
        %2015 = vmatpush2.msra.mxu0 %v1665
        %2016 = vmatprep.subr.mxu0 %v1660
        %2017 = vmatpush2.msra.mxu0 %v1659
        %2018 = vmatprep.subr.mxu0 %v1654
        %2019 = vmatpush2.msra.mxu0 %v1653
        %2020 = vmatprep.subr.mxu0 %v1648
        %2021 = vmatpush2.msra.mxu0 %v1647
        %2022 = vmatprep.subr.mxu0 %v1642
        %2023 = vmatpush2.msra.mxu0 %v1641
        %2024 = vmatprep.subr.mxu0 %v1636
        %2025 = vmatpush2.msra.mxu0 %v1635
        %2026 = vmatprep.subr.mxu0 %v1630
        %2027 = vmatpush2.msra.mxu0 %v1629
        %2028 = vmatprep.subr.mxu0 %v1624
        %2029 = vmatpush2.msra.mxu0 %v1623
        %2030 = vmatprep.subr.mxu0 %v1618
        %2031 = vmatpush2.msra.mxu0 %v1617
        %2032 = vmatprep.mubr.f32.mxu0 %v1456
        %2033 = vmatmul.mubr.f32.gmra.mxu0 %v1455
        %v2034 = vpop.f32.mrf.mxu0
        %v2035 = vadd.f32 0.0, %v2034
        %v2036 = vpop.f32.mrf.mxu0
        %v2037 = vadd.f32 0.0, %v2036
        %2038 = vmatprep.mubr.f32.mxu0 %v1458
        %2039 = vmatmul.mubr.f32.gmra.mxu0 %v1457
        %v2040 = vpop.f32.mrf.mxu0
        %v2041 = vadd.f32 0.0, %v2040
        %v2042 = vpop.f32.mrf.mxu0
        %v2043 = vadd.f32 0.0, %v2042
        %2044 = vmatprep.mubr.f32.mxu0 %v1460
        %2045 = vmatmul.mubr.f32.gmra.mxu0 %v1459
        %v2046 = vpop.f32.mrf.mxu0
        %v2047 = vadd.f32 0.0, %v2046
        %v2048 = vpop.f32.mrf.mxu0
        %v2049 = vadd.f32 0.0, %v2048
        %2050 = vmatprep.mubr.f32.mxu0 %v1462
        %2051 = vmatmul.mubr.f32.gmra.mxu0 %v1461
        %v2052 = vpop.f32.mrf.mxu0
        %v2053 = vadd.f32 0.0, %v2052
        %v2054 = vpop.f32.mrf.mxu0
        %v2055 = vadd.f32 0.0, %v2054
        %2056 = vmatprep.mubr.f32.mxu0 %v1464
        %2057 = vmatmul.mubr.f32.gmra.mxu0 %v1463
        %v2058 = vpop.f32.mrf.mxu0
        %v2059 = vadd.f32 0.0, %v2058
        %v2060 = vpop.f32.mrf.mxu0
        %v2061 = vadd.f32 0.0, %v2060
        %2062 = vmatprep.mubr.f32.mxu0 %v1466
        %2063 = vmatmul.mubr.f32.gmra.mxu0 %v1465
        %v2064 = vpop.f32.mrf.mxu0
        %v2065 = vadd.f32 0.0, %v2064
        %v2066 = vpop.f32.mrf.mxu0
        %v2067 = vadd.f32 0.0, %v2066
        %2068 = vmatprep.mubr.f32.mxu0 %v1468
        %2069 = vmatmul.mubr.f32.gmra.mxu0 %v1467
        %v2070 = vpop.f32.mrf.mxu0
        %v2071 = vadd.f32 0.0, %v2070
        %v2072 = vpop.f32.mrf.mxu0
        %v2073 = vadd.f32 0.0, %v2072
        %2074 = vmatprep.mubr.f32.mxu0 %v1470
        %2075 = vmatmul.mubr.f32.gmra.mxu0 %v1469
        %v2076 = vpop.f32.mrf.mxu0
        %v2077 = vadd.f32 0.0, %v2076
        %v2078 = vpop.f32.mrf.mxu0
        %v2079 = vadd.f32 0.0, %v2078
        %2080 = vmatprep.mubr.f32.mxu0 %v1472
        %2081 = vmatmul.mubr.f32.gmra.mxu0 %v1471
        %v2082 = vpop.f32.mrf.mxu0
        %v2083 = vadd.f32 0.0, %v2082
        %v2084 = vpop.f32.mrf.mxu0
        %v2085 = vadd.f32 0.0, %v2084
        %2086 = vmatprep.mubr.f32.mxu0 %v1474
        %2087 = vmatmul.mubr.f32.gmra.mxu0 %v1473
        %v2088 = vpop.f32.mrf.mxu0
        %v2089 = vadd.f32 0.0, %v2088
        %v2090 = vpop.f32.mrf.mxu0
        %v2091 = vadd.f32 0.0, %v2090
        %2092 = vmatprep.mubr.f32.mxu0 %v1476
        %2093 = vmatmul.mubr.f32.gmra.mxu0 %v1475
        %v2094 = vpop.f32.mrf.mxu0
        %v2095 = vadd.f32 0.0, %v2094
        %v2096 = vpop.f32.mrf.mxu0
        %v2097 = vadd.f32 0.0, %v2096
        %2098 = vmatprep.mubr.f32.mxu0 %v1478
        %2099 = vmatmul.mubr.f32.gmra.mxu0 %v1477
        %v2100 = vpop.f32.mrf.mxu0
        %v2101 = vadd.f32 0.0, %v2100
        %v2102 = vpop.f32.mrf.mxu0
        %v2103 = vadd.f32 0.0, %v2102
        %2104 = vmatprep.mubr.f32.mxu0 %v1480
        %2105 = vmatmul.mubr.f32.gmra.mxu0 %v1479
        %v2106 = vpop.f32.mrf.mxu0
        %v2107 = vadd.f32 0.0, %v2106
        %v2108 = vpop.f32.mrf.mxu0
        %v2109 = vadd.f32 0.0, %v2108
        %2110 = vmatprep.mubr.f32.mxu0 %v1482
        %2111 = vmatmul.mubr.f32.gmra.mxu0 %v1481
        %v2112 = vpop.f32.mrf.mxu0
        %v2113 = vadd.f32 0.0, %v2112
        %v2114 = vpop.f32.mrf.mxu0
        %v2115 = vadd.f32 0.0, %v2114
        %2116 = vmatprep.mubr.f32.mxu0 %v1484
        %2117 = vmatmul.mubr.f32.gmra.mxu0 %v1483
        %v2118 = vpop.f32.mrf.mxu0
        %v2119 = vadd.f32 0.0, %v2118
        %v2120 = vpop.f32.mrf.mxu0
        %v2121 = vadd.f32 0.0, %v2120
        %2122 = vmatprep.mubr.f32.mxu0 %v1486
        %2123 = vmatmul.mubr.f32.gmra.mxu0 %v1485
        %v2124 = vpop.f32.mrf.mxu0
        %v2125 = vadd.f32 0.0, %v2124
        %v2126 = vpop.f32.mrf.mxu0
        %v2127 = vadd.f32 0.0, %v2126
        %2128 = vmatprep.mubr.f32.mxu0 %v1488
        %2129 = vmatmul.mubr.f32.gmra.mxu0 %v1487
        %v2130 = vpop.f32.mrf.mxu0
        %v2131 = vadd.f32 0.0, %v2130
        %v2132 = vpop.f32.mrf.mxu0
        %v2133 = vadd.f32 0.0, %v2132
        %2134 = vmatprep.mubr.f32.mxu0 %v1490
        %2135 = vmatmul.mubr.f32.gmra.mxu0 %v1489
        %v2136 = vpop.f32.mrf.mxu0
        %v2137 = vadd.f32 0.0, %v2136
        %v2138 = vpop.f32.mrf.mxu0
        %v2139 = vadd.f32 0.0, %v2138
        %2140 = vmatprep.mubr.f32.mxu0 %v1492
        %2141 = vmatmul.mubr.f32.gmra.mxu0 %v1491
        %v2142 = vpop.f32.mrf.mxu0
        %v2143 = vadd.f32 0.0, %v2142
        %v2144 = vpop.f32.mrf.mxu0
        %v2145 = vadd.f32 0.0, %v2144
        %2146 = vmatprep.mubr.f32.mxu0 %v1494
        %2147 = vmatmul.mubr.f32.gmra.mxu0 %v1493
        %v2148 = vpop.f32.mrf.mxu0
        %v2149 = vadd.f32 0.0, %v2148
        %v2150 = vpop.f32.mrf.mxu0
        %v2151 = vadd.f32 0.0, %v2150
        %2152 = vmatprep.mubr.f32.mxu0 %v1496
        %2153 = vmatmul.mubr.f32.gmra.mxu0 %v1495
        %v2154 = vpop.f32.mrf.mxu0
        %v2155 = vadd.f32 0.0, %v2154
        %v2156 = vpop.f32.mrf.mxu0
        %v2157 = vadd.f32 0.0, %v2156
        %2158 = vmatprep.mubr.f32.mxu0 %v1498
        %2159 = vmatmul.mubr.f32.gmra.mxu0 %v1497
        %v2160 = vpop.f32.mrf.mxu0
        %v2161 = vadd.f32 0.0, %v2160
        %v2162 = vpop.f32.mrf.mxu0
        %v2163 = vadd.f32 0.0, %v2162
        %2164 = vmatprep.mubr.f32.mxu0 %v1500
        %2165 = vmatmul.mubr.f32.gmra.mxu0 %v1499
        %v2166 = vpop.f32.mrf.mxu0
        %v2167 = vadd.f32 0.0, %v2166
        %v2168 = vpop.f32.mrf.mxu0
        %v2169 = vadd.f32 0.0, %v2168
        %2170 = vmatprep.mubr.f32.mxu0 %v1502
        %2171 = vmatmul.mubr.f32.gmra.mxu0 %v1501
        %v2172 = vpop.f32.mrf.mxu0
        %v2173 = vadd.f32 0.0, %v2172
        %v2174 = vpop.f32.mrf.mxu0
        %v2175 = vadd.f32 0.0, %v2174
        %2176 = vmatprep.mubr.f32.mxu0 %v1504
        %2177 = vmatmul.mubr.f32.gmra.mxu0 %v1503
        %v2178 = vpop.f32.mrf.mxu0
        %v2179 = vadd.f32 0.0, %v2178
        %v2180 = vpop.f32.mrf.mxu0
        %v2181 = vadd.f32 0.0, %v2180
        %2182 = vmatprep.mubr.f32.mxu0 %v1506
        %2183 = vmatmul.mubr.f32.gmra.mxu0 %v1505
        %v2184 = vpop.f32.mrf.mxu0
        %v2185 = vadd.f32 0.0, %v2184
        %v2186 = vpop.f32.mrf.mxu0
        %v2187 = vadd.f32 0.0, %v2186
        %2188 = vmatprep.mubr.f32.mxu0 %v1508
        %2189 = vmatmul.mubr.f32.gmra.mxu0 %v1507
        %v2190 = vpop.f32.mrf.mxu0
        %v2191 = vadd.f32 0.0, %v2190
        %v2192 = vpop.f32.mrf.mxu0
        %v2193 = vadd.f32 0.0, %v2192
        %2194 = vmatprep.mubr.f32.mxu0 %v1510
        %2195 = vmatmul.mubr.f32.gmra.mxu0 %v1509
        %v2196 = vpop.f32.mrf.mxu0
        %v2197 = vadd.f32 0.0, %v2196
        %v2198 = vpop.f32.mrf.mxu0
        %v2199 = vadd.f32 0.0, %v2198
        %2200 = vmatprep.mubr.f32.mxu0 %v1512
        %2201 = vmatmul.mubr.f32.gmra.mxu0 %v1511
        %v2202 = vpop.f32.mrf.mxu0
        %v2203 = vadd.f32 0.0, %v2202
        %v2204 = vpop.f32.mrf.mxu0
        %v2205 = vadd.f32 0.0, %v2204
        %2206 = vmatprep.mubr.f32.mxu0 %v1514
        %2207 = vmatmul.mubr.f32.gmra.mxu0 %v1513
        %v2208 = vpop.f32.mrf.mxu0
        %v2209 = vadd.f32 0.0, %v2208
        %v2210 = vpop.f32.mrf.mxu0
        %v2211 = vadd.f32 0.0, %v2210
        %2212 = vmatprep.mubr.f32.mxu0 %v1516
        %2213 = vmatmul.mubr.f32.gmra.mxu0 %v1515
        %v2214 = vpop.f32.mrf.mxu0
        %v2215 = vadd.f32 0.0, %v2214
        %v2216 = vpop.f32.mrf.mxu0
        %v2217 = vadd.f32 0.0, %v2216
        %2218 = vmatprep.mubr.f32.mxu0 %v1518
        %2219 = vmatmul.mubr.f32.gmra.mxu0 %v1517
        %v2220 = vpop.f32.mrf.mxu0
        %v2221 = vadd.f32 0.0, %v2220
        %v2222 = vpop.f32.mrf.mxu0
        %v2223 = vadd.f32 0.0, %v2222
        %2224 = vdwg.mxu0
        %2225 = vmatprep.subr.mxu0 %v1614
        %2226 = vmatpush1.msra.mxu0 %v1613
        %2227 = vmatprep.subr.mxu0 %v1608
        %2228 = vmatpush1.msra.mxu0 %v1607
        %2229 = vmatprep.subr.mxu0 %v1602
        %2230 = vmatpush1.msra.mxu0 %v1601
        %2231 = vmatprep.subr.mxu0 %v1596
        %2232 = vmatpush1.msra.mxu0 %v1595
        %2233 = vmatprep.subr.mxu0 %v1590
        %2234 = vmatpush1.msra.mxu0 %v1589
        %2235 = vmatprep.subr.mxu0 %v1584
        %2236 = vmatpush1.msra.mxu0 %v1583
        %2237 = vmatprep.subr.mxu0 %v1578
        %2238 = vmatpush1.msra.mxu0 %v1577
        %2239 = vmatprep.subr.mxu0 %v1572
        %2240 = vmatpush1.msra.mxu0 %v1571
        %2241 = vmatprep.subr.mxu0 %v1566
        %2242 = vmatpush1.msra.mxu0 %v1565
        %2243 = vmatprep.subr.mxu0 %v1560
        %2244 = vmatpush1.msra.mxu0 %v1559
        %2245 = vmatprep.subr.mxu0 %v1554
        %2246 = vmatpush1.msra.mxu0 %v1553
        %2247 = vmatprep.subr.mxu0 %v1548
        %2248 = vmatpush1.msra.mxu0 %v1547
        %2249 = vmatprep.subr.mxu0 %v1542
        %2250 = vmatpush1.msra.mxu0 %v1541
        %2251 = vmatprep.subr.mxu0 %v1536
        %2252 = vmatpush1.msra.mxu0 %v1535
        %2253 = vmatprep.subr.mxu0 %v1530
        %2254 = vmatpush1.msra.mxu0 %v1529
        %2255 = vmatprep.subr.mxu0 %v1524
        %2256 = vmatpush1.msra.mxu0 %v1523
        %2257 = vmatprep.subr.mxu0 %v1710
        %2258 = vmatpush2.msra.mxu0 %v1709
        %2259 = vmatprep.subr.mxu0 %v1704
        %2260 = vmatpush2.msra.mxu0 %v1703
        %2261 = vmatprep.subr.mxu0 %v1698
        %2262 = vmatpush2.msra.mxu0 %v1697
        %2263 = vmatprep.subr.mxu0 %v1692
        %2264 = vmatpush2.msra.mxu0 %v1691
        %2265 = vmatprep.subr.mxu0 %v1686
        %2266 = vmatpush2.msra.mxu0 %v1685
        %2267 = vmatprep.subr.mxu0 %v1680
        %2268 = vmatpush2.msra.mxu0 %v1679
        %2269 = vmatprep.subr.mxu0 %v1674
        %2270 = vmatpush2.msra.mxu0 %v1673
        %2271 = vmatprep.subr.mxu0 %v1668
        %2272 = vmatpush2.msra.mxu0 %v1667
        %2273 = vmatprep.subr.mxu0 %v1662
        %2274 = vmatpush2.msra.mxu0 %v1661
        %2275 = vmatprep.subr.mxu0 %v1656
        %2276 = vmatpush2.msra.mxu0 %v1655
        %2277 = vmatprep.subr.mxu0 %v1650
        %2278 = vmatpush2.msra.mxu0 %v1649
        %2279 = vmatprep.subr.mxu0 %v1644
        %2280 = vmatpush2.msra.mxu0 %v1643
        %2281 = vmatprep.subr.mxu0 %v1638
        %2282 = vmatpush2.msra.mxu0 %v1637
        %2283 = vmatprep.subr.mxu0 %v1632
        %2284 = vmatpush2.msra.mxu0 %v1631
        %2285 = vmatprep.subr.mxu0 %v1626
        %2286 = vmatpush2.msra.mxu0 %v1625
        %2287 = vmatprep.subr.mxu0 %v1620
        %2288 = vmatpush2.msra.mxu0 %v1619
        %2289 = vmatprep.mubr.f32.mxu0 %v1456
        %2290 = vmatmul.mubr.f32.gmra.mxu0 %v1455
        %v2291 = vpop.f32.mrf.mxu0
        %v2292 = vadd.f32 0.0, %v2291
        %v2293 = vpop.f32.mrf.mxu0
        %v2294 = vadd.f32 0.0, %v2293
        %2295 = vmatprep.mubr.f32.mxu0 %v1458
        %2296 = vmatmul.mubr.f32.gmra.mxu0 %v1457
        %v2297 = vpop.f32.mrf.mxu0
        %v2298 = vadd.f32 0.0, %v2297
        %v2299 = vpop.f32.mrf.mxu0
        %v2300 = vadd.f32 0.0, %v2299
        %2301 = vmatprep.mubr.f32.mxu0 %v1460
        %2302 = vmatmul.mubr.f32.gmra.mxu0 %v1459
        %v2303 = vpop.f32.mrf.mxu0
        %v2304 = vadd.f32 0.0, %v2303
        %v2305 = vpop.f32.mrf.mxu0
        %v2306 = vadd.f32 0.0, %v2305
        %2307 = vmatprep.mubr.f32.mxu0 %v1462
        %2308 = vmatmul.mubr.f32.gmra.mxu0 %v1461
        %v2309 = vpop.f32.mrf.mxu0
        %v2310 = vadd.f32 0.0, %v2309
        %v2311 = vpop.f32.mrf.mxu0
        %v2312 = vadd.f32 0.0, %v2311
        %2313 = vmatprep.mubr.f32.mxu0 %v1464
        %2314 = vmatmul.mubr.f32.gmra.mxu0 %v1463
        %v2315 = vpop.f32.mrf.mxu0
        %v2316 = vadd.f32 0.0, %v2315
        %v2317 = vpop.f32.mrf.mxu0
        %v2318 = vadd.f32 0.0, %v2317
        %2319 = vmatprep.mubr.f32.mxu0 %v1466
        %2320 = vmatmul.mubr.f32.gmra.mxu0 %v1465
        %v2321 = vpop.f32.mrf.mxu0
        %v2322 = vadd.f32 0.0, %v2321
        %v2323 = vpop.f32.mrf.mxu0
        %v2324 = vadd.f32 0.0, %v2323
        %2325 = vmatprep.mubr.f32.mxu0 %v1468
        %2326 = vmatmul.mubr.f32.gmra.mxu0 %v1467
        %v2327 = vpop.f32.mrf.mxu0
        %v2328 = vadd.f32 0.0, %v2327
        %v2329 = vpop.f32.mrf.mxu0
        %v2330 = vadd.f32 0.0, %v2329
        %2331 = vmatprep.mubr.f32.mxu0 %v1470
        %2332 = vmatmul.mubr.f32.gmra.mxu0 %v1469
        %v2333 = vpop.f32.mrf.mxu0
        %v2334 = vadd.f32 0.0, %v2333
        %v2335 = vpop.f32.mrf.mxu0
        %v2336 = vadd.f32 0.0, %v2335
        %2337 = vmatprep.mubr.f32.mxu0 %v1472
        %2338 = vmatmul.mubr.f32.gmra.mxu0 %v1471
        %v2339 = vpop.f32.mrf.mxu0
        %v2340 = vadd.f32 0.0, %v2339
        %v2341 = vpop.f32.mrf.mxu0
        %v2342 = vadd.f32 0.0, %v2341
        %2343 = vmatprep.mubr.f32.mxu0 %v1474
        %2344 = vmatmul.mubr.f32.gmra.mxu0 %v1473
        %v2345 = vpop.f32.mrf.mxu0
        %v2346 = vadd.f32 0.0, %v2345
        %v2347 = vpop.f32.mrf.mxu0
        %v2348 = vadd.f32 0.0, %v2347
        %2349 = vmatprep.mubr.f32.mxu0 %v1476
        %2350 = vmatmul.mubr.f32.gmra.mxu0 %v1475
        %v2351 = vpop.f32.mrf.mxu0
        %v2352 = vadd.f32 0.0, %v2351
        %v2353 = vpop.f32.mrf.mxu0
        %v2354 = vadd.f32 0.0, %v2353
        %2355 = vmatprep.mubr.f32.mxu0 %v1478
        %2356 = vmatmul.mubr.f32.gmra.mxu0 %v1477
        %v2357 = vpop.f32.mrf.mxu0
        %v2358 = vadd.f32 0.0, %v2357
        %v2359 = vpop.f32.mrf.mxu0
        %v2360 = vadd.f32 0.0, %v2359
        %2361 = vmatprep.mubr.f32.mxu0 %v1480
        %2362 = vmatmul.mubr.f32.gmra.mxu0 %v1479
        %v2363 = vpop.f32.mrf.mxu0
        %v2364 = vadd.f32 0.0, %v2363
        %v2365 = vpop.f32.mrf.mxu0
        %v2366 = vadd.f32 0.0, %v2365
        %2367 = vmatprep.mubr.f32.mxu0 %v1482
        %2368 = vmatmul.mubr.f32.gmra.mxu0 %v1481
        %v2369 = vpop.f32.mrf.mxu0
        %v2370 = vadd.f32 0.0, %v2369
        %v2371 = vpop.f32.mrf.mxu0
        %v2372 = vadd.f32 0.0, %v2371
        %2373 = vmatprep.mubr.f32.mxu0 %v1484
        %2374 = vmatmul.mubr.f32.gmra.mxu0 %v1483
        %v2375 = vpop.f32.mrf.mxu0
        %v2376 = vadd.f32 0.0, %v2375
        %v2377 = vpop.f32.mrf.mxu0
        %v2378 = vadd.f32 0.0, %v2377
        %2379 = vmatprep.mubr.f32.mxu0 %v1486
        %2380 = vmatmul.mubr.f32.gmra.mxu0 %v1485
        %v2381 = vpop.f32.mrf.mxu0
        %v2382 = vadd.f32 0.0, %v2381
        %v2383 = vpop.f32.mrf.mxu0
        %v2384 = vadd.f32 0.0, %v2383
        %2385 = vmatprep.mubr.f32.mxu0 %v1488
        %2386 = vmatmul.mubr.f32.gmra.mxu0 %v1487
        %v2387 = vpop.f32.mrf.mxu0
        %v2388 = vadd.f32 0.0, %v2387
        %v2389 = vpop.f32.mrf.mxu0
        %v2390 = vadd.f32 0.0, %v2389
        %2391 = vmatprep.mubr.f32.mxu0 %v1490
        %2392 = vmatmul.mubr.f32.gmra.mxu0 %v1489
        %v2393 = vpop.f32.mrf.mxu0
        %v2394 = vadd.f32 0.0, %v2393
        %v2395 = vpop.f32.mrf.mxu0
        %v2396 = vadd.f32 0.0, %v2395
        %2397 = vmatprep.mubr.f32.mxu0 %v1492
        %2398 = vmatmul.mubr.f32.gmra.mxu0 %v1491
        %v2399 = vpop.f32.mrf.mxu0
        %v2400 = vadd.f32 0.0, %v2399
        %v2401 = vpop.f32.mrf.mxu0
        %v2402 = vadd.f32 0.0, %v2401
        %2403 = vmatprep.mubr.f32.mxu0 %v1494
        %2404 = vmatmul.mubr.f32.gmra.mxu0 %v1493
        %v2405 = vpop.f32.mrf.mxu0
        %v2406 = vadd.f32 0.0, %v2405
        %v2407 = vpop.f32.mrf.mxu0
        %v2408 = vadd.f32 0.0, %v2407
        %2409 = vmatprep.mubr.f32.mxu0 %v1496
        %2410 = vmatmul.mubr.f32.gmra.mxu0 %v1495
        %v2411 = vpop.f32.mrf.mxu0
        %v2412 = vadd.f32 0.0, %v2411
        %v2413 = vpop.f32.mrf.mxu0
        %v2414 = vadd.f32 0.0, %v2413
        %2415 = vmatprep.mubr.f32.mxu0 %v1498
        %2416 = vmatmul.mubr.f32.gmra.mxu0 %v1497
        %v2417 = vpop.f32.mrf.mxu0
        %v2418 = vadd.f32 0.0, %v2417
        %v2419 = vpop.f32.mrf.mxu0
        %v2420 = vadd.f32 0.0, %v2419
        %2421 = vmatprep.mubr.f32.mxu0 %v1500
        %2422 = vmatmul.mubr.f32.gmra.mxu0 %v1499
        %v2423 = vpop.f32.mrf.mxu0
        %v2424 = vadd.f32 0.0, %v2423
        %v2425 = vpop.f32.mrf.mxu0
        %v2426 = vadd.f32 0.0, %v2425
        %2427 = vmatprep.mubr.f32.mxu0 %v1502
        %2428 = vmatmul.mubr.f32.gmra.mxu0 %v1501
        %v2429 = vpop.f32.mrf.mxu0
        %v2430 = vadd.f32 0.0, %v2429
        %v2431 = vpop.f32.mrf.mxu0
        %v2432 = vadd.f32 0.0, %v2431
        %2433 = vmatprep.mubr.f32.mxu0 %v1504
        %2434 = vmatmul.mubr.f32.gmra.mxu0 %v1503
        %v2435 = vpop.f32.mrf.mxu0
        %v2436 = vadd.f32 0.0, %v2435
        %v2437 = vpop.f32.mrf.mxu0
        %v2438 = vadd.f32 0.0, %v2437
        %2439 = vmatprep.mubr.f32.mxu0 %v1506
        %2440 = vmatmul.mubr.f32.gmra.mxu0 %v1505
        %v2441 = vpop.f32.mrf.mxu0
        %v2442 = vadd.f32 0.0, %v2441
        %v2443 = vpop.f32.mrf.mxu0
        %v2444 = vadd.f32 0.0, %v2443
        %2445 = vmatprep.mubr.f32.mxu0 %v1508
        %2446 = vmatmul.mubr.f32.gmra.mxu0 %v1507
        %v2447 = vpop.f32.mrf.mxu0
        %v2448 = vadd.f32 0.0, %v2447
        %v2449 = vpop.f32.mrf.mxu0
        %v2450 = vadd.f32 0.0, %v2449
        %2451 = vmatprep.mubr.f32.mxu0 %v1510
        %2452 = vmatmul.mubr.f32.gmra.mxu0 %v1509
        %v2453 = vpop.f32.mrf.mxu0
        %v2454 = vadd.f32 0.0, %v2453
        %v2455 = vpop.f32.mrf.mxu0
        %v2456 = vadd.f32 0.0, %v2455
        %2457 = vmatprep.mubr.f32.mxu0 %v1512
        %2458 = vmatmul.mubr.f32.gmra.mxu0 %v1511
        %v2459 = vpop.f32.mrf.mxu0
        %v2460 = vadd.f32 0.0, %v2459
        %v2461 = vpop.f32.mrf.mxu0
        %v2462 = vadd.f32 0.0, %v2461
        %2463 = vmatprep.mubr.f32.mxu0 %v1514
        %2464 = vmatmul.mubr.f32.gmra.mxu0 %v1513
        %v2465 = vpop.f32.mrf.mxu0
        %v2466 = vadd.f32 0.0, %v2465
        %v2467 = vpop.f32.mrf.mxu0
        %v2468 = vadd.f32 0.0, %v2467
        %2469 = vmatprep.mubr.f32.mxu0 %v1516
        %2470 = vmatmul.mubr.f32.gmra.mxu0 %v1515
        %v2471 = vpop.f32.mrf.mxu0
        %v2472 = vadd.f32 0.0, %v2471
        %v2473 = vpop.f32.mrf.mxu0
        %v2474 = vadd.f32 0.0, %v2473
        %2475 = vmatprep.mubr.f32.mxu0 %v1518
        %2476 = vmatmul.mubr.f32.gmra.mxu0 %v1517
        %v2477 = vpop.f32.mrf.mxu0
        %v2478 = vadd.f32 0.0, %v2477
        %v2479 = vpop.f32.mrf.mxu0
        %v2480 = vadd.f32 0.0, %v2479
        %2481 = vdwg.mxu0
        %v2482 = vld [vmem:[#allocation5] sm:$0xff]
        %v2483 = vld [vmem:[#allocation5 + $0x8] sm:$0xff]
        %v2484 = vld [vmem:[#allocation5 + $0x10] sm:$0xff]
        %v2485 = vld [vmem:[#allocation5 + $0x18] sm:$0xff]
        %v2486 = vld [vmem:[#allocation5 + $0x20] sm:$0xff]
        %v2487 = vld [vmem:[#allocation5 + $0x28] sm:$0xff]
        %v2488 = vld [vmem:[#allocation5 + $0x30] sm:$0xff]
        %v2489 = vld [vmem:[#allocation5 + $0x38] sm:$0xff]
        %v2490 = vld [vmem:[#allocation5 + $0x40] sm:$0xff]
        %v2491 = vld [vmem:[#allocation5 + $0x48] sm:$0xff]
        %v2492 = vld [vmem:[#allocation5 + $0x50] sm:$0xff]
        %v2493 = vld [vmem:[#allocation5 + $0x58] sm:$0xff]
        %v2494 = vld [vmem:[#allocation5 + $0x60] sm:$0xff]
        %v2495 = vld [vmem:[#allocation5 + $0x68] sm:$0xff]
        %v2496 = vld [vmem:[#allocation5 + $0x70] sm:$0xff]
        %v2497 = vld [vmem:[#allocation5 + $0x78] sm:$0xff]
        %2498 = vmatprep.subr.mxu0 0.0
        %2499 = vmatpush1.xpose.msra.mxu0 %v2125
        %2500 = vmatprep.subr.mxu0 0.0
        %2501 = vmatpush1.xpose.msra.mxu0 %v2119
        %2502 = vmatprep.subr.mxu0 0.0
        %2503 = vmatpush1.xpose.msra.mxu0 %v2113
        %2504 = vmatprep.subr.mxu0 0.0
        %2505 = vmatpush1.xpose.msra.mxu0 %v2107
        %2506 = vmatprep.subr.mxu0 0.0
        %2507 = vmatpush1.xpose.msra.mxu0 %v2101
        %2508 = vmatprep.subr.mxu0 0.0
        %2509 = vmatpush1.xpose.msra.mxu0 %v2095
        %2510 = vmatprep.subr.mxu0 0.0
        %2511 = vmatpush1.xpose.msra.mxu0 %v2089
        %2512 = vmatprep.subr.mxu0 0.0
        %2513 = vmatpush1.xpose.msra.mxu0 %v2083
        %2514 = vmatprep.subr.mxu0 0.0
        %2515 = vmatpush1.xpose.msra.mxu0 %v2077
        %2516 = vmatprep.subr.mxu0 0.0
        %2517 = vmatpush1.xpose.msra.mxu0 %v2071
        %2518 = vmatprep.subr.mxu0 0.0
        %2519 = vmatpush1.xpose.msra.mxu0 %v2065
        %2520 = vmatprep.subr.mxu0 0.0
        %2521 = vmatpush1.xpose.msra.mxu0 %v2059
        %2522 = vmatprep.subr.mxu0 0.0
        %2523 = vmatpush1.xpose.msra.mxu0 %v2053
        %2524 = vmatprep.subr.mxu0 0.0
        %2525 = vmatpush1.xpose.msra.mxu0 %v2047
        %2526 = vmatprep.subr.mxu0 0.0
        %2527 = vmatpush1.xpose.msra.mxu0 %v2041
        %2528 = vmatprep.subr.mxu0 0.0
        %2529 = vmatpush1.xpose.msra.mxu0 %v2035
        %2530 = vmatprep.subr.mxu0 0.0
        %2531 = vmatpush2.xpose.msra.mxu0 0.0
        %2532 = vmatprep.subr.mxu0 0.0
        %2533 = vmatpush2.xpose.msra.mxu0 0.0
        %2534 = vmatprep.subr.mxu0 0.0
        %2535 = vmatpush2.xpose.msra.mxu0 0.0
        %2536 = vmatprep.subr.mxu0 0.0
        %2537 = vmatpush2.xpose.msra.mxu0 0.0
        %2538 = vmatprep.subr.mxu0 0.0
        %2539 = vmatpush2.xpose.msra.mxu0 0.0
        %2540 = vmatprep.subr.mxu0 0.0
        %2541 = vmatpush2.xpose.msra.mxu0 0.0
        %2542 = vmatprep.subr.mxu0 0.0
        %2543 = vmatpush2.xpose.msra.mxu0 0.0
        %2544 = vmatprep.subr.mxu0 0.0
        %2545 = vmatpush2.xpose.msra.mxu0 0.0
        %2546 = vmatprep.subr.mxu0 0.0
        %2547 = vmatpush2.xpose.msra.mxu0 0.0
        %2548 = vmatprep.subr.mxu0 0.0
        %2549 = vmatpush2.xpose.msra.mxu0 0.0
        %2550 = vmatprep.subr.mxu0 0.0
        %2551 = vmatpush2.xpose.msra.mxu0 0.0
        %2552 = vmatprep.subr.mxu0 0.0
        %2553 = vmatpush2.xpose.msra.mxu0 0.0
        %2554 = vmatprep.subr.mxu0 0.0
        %2555 = vmatpush2.xpose.msra.mxu0 0.0
        %2556 = vmatprep.subr.mxu0 0.0
        %2557 = vmatpush2.xpose.msra.mxu0 0.0
        %2558 = vmatprep.subr.mxu0 0.0
        %2559 = vmatpush2.xpose.msra.mxu0 0.0
        %2560 = vmatprep.subr.mxu0 0.0
        %2561 = vmatpush2.xpose.msra.mxu0 0.0
        %2562 = vmatprep.mubr.f32.mxu0 0.0
        %2563 = vmatmul.mubr.f32.gmra.mxu0 %v1778
        %v2564 = vpop.f32.mrf.mxu0
        %v2565 = vadd.f32 0.0, %v2564
        %v2566 = vpop.f32.mrf.mxu0
        %2567 = vmatprep.mubr.f32.mxu0 0.0
        %2568 = vmatmul.mubr.f32.gmra.mxu0 %v1784
        %v2569 = vpop.f32.mrf.mxu0
        %v2570 = vadd.f32 0.0, %v2569
        %v2571 = vpop.f32.mrf.mxu0
        %2572 = vmatprep.mubr.f32.mxu0 0.0
        %2573 = vmatmul.mubr.f32.gmra.mxu0 %v1790
        %v2574 = vpop.f32.mrf.mxu0
        %v2575 = vadd.f32 0.0, %v2574
        %v2576 = vpop.f32.mrf.mxu0
        %2577 = vmatprep.mubr.f32.mxu0 0.0
        %2578 = vmatmul.mubr.f32.gmra.mxu0 %v1796
        %v2579 = vpop.f32.mrf.mxu0
        %v2580 = vadd.f32 0.0, %v2579
        %v2581 = vpop.f32.mrf.mxu0
        %2582 = vmatprep.mubr.f32.mxu0 0.0
        %2583 = vmatmul.mubr.f32.gmra.mxu0 %v1802
        %v2584 = vpop.f32.mrf.mxu0
        %v2585 = vadd.f32 0.0, %v2584
        %v2586 = vpop.f32.mrf.mxu0
        %2587 = vmatprep.mubr.f32.mxu0 0.0
        %2588 = vmatmul.mubr.f32.gmra.mxu0 %v1808
        %v2589 = vpop.f32.mrf.mxu0
        %v2590 = vadd.f32 0.0, %v2589
        %v2591 = vpop.f32.mrf.mxu0
        %2592 = vmatprep.mubr.f32.mxu0 0.0
        %2593 = vmatmul.mubr.f32.gmra.mxu0 %v1814
        %v2594 = vpop.f32.mrf.mxu0
        %v2595 = vadd.f32 0.0, %v2594
        %v2596 = vpop.f32.mrf.mxu0
        %2597 = vmatprep.mubr.f32.mxu0 0.0
        %2598 = vmatmul.mubr.f32.gmra.mxu0 %v1820
        %v2599 = vpop.f32.mrf.mxu0
        %v2600 = vadd.f32 0.0, %v2599
        %v2601 = vpop.f32.mrf.mxu0
        %2602 = vmatprep.mubr.f32.mxu0 0.0
        %2603 = vmatmul.mubr.f32.gmra.mxu0 %v1826
        %v2604 = vpop.f32.mrf.mxu0
        %v2605 = vadd.f32 0.0, %v2604
        %v2606 = vpop.f32.mrf.mxu0
        %2607 = vmatprep.mubr.f32.mxu0 0.0
        %2608 = vmatmul.mubr.f32.gmra.mxu0 %v1832
        %v2609 = vpop.f32.mrf.mxu0
        %v2610 = vadd.f32 0.0, %v2609
        %v2611 = vpop.f32.mrf.mxu0
        %2612 = vmatprep.mubr.f32.mxu0 0.0
        %2613 = vmatmul.mubr.f32.gmra.mxu0 %v1838
        %v2614 = vpop.f32.mrf.mxu0
        %v2615 = vadd.f32 0.0, %v2614
        %v2616 = vpop.f32.mrf.mxu0
        %2617 = vmatprep.mubr.f32.mxu0 0.0
        %2618 = vmatmul.mubr.f32.gmra.mxu0 %v1844
        %v2619 = vpop.f32.mrf.mxu0
        %v2620 = vadd.f32 0.0, %v2619
        %v2621 = vpop.f32.mrf.mxu0
        %2622 = vmatprep.mubr.f32.mxu0 0.0
        %2623 = vmatmul.mubr.f32.gmra.mxu0 %v1850
        %v2624 = vpop.f32.mrf.mxu0
        %v2625 = vadd.f32 0.0, %v2624
        %v2626 = vpop.f32.mrf.mxu0
        %2627 = vmatprep.mubr.f32.mxu0 0.0
        %2628 = vmatmul.mubr.f32.gmra.mxu0 %v1856
        %v2629 = vpop.f32.mrf.mxu0
        %v2630 = vadd.f32 0.0, %v2629
        %v2631 = vpop.f32.mrf.mxu0
        %2632 = vmatprep.mubr.f32.mxu0 0.0
        %2633 = vmatmul.mubr.f32.gmra.mxu0 %v1862
        %v2634 = vpop.f32.mrf.mxu0
        %v2635 = vadd.f32 0.0, %v2634
        %v2636 = vpop.f32.mrf.mxu0
        %2637 = vmatprep.mubr.f32.mxu0 0.0
        %2638 = vmatmul.mubr.f32.gmra.mxu0 %v1868
        %v2639 = vpop.f32.mrf.mxu0
        %v2640 = vadd.f32 0.0, %v2639
        %v2641 = vpop.f32.mrf.mxu0
        %2642 = vdwg.mxu0
        %2643 = vmatprep.subr.mxu0 0.0
        %2644 = vmatpush1.xpose.msra.mxu0 %v2221
        %2645 = vmatprep.subr.mxu0 0.0
        %2646 = vmatpush1.xpose.msra.mxu0 %v2215
        %2647 = vmatprep.subr.mxu0 0.0
        %2648 = vmatpush1.xpose.msra.mxu0 %v2209
        %2649 = vmatprep.subr.mxu0 0.0
        %2650 = vmatpush1.xpose.msra.mxu0 %v2203
        %2651 = vmatprep.subr.mxu0 0.0
        %2652 = vmatpush1.xpose.msra.mxu0 %v2197
        %2653 = vmatprep.subr.mxu0 0.0
        %2654 = vmatpush1.xpose.msra.mxu0 %v2191
        %2655 = vmatprep.subr.mxu0 0.0
        %2656 = vmatpush1.xpose.msra.mxu0 %v2185
        %2657 = vmatprep.subr.mxu0 0.0
        %2658 = vmatpush1.xpose.msra.mxu0 %v2179
        %2659 = vmatprep.subr.mxu0 0.0
        %2660 = vmatpush1.xpose.msra.mxu0 %v2173
        %2661 = vmatprep.subr.mxu0 0.0
        %2662 = vmatpush1.xpose.msra.mxu0 %v2167
        %2663 = vmatprep.subr.mxu0 0.0
        %2664 = vmatpush1.xpose.msra.mxu0 %v2161
        %2665 = vmatprep.subr.mxu0 0.0
        %2666 = vmatpush1.xpose.msra.mxu0 %v2155
        %2667 = vmatprep.subr.mxu0 0.0
        %2668 = vmatpush1.xpose.msra.mxu0 %v2149
        %2669 = vmatprep.subr.mxu0 0.0
        %2670 = vmatpush1.xpose.msra.mxu0 %v2143
        %2671 = vmatprep.subr.mxu0 0.0
        %2672 = vmatpush1.xpose.msra.mxu0 %v2137
        %2673 = vmatprep.subr.mxu0 0.0
        %2674 = vmatpush1.xpose.msra.mxu0 %v2131
        %2675 = vmatprep.subr.mxu0 0.0
        %2676 = vmatpush2.xpose.msra.mxu0 0.0
        %2677 = vmatprep.subr.mxu0 0.0
        %2678 = vmatpush2.xpose.msra.mxu0 0.0
        %2679 = vmatprep.subr.mxu0 0.0
        %2680 = vmatpush2.xpose.msra.mxu0 0.0
        %2681 = vmatprep.subr.mxu0 0.0
        %2682 = vmatpush2.xpose.msra.mxu0 0.0
        %2683 = vmatprep.subr.mxu0 0.0
        %2684 = vmatpush2.xpose.msra.mxu0 0.0
        %2685 = vmatprep.subr.mxu0 0.0
        %2686 = vmatpush2.xpose.msra.mxu0 0.0
        %2687 = vmatprep.subr.mxu0 0.0
        %2688 = vmatpush2.xpose.msra.mxu0 0.0
        %2689 = vmatprep.subr.mxu0 0.0
        %2690 = vmatpush2.xpose.msra.mxu0 0.0
        %2691 = vmatprep.subr.mxu0 0.0
        %2692 = vmatpush2.xpose.msra.mxu0 0.0
        %2693 = vmatprep.subr.mxu0 0.0
        %2694 = vmatpush2.xpose.msra.mxu0 0.0
        %2695 = vmatprep.subr.mxu0 0.0
        %2696 = vmatpush2.xpose.msra.mxu0 0.0
        %2697 = vmatprep.subr.mxu0 0.0
        %2698 = vmatpush2.xpose.msra.mxu0 0.0
        %2699 = vmatprep.subr.mxu0 0.0
        %2700 = vmatpush2.xpose.msra.mxu0 0.0
        %2701 = vmatprep.subr.mxu0 0.0
        %2702 = vmatpush2.xpose.msra.mxu0 0.0
        %2703 = vmatprep.subr.mxu0 0.0
        %2704 = vmatpush2.xpose.msra.mxu0 0.0
        %2705 = vmatprep.subr.mxu0 0.0
        %2706 = vmatpush2.xpose.msra.mxu0 0.0
        %2707 = vmatprep.mubr.f32.mxu0 0.0
        %2708 = vmatmul.mubr.f32.gmra.mxu0 %v1874
        %v2709 = vpop.f32.mrf.mxu0
        %v2710 = vadd.f32 0.0, %v2709
        %v2711 = vpop.f32.mrf.mxu0
        %2712 = vmatprep.mubr.f32.mxu0 0.0
        %2713 = vmatmul.mubr.f32.gmra.mxu0 %v1880
        %v2714 = vpop.f32.mrf.mxu0
        %v2715 = vadd.f32 0.0, %v2714
        %v2716 = vpop.f32.mrf.mxu0
        %2717 = vmatprep.mubr.f32.mxu0 0.0
        %2718 = vmatmul.mubr.f32.gmra.mxu0 %v1886
        %v2719 = vpop.f32.mrf.mxu0
        %v2720 = vadd.f32 0.0, %v2719
        %v2721 = vpop.f32.mrf.mxu0
        %2722 = vmatprep.mubr.f32.mxu0 0.0
        %2723 = vmatmul.mubr.f32.gmra.mxu0 %v1892
        %v2724 = vpop.f32.mrf.mxu0
        %v2725 = vadd.f32 0.0, %v2724
        %v2726 = vpop.f32.mrf.mxu0
        %2727 = vmatprep.mubr.f32.mxu0 0.0
        %2728 = vmatmul.mubr.f32.gmra.mxu0 %v1898
        %v2729 = vpop.f32.mrf.mxu0
        %v2730 = vadd.f32 0.0, %v2729
        %v2731 = vpop.f32.mrf.mxu0
        %2732 = vmatprep.mubr.f32.mxu0 0.0
        %2733 = vmatmul.mubr.f32.gmra.mxu0 %v1904
        %v2734 = vpop.f32.mrf.mxu0
        %v2735 = vadd.f32 0.0, %v2734
        %v2736 = vpop.f32.mrf.mxu0
        %2737 = vmatprep.mubr.f32.mxu0 0.0
        %2738 = vmatmul.mubr.f32.gmra.mxu0 %v1910
        %v2739 = vpop.f32.mrf.mxu0
        %v2740 = vadd.f32 0.0, %v2739
        %v2741 = vpop.f32.mrf.mxu0
        %2742 = vmatprep.mubr.f32.mxu0 0.0
        %2743 = vmatmul.mubr.f32.gmra.mxu0 %v1916
        %v2744 = vpop.f32.mrf.mxu0
        %v2745 = vadd.f32 0.0, %v2744
        %v2746 = vpop.f32.mrf.mxu0
        %2747 = vmatprep.mubr.f32.mxu0 0.0
        %2748 = vmatmul.mubr.f32.gmra.mxu0 %v1922
        %v2749 = vpop.f32.mrf.mxu0
        %v2750 = vadd.f32 0.0, %v2749
        %v2751 = vpop.f32.mrf.mxu0
        %2752 = vmatprep.mubr.f32.mxu0 0.0
        %2753 = vmatmul.mubr.f32.gmra.mxu0 %v1928
        %v2754 = vpop.f32.mrf.mxu0
        %v2755 = vadd.f32 0.0, %v2754
        %v2756 = vpop.f32.mrf.mxu0
        %2757 = vmatprep.mubr.f32.mxu0 0.0
        %2758 = vmatmul.mubr.f32.gmra.mxu0 %v1934
        %v2759 = vpop.f32.mrf.mxu0
        %v2760 = vadd.f32 0.0, %v2759
        %v2761 = vpop.f32.mrf.mxu0
        %2762 = vmatprep.mubr.f32.mxu0 0.0
        %2763 = vmatmul.mubr.f32.gmra.mxu0 %v1940
        %v2764 = vpop.f32.mrf.mxu0
        %v2765 = vadd.f32 0.0, %v2764
        %v2766 = vpop.f32.mrf.mxu0
        %2767 = vmatprep.mubr.f32.mxu0 0.0
        %2768 = vmatmul.mubr.f32.gmra.mxu0 %v1946
        %v2769 = vpop.f32.mrf.mxu0
        %v2770 = vadd.f32 0.0, %v2769
        %v2771 = vpop.f32.mrf.mxu0
        %2772 = vmatprep.mubr.f32.mxu0 0.0
        %2773 = vmatmul.mubr.f32.gmra.mxu0 %v1952
        %v2774 = vpop.f32.mrf.mxu0
        %v2775 = vadd.f32 0.0, %v2774
        %v2776 = vpop.f32.mrf.mxu0
        %2777 = vmatprep.mubr.f32.mxu0 0.0
        %2778 = vmatmul.mubr.f32.gmra.mxu0 %v1958
        %v2779 = vpop.f32.mrf.mxu0
        %v2780 = vadd.f32 0.0, %v2779
        %v2781 = vpop.f32.mrf.mxu0
        %2782 = vmatprep.mubr.f32.mxu0 0.0
        %2783 = vmatmul.mubr.f32.gmra.mxu0 %v1964
        %v2784 = vpop.f32.mrf.mxu0
        %v2785 = vadd.f32 0.0, %v2784
        %v2786 = vpop.f32.mrf.mxu0
        %2787 = vdwg.mxu0
        %v2788 = vmul.f32 %v2565, 0.088388346
        %v2789 = vmul.f32 %v2570, 0.088388346
        %v2790 = vmul.f32 %v2575, 0.088388346
        %v2791 = vmul.f32 %v2580, 0.088388346
        %v2792 = vmul.f32 %v2585, 0.088388346
        %v2793 = vmul.f32 %v2590, 0.088388346
        %v2794 = vmul.f32 %v2595, 0.088388346
        %v2795 = vmul.f32 %v2600, 0.088388346
        %v2796 = vmul.f32 %v2605, 0.088388346
        %v2797 = vmul.f32 %v2610, 0.088388346
        %v2798 = vmul.f32 %v2615, 0.088388346
        %v2799 = vmul.f32 %v2620, 0.088388346
        %v2800 = vmul.f32 %v2625, 0.088388346
        %v2801 = vmul.f32 %v2630, 0.088388346
        %v2802 = vmul.f32 %v2635, 0.088388346
        %v2803 = vmul.f32 %v2640, 0.088388346
        %v2804 = vmul.f32 %v2710, 0.088388346
        %v2805 = vmul.f32 %v2715, 0.088388346
        %v2806 = vmul.f32 %v2720, 0.088388346
        %v2807 = vmul.f32 %v2725, 0.088388346
        %v2808 = vmul.f32 %v2730, 0.088388346
        %v2809 = vmul.f32 %v2735, 0.088388346
        %v2810 = vmul.f32 %v2740, 0.088388346
        %v2811 = vmul.f32 %v2745, 0.088388346
        %v2812 = vmul.f32 %v2750, 0.088388346
        %v2813 = vmul.f32 %v2755, 0.088388346
        %v2814 = vmul.f32 %v2760, 0.088388346
        %v2815 = vmul.f32 %v2765, 0.088388346
        %v2816 = vmul.f32 %v2770, 0.088388346
        %v2817 = vmul.f32 %v2775, 0.088388346
        %v2818 = vmul.f32 %v2780, 0.088388346
        %v2819 = vmul.f32 %v2785, 0.088388346
        %v2820 = vadd.f32 %v2788, %v2482
        %v2821 = vadd.f32 %v2789, %v2483
        %v2822 = vadd.f32 %v2790, %v2484
        %v2823 = vadd.f32 %v2791, %v2485
        %v2824 = vadd.f32 %v2792, %v2486
        %v2825 = vadd.f32 %v2793, %v2487
        %v2826 = vadd.f32 %v2794, %v2488
        %v2827 = vadd.f32 %v2795, %v2489
        %v2828 = vadd.f32 %v2796, %v2490
        %v2829 = vadd.f32 %v2797, %v2491
        %v2830 = vadd.f32 %v2798, %v2492
        %v2831 = vadd.f32 %v2799, %v2493
        %v2832 = vadd.f32 %v2800, %v2494
        %v2833 = vadd.f32 %v2801, %v2495
        %v2834 = vadd.f32 %v2802, %v2496
        %v2835 = vadd.f32 %v2803, %v2497
        %v2836 = vadd.f32 %v2804, %v2482
        %v2837 = vadd.f32 %v2805, %v2483
        %v2838 = vadd.f32 %v2806, %v2484
        %v2839 = vadd.f32 %v2807, %v2485
        %v2840 = vadd.f32 %v2808, %v2486
        %v2841 = vadd.f32 %v2809, %v2487
        %v2842 = vadd.f32 %v2810, %v2488
        %v2843 = vadd.f32 %v2811, %v2489
        %v2844 = vadd.f32 %v2812, %v2490
        %v2845 = vadd.f32 %v2813, %v2491
        %v2846 = vadd.f32 %v2814, %v2492
        %v2847 = vadd.f32 %v2815, %v2493
        %v2848 = vadd.f32 %v2816, %v2494
        %v2849 = vadd.f32 %v2817, %v2495
        %v2850 = vadd.f32 %v2818, %v2496
        %v2851 = vadd.f32 %v2819, %v2497
        %2852 = vmax.xlane.f32.xlu0 %v2820
        %v2853 = vpop.xlane.xlu0 %2852
        %2854 = vmax.xlane.f32.xlu0 %v2821
        %v2855 = vpop.xlane.xlu0 %2854
        %2856 = vmax.xlane.f32.xlu0 %v2822
        %v2857 = vpop.xlane.xlu0 %2856
        %2858 = vmax.xlane.f32.xlu0 %v2823
        %v2859 = vpop.xlane.xlu0 %2858
        %2860 = vmax.xlane.f32.xlu0 %v2824
        %v2861 = vpop.xlane.xlu0 %2860
        %2862 = vmax.xlane.f32.xlu0 %v2825
        %v2863 = vpop.xlane.xlu0 %2862
        %2864 = vmax.xlane.f32.xlu0 %v2826
        %v2865 = vpop.xlane.xlu0 %2864
        %2866 = vmax.xlane.f32.xlu0 %v2827
        %v2867 = vpop.xlane.xlu0 %2866
        %2868 = vmax.xlane.f32.xlu0 %v2828
        %v2869 = vpop.xlane.xlu0 %2868
        %2870 = vmax.xlane.f32.xlu0 %v2829
        %v2871 = vpop.xlane.xlu0 %2870
        %2872 = vmax.xlane.f32.xlu0 %v2830
        %v2873 = vpop.xlane.xlu0 %2872
        %2874 = vmax.xlane.f32.xlu0 %v2831
        %v2875 = vpop.xlane.xlu0 %2874
        %2876 = vmax.xlane.f32.xlu0 %v2832
        %v2877 = vpop.xlane.xlu0 %2876
        %2878 = vmax.xlane.f32.xlu0 %v2833
        %v2879 = vpop.xlane.xlu0 %2878
        %2880 = vmax.xlane.f32.xlu0 %v2834
        %v2881 = vpop.xlane.xlu0 %2880
        %2882 = vmax.xlane.f32.xlu0 %v2835
        %v2883 = vpop.xlane.xlu0 %2882
        %2884 = vmax.xlane.f32.xlu0 %v2836
        %v2885 = vpop.xlane.xlu0 %2884
        %2886 = vmax.xlane.f32.xlu0 %v2837
        %v2887 = vpop.xlane.xlu0 %2886
        %2888 = vmax.xlane.f32.xlu0 %v2838
        %v2889 = vpop.xlane.xlu0 %2888
        %2890 = vmax.xlane.f32.xlu0 %v2839
        %v2891 = vpop.xlane.xlu0 %2890
        %2892 = vmax.xlane.f32.xlu0 %v2840
        %v2893 = vpop.xlane.xlu0 %2892
        %2894 = vmax.xlane.f32.xlu0 %v2841
        %v2895 = vpop.xlane.xlu0 %2894
        %2896 = vmax.xlane.f32.xlu0 %v2842
        %v2897 = vpop.xlane.xlu0 %2896
        %2898 = vmax.xlane.f32.xlu0 %v2843
        %v2899 = vpop.xlane.xlu0 %2898
        %2900 = vmax.xlane.f32.xlu0 %v2844
        %v2901 = vpop.xlane.xlu0 %2900
        %2902 = vmax.xlane.f32.xlu0 %v2845
        %v2903 = vpop.xlane.xlu0 %2902
        %2904 = vmax.xlane.f32.xlu0 %v2846
        %v2905 = vpop.xlane.xlu0 %2904
        %2906 = vmax.xlane.f32.xlu0 %v2847
        %v2907 = vpop.xlane.xlu0 %2906
        %2908 = vmax.xlane.f32.xlu0 %v2848
        %v2909 = vpop.xlane.xlu0 %2908
        %2910 = vmax.xlane.f32.xlu0 %v2849
        %v2911 = vpop.xlane.xlu0 %2910
        %2912 = vmax.xlane.f32.xlu0 %v2850
        %v2913 = vpop.xlane.xlu0 %2912
        %2914 = vmax.xlane.f32.xlu0 %v2851
        %v2915 = vpop.xlane.xlu0 %2914
        %v2916 = vsub.f32 %v2820, %v2853
        %v2917 = vsub.f32 %v2821, %v2855
        %v2918 = vsub.f32 %v2822, %v2857
        %v2919 = vsub.f32 %v2823, %v2859
        %v2920 = vsub.f32 %v2824, %v2861
        %v2921 = vsub.f32 %v2825, %v2863
        %v2922 = vsub.f32 %v2826, %v2865
        %v2923 = vsub.f32 %v2827, %v2867
        %v2924 = vsub.f32 %v2828, %v2869
        %v2925 = vsub.f32 %v2829, %v2871
        %v2926 = vsub.f32 %v2830, %v2873
        %v2927 = vsub.f32 %v2831, %v2875
        %v2928 = vsub.f32 %v2832, %v2877
        %v2929 = vsub.f32 %v2833, %v2879
        %v2930 = vsub.f32 %v2834, %v2881
        %v2931 = vsub.f32 %v2835, %v2883
        %v2932 = vsub.f32 %v2836, %v2885
        %v2933 = vsub.f32 %v2837, %v2887
        %v2934 = vsub.f32 %v2838, %v2889
        %v2935 = vsub.f32 %v2839, %v2891
        %v2936 = vsub.f32 %v2840, %v2893
        %v2937 = vsub.f32 %v2841, %v2895
        %v2938 = vsub.f32 %v2842, %v2897
        %v2939 = vsub.f32 %v2843, %v2899
        %v2940 = vsub.f32 %v2844, %v2901
        %v2941 = vsub.f32 %v2845, %v2903
        %v2942 = vsub.f32 %v2846, %v2905
        %v2943 = vsub.f32 %v2847, %v2907
        %v2944 = vsub.f32 %v2848, %v2909
        %v2945 = vsub.f32 %v2849, %v2911
        %v2946 = vsub.f32 %v2850, %v2913
        %v2947 = vsub.f32 %v2851, %v2915
        %v2948 = vmul.f32 %v2916, 1.442695
        %v2949 = vpow.pop %v2948
        %v2950 = vmul.f32 %v2917, 1.442695
        %v2951 = vpow.pop %v2950
        %v2952 = vmul.f32 %v2918, 1.442695
        %v2953 = vpow.pop %v2952
        %v2954 = vmul.f32 %v2919, 1.442695
        %v2955 = vpow.pop %v2954
        %v2956 = vmul.f32 %v2920, 1.442695
        %v2957 = vpow.pop %v2956
        %v2958 = vmul.f32 %v2921, 1.442695
        %v2959 = vpow.pop %v2958
        %v2960 = vmul.f32 %v2922, 1.442695
        %v2961 = vpow.pop %v2960
        %v2962 = vmul.f32 %v2923, 1.442695
        %v2963 = vpow.pop %v2962
        %v2964 = vmul.f32 %v2924, 1.442695
        %v2965 = vpow.pop %v2964
        %v2966 = vmul.f32 %v2925, 1.442695
        %v2967 = vpow.pop %v2966
        %v2968 = vmul.f32 %v2926, 1.442695
        %v2969 = vpow.pop %v2968
        %v2970 = vmul.f32 %v2927, 1.442695
        %v2971 = vpow.pop %v2970
        %v2972 = vmul.f32 %v2928, 1.442695
        %v2973 = vpow.pop %v2972
        %v2974 = vmul.f32 %v2929, 1.442695
        %v2975 = vpow.pop %v2974
        %v2976 = vmul.f32 %v2930, 1.442695
        %v2977 = vpow.pop %v2976
        %v2978 = vmul.f32 %v2931, 1.442695
        %v2979 = vpow.pop %v2978
        %v2980 = vmul.f32 %v2932, 1.442695
        %v2981 = vpow.pop %v2980
        %v2982 = vmul.f32 %v2933, 1.442695
        %v2983 = vpow.pop %v2982
        %v2984 = vmul.f32 %v2934, 1.442695
        %v2985 = vpow.pop %v2984
        %v2986 = vmul.f32 %v2935, 1.442695
        %v2987 = vpow.pop %v2986
        %v2988 = vmul.f32 %v2936, 1.442695
        %v2989 = vpow.pop %v2988
        %v2990 = vmul.f32 %v2937, 1.442695
        %v2991 = vpow.pop %v2990
        %v2992 = vmul.f32 %v2938, 1.442695
        %v2993 = vpow.pop %v2992
        %v2994 = vmul.f32 %v2939, 1.442695
        %v2995 = vpow.pop %v2994
        %v2996 = vmul.f32 %v2940, 1.442695
        %v2997 = vpow.pop %v2996
        %v2998 = vmul.f32 %v2941, 1.442695
        %v2999 = vpow.pop %v2998
        %v3000 = vmul.f32 %v2942, 1.442695
        %v3001 = vpow.pop %v3000
        %v3002 = vmul.f32 %v2943, 1.442695
        %v3003 = vpow.pop %v3002
        %v3004 = vmul.f32 %v2944, 1.442695
        %v3005 = vpow.pop %v3004
        %v3006 = vmul.f32 %v2945, 1.442695
        %v3007 = vpow.pop %v3006
        %v3008 = vmul.f32 %v2946, 1.442695
        %v3009 = vpow.pop %v3008
        %v3010 = vmul.f32 %v2947, 1.442695
        %v3011 = vpow.pop %v3010
        %3012 = vadd.xlane.f32.xlu0 %v2949
        %v3013 = vpop.xlane.xlu0 %3012
        %3014 = vadd.xlane.f32.xlu0 %v2951
        %v3015 = vpop.xlane.xlu0 %3014
        %3016 = vadd.xlane.f32.xlu0 %v2953
        %v3017 = vpop.xlane.xlu0 %3016
        %3018 = vadd.xlane.f32.xlu0 %v2955
        %v3019 = vpop.xlane.xlu0 %3018
        %3020 = vadd.xlane.f32.xlu0 %v2957
        %v3021 = vpop.xlane.xlu0 %3020
        %3022 = vadd.xlane.f32.xlu0 %v2959
        %v3023 = vpop.xlane.xlu0 %3022
        %3024 = vadd.xlane.f32.xlu0 %v2961
        %v3025 = vpop.xlane.xlu0 %3024
        %3026 = vadd.xlane.f32.xlu0 %v2963
        %v3027 = vpop.xlane.xlu0 %3026
        %3028 = vadd.xlane.f32.xlu0 %v2965
        %v3029 = vpop.xlane.xlu0 %3028
        %3030 = vadd.xlane.f32.xlu0 %v2967
        %v3031 = vpop.xlane.xlu0 %3030
        %3032 = vadd.xlane.f32.xlu0 %v2969
        %v3033 = vpop.xlane.xlu0 %3032
        %3034 = vadd.xlane.f32.xlu0 %v2971
        %v3035 = vpop.xlane.xlu0 %3034
        %3036 = vadd.xlane.f32.xlu0 %v2973
        %v3037 = vpop.xlane.xlu0 %3036
        %3038 = vadd.xlane.f32.xlu0 %v2975
        %v3039 = vpop.xlane.xlu0 %3038
        %3040 = vadd.xlane.f32.xlu0 %v2977
        %v3041 = vpop.xlane.xlu0 %3040
        %3042 = vadd.xlane.f32.xlu0 %v2979
        %v3043 = vpop.xlane.xlu0 %3042
        %3044 = vadd.xlane.f32.xlu0 %v2981
        %v3045 = vpop.xlane.xlu0 %3044
        %3046 = vadd.xlane.f32.xlu0 %v2983
        %v3047 = vpop.xlane.xlu0 %3046
        %3048 = vadd.xlane.f32.xlu0 %v2985
        %v3049 = vpop.xlane.xlu0 %3048
        %3050 = vadd.xlane.f32.xlu0 %v2987
        %v3051 = vpop.xlane.xlu0 %3050
        %3052 = vadd.xlane.f32.xlu0 %v2989
        %v3053 = vpop.xlane.xlu0 %3052
        %3054 = vadd.xlane.f32.xlu0 %v2991
        %v3055 = vpop.xlane.xlu0 %3054
        %3056 = vadd.xlane.f32.xlu0 %v2993
        %v3057 = vpop.xlane.xlu0 %3056
        %3058 = vadd.xlane.f32.xlu0 %v2995
        %v3059 = vpop.xlane.xlu0 %3058
        %3060 = vadd.xlane.f32.xlu0 %v2997
        %v3061 = vpop.xlane.xlu0 %3060
        %3062 = vadd.xlane.f32.xlu0 %v2999
        %v3063 = vpop.xlane.xlu0 %3062
        %3064 = vadd.xlane.f32.xlu0 %v3001
        %v3065 = vpop.xlane.xlu0 %3064
        %3066 = vadd.xlane.f32.xlu0 %v3003
        %v3067 = vpop.xlane.xlu0 %3066
        %3068 = vadd.xlane.f32.xlu0 %v3005
        %v3069 = vpop.xlane.xlu0 %3068
        %3070 = vadd.xlane.f32.xlu0 %v3007
        %v3071 = vpop.xlane.xlu0 %3070
        %3072 = vadd.xlane.f32.xlu0 %v3009
        %v3073 = vpop.xlane.xlu0 %3072
        %3074 = vadd.xlane.f32.xlu0 %v3011
        %v3075 = vpop.xlane.xlu0 %3074
        %v3076 = vrcp.pop %v3013
        %v3077 = vmul.f32 %v2949, %v3076
        %v3078 = vrcp.pop %v3015
        %v3079 = vmul.f32 %v2951, %v3078
        %v3080 = vrcp.pop %v3017
        %v3081 = vmul.f32 %v2953, %v3080
        %v3082 = vrcp.pop %v3019
        %v3083 = vmul.f32 %v2955, %v3082
        %v3084 = vrcp.pop %v3021
        %v3085 = vmul.f32 %v2957, %v3084
        %v3086 = vrcp.pop %v3023
        %v3087 = vmul.f32 %v2959, %v3086
        %v3088 = vrcp.pop %v3025
        %v3089 = vmul.f32 %v2961, %v3088
        %v3090 = vrcp.pop %v3027
        %v3091 = vmul.f32 %v2963, %v3090
        %v3092 = vrcp.pop %v3029
        %v3093 = vmul.f32 %v2965, %v3092
        %v3094 = vrcp.pop %v3031
        %v3095 = vmul.f32 %v2967, %v3094
        %v3096 = vrcp.pop %v3033
        %v3097 = vmul.f32 %v2969, %v3096
        %v3098 = vrcp.pop %v3035
        %v3099 = vmul.f32 %v2971, %v3098
        %v3100 = vrcp.pop %v3037
        %v3101 = vmul.f32 %v2973, %v3100
        %v3102 = vrcp.pop %v3039
        %v3103 = vmul.f32 %v2975, %v3102
        %v3104 = vrcp.pop %v3041
        %v3105 = vmul.f32 %v2977, %v3104
        %v3106 = vrcp.pop %v3043
        %v3107 = vmul.f32 %v2979, %v3106
        %v3108 = vrcp.pop %v3045
        %v3109 = vmul.f32 %v2981, %v3108
        %v3110 = vrcp.pop %v3047
        %v3111 = vmul.f32 %v2983, %v3110
        %v3112 = vrcp.pop %v3049
        %v3113 = vmul.f32 %v2985, %v3112
        %v3114 = vrcp.pop %v3051
        %v3115 = vmul.f32 %v2987, %v3114
        %v3116 = vrcp.pop %v3053
        %v3117 = vmul.f32 %v2989, %v3116
        %v3118 = vrcp.pop %v3055
        %v3119 = vmul.f32 %v2991, %v3118
        %v3120 = vrcp.pop %v3057
        %v3121 = vmul.f32 %v2993, %v3120
        %v3122 = vrcp.pop %v3059
        %v3123 = vmul.f32 %v2995, %v3122
        %v3124 = vrcp.pop %v3061
        %v3125 = vmul.f32 %v2997, %v3124
        %v3126 = vrcp.pop %v3063
        %v3127 = vmul.f32 %v2999, %v3126
        %v3128 = vrcp.pop %v3065
        %v3129 = vmul.f32 %v3001, %v3128
        %v3130 = vrcp.pop %v3067
        %v3131 = vmul.f32 %v3003, %v3130
        %v3132 = vrcp.pop %v3069
        %v3133 = vmul.f32 %v3005, %v3132
        %v3134 = vrcp.pop %v3071
        %v3135 = vmul.f32 %v3007, %v3134
        %v3136 = vrcp.pop %v3073
        %v3137 = vmul.f32 %v3009, %v3136
        %v3138 = vrcp.pop %v3075
        %v3139 = vmul.f32 %v3011, %v3138
        %3140 = vmatprep.subr.mxu0 0.0
        %3141 = vmatpush1.msra.mxu0 %v2382
        %3142 = vmatprep.subr.mxu0 0.0
        %3143 = vmatpush1.msra.mxu0 %v2376
        %3144 = vmatprep.subr.mxu0 0.0
        %3145 = vmatpush1.msra.mxu0 %v2370
        %3146 = vmatprep.subr.mxu0 0.0
        %3147 = vmatpush1.msra.mxu0 %v2364
        %3148 = vmatprep.subr.mxu0 0.0
        %3149 = vmatpush1.msra.mxu0 %v2358
        %3150 = vmatprep.subr.mxu0 0.0
        %3151 = vmatpush1.msra.mxu0 %v2352
        %3152 = vmatprep.subr.mxu0 0.0
        %3153 = vmatpush1.msra.mxu0 %v2346
        %3154 = vmatprep.subr.mxu0 0.0
        %3155 = vmatpush1.msra.mxu0 %v2340
        %3156 = vmatprep.subr.mxu0 0.0
        %3157 = vmatpush1.msra.mxu0 %v2334
        %3158 = vmatprep.subr.mxu0 0.0
        %3159 = vmatpush1.msra.mxu0 %v2328
        %3160 = vmatprep.subr.mxu0 0.0
        %3161 = vmatpush1.msra.mxu0 %v2322
        %3162 = vmatprep.subr.mxu0 0.0
        %3163 = vmatpush1.msra.mxu0 %v2316
        %3164 = vmatprep.subr.mxu0 0.0
        %3165 = vmatpush1.msra.mxu0 %v2310
        %3166 = vmatprep.subr.mxu0 0.0
        %3167 = vmatpush1.msra.mxu0 %v2304
        %3168 = vmatprep.subr.mxu0 0.0
        %3169 = vmatpush1.msra.mxu0 %v2298
        %3170 = vmatprep.subr.mxu0 0.0
        %3171 = vmatpush1.msra.mxu0 %v2292
        %3172 = vmatprep.subr.mxu0 0.0
        %3173 = vmatpush2.msra.mxu0 0.0
        %3174 = vmatprep.subr.mxu0 0.0
        %3175 = vmatpush2.msra.mxu0 0.0
        %3176 = vmatprep.subr.mxu0 0.0
        %3177 = vmatpush2.msra.mxu0 0.0
        %3178 = vmatprep.subr.mxu0 0.0
        %3179 = vmatpush2.msra.mxu0 0.0
        %3180 = vmatprep.subr.mxu0 0.0
        %3181 = vmatpush2.msra.mxu0 0.0
        %3182 = vmatprep.subr.mxu0 0.0
        %3183 = vmatpush2.msra.mxu0 0.0
        %3184 = vmatprep.subr.mxu0 0.0
        %3185 = vmatpush2.msra.mxu0 0.0
        %3186 = vmatprep.subr.mxu0 0.0
        %3187 = vmatpush2.msra.mxu0 0.0
        %3188 = vmatprep.subr.mxu0 0.0
        %3189 = vmatpush2.msra.mxu0 0.0
        %3190 = vmatprep.subr.mxu0 0.0
        %3191 = vmatpush2.msra.mxu0 0.0
        %3192 = vmatprep.subr.mxu0 0.0
        %3193 = vmatpush2.msra.mxu0 0.0
        %3194 = vmatprep.subr.mxu0 0.0
        %3195 = vmatpush2.msra.mxu0 0.0
        %3196 = vmatprep.subr.mxu0 0.0
        %3197 = vmatpush2.msra.mxu0 0.0
        %3198 = vmatprep.subr.mxu0 0.0
        %3199 = vmatpush2.msra.mxu0 0.0
        %3200 = vmatprep.subr.mxu0 0.0
        %3201 = vmatpush2.msra.mxu0 0.0
        %3202 = vmatprep.subr.mxu0 0.0
        %3203 = vmatpush2.msra.mxu0 0.0
        %3204 = vmatprep.mubr.f32.mxu0 0.0
        %3205 = vmatmul.mubr.f32.gmra.mxu0 %v3077
        %v3206 = vpop.f32.mrf.mxu0
        %v3207 = vadd.f32 0.0, %v3206
        %v3208 = vpop.f32.mrf.mxu0
        %3209 = vmatprep.mubr.f32.mxu0 0.0
        %3210 = vmatmul.mubr.f32.gmra.mxu0 %v3079
        %v3211 = vpop.f32.mrf.mxu0
        %v3212 = vadd.f32 0.0, %v3211
        %v3213 = vpop.f32.mrf.mxu0
        %3214 = vmatprep.mubr.f32.mxu0 0.0
        %3215 = vmatmul.mubr.f32.gmra.mxu0 %v3081
        %v3216 = vpop.f32.mrf.mxu0
        %v3217 = vadd.f32 0.0, %v3216
        %v3218 = vpop.f32.mrf.mxu0
        %3219 = vmatprep.mubr.f32.mxu0 0.0
        %3220 = vmatmul.mubr.f32.gmra.mxu0 %v3083
        %v3221 = vpop.f32.mrf.mxu0
        %v3222 = vadd.f32 0.0, %v3221
        %v3223 = vpop.f32.mrf.mxu0
        %3224 = vmatprep.mubr.f32.mxu0 0.0
        %3225 = vmatmul.mubr.f32.gmra.mxu0 %v3085
        %v3226 = vpop.f32.mrf.mxu0
        %v3227 = vadd.f32 0.0, %v3226
        %v3228 = vpop.f32.mrf.mxu0
        %3229 = vmatprep.mubr.f32.mxu0 0.0
        %3230 = vmatmul.mubr.f32.gmra.mxu0 %v3087
        %v3231 = vpop.f32.mrf.mxu0
        %v3232 = vadd.f32 0.0, %v3231
        %v3233 = vpop.f32.mrf.mxu0
        %3234 = vmatprep.mubr.f32.mxu0 0.0
        %3235 = vmatmul.mubr.f32.gmra.mxu0 %v3089
        %v3236 = vpop.f32.mrf.mxu0
        %v3237 = vadd.f32 0.0, %v3236
        %v3238 = vpop.f32.mrf.mxu0
        %3239 = vmatprep.mubr.f32.mxu0 0.0
        %3240 = vmatmul.mubr.f32.gmra.mxu0 %v3091
        %v3241 = vpop.f32.mrf.mxu0
        %v3242 = vadd.f32 0.0, %v3241
        %v3243 = vpop.f32.mrf.mxu0
        %3244 = vmatprep.mubr.f32.mxu0 0.0
        %3245 = vmatmul.mubr.f32.gmra.mxu0 %v3093
        %v3246 = vpop.f32.mrf.mxu0
        %v3247 = vadd.f32 0.0, %v3246
        %v3248 = vpop.f32.mrf.mxu0
        %3249 = vmatprep.mubr.f32.mxu0 0.0
        %3250 = vmatmul.mubr.f32.gmra.mxu0 %v3095
        %v3251 = vpop.f32.mrf.mxu0
        %v3252 = vadd.f32 0.0, %v3251
        %v3253 = vpop.f32.mrf.mxu0
        %3254 = vmatprep.mubr.f32.mxu0 0.0
        %3255 = vmatmul.mubr.f32.gmra.mxu0 %v3097
        %v3256 = vpop.f32.mrf.mxu0
        %v3257 = vadd.f32 0.0, %v3256
        %v3258 = vpop.f32.mrf.mxu0
        %3259 = vmatprep.mubr.f32.mxu0 0.0
        %3260 = vmatmul.mubr.f32.gmra.mxu0 %v3099
        %v3261 = vpop.f32.mrf.mxu0
        %v3262 = vadd.f32 0.0, %v3261
        %v3263 = vpop.f32.mrf.mxu0
        %3264 = vmatprep.mubr.f32.mxu0 0.0
        %3265 = vmatmul.mubr.f32.gmra.mxu0 %v3101
        %v3266 = vpop.f32.mrf.mxu0
        %v3267 = vadd.f32 0.0, %v3266
        %v3268 = vpop.f32.mrf.mxu0
        %3269 = vmatprep.mubr.f32.mxu0 0.0
        %3270 = vmatmul.mubr.f32.gmra.mxu0 %v3103
        %v3271 = vpop.f32.mrf.mxu0
        %v3272 = vadd.f32 0.0, %v3271
        %v3273 = vpop.f32.mrf.mxu0
        %3274 = vmatprep.mubr.f32.mxu0 0.0
        %3275 = vmatmul.mubr.f32.gmra.mxu0 %v3105
        %v3276 = vpop.f32.mrf.mxu0
        %v3277 = vadd.f32 0.0, %v3276
        %v3278 = vpop.f32.mrf.mxu0
        %3279 = vmatprep.mubr.f32.mxu0 0.0
        %3280 = vmatmul.mubr.f32.gmra.mxu0 %v3107
        %v3281 = vpop.f32.mrf.mxu0
        %v3282 = vadd.f32 0.0, %v3281
        %v3283 = vpop.f32.mrf.mxu0
        %3284 = vdwg.mxu0
        %3285 = vmatprep.subr.mxu0 0.0
        %3286 = vmatpush1.msra.mxu0 %v2478
        %3287 = vmatprep.subr.mxu0 0.0
        %3288 = vmatpush1.msra.mxu0 %v2472
        %3289 = vmatprep.subr.mxu0 0.0
        %3290 = vmatpush1.msra.mxu0 %v2466
        %3291 = vmatprep.subr.mxu0 0.0
        %3292 = vmatpush1.msra.mxu0 %v2460
        %3293 = vmatprep.subr.mxu0 0.0
        %3294 = vmatpush1.msra.mxu0 %v2454
        %3295 = vmatprep.subr.mxu0 0.0
        %3296 = vmatpush1.msra.mxu0 %v2448
        %3297 = vmatprep.subr.mxu0 0.0
        %3298 = vmatpush1.msra.mxu0 %v2442
        %3299 = vmatprep.subr.mxu0 0.0
        %3300 = vmatpush1.msra.mxu0 %v2436
        %3301 = vmatprep.subr.mxu0 0.0
        %3302 = vmatpush1.msra.mxu0 %v2430
        %3303 = vmatprep.subr.mxu0 0.0
        %3304 = vmatpush1.msra.mxu0 %v2424
        %3305 = vmatprep.subr.mxu0 0.0
        %3306 = vmatpush1.msra.mxu0 %v2418
        %3307 = vmatprep.subr.mxu0 0.0
        %3308 = vmatpush1.msra.mxu0 %v2412
        %3309 = vmatprep.subr.mxu0 0.0
        %3310 = vmatpush1.msra.mxu0 %v2406
        %3311 = vmatprep.subr.mxu0 0.0
        %3312 = vmatpush1.msra.mxu0 %v2400
        %3313 = vmatprep.subr.mxu0 0.0
        %3314 = vmatpush1.msra.mxu0 %v2394
        %3315 = vmatprep.subr.mxu0 0.0
        %3316 = vmatpush1.msra.mxu0 %v2388
        %3317 = vmatprep.subr.mxu0 0.0
        %3318 = vmatpush2.msra.mxu0 0.0
        %3319 = vmatprep.subr.mxu0 0.0
        %3320 = vmatpush2.msra.mxu0 0.0
        %3321 = vmatprep.subr.mxu0 0.0
        %3322 = vmatpush2.msra.mxu0 0.0
        %3323 = vmatprep.subr.mxu0 0.0
        %3324 = vmatpush2.msra.mxu0 0.0
        %3325 = vmatprep.subr.mxu0 0.0
        %3326 = vmatpush2.msra.mxu0 0.0
        %3327 = vmatprep.subr.mxu0 0.0
        %3328 = vmatpush2.msra.mxu0 0.0
        %3329 = vmatprep.subr.mxu0 0.0
        %3330 = vmatpush2.msra.mxu0 0.0
        %3331 = vmatprep.subr.mxu0 0.0
        %3332 = vmatpush2.msra.mxu0 0.0
        %3333 = vmatprep.subr.mxu0 0.0
        %3334 = vmatpush2.msra.mxu0 0.0
        %3335 = vmatprep.subr.mxu0 0.0
        %3336 = vmatpush2.msra.mxu0 0.0
        %3337 = vmatprep.subr.mxu0 0.0
        %3338 = vmatpush2.msra.mxu0 0.0
        %3339 = vmatprep.subr.mxu0 0.0
        %3340 = vmatpush2.msra.mxu0 0.0
        %3341 = vmatprep.subr.mxu0 0.0
        %3342 = vmatpush2.msra.mxu0 0.0
        %3343 = vmatprep.subr.mxu0 0.0
        %3344 = vmatpush2.msra.mxu0 0.0
        %3345 = vmatprep.subr.mxu0 0.0
        %3346 = vmatpush2.msra.mxu0 0.0
        %3347 = vmatprep.subr.mxu0 0.0
        %3348 = vmatpush2.msra.mxu0 0.0
        %3349 = vmatprep.mubr.f32.mxu0 0.0
        %3350 = vmatmul.mubr.f32.gmra.mxu0 %v3109
        %v3351 = vpop.f32.mrf.mxu0
        %v3352 = vadd.f32 0.0, %v3351
        %v3353 = vpop.f32.mrf.mxu0
        %3354 = vmatprep.mubr.f32.mxu0 0.0
        %3355 = vmatmul.mubr.f32.gmra.mxu0 %v3111
        %v3356 = vpop.f32.mrf.mxu0
        %v3357 = vadd.f32 0.0, %v3356
        %v3358 = vpop.f32.mrf.mxu0
        %3359 = vmatprep.mubr.f32.mxu0 0.0
        %3360 = vmatmul.mubr.f32.gmra.mxu0 %v3113
        %v3361 = vpop.f32.mrf.mxu0
        %v3362 = vadd.f32 0.0, %v3361
        %v3363 = vpop.f32.mrf.mxu0
        %3364 = vmatprep.mubr.f32.mxu0 0.0
        %3365 = vmatmul.mubr.f32.gmra.mxu0 %v3115
        %v3366 = vpop.f32.mrf.mxu0
        %v3367 = vadd.f32 0.0, %v3366
        %v3368 = vpop.f32.mrf.mxu0
        %3369 = vmatprep.mubr.f32.mxu0 0.0
        %3370 = vmatmul.mubr.f32.gmra.mxu0 %v3117
        %v3371 = vpop.f32.mrf.mxu0
        %v3372 = vadd.f32 0.0, %v3371
        %v3373 = vpop.f32.mrf.mxu0
        %3374 = vmatprep.mubr.f32.mxu0 0.0
        %3375 = vmatmul.mubr.f32.gmra.mxu0 %v3119
        %v3376 = vpop.f32.mrf.mxu0
        %v3377 = vadd.f32 0.0, %v3376
        %v3378 = vpop.f32.mrf.mxu0
        %3379 = vmatprep.mubr.f32.mxu0 0.0
        %3380 = vmatmul.mubr.f32.gmra.mxu0 %v3121
        %v3381 = vpop.f32.mrf.mxu0
        %v3382 = vadd.f32 0.0, %v3381
        %v3383 = vpop.f32.mrf.mxu0
        %3384 = vmatprep.mubr.f32.mxu0 0.0
        %3385 = vmatmul.mubr.f32.gmra.mxu0 %v3123
        %v3386 = vpop.f32.mrf.mxu0
        %v3387 = vadd.f32 0.0, %v3386
        %v3388 = vpop.f32.mrf.mxu0
        %3389 = vmatprep.mubr.f32.mxu0 0.0
        %3390 = vmatmul.mubr.f32.gmra.mxu0 %v3125
        %v3391 = vpop.f32.mrf.mxu0
        %v3392 = vadd.f32 0.0, %v3391
        %v3393 = vpop.f32.mrf.mxu0
        %3394 = vmatprep.mubr.f32.mxu0 0.0
        %3395 = vmatmul.mubr.f32.gmra.mxu0 %v3127
        %v3396 = vpop.f32.mrf.mxu0
        %v3397 = vadd.f32 0.0, %v3396
        %v3398 = vpop.f32.mrf.mxu0
        %3399 = vmatprep.mubr.f32.mxu0 0.0
        %3400 = vmatmul.mubr.f32.gmra.mxu0 %v3129
        %v3401 = vpop.f32.mrf.mxu0
        %v3402 = vadd.f32 0.0, %v3401
        %v3403 = vpop.f32.mrf.mxu0
        %3404 = vmatprep.mubr.f32.mxu0 0.0
        %3405 = vmatmul.mubr.f32.gmra.mxu0 %v3131
        %v3406 = vpop.f32.mrf.mxu0
        %v3407 = vadd.f32 0.0, %v3406
        %v3408 = vpop.f32.mrf.mxu0
        %3409 = vmatprep.mubr.f32.mxu0 0.0
        %3410 = vmatmul.mubr.f32.gmra.mxu0 %v3133
        %v3411 = vpop.f32.mrf.mxu0
        %v3412 = vadd.f32 0.0, %v3411
        %v3413 = vpop.f32.mrf.mxu0
        %3414 = vmatprep.mubr.f32.mxu0 0.0
        %3415 = vmatmul.mubr.f32.gmra.mxu0 %v3135
        %v3416 = vpop.f32.mrf.mxu0
        %v3417 = vadd.f32 0.0, %v3416
        %v3418 = vpop.f32.mrf.mxu0
        %3419 = vmatprep.mubr.f32.mxu0 0.0
        %3420 = vmatmul.mubr.f32.gmra.mxu0 %v3137
        %v3421 = vpop.f32.mrf.mxu0
        %v3422 = vadd.f32 0.0, %v3421
        %v3423 = vpop.f32.mrf.mxu0
        %3424 = vmatprep.mubr.f32.mxu0 0.0
        %3425 = vmatmul.mubr.f32.gmra.mxu0 %v3139
        %v3426 = vpop.f32.mrf.mxu0
        %v3427 = vadd.f32 0.0, %v3426
        %v3428 = vpop.f32.mrf.mxu0
        %3429 = vdwg.mxu0
        %3430 = vmatprep.subr.mxu0 0.0
        %3431 = vmatpush1.xpose.msra.mxu0 %v2127
        %3432 = vmatprep.subr.mxu0 0.0
        %3433 = vmatpush1.xpose.msra.mxu0 %v2121
        %3434 = vmatprep.subr.mxu0 0.0
        %3435 = vmatpush1.xpose.msra.mxu0 %v2115
        %3436 = vmatprep.subr.mxu0 0.0
        %3437 = vmatpush1.xpose.msra.mxu0 %v2109
        %3438 = vmatprep.subr.mxu0 0.0
        %3439 = vmatpush1.xpose.msra.mxu0 %v2103
        %3440 = vmatprep.subr.mxu0 0.0
        %3441 = vmatpush1.xpose.msra.mxu0 %v2097
        %3442 = vmatprep.subr.mxu0 0.0
        %3443 = vmatpush1.xpose.msra.mxu0 %v2091
        %3444 = vmatprep.subr.mxu0 0.0
        %3445 = vmatpush1.xpose.msra.mxu0 %v2085
        %3446 = vmatprep.subr.mxu0 0.0
        %3447 = vmatpush1.xpose.msra.mxu0 %v2079
        %3448 = vmatprep.subr.mxu0 0.0
        %3449 = vmatpush1.xpose.msra.mxu0 %v2073
        %3450 = vmatprep.subr.mxu0 0.0
        %3451 = vmatpush1.xpose.msra.mxu0 %v2067
        %3452 = vmatprep.subr.mxu0 0.0
        %3453 = vmatpush1.xpose.msra.mxu0 %v2061
        %3454 = vmatprep.subr.mxu0 0.0
        %3455 = vmatpush1.xpose.msra.mxu0 %v2055
        %3456 = vmatprep.subr.mxu0 0.0
        %3457 = vmatpush1.xpose.msra.mxu0 %v2049
        %3458 = vmatprep.subr.mxu0 0.0
        %3459 = vmatpush1.xpose.msra.mxu0 %v2043
        %3460 = vmatprep.subr.mxu0 0.0
        %3461 = vmatpush1.xpose.msra.mxu0 %v2037
        %3462 = vmatprep.subr.mxu0 0.0
        %3463 = vmatpush2.xpose.msra.mxu0 0.0
        %3464 = vmatprep.subr.mxu0 0.0
        %3465 = vmatpush2.xpose.msra.mxu0 0.0
        %3466 = vmatprep.subr.mxu0 0.0
        %3467 = vmatpush2.xpose.msra.mxu0 0.0
        %3468 = vmatprep.subr.mxu0 0.0
        %3469 = vmatpush2.xpose.msra.mxu0 0.0
        %3470 = vmatprep.subr.mxu0 0.0
        %3471 = vmatpush2.xpose.msra.mxu0 0.0
        %3472 = vmatprep.subr.mxu0 0.0
        %3473 = vmatpush2.xpose.msra.mxu0 0.0
        %3474 = vmatprep.subr.mxu0 0.0
        %3475 = vmatpush2.xpose.msra.mxu0 0.0
        %3476 = vmatprep.subr.mxu0 0.0
        %3477 = vmatpush2.xpose.msra.mxu0 0.0
        %3478 = vmatprep.subr.mxu0 0.0
        %3479 = vmatpush2.xpose.msra.mxu0 0.0
        %3480 = vmatprep.subr.mxu0 0.0
        %3481 = vmatpush2.xpose.msra.mxu0 0.0
        %3482 = vmatprep.subr.mxu0 0.0
        %3483 = vmatpush2.xpose.msra.mxu0 0.0
        %3484 = vmatprep.subr.mxu0 0.0
        %3485 = vmatpush2.xpose.msra.mxu0 0.0
        %3486 = vmatprep.subr.mxu0 0.0
        %3487 = vmatpush2.xpose.msra.mxu0 0.0
        %3488 = vmatprep.subr.mxu0 0.0
        %3489 = vmatpush2.xpose.msra.mxu0 0.0
        %3490 = vmatprep.subr.mxu0 0.0
        %3491 = vmatpush2.xpose.msra.mxu0 0.0
        %3492 = vmatprep.subr.mxu0 0.0
        %3493 = vmatpush2.xpose.msra.mxu0 0.0
        %3494 = vmatprep.mubr.f32.mxu0 0.0
        %3495 = vmatmul.mubr.f32.gmra.mxu0 %v1780
        %v3496 = vpop.f32.mrf.mxu0
        %v3497 = vadd.f32 0.0, %v3496
        %v3498 = vpop.f32.mrf.mxu0
        %3499 = vmatprep.mubr.f32.mxu0 0.0
        %3500 = vmatmul.mubr.f32.gmra.mxu0 %v1786
        %v3501 = vpop.f32.mrf.mxu0
        %v3502 = vadd.f32 0.0, %v3501
        %v3503 = vpop.f32.mrf.mxu0
        %3504 = vmatprep.mubr.f32.mxu0 0.0
        %3505 = vmatmul.mubr.f32.gmra.mxu0 %v1792
        %v3506 = vpop.f32.mrf.mxu0
        %v3507 = vadd.f32 0.0, %v3506
        %v3508 = vpop.f32.mrf.mxu0
        %3509 = vmatprep.mubr.f32.mxu0 0.0
        %3510 = vmatmul.mubr.f32.gmra.mxu0 %v1798
        %v3511 = vpop.f32.mrf.mxu0
        %v3512 = vadd.f32 0.0, %v3511
        %v3513 = vpop.f32.mrf.mxu0
        %3514 = vmatprep.mubr.f32.mxu0 0.0
        %3515 = vmatmul.mubr.f32.gmra.mxu0 %v1804
        %v3516 = vpop.f32.mrf.mxu0
        %v3517 = vadd.f32 0.0, %v3516
        %v3518 = vpop.f32.mrf.mxu0
        %3519 = vmatprep.mubr.f32.mxu0 0.0
        %3520 = vmatmul.mubr.f32.gmra.mxu0 %v1810
        %v3521 = vpop.f32.mrf.mxu0
        %v3522 = vadd.f32 0.0, %v3521
        %v3523 = vpop.f32.mrf.mxu0
        %3524 = vmatprep.mubr.f32.mxu0 0.0
        %3525 = vmatmul.mubr.f32.gmra.mxu0 %v1816
        %v3526 = vpop.f32.mrf.mxu0
        %v3527 = vadd.f32 0.0, %v3526
        %v3528 = vpop.f32.mrf.mxu0
        %3529 = vmatprep.mubr.f32.mxu0 0.0
        %3530 = vmatmul.mubr.f32.gmra.mxu0 %v1822
        %v3531 = vpop.f32.mrf.mxu0
        %v3532 = vadd.f32 0.0, %v3531
        %v3533 = vpop.f32.mrf.mxu0
        %3534 = vmatprep.mubr.f32.mxu0 0.0
        %3535 = vmatmul.mubr.f32.gmra.mxu0 %v1828
        %v3536 = vpop.f32.mrf.mxu0
        %v3537 = vadd.f32 0.0, %v3536
        %v3538 = vpop.f32.mrf.mxu0
        %3539 = vmatprep.mubr.f32.mxu0 0.0
        %3540 = vmatmul.mubr.f32.gmra.mxu0 %v1834
        %v3541 = vpop.f32.mrf.mxu0
        %v3542 = vadd.f32 0.0, %v3541
        %v3543 = vpop.f32.mrf.mxu0
        %3544 = vmatprep.mubr.f32.mxu0 0.0
        %3545 = vmatmul.mubr.f32.gmra.mxu0 %v1840
        %v3546 = vpop.f32.mrf.mxu0
        %v3547 = vadd.f32 0.0, %v3546
        %v3548 = vpop.f32.mrf.mxu0
        %3549 = vmatprep.mubr.f32.mxu0 0.0
        %3550 = vmatmul.mubr.f32.gmra.mxu0 %v1846
        %v3551 = vpop.f32.mrf.mxu0
        %v3552 = vadd.f32 0.0, %v3551
        %v3553 = vpop.f32.mrf.mxu0
        %3554 = vmatprep.mubr.f32.mxu0 0.0
        %3555 = vmatmul.mubr.f32.gmra.mxu0 %v1852
        %v3556 = vpop.f32.mrf.mxu0
        %v3557 = vadd.f32 0.0, %v3556
        %v3558 = vpop.f32.mrf.mxu0
        %3559 = vmatprep.mubr.f32.mxu0 0.0
        %3560 = vmatmul.mubr.f32.gmra.mxu0 %v1858
        %v3561 = vpop.f32.mrf.mxu0
        %v3562 = vadd.f32 0.0, %v3561
        %v3563 = vpop.f32.mrf.mxu0
        %3564 = vmatprep.mubr.f32.mxu0 0.0
        %3565 = vmatmul.mubr.f32.gmra.mxu0 %v1864
        %v3566 = vpop.f32.mrf.mxu0
        %v3567 = vadd.f32 0.0, %v3566
        %v3568 = vpop.f32.mrf.mxu0
        %3569 = vmatprep.mubr.f32.mxu0 0.0
        %3570 = vmatmul.mubr.f32.gmra.mxu0 %v1870
        %v3571 = vpop.f32.mrf.mxu0
        %v3572 = vadd.f32 0.0, %v3571
        %v3573 = vpop.f32.mrf.mxu0
        %3574 = vdwg.mxu0
        %3575 = vmatprep.subr.mxu0 0.0
        %3576 = vmatpush1.xpose.msra.mxu0 %v2223
        %3577 = vmatprep.subr.mxu0 0.0
        %3578 = vmatpush1.xpose.msra.mxu0 %v2217
        %3579 = vmatprep.subr.mxu0 0.0
        %3580 = vmatpush1.xpose.msra.mxu0 %v2211
        %3581 = vmatprep.subr.mxu0 0.0
        %3582 = vmatpush1.xpose.msra.mxu0 %v2205
        %3583 = vmatprep.subr.mxu0 0.0
        %3584 = vmatpush1.xpose.msra.mxu0 %v2199
        %3585 = vmatprep.subr.mxu0 0.0
        %3586 = vmatpush1.xpose.msra.mxu0 %v2193
        %3587 = vmatprep.subr.mxu0 0.0
        %3588 = vmatpush1.xpose.msra.mxu0 %v2187
        %3589 = vmatprep.subr.mxu0 0.0
        %3590 = vmatpush1.xpose.msra.mxu0 %v2181
        %3591 = vmatprep.subr.mxu0 0.0
        %3592 = vmatpush1.xpose.msra.mxu0 %v2175
        %3593 = vmatprep.subr.mxu0 0.0
        %3594 = vmatpush1.xpose.msra.mxu0 %v2169
        %3595 = vmatprep.subr.mxu0 0.0
        %3596 = vmatpush1.xpose.msra.mxu0 %v2163
        %3597 = vmatprep.subr.mxu0 0.0
        %3598 = vmatpush1.xpose.msra.mxu0 %v2157
        %3599 = vmatprep.subr.mxu0 0.0
        %3600 = vmatpush1.xpose.msra.mxu0 %v2151
        %3601 = vmatprep.subr.mxu0 0.0
        %3602 = vmatpush1.xpose.msra.mxu0 %v2145
        %3603 = vmatprep.subr.mxu0 0.0
        %3604 = vmatpush1.xpose.msra.mxu0 %v2139
        %3605 = vmatprep.subr.mxu0 0.0
        %3606 = vmatpush1.xpose.msra.mxu0 %v2133
        %3607 = vmatprep.subr.mxu0 0.0
        %3608 = vmatpush2.xpose.msra.mxu0 0.0
        %3609 = vmatprep.subr.mxu0 0.0
        %3610 = vmatpush2.xpose.msra.mxu0 0.0
        %3611 = vmatprep.subr.mxu0 0.0
        %3612 = vmatpush2.xpose.msra.mxu0 0.0
        %3613 = vmatprep.subr.mxu0 0.0
        %3614 = vmatpush2.xpose.msra.mxu0 0.0
        %3615 = vmatprep.subr.mxu0 0.0
        %3616 = vmatpush2.xpose.msra.mxu0 0.0
        %3617 = vmatprep.subr.mxu0 0.0
        %3618 = vmatpush2.xpose.msra.mxu0 0.0
        %3619 = vmatprep.subr.mxu0 0.0
        %3620 = vmatpush2.xpose.msra.mxu0 0.0
        %3621 = vmatprep.subr.mxu0 0.0
        %3622 = vmatpush2.xpose.msra.mxu0 0.0
        %3623 = vmatprep.subr.mxu0 0.0
        %3624 = vmatpush2.xpose.msra.mxu0 0.0
        %3625 = vmatprep.subr.mxu0 0.0
        %3626 = vmatpush2.xpose.msra.mxu0 0.0
        %3627 = vmatprep.subr.mxu0 0.0
        %3628 = vmatpush2.xpose.msra.mxu0 0.0
        %3629 = vmatprep.subr.mxu0 0.0
        %3630 = vmatpush2.xpose.msra.mxu0 0.0
        %3631 = vmatprep.subr.mxu0 0.0
        %3632 = vmatpush2.xpose.msra.mxu0 0.0
        %3633 = vmatprep.subr.mxu0 0.0
        %3634 = vmatpush2.xpose.msra.mxu0 0.0
        %3635 = vmatprep.subr.mxu0 0.0
        %3636 = vmatpush2.xpose.msra.mxu0 0.0
        %3637 = vmatprep.subr.mxu0 0.0
        %3638 = vmatpush2.xpose.msra.mxu0 0.0
        %3639 = vmatprep.mubr.f32.mxu0 0.0
        %3640 = vmatmul.mubr.f32.gmra.mxu0 %v1876
        %v3641 = vpop.f32.mrf.mxu0
        %v3642 = vadd.f32 0.0, %v3641
        %v3643 = vpop.f32.mrf.mxu0
        %3644 = vmatprep.mubr.f32.mxu0 0.0
        %3645 = vmatmul.mubr.f32.gmra.mxu0 %v1882
        %v3646 = vpop.f32.mrf.mxu0
        %v3647 = vadd.f32 0.0, %v3646
        %v3648 = vpop.f32.mrf.mxu0
        %3649 = vmatprep.mubr.f32.mxu0 0.0
        %3650 = vmatmul.mubr.f32.gmra.mxu0 %v1888
        %v3651 = vpop.f32.mrf.mxu0
        %v3652 = vadd.f32 0.0, %v3651
        %v3653 = vpop.f32.mrf.mxu0
        %3654 = vmatprep.mubr.f32.mxu0 0.0
        %3655 = vmatmul.mubr.f32.gmra.mxu0 %v1894
        %v3656 = vpop.f32.mrf.mxu0
        %v3657 = vadd.f32 0.0, %v3656
        %v3658 = vpop.f32.mrf.mxu0
        %3659 = vmatprep.mubr.f32.mxu0 0.0
        %3660 = vmatmul.mubr.f32.gmra.mxu0 %v1900
        %v3661 = vpop.f32.mrf.mxu0
        %v3662 = vadd.f32 0.0, %v3661
        %v3663 = vpop.f32.mrf.mxu0
        %3664 = vmatprep.mubr.f32.mxu0 0.0
        %3665 = vmatmul.mubr.f32.gmra.mxu0 %v1906
        %v3666 = vpop.f32.mrf.mxu0
        %v3667 = vadd.f32 0.0, %v3666
        %v3668 = vpop.f32.mrf.mxu0
        %3669 = vmatprep.mubr.f32.mxu0 0.0
        %3670 = vmatmul.mubr.f32.gmra.mxu0 %v1912
        %v3671 = vpop.f32.mrf.mxu0
        %v3672 = vadd.f32 0.0, %v3671
        %v3673 = vpop.f32.mrf.mxu0
        %3674 = vmatprep.mubr.f32.mxu0 0.0
        %3675 = vmatmul.mubr.f32.gmra.mxu0 %v1918
        %v3676 = vpop.f32.mrf.mxu0
        %v3677 = vadd.f32 0.0, %v3676
        %v3678 = vpop.f32.mrf.mxu0
        %3679 = vmatprep.mubr.f32.mxu0 0.0
        %3680 = vmatmul.mubr.f32.gmra.mxu0 %v1924
        %v3681 = vpop.f32.mrf.mxu0
        %v3682 = vadd.f32 0.0, %v3681
        %v3683 = vpop.f32.mrf.mxu0
        %3684 = vmatprep.mubr.f32.mxu0 0.0
        %3685 = vmatmul.mubr.f32.gmra.mxu0 %v1930
        %v3686 = vpop.f32.mrf.mxu0
        %v3687 = vadd.f32 0.0, %v3686
        %v3688 = vpop.f32.mrf.mxu0
        %3689 = vmatprep.mubr.f32.mxu0 0.0
        %3690 = vmatmul.mubr.f32.gmra.mxu0 %v1936
        %v3691 = vpop.f32.mrf.mxu0
        %v3692 = vadd.f32 0.0, %v3691
        %v3693 = vpop.f32.mrf.mxu0
        %3694 = vmatprep.mubr.f32.mxu0 0.0
        %3695 = vmatmul.mubr.f32.gmra.mxu0 %v1942
        %v3696 = vpop.f32.mrf.mxu0
        %v3697 = vadd.f32 0.0, %v3696
        %v3698 = vpop.f32.mrf.mxu0
        %3699 = vmatprep.mubr.f32.mxu0 0.0
        %3700 = vmatmul.mubr.f32.gmra.mxu0 %v1948
        %v3701 = vpop.f32.mrf.mxu0
        %v3702 = vadd.f32 0.0, %v3701
        %v3703 = vpop.f32.mrf.mxu0
        %3704 = vmatprep.mubr.f32.mxu0 0.0
        %3705 = vmatmul.mubr.f32.gmra.mxu0 %v1954
        %v3706 = vpop.f32.mrf.mxu0
        %v3707 = vadd.f32 0.0, %v3706
        %v3708 = vpop.f32.mrf.mxu0
        %3709 = vmatprep.mubr.f32.mxu0 0.0
        %3710 = vmatmul.mubr.f32.gmra.mxu0 %v1960
        %v3711 = vpop.f32.mrf.mxu0
        %v3712 = vadd.f32 0.0, %v3711
        %v3713 = vpop.f32.mrf.mxu0
        %3714 = vmatprep.mubr.f32.mxu0 0.0
        %3715 = vmatmul.mubr.f32.gmra.mxu0 %v1966
        %v3716 = vpop.f32.mrf.mxu0
        %v3717 = vadd.f32 0.0, %v3716
        %v3718 = vpop.f32.mrf.mxu0
        %3719 = vdwg.mxu0
        %v3720 = vmul.f32 %v3497, 0.088388346
        %v3721 = vmul.f32 %v3502, 0.088388346
        %v3722 = vmul.f32 %v3507, 0.088388346
        %v3723 = vmul.f32 %v3512, 0.088388346
        %v3724 = vmul.f32 %v3517, 0.088388346
        %v3725 = vmul.f32 %v3522, 0.088388346
        %v3726 = vmul.f32 %v3527, 0.088388346
        %v3727 = vmul.f32 %v3532, 0.088388346
        %v3728 = vmul.f32 %v3537, 0.088388346
        %v3729 = vmul.f32 %v3542, 0.088388346
        %v3730 = vmul.f32 %v3547, 0.088388346
        %v3731 = vmul.f32 %v3552, 0.088388346
        %v3732 = vmul.f32 %v3557, 0.088388346
        %v3733 = vmul.f32 %v3562, 0.088388346
        %v3734 = vmul.f32 %v3567, 0.088388346
        %v3735 = vmul.f32 %v3572, 0.088388346
        %v3736 = vmul.f32 %v3642, 0.088388346
        %v3737 = vmul.f32 %v3647, 0.088388346
        %v3738 = vmul.f32 %v3652, 0.088388346
        %v3739 = vmul.f32 %v3657, 0.088388346
        %v3740 = vmul.f32 %v3662, 0.088388346
        %v3741 = vmul.f32 %v3667, 0.088388346
        %v3742 = vmul.f32 %v3672, 0.088388346
        %v3743 = vmul.f32 %v3677, 0.088388346
        %v3744 = vmul.f32 %v3682, 0.088388346
        %v3745 = vmul.f32 %v3687, 0.088388346
        %v3746 = vmul.f32 %v3692, 0.088388346
        %v3747 = vmul.f32 %v3697, 0.088388346
        %v3748 = vmul.f32 %v3702, 0.088388346
        %v3749 = vmul.f32 %v3707, 0.088388346
        %v3750 = vmul.f32 %v3712, 0.088388346
        %v3751 = vmul.f32 %v3717, 0.088388346
        %v3752 = vadd.f32 %v3720, %v2482
        %v3753 = vadd.f32 %v3721, %v2483
        %v3754 = vadd.f32 %v3722, %v2484
        %v3755 = vadd.f32 %v3723, %v2485
        %v3756 = vadd.f32 %v3724, %v2486
        %v3757 = vadd.f32 %v3725, %v2487
        %v3758 = vadd.f32 %v3726, %v2488
        %v3759 = vadd.f32 %v3727, %v2489
        %v3760 = vadd.f32 %v3728, %v2490
        %v3761 = vadd.f32 %v3729, %v2491
        %v3762 = vadd.f32 %v3730, %v2492
        %v3763 = vadd.f32 %v3731, %v2493
        %v3764 = vadd.f32 %v3732, %v2494
        %v3765 = vadd.f32 %v3733, %v2495
        %v3766 = vadd.f32 %v3734, %v2496
        %v3767 = vadd.f32 %v3735, %v2497
        %v3768 = vadd.f32 %v3736, %v2482
        %v3769 = vadd.f32 %v3737, %v2483
        %v3770 = vadd.f32 %v3738, %v2484
        %v3771 = vadd.f32 %v3739, %v2485
        %v3772 = vadd.f32 %v3740, %v2486
        %v3773 = vadd.f32 %v3741, %v2487
        %v3774 = vadd.f32 %v3742, %v2488
        %v3775 = vadd.f32 %v3743, %v2489
        %v3776 = vadd.f32 %v3744, %v2490
        %v3777 = vadd.f32 %v3745, %v2491
        %v3778 = vadd.f32 %v3746, %v2492
        %v3779 = vadd.f32 %v3747, %v2493
        %v3780 = vadd.f32 %v3748, %v2494
        %v3781 = vadd.f32 %v3749, %v2495
        %v3782 = vadd.f32 %v3750, %v2496
        %v3783 = vadd.f32 %v3751, %v2497
        %3784 = vmax.xlane.f32.xlu0 %v3752
        %v3785 = vpop.xlane.xlu0 %3784
        %3786 = vmax.xlane.f32.xlu0 %v3753
        %v3787 = vpop.xlane.xlu0 %3786
        %3788 = vmax.xlane.f32.xlu0 %v3754
        %v3789 = vpop.xlane.xlu0 %3788
        %3790 = vmax.xlane.f32.xlu0 %v3755
        %v3791 = vpop.xlane.xlu0 %3790
        %3792 = vmax.xlane.f32.xlu0 %v3756
        %v3793 = vpop.xlane.xlu0 %3792
        %3794 = vmax.xlane.f32.xlu0 %v3757
        %v3795 = vpop.xlane.xlu0 %3794
        %3796 = vmax.xlane.f32.xlu0 %v3758
        %v3797 = vpop.xlane.xlu0 %3796
        %3798 = vmax.xlane.f32.xlu0 %v3759
        %v3799 = vpop.xlane.xlu0 %3798
        %3800 = vmax.xlane.f32.xlu0 %v3760
        %v3801 = vpop.xlane.xlu0 %3800
        %3802 = vmax.xlane.f32.xlu0 %v3761
        %v3803 = vpop.xlane.xlu0 %3802
        %3804 = vmax.xlane.f32.xlu0 %v3762
        %v3805 = vpop.xlane.xlu0 %3804
        %3806 = vmax.xlane.f32.xlu0 %v3763
        %v3807 = vpop.xlane.xlu0 %3806
        %3808 = vmax.xlane.f32.xlu0 %v3764
        %v3809 = vpop.xlane.xlu0 %3808
        %3810 = vmax.xlane.f32.xlu0 %v3765
        %v3811 = vpop.xlane.xlu0 %3810
        %3812 = vmax.xlane.f32.xlu0 %v3766
        %v3813 = vpop.xlane.xlu0 %3812
        %3814 = vmax.xlane.f32.xlu0 %v3767
        %v3815 = vpop.xlane.xlu0 %3814
        %3816 = vmax.xlane.f32.xlu0 %v3768
        %v3817 = vpop.xlane.xlu0 %3816
        %3818 = vmax.xlane.f32.xlu0 %v3769
        %v3819 = vpop.xlane.xlu0 %3818
        %3820 = vmax.xlane.f32.xlu0 %v3770
        %v3821 = vpop.xlane.xlu0 %3820
        %3822 = vmax.xlane.f32.xlu0 %v3771
        %v3823 = vpop.xlane.xlu0 %3822
        %3824 = vmax.xlane.f32.xlu0 %v3772
        %v3825 = vpop.xlane.xlu0 %3824
        %3826 = vmax.xlane.f32.xlu0 %v3773
        %v3827 = vpop.xlane.xlu0 %3826
        %3828 = vmax.xlane.f32.xlu0 %v3774
        %v3829 = vpop.xlane.xlu0 %3828
        %3830 = vmax.xlane.f32.xlu0 %v3775
        %v3831 = vpop.xlane.xlu0 %3830
        %3832 = vmax.xlane.f32.xlu0 %v3776
        %v3833 = vpop.xlane.xlu0 %3832
        %3834 = vmax.xlane.f32.xlu0 %v3777
        %v3835 = vpop.xlane.xlu0 %3834
        %3836 = vmax.xlane.f32.xlu0 %v3778
        %v3837 = vpop.xlane.xlu0 %3836
        %3838 = vmax.xlane.f32.xlu0 %v3779
        %v3839 = vpop.xlane.xlu0 %3838
        %3840 = vmax.xlane.f32.xlu0 %v3780
        %v3841 = vpop.xlane.xlu0 %3840
        %3842 = vmax.xlane.f32.xlu0 %v3781
        %v3843 = vpop.xlane.xlu0 %3842
        %3844 = vmax.xlane.f32.xlu0 %v3782
        %v3845 = vpop.xlane.xlu0 %3844
        %3846 = vmax.xlane.f32.xlu0 %v3783
        %v3847 = vpop.xlane.xlu0 %3846
        %v3848 = vsub.f32 %v3752, %v3785
        %v3849 = vsub.f32 %v3753, %v3787
        %v3850 = vsub.f32 %v3754, %v3789
        %v3851 = vsub.f32 %v3755, %v3791
        %v3852 = vsub.f32 %v3756, %v3793
        %v3853 = vsub.f32 %v3757, %v3795
        %v3854 = vsub.f32 %v3758, %v3797
        %v3855 = vsub.f32 %v3759, %v3799
        %v3856 = vsub.f32 %v3760, %v3801
        %v3857 = vsub.f32 %v3761, %v3803
        %v3858 = vsub.f32 %v3762, %v3805
        %v3859 = vsub.f32 %v3763, %v3807
        %v3860 = vsub.f32 %v3764, %v3809
        %v3861 = vsub.f32 %v3765, %v3811
        %v3862 = vsub.f32 %v3766, %v3813
        %v3863 = vsub.f32 %v3767, %v3815
        %v3864 = vsub.f32 %v3768, %v3817
        %v3865 = vsub.f32 %v3769, %v3819
        %v3866 = vsub.f32 %v3770, %v3821
        %v3867 = vsub.f32 %v3771, %v3823
        %v3868 = vsub.f32 %v3772, %v3825
        %v3869 = vsub.f32 %v3773, %v3827
        %v3870 = vsub.f32 %v3774, %v3829
        %v3871 = vsub.f32 %v3775, %v3831
        %v3872 = vsub.f32 %v3776, %v3833
        %v3873 = vsub.f32 %v3777, %v3835
        %v3874 = vsub.f32 %v3778, %v3837
        %v3875 = vsub.f32 %v3779, %v3839
        %v3876 = vsub.f32 %v3780, %v3841
        %v3877 = vsub.f32 %v3781, %v3843
        %v3878 = vsub.f32 %v3782, %v3845
        %v3879 = vsub.f32 %v3783, %v3847
        %v3880 = vmul.f32 %v3848, 1.442695
        %v3881 = vpow.pop %v3880
        %v3882 = vmul.f32 %v3849, 1.442695
        %v3883 = vpow.pop %v3882
        %v3884 = vmul.f32 %v3850, 1.442695
        %v3885 = vpow.pop %v3884
        %v3886 = vmul.f32 %v3851, 1.442695
        %v3887 = vpow.pop %v3886
        %v3888 = vmul.f32 %v3852, 1.442695
        %v3889 = vpow.pop %v3888
        %v3890 = vmul.f32 %v3853, 1.442695
        %v3891 = vpow.pop %v3890
        %v3892 = vmul.f32 %v3854, 1.442695
        %v3893 = vpow.pop %v3892
        %v3894 = vmul.f32 %v3855, 1.442695
        %v3895 = vpow.pop %v3894
        %v3896 = vmul.f32 %v3856, 1.442695
        %v3897 = vpow.pop %v3896
        %v3898 = vmul.f32 %v3857, 1.442695
        %v3899 = vpow.pop %v3898
        %v3900 = vmul.f32 %v3858, 1.442695
        %v3901 = vpow.pop %v3900
        %v3902 = vmul.f32 %v3859, 1.442695
        %v3903 = vpow.pop %v3902
        %v3904 = vmul.f32 %v3860, 1.442695
        %v3905 = vpow.pop %v3904
        %v3906 = vmul.f32 %v3861, 1.442695
        %v3907 = vpow.pop %v3906
        %v3908 = vmul.f32 %v3862, 1.442695
        %v3909 = vpow.pop %v3908
        %v3910 = vmul.f32 %v3863, 1.442695
        %v3911 = vpow.pop %v3910
        %v3912 = vmul.f32 %v3864, 1.442695
        %v3913 = vpow.pop %v3912
        %v3914 = vmul.f32 %v3865, 1.442695
        %v3915 = vpow.pop %v3914
        %v3916 = vmul.f32 %v3866, 1.442695
        %v3917 = vpow.pop %v3916
        %v3918 = vmul.f32 %v3867, 1.442695
        %v3919 = vpow.pop %v3918
        %v3920 = vmul.f32 %v3868, 1.442695
        %v3921 = vpow.pop %v3920
        %v3922 = vmul.f32 %v3869, 1.442695
        %v3923 = vpow.pop %v3922
        %v3924 = vmul.f32 %v3870, 1.442695
        %v3925 = vpow.pop %v3924
        %v3926 = vmul.f32 %v3871, 1.442695
        %v3927 = vpow.pop %v3926
        %v3928 = vmul.f32 %v3872, 1.442695
        %v3929 = vpow.pop %v3928
        %v3930 = vmul.f32 %v3873, 1.442695
        %v3931 = vpow.pop %v3930
        %v3932 = vmul.f32 %v3874, 1.442695
        %v3933 = vpow.pop %v3932
        %v3934 = vmul.f32 %v3875, 1.442695
        %v3935 = vpow.pop %v3934
        %v3936 = vmul.f32 %v3876, 1.442695
        %v3937 = vpow.pop %v3936
        %v3938 = vmul.f32 %v3877, 1.442695
        %v3939 = vpow.pop %v3938
        %v3940 = vmul.f32 %v3878, 1.442695
        %v3941 = vpow.pop %v3940
        %v3942 = vmul.f32 %v3879, 1.442695
        %v3943 = vpow.pop %v3942
        %3944 = vadd.xlane.f32.xlu0 %v3881
        %v3945 = vpop.xlane.xlu0 %3944
        %3946 = vadd.xlane.f32.xlu0 %v3883
        %v3947 = vpop.xlane.xlu0 %3946
        %3948 = vadd.xlane.f32.xlu0 %v3885
        %v3949 = vpop.xlane.xlu0 %3948
        %3950 = vadd.xlane.f32.xlu0 %v3887
        %v3951 = vpop.xlane.xlu0 %3950
        %3952 = vadd.xlane.f32.xlu0 %v3889
        %v3953 = vpop.xlane.xlu0 %3952
        %3954 = vadd.xlane.f32.xlu0 %v3891
        %v3955 = vpop.xlane.xlu0 %3954
        %3956 = vadd.xlane.f32.xlu0 %v3893
        %v3957 = vpop.xlane.xlu0 %3956
        %3958 = vadd.xlane.f32.xlu0 %v3895
        %v3959 = vpop.xlane.xlu0 %3958
        %3960 = vadd.xlane.f32.xlu0 %v3897
        %v3961 = vpop.xlane.xlu0 %3960
        %3962 = vadd.xlane.f32.xlu0 %v3899
        %v3963 = vpop.xlane.xlu0 %3962
        %3964 = vadd.xlane.f32.xlu0 %v3901
        %v3965 = vpop.xlane.xlu0 %3964
        %3966 = vadd.xlane.f32.xlu0 %v3903
        %v3967 = vpop.xlane.xlu0 %3966
        %3968 = vadd.xlane.f32.xlu0 %v3905
        %v3969 = vpop.xlane.xlu0 %3968
        %3970 = vadd.xlane.f32.xlu0 %v3907
        %v3971 = vpop.xlane.xlu0 %3970
        %3972 = vadd.xlane.f32.xlu0 %v3909
        %v3973 = vpop.xlane.xlu0 %3972
        %3974 = vadd.xlane.f32.xlu0 %v3911
        %v3975 = vpop.xlane.xlu0 %3974
        %3976 = vadd.xlane.f32.xlu0 %v3913
        %v3977 = vpop.xlane.xlu0 %3976
        %3978 = vadd.xlane.f32.xlu0 %v3915
        %v3979 = vpop.xlane.xlu0 %3978
        %3980 = vadd.xlane.f32.xlu0 %v3917
        %v3981 = vpop.xlane.xlu0 %3980
        %3982 = vadd.xlane.f32.xlu0 %v3919
        %v3983 = vpop.xlane.xlu0 %3982
        %3984 = vadd.xlane.f32.xlu0 %v3921
        %v3985 = vpop.xlane.xlu0 %3984
        %3986 = vadd.xlane.f32.xlu0 %v3923
        %v3987 = vpop.xlane.xlu0 %3986
        %3988 = vadd.xlane.f32.xlu0 %v3925
        %v3989 = vpop.xlane.xlu0 %3988
        %3990 = vadd.xlane.f32.xlu0 %v3927
        %v3991 = vpop.xlane.xlu0 %3990
        %3992 = vadd.xlane.f32.xlu0 %v3929
        %v3993 = vpop.xlane.xlu0 %3992
        %3994 = vadd.xlane.f32.xlu0 %v3931
        %v3995 = vpop.xlane.xlu0 %3994
        %3996 = vadd.xlane.f32.xlu0 %v3933
        %v3997 = vpop.xlane.xlu0 %3996
        %3998 = vadd.xlane.f32.xlu0 %v3935
        %v3999 = vpop.xlane.xlu0 %3998
        %4000 = vadd.xlane.f32.xlu0 %v3937
        %v4001 = vpop.xlane.xlu0 %4000
        %4002 = vadd.xlane.f32.xlu0 %v3939
        %v4003 = vpop.xlane.xlu0 %4002
        %4004 = vadd.xlane.f32.xlu0 %v3941
        %v4005 = vpop.xlane.xlu0 %4004
        %4006 = vadd.xlane.f32.xlu0 %v3943
        %v4007 = vpop.xlane.xlu0 %4006
        %v4008 = vrcp.pop %v3945
        %v4009 = vmul.f32 %v3881, %v4008
        %v4010 = vrcp.pop %v3947
        %v4011 = vmul.f32 %v3883, %v4010
        %v4012 = vrcp.pop %v3949
        %v4013 = vmul.f32 %v3885, %v4012
        %v4014 = vrcp.pop %v3951
        %v4015 = vmul.f32 %v3887, %v4014
        %v4016 = vrcp.pop %v3953
        %v4017 = vmul.f32 %v3889, %v4016
        %v4018 = vrcp.pop %v3955
        %v4019 = vmul.f32 %v3891, %v4018
        %v4020 = vrcp.pop %v3957
        %v4021 = vmul.f32 %v3893, %v4020
        %v4022 = vrcp.pop %v3959
        %v4023 = vmul.f32 %v3895, %v4022
        %v4024 = vrcp.pop %v3961
        %v4025 = vmul.f32 %v3897, %v4024
        %v4026 = vrcp.pop %v3963
        %v4027 = vmul.f32 %v3899, %v4026
        %v4028 = vrcp.pop %v3965
        %v4029 = vmul.f32 %v3901, %v4028
        %v4030 = vrcp.pop %v3967
        %v4031 = vmul.f32 %v3903, %v4030
        %v4032 = vrcp.pop %v3969
        %v4033 = vmul.f32 %v3905, %v4032
        %v4034 = vrcp.pop %v3971
        %v4035 = vmul.f32 %v3907, %v4034
        %v4036 = vrcp.pop %v3973
        %v4037 = vmul.f32 %v3909, %v4036
        %v4038 = vrcp.pop %v3975
        %v4039 = vmul.f32 %v3911, %v4038
        %v4040 = vrcp.pop %v3977
        %v4041 = vmul.f32 %v3913, %v4040
        %v4042 = vrcp.pop %v3979
        %v4043 = vmul.f32 %v3915, %v4042
        %v4044 = vrcp.pop %v3981
        %v4045 = vmul.f32 %v3917, %v4044
        %v4046 = vrcp.pop %v3983
        %v4047 = vmul.f32 %v3919, %v4046
        %v4048 = vrcp.pop %v3985
        %v4049 = vmul.f32 %v3921, %v4048
        %v4050 = vrcp.pop %v3987
        %v4051 = vmul.f32 %v3923, %v4050
        %v4052 = vrcp.pop %v3989
        %v4053 = vmul.f32 %v3925, %v4052
        %v4054 = vrcp.pop %v3991
        %v4055 = vmul.f32 %v3927, %v4054
        %v4056 = vrcp.pop %v3993
        %v4057 = vmul.f32 %v3929, %v4056
        %v4058 = vrcp.pop %v3995
        %v4059 = vmul.f32 %v3931, %v4058
        %v4060 = vrcp.pop %v3997
        %v4061 = vmul.f32 %v3933, %v4060
        %v4062 = vrcp.pop %v3999
        %v4063 = vmul.f32 %v3935, %v4062
        %v4064 = vrcp.pop %v4001
        %v4065 = vmul.f32 %v3937, %v4064
        %v4066 = vrcp.pop %v4003
        %v4067 = vmul.f32 %v3939, %v4066
        %v4068 = vrcp.pop %v4005
        %v4069 = vmul.f32 %v3941, %v4068
        %v4070 = vrcp.pop %v4007
        %v4071 = vmul.f32 %v3943, %v4070
        %4072 = vmatprep.subr.mxu0 0.0
        %4073 = vmatpush1.msra.mxu0 %v2384
        %4074 = vmatprep.subr.mxu0 0.0
        %4075 = vmatpush1.msra.mxu0 %v2378
        %4076 = vmatprep.subr.mxu0 0.0
        %4077 = vmatpush1.msra.mxu0 %v2372
        %4078 = vmatprep.subr.mxu0 0.0
        %4079 = vmatpush1.msra.mxu0 %v2366
        %4080 = vmatprep.subr.mxu0 0.0
        %4081 = vmatpush1.msra.mxu0 %v2360
        %4082 = vmatprep.subr.mxu0 0.0
        %4083 = vmatpush1.msra.mxu0 %v2354
        %4084 = vmatprep.subr.mxu0 0.0
        %4085 = vmatpush1.msra.mxu0 %v2348
        %4086 = vmatprep.subr.mxu0 0.0
        %4087 = vmatpush1.msra.mxu0 %v2342
        %4088 = vmatprep.subr.mxu0 0.0
        %4089 = vmatpush1.msra.mxu0 %v2336
        %4090 = vmatprep.subr.mxu0 0.0
        %4091 = vmatpush1.msra.mxu0 %v2330
        %4092 = vmatprep.subr.mxu0 0.0
        %4093 = vmatpush1.msra.mxu0 %v2324
        %4094 = vmatprep.subr.mxu0 0.0
        %4095 = vmatpush1.msra.mxu0 %v2318
        %4096 = vmatprep.subr.mxu0 0.0
        %4097 = vmatpush1.msra.mxu0 %v2312
        %4098 = vmatprep.subr.mxu0 0.0
        %4099 = vmatpush1.msra.mxu0 %v2306
        %4100 = vmatprep.subr.mxu0 0.0
        %4101 = vmatpush1.msra.mxu0 %v2300
        %4102 = vmatprep.subr.mxu0 0.0
        %4103 = vmatpush1.msra.mxu0 %v2294
        %4104 = vmatprep.subr.mxu0 0.0
        %4105 = vmatpush2.msra.mxu0 0.0
        %4106 = vmatprep.subr.mxu0 0.0
        %4107 = vmatpush2.msra.mxu0 0.0
        %4108 = vmatprep.subr.mxu0 0.0
        %4109 = vmatpush2.msra.mxu0 0.0
        %4110 = vmatprep.subr.mxu0 0.0
        %4111 = vmatpush2.msra.mxu0 0.0
        %4112 = vmatprep.subr.mxu0 0.0
        %4113 = vmatpush2.msra.mxu0 0.0
        %4114 = vmatprep.subr.mxu0 0.0
        %4115 = vmatpush2.msra.mxu0 0.0
        %4116 = vmatprep.subr.mxu0 0.0
        %4117 = vmatpush2.msra.mxu0 0.0
        %4118 = vmatprep.subr.mxu0 0.0
        %4119 = vmatpush2.msra.mxu0 0.0
        %4120 = vmatprep.subr.mxu0 0.0
        %4121 = vmatpush2.msra.mxu0 0.0
        %4122 = vmatprep.subr.mxu0 0.0
        %4123 = vmatpush2.msra.mxu0 0.0
        %4124 = vmatprep.subr.mxu0 0.0
        %4125 = vmatpush2.msra.mxu0 0.0
        %4126 = vmatprep.subr.mxu0 0.0
        %4127 = vmatpush2.msra.mxu0 0.0
        %4128 = vmatprep.subr.mxu0 0.0
        %4129 = vmatpush2.msra.mxu0 0.0
        %4130 = vmatprep.subr.mxu0 0.0
        %4131 = vmatpush2.msra.mxu0 0.0
        %4132 = vmatprep.subr.mxu0 0.0
        %4133 = vmatpush2.msra.mxu0 0.0
        %4134 = vmatprep.subr.mxu0 0.0
        %4135 = vmatpush2.msra.mxu0 0.0
        %4136 = vmatprep.mubr.f32.mxu0 0.0
        %4137 = vmatmul.mubr.f32.gmra.mxu0 %v4009
        %v4138 = vpop.f32.mrf.mxu0
        %v4139 = vadd.f32 0.0, %v4138
        %v4140 = vpop.f32.mrf.mxu0
        %4141 = vmatprep.mubr.f32.mxu0 0.0
        %4142 = vmatmul.mubr.f32.gmra.mxu0 %v4011
        %v4143 = vpop.f32.mrf.mxu0
        %v4144 = vadd.f32 0.0, %v4143
        %v4145 = vpop.f32.mrf.mxu0
        %4146 = vmatprep.mubr.f32.mxu0 0.0
        %4147 = vmatmul.mubr.f32.gmra.mxu0 %v4013
        %v4148 = vpop.f32.mrf.mxu0
        %v4149 = vadd.f32 0.0, %v4148
        %v4150 = vpop.f32.mrf.mxu0
        %4151 = vmatprep.mubr.f32.mxu0 0.0
        %4152 = vmatmul.mubr.f32.gmra.mxu0 %v4015
        %v4153 = vpop.f32.mrf.mxu0
        %v4154 = vadd.f32 0.0, %v4153
        %v4155 = vpop.f32.mrf.mxu0
        %4156 = vmatprep.mubr.f32.mxu0 0.0
        %4157 = vmatmul.mubr.f32.gmra.mxu0 %v4017
        %v4158 = vpop.f32.mrf.mxu0
        %v4159 = vadd.f32 0.0, %v4158
        %v4160 = vpop.f32.mrf.mxu0
        %4161 = vmatprep.mubr.f32.mxu0 0.0
        %4162 = vmatmul.mubr.f32.gmra.mxu0 %v4019
        %v4163 = vpop.f32.mrf.mxu0
        %v4164 = vadd.f32 0.0, %v4163
        %v4165 = vpop.f32.mrf.mxu0
        %4166 = vmatprep.mubr.f32.mxu0 0.0
        %4167 = vmatmul.mubr.f32.gmra.mxu0 %v4021
        %v4168 = vpop.f32.mrf.mxu0
        %v4169 = vadd.f32 0.0, %v4168
        %v4170 = vpop.f32.mrf.mxu0
        %4171 = vmatprep.mubr.f32.mxu0 0.0
        %4172 = vmatmul.mubr.f32.gmra.mxu0 %v4023
        %v4173 = vpop.f32.mrf.mxu0
        %v4174 = vadd.f32 0.0, %v4173
        %v4175 = vpop.f32.mrf.mxu0
        %4176 = vmatprep.mubr.f32.mxu0 0.0
        %4177 = vmatmul.mubr.f32.gmra.mxu0 %v4025
        %v4178 = vpop.f32.mrf.mxu0
        %v4179 = vadd.f32 0.0, %v4178
        %v4180 = vpop.f32.mrf.mxu0
        %4181 = vmatprep.mubr.f32.mxu0 0.0
        %4182 = vmatmul.mubr.f32.gmra.mxu0 %v4027
        %v4183 = vpop.f32.mrf.mxu0
        %v4184 = vadd.f32 0.0, %v4183
        %v4185 = vpop.f32.mrf.mxu0
        %4186 = vmatprep.mubr.f32.mxu0 0.0
        %4187 = vmatmul.mubr.f32.gmra.mxu0 %v4029
        %v4188 = vpop.f32.mrf.mxu0
        %v4189 = vadd.f32 0.0, %v4188
        %v4190 = vpop.f32.mrf.mxu0
        %4191 = vmatprep.mubr.f32.mxu0 0.0
        %4192 = vmatmul.mubr.f32.gmra.mxu0 %v4031
        %v4193 = vpop.f32.mrf.mxu0
        %v4194 = vadd.f32 0.0, %v4193
        %v4195 = vpop.f32.mrf.mxu0
        %4196 = vmatprep.mubr.f32.mxu0 0.0
        %4197 = vmatmul.mubr.f32.gmra.mxu0 %v4033
        %v4198 = vpop.f32.mrf.mxu0
        %v4199 = vadd.f32 0.0, %v4198
        %v4200 = vpop.f32.mrf.mxu0
        %4201 = vmatprep.mubr.f32.mxu0 0.0
        %4202 = vmatmul.mubr.f32.gmra.mxu0 %v4035
        %v4203 = vpop.f32.mrf.mxu0
        %v4204 = vadd.f32 0.0, %v4203
        %v4205 = vpop.f32.mrf.mxu0
        %4206 = vmatprep.mubr.f32.mxu0 0.0
        %4207 = vmatmul.mubr.f32.gmra.mxu0 %v4037
        %v4208 = vpop.f32.mrf.mxu0
        %v4209 = vadd.f32 0.0, %v4208
        %v4210 = vpop.f32.mrf.mxu0
        %4211 = vmatprep.mubr.f32.mxu0 0.0
        %4212 = vmatmul.mubr.f32.gmra.mxu0 %v4039
        %v4213 = vpop.f32.mrf.mxu0
        %v4214 = vadd.f32 0.0, %v4213
        %v4215 = vpop.f32.mrf.mxu0
        %4216 = vdwg.mxu0
        %4217 = vmatprep.subr.mxu0 0.0
        %4218 = vmatpush1.msra.mxu0 %v2480
        %4219 = vmatprep.subr.mxu0 0.0
        %4220 = vmatpush1.msra.mxu0 %v2474
        %4221 = vmatprep.subr.mxu0 0.0
        %4222 = vmatpush1.msra.mxu0 %v2468
        %4223 = vmatprep.subr.mxu0 0.0
        %4224 = vmatpush1.msra.mxu0 %v2462
        %4225 = vmatprep.subr.mxu0 0.0
        %4226 = vmatpush1.msra.mxu0 %v2456
        %4227 = vmatprep.subr.mxu0 0.0
        %4228 = vmatpush1.msra.mxu0 %v2450
        %4229 = vmatprep.subr.mxu0 0.0
        %4230 = vmatpush1.msra.mxu0 %v2444
        %4231 = vmatprep.subr.mxu0 0.0
        %4232 = vmatpush1.msra.mxu0 %v2438
        %4233 = vmatprep.subr.mxu0 0.0
        %4234 = vmatpush1.msra.mxu0 %v2432
        %4235 = vmatprep.subr.mxu0 0.0
        %4236 = vmatpush1.msra.mxu0 %v2426
        %4237 = vmatprep.subr.mxu0 0.0
        %4238 = vmatpush1.msra.mxu0 %v2420
        %4239 = vmatprep.subr.mxu0 0.0
        %4240 = vmatpush1.msra.mxu0 %v2414
        %4241 = vmatprep.subr.mxu0 0.0
        %4242 = vmatpush1.msra.mxu0 %v2408
        %4243 = vmatprep.subr.mxu0 0.0
        %4244 = vmatpush1.msra.mxu0 %v2402
        %4245 = vmatprep.subr.mxu0 0.0
        %4246 = vmatpush1.msra.mxu0 %v2396
        %4247 = vmatprep.subr.mxu0 0.0
        %4248 = vmatpush1.msra.mxu0 %v2390
        %4249 = vmatprep.subr.mxu0 0.0
        %4250 = vmatpush2.msra.mxu0 0.0
        %4251 = vmatprep.subr.mxu0 0.0
        %4252 = vmatpush2.msra.mxu0 0.0
        %4253 = vmatprep.subr.mxu0 0.0
        %4254 = vmatpush2.msra.mxu0 0.0
        %4255 = vmatprep.subr.mxu0 0.0
        %4256 = vmatpush2.msra.mxu0 0.0
        %4257 = vmatprep.subr.mxu0 0.0
        %4258 = vmatpush2.msra.mxu0 0.0
        %4259 = vmatprep.subr.mxu0 0.0
        %4260 = vmatpush2.msra.mxu0 0.0
        %4261 = vmatprep.subr.mxu0 0.0
        %4262 = vmatpush2.msra.mxu0 0.0
        %4263 = vmatprep.subr.mxu0 0.0
        %4264 = vmatpush2.msra.mxu0 0.0
        %4265 = vmatprep.subr.mxu0 0.0
        %4266 = vmatpush2.msra.mxu0 0.0
        %4267 = vmatprep.subr.mxu0 0.0
        %4268 = vmatpush2.msra.mxu0 0.0
        %4269 = vmatprep.subr.mxu0 0.0
        %4270 = vmatpush2.msra.mxu0 0.0
        %4271 = vmatprep.subr.mxu0 0.0
        %4272 = vmatpush2.msra.mxu0 0.0
        %4273 = vmatprep.subr.mxu0 0.0
        %4274 = vmatpush2.msra.mxu0 0.0
        %4275 = vmatprep.subr.mxu0 0.0
        %4276 = vmatpush2.msra.mxu0 0.0
        %4277 = vmatprep.subr.mxu0 0.0
        %4278 = vmatpush2.msra.mxu0 0.0
        %4279 = vmatprep.subr.mxu0 0.0
        %4280 = vmatpush2.msra.mxu0 0.0
        %4281 = vmatprep.mubr.f32.mxu0 0.0
        %4282 = vmatmul.mubr.f32.gmra.mxu0 %v4041
        %v4283 = vpop.f32.mrf.mxu0
        %v4284 = vadd.f32 0.0, %v4283
        %v4285 = vpop.f32.mrf.mxu0
        %4286 = vmatprep.mubr.f32.mxu0 0.0
        %4287 = vmatmul.mubr.f32.gmra.mxu0 %v4043
        %v4288 = vpop.f32.mrf.mxu0
        %v4289 = vadd.f32 0.0, %v4288
        %v4290 = vpop.f32.mrf.mxu0
        %4291 = vmatprep.mubr.f32.mxu0 0.0
        %4292 = vmatmul.mubr.f32.gmra.mxu0 %v4045
        %v4293 = vpop.f32.mrf.mxu0
        %v4294 = vadd.f32 0.0, %v4293
        %v4295 = vpop.f32.mrf.mxu0
        %4296 = vmatprep.mubr.f32.mxu0 0.0
        %4297 = vmatmul.mubr.f32.gmra.mxu0 %v4047
        %v4298 = vpop.f32.mrf.mxu0
        %v4299 = vadd.f32 0.0, %v4298
        %v4300 = vpop.f32.mrf.mxu0
        %4301 = vmatprep.mubr.f32.mxu0 0.0
        %4302 = vmatmul.mubr.f32.gmra.mxu0 %v4049
        %v4303 = vpop.f32.mrf.mxu0
        %v4304 = vadd.f32 0.0, %v4303
        %v4305 = vpop.f32.mrf.mxu0
        %4306 = vmatprep.mubr.f32.mxu0 0.0
        %4307 = vmatmul.mubr.f32.gmra.mxu0 %v4051
        %v4308 = vpop.f32.mrf.mxu0
        %v4309 = vadd.f32 0.0, %v4308
        %v4310 = vpop.f32.mrf.mxu0
        %4311 = vmatprep.mubr.f32.mxu0 0.0
        %4312 = vmatmul.mubr.f32.gmra.mxu0 %v4053
        %v4313 = vpop.f32.mrf.mxu0
        %v4314 = vadd.f32 0.0, %v4313
        %v4315 = vpop.f32.mrf.mxu0
        %4316 = vmatprep.mubr.f32.mxu0 0.0
        %4317 = vmatmul.mubr.f32.gmra.mxu0 %v4055
        %v4318 = vpop.f32.mrf.mxu0
        %v4319 = vadd.f32 0.0, %v4318
        %v4320 = vpop.f32.mrf.mxu0
        %4321 = vmatprep.mubr.f32.mxu0 0.0
        %4322 = vmatmul.mubr.f32.gmra.mxu0 %v4057
        %v4323 = vpop.f32.mrf.mxu0
        %v4324 = vadd.f32 0.0, %v4323
        %v4325 = vpop.f32.mrf.mxu0
        %4326 = vmatprep.mubr.f32.mxu0 0.0
        %4327 = vmatmul.mubr.f32.gmra.mxu0 %v4059
        %v4328 = vpop.f32.mrf.mxu0
        %v4329 = vadd.f32 0.0, %v4328
        %v4330 = vpop.f32.mrf.mxu0
        %4331 = vmatprep.mubr.f32.mxu0 0.0
        %4332 = vmatmul.mubr.f32.gmra.mxu0 %v4061
        %v4333 = vpop.f32.mrf.mxu0
        %v4334 = vadd.f32 0.0, %v4333
        %v4335 = vpop.f32.mrf.mxu0
        %4336 = vmatprep.mubr.f32.mxu0 0.0
        %4337 = vmatmul.mubr.f32.gmra.mxu0 %v4063
        %v4338 = vpop.f32.mrf.mxu0
        %v4339 = vadd.f32 0.0, %v4338
        %v4340 = vpop.f32.mrf.mxu0
        %4341 = vmatprep.mubr.f32.mxu0 0.0
        %4342 = vmatmul.mubr.f32.gmra.mxu0 %v4065
        %v4343 = vpop.f32.mrf.mxu0
        %v4344 = vadd.f32 0.0, %v4343
        %v4345 = vpop.f32.mrf.mxu0
        %4346 = vmatprep.mubr.f32.mxu0 0.0
        %4347 = vmatmul.mubr.f32.gmra.mxu0 %v4067
        %v4348 = vpop.f32.mrf.mxu0
        %v4349 = vadd.f32 0.0, %v4348
        %v4350 = vpop.f32.mrf.mxu0
        %4351 = vmatprep.mubr.f32.mxu0 0.0
        %4352 = vmatmul.mubr.f32.gmra.mxu0 %v4069
        %v4353 = vpop.f32.mrf.mxu0
        %v4354 = vadd.f32 0.0, %v4353
        %v4355 = vpop.f32.mrf.mxu0
        %4356 = vmatprep.mubr.f32.mxu0 0.0
        %4357 = vmatmul.mubr.f32.gmra.mxu0 %v4071
        %v4358 = vpop.f32.mrf.mxu0
        %v4359 = vadd.f32 0.0, %v4358
        %v4360 = vpop.f32.mrf.mxu0
        %4361 = vdwg.mxu0
        %v4362 = vld [vmem:[%s532] sm:$0xff]
        %v4363 = vld [vmem:[%s532 + $0x8] sm:$0xff]
        %v4364 = vld [vmem:[%s532 + $0x10] sm:$0xff]
        %v4365 = vld [vmem:[%s532 + $0x18] sm:$0xff]
        %v4366 = vld [vmem:[%s532 + $0x20] sm:$0xff]
        %v4367 = vld [vmem:[%s532 + $0x28] sm:$0xff]
        %v4368 = vld [vmem:[%s532 + $0x30] sm:$0xff]
        %v4369 = vld [vmem:[%s532 + $0x38] sm:$0xff]
        %v4370 = vld [vmem:[%s532 + $0x40] sm:$0xff]
        %v4371 = vld [vmem:[%s532 + $0x48] sm:$0xff]
        %v4372 = vld [vmem:[%s532 + $0x50] sm:$0xff]
        %v4373 = vld [vmem:[%s532 + $0x58] sm:$0xff]
        %v4374 = vld [vmem:[%s532 + $0x60] sm:$0xff]
        %v4375 = vld [vmem:[%s532 + $0x68] sm:$0xff]
        %v4376 = vld [vmem:[%s532 + $0x70] sm:$0xff]
        %v4377 = vld [vmem:[%s532 + $0x78] sm:$0xff]
        %v4378 = vld [vmem:[%s532 + $0x80] sm:$0xff]
        %v4379 = vld [vmem:[%s532 + $0x88] sm:$0xff]
        %v4380 = vld [vmem:[%s532 + $0x90] sm:$0xff]
        %v4381 = vld [vmem:[%s532 + $0x98] sm:$0xff]
        %v4382 = vld [vmem:[%s532 + $0xa0] sm:$0xff]
        %v4383 = vld [vmem:[%s532 + $0xa8] sm:$0xff]
        %v4384 = vld [vmem:[%s532 + $0xb0] sm:$0xff]
        %v4385 = vld [vmem:[%s532 + $0xb8] sm:$0xff]
        %v4386 = vld [vmem:[%s532 + $0xc0] sm:$0xff]
        %v4387 = vld [vmem:[%s532 + $0xc8] sm:$0xff]
        %v4388 = vld [vmem:[%s532 + $0xd0] sm:$0xff]
        %v4389 = vld [vmem:[%s532 + $0xd8] sm:$0xff]
        %v4390 = vld [vmem:[%s532 + $0xe0] sm:$0xff]
        %v4391 = vld [vmem:[%s532 + $0xe8] sm:$0xff]
        %v4392 = vld [vmem:[%s532 + $0xf0] sm:$0xff]
        %v4393 = vld [vmem:[%s532 + $0xf8] sm:$0xff]
        %v4394 = vld [vmem:[%s532 + $0x100] sm:$0xff]
        %v4395 = vld [vmem:[%s532 + $0x108] sm:$0xff]
        %v4396 = vld [vmem:[%s532 + $0x110] sm:$0xff]
        %v4397 = vld [vmem:[%s532 + $0x118] sm:$0xff]
        %v4398 = vld [vmem:[%s532 + $0x120] sm:$0xff]
        %v4399 = vld [vmem:[%s532 + $0x128] sm:$0xff]
        %v4400 = vld [vmem:[%s532 + $0x130] sm:$0xff]
        %v4401 = vld [vmem:[%s532 + $0x138] sm:$0xff]
        %v4402 = vld [vmem:[%s532 + $0x140] sm:$0xff]
        %v4403 = vld [vmem:[%s532 + $0x148] sm:$0xff]
        %v4404 = vld [vmem:[%s532 + $0x150] sm:$0xff]
        %v4405 = vld [vmem:[%s532 + $0x158] sm:$0xff]
        %v4406 = vld [vmem:[%s532 + $0x160] sm:$0xff]
        %v4407 = vld [vmem:[%s532 + $0x168] sm:$0xff]
        %v4408 = vld [vmem:[%s532 + $0x170] sm:$0xff]
        %v4409 = vld [vmem:[%s532 + $0x178] sm:$0xff]
        %v4410 = vld [vmem:[%s532 + $0x180] sm:$0xff]
        %v4411 = vld [vmem:[%s532 + $0x188] sm:$0xff]
        %v4412 = vld [vmem:[%s532 + $0x190] sm:$0xff]
        %v4413 = vld [vmem:[%s532 + $0x198] sm:$0xff]
        %v4414 = vld [vmem:[%s532 + $0x1a0] sm:$0xff]
        %v4415 = vld [vmem:[%s532 + $0x1a8] sm:$0xff]
        %v4416 = vld [vmem:[%s532 + $0x1b0] sm:$0xff]
        %v4417 = vld [vmem:[%s532 + $0x1b8] sm:$0xff]
        %v4418 = vld [vmem:[%s532 + $0x1c0] sm:$0xff]
        %v4419 = vld [vmem:[%s532 + $0x1c8] sm:$0xff]
        %v4420 = vld [vmem:[%s532 + $0x1d0] sm:$0xff]
        %v4421 = vld [vmem:[%s532 + $0x1d8] sm:$0xff]
        %v4422 = vld [vmem:[%s532 + $0x1e0] sm:$0xff]
        %v4423 = vld [vmem:[%s532 + $0x1e8] sm:$0xff]
        %v4424 = vld [vmem:[%s532 + $0x1f0] sm:$0xff]
        %v4425 = vld [vmem:[%s532 + $0x1f8] sm:$0xff]
        %v4426 = vld [vmem:[%s541] sm:$0x3]
        %v4428 = vlaneseq
        %v4429 = vshrl.u32 %v4428, 7
        %v4430 = vsub.s32 0, %v4429
        %v4431 = vrot.slane %v4426, %v4430
        %v4432 = vlaneseq
        %v4433 = vshrl.u32 %v4432, 7
        %v4434 = vsub.s32 1, %v4433
        %v4435 = vrot.slane %v4426, %v4434
        %4438 = vmatprep.subr.mxu0 %v4393
        %4439 = vmatpush1.msra.mxu0 %v4392
        %4440 = vmatprep.subr.mxu0 %v4391
        %4441 = vmatpush1.msra.mxu0 %v4390
        %4442 = vmatprep.subr.mxu0 %v4389
        %4443 = vmatpush1.msra.mxu0 %v4388
        %4444 = vmatprep.subr.mxu0 %v4387
        %4445 = vmatpush1.msra.mxu0 %v4386
        %4446 = vmatprep.subr.mxu0 %v4385
        %4447 = vmatpush1.msra.mxu0 %v4384
        %4448 = vmatprep.subr.mxu0 %v4383
        %4449 = vmatpush1.msra.mxu0 %v4382
        %4450 = vmatprep.subr.mxu0 %v4381
        %4451 = vmatpush1.msra.mxu0 %v4380
        %4452 = vmatprep.subr.mxu0 %v4379
        %4453 = vmatpush1.msra.mxu0 %v4378
        %4454 = vmatprep.subr.mxu0 %v4377
        %4455 = vmatpush1.msra.mxu0 %v4376
        %4456 = vmatprep.subr.mxu0 %v4375
        %4457 = vmatpush1.msra.mxu0 %v4374
        %4458 = vmatprep.subr.mxu0 %v4373
        %4459 = vmatpush1.msra.mxu0 %v4372
        %4460 = vmatprep.subr.mxu0 %v4371
        %4461 = vmatpush1.msra.mxu0 %v4370
        %4462 = vmatprep.subr.mxu0 %v4369
        %4463 = vmatpush1.msra.mxu0 %v4368
        %4464 = vmatprep.subr.mxu0 %v4367
        %4465 = vmatpush1.msra.mxu0 %v4366
        %4466 = vmatprep.subr.mxu0 %v4365
        %4467 = vmatpush1.msra.mxu0 %v4364
        %4468 = vmatprep.subr.mxu0 %v4363
        %4469 = vmatpush1.msra.mxu0 %v4362
        %4470 = vmatprep.subr.mxu0 %v4425
        %4471 = vmatpush2.msra.mxu0 %v4424
        %4472 = vmatprep.subr.mxu0 %v4423
        %4473 = vmatpush2.msra.mxu0 %v4422
        %4474 = vmatprep.subr.mxu0 %v4421
        %4475 = vmatpush2.msra.mxu0 %v4420
        %4476 = vmatprep.subr.mxu0 %v4419
        %4477 = vmatpush2.msra.mxu0 %v4418
        %4478 = vmatprep.subr.mxu0 %v4417
        %4479 = vmatpush2.msra.mxu0 %v4416
        %4480 = vmatprep.subr.mxu0 %v4415
        %4481 = vmatpush2.msra.mxu0 %v4414
        %4482 = vmatprep.subr.mxu0 %v4413
        %4483 = vmatpush2.msra.mxu0 %v4412
        %4484 = vmatprep.subr.mxu0 %v4411
        %4485 = vmatpush2.msra.mxu0 %v4410
        %4486 = vmatprep.subr.mxu0 %v4409
        %4487 = vmatpush2.msra.mxu0 %v4408
        %4488 = vmatprep.subr.mxu0 %v4407
        %4489 = vmatpush2.msra.mxu0 %v4406
        %4490 = vmatprep.subr.mxu0 %v4405
        %4491 = vmatpush2.msra.mxu0 %v4404
        %4492 = vmatprep.subr.mxu0 %v4403
        %4493 = vmatpush2.msra.mxu0 %v4402
        %4494 = vmatprep.subr.mxu0 %v4401
        %4495 = vmatpush2.msra.mxu0 %v4400
        %4496 = vmatprep.subr.mxu0 %v4399
        %4497 = vmatpush2.msra.mxu0 %v4398
        %4498 = vmatprep.subr.mxu0 %v4397
        %4499 = vmatpush2.msra.mxu0 %v4396
        %4500 = vmatprep.subr.mxu0 %v4395
        %4501 = vmatpush2.msra.mxu0 %v4394
        %4502 = vmatprep.mubr.f32.mxu0 %v4139
        %4503 = vmatmul.mubr.f32.gmra.mxu0 %v3207
        %v4504 = vpop.f32.mrf.mxu0
        %v4505 = vadd.f32 %v4431, %v4504
        %v4506 = vpop.f32.mrf.mxu0
        %v4507 = vadd.f32 %v4435, %v4506
        %4508 = vmatprep.mubr.f32.mxu0 %v4144
        %4509 = vmatmul.mubr.f32.gmra.mxu0 %v3212
        %v4510 = vpop.f32.mrf.mxu0
        %v4511 = vadd.f32 %v4431, %v4510
        %v4512 = vpop.f32.mrf.mxu0
        %v4513 = vadd.f32 %v4435, %v4512
        %4514 = vmatprep.mubr.f32.mxu0 %v4149
        %4515 = vmatmul.mubr.f32.gmra.mxu0 %v3217
        %v4516 = vpop.f32.mrf.mxu0
        %v4517 = vadd.f32 %v4431, %v4516
        %v4518 = vpop.f32.mrf.mxu0
        %v4519 = vadd.f32 %v4435, %v4518
        %4520 = vmatprep.mubr.f32.mxu0 %v4154
        %4521 = vmatmul.mubr.f32.gmra.mxu0 %v3222
        %v4522 = vpop.f32.mrf.mxu0
        %v4523 = vadd.f32 %v4431, %v4522
        %v4524 = vpop.f32.mrf.mxu0
        %v4525 = vadd.f32 %v4435, %v4524
        %4526 = vmatprep.mubr.f32.mxu0 %v4159
        %4527 = vmatmul.mubr.f32.gmra.mxu0 %v3227
        %v4528 = vpop.f32.mrf.mxu0
        %v4529 = vadd.f32 %v4431, %v4528
        %v4530 = vpop.f32.mrf.mxu0
        %v4531 = vadd.f32 %v4435, %v4530
        %4532 = vmatprep.mubr.f32.mxu0 %v4164
        %4533 = vmatmul.mubr.f32.gmra.mxu0 %v3232
        %v4534 = vpop.f32.mrf.mxu0
        %v4535 = vadd.f32 %v4431, %v4534
        %v4536 = vpop.f32.mrf.mxu0
        %v4537 = vadd.f32 %v4435, %v4536
        %4538 = vmatprep.mubr.f32.mxu0 %v4169
        %4539 = vmatmul.mubr.f32.gmra.mxu0 %v3237
        %v4540 = vpop.f32.mrf.mxu0
        %v4541 = vadd.f32 %v4431, %v4540
        %v4542 = vpop.f32.mrf.mxu0
        %v4543 = vadd.f32 %v4435, %v4542
        %4544 = vmatprep.mubr.f32.mxu0 %v4174
        %4545 = vmatmul.mubr.f32.gmra.mxu0 %v3242
        %v4546 = vpop.f32.mrf.mxu0
        %v4547 = vadd.f32 %v4431, %v4546
        %v4548 = vpop.f32.mrf.mxu0
        %v4549 = vadd.f32 %v4435, %v4548
        %4550 = vmatprep.mubr.f32.mxu0 %v4179
        %4551 = vmatmul.mubr.f32.gmra.mxu0 %v3247
        %v4552 = vpop.f32.mrf.mxu0
        %v4553 = vadd.f32 %v4431, %v4552
        %v4554 = vpop.f32.mrf.mxu0
        %v4555 = vadd.f32 %v4435, %v4554
        %4556 = vmatprep.mubr.f32.mxu0 %v4184
        %4557 = vmatmul.mubr.f32.gmra.mxu0 %v3252
        %v4558 = vpop.f32.mrf.mxu0
        %v4559 = vadd.f32 %v4431, %v4558
        %v4560 = vpop.f32.mrf.mxu0
        %v4561 = vadd.f32 %v4435, %v4560
        %4562 = vmatprep.mubr.f32.mxu0 %v4189
        %4563 = vmatmul.mubr.f32.gmra.mxu0 %v3257
        %v4564 = vpop.f32.mrf.mxu0
        %v4565 = vadd.f32 %v4431, %v4564
        %v4566 = vpop.f32.mrf.mxu0
        %v4567 = vadd.f32 %v4435, %v4566
        %4568 = vmatprep.mubr.f32.mxu0 %v4194
        %4569 = vmatmul.mubr.f32.gmra.mxu0 %v3262
        %v4570 = vpop.f32.mrf.mxu0
        %v4571 = vadd.f32 %v4431, %v4570
        %v4572 = vpop.f32.mrf.mxu0
        %v4573 = vadd.f32 %v4435, %v4572
        %4574 = vmatprep.mubr.f32.mxu0 %v4199
        %4575 = vmatmul.mubr.f32.gmra.mxu0 %v3267
        %v4576 = vpop.f32.mrf.mxu0
        %v4577 = vadd.f32 %v4431, %v4576
        %v4578 = vpop.f32.mrf.mxu0
        %v4579 = vadd.f32 %v4435, %v4578
        %4580 = vmatprep.mubr.f32.mxu0 %v4204
        %4581 = vmatmul.mubr.f32.gmra.mxu0 %v3272
        %v4582 = vpop.f32.mrf.mxu0
        %v4583 = vadd.f32 %v4431, %v4582
        %v4584 = vpop.f32.mrf.mxu0
        %v4585 = vadd.f32 %v4435, %v4584
        %4586 = vmatprep.mubr.f32.mxu0 %v4209
        %4587 = vmatmul.mubr.f32.gmra.mxu0 %v3277
        %v4588 = vpop.f32.mrf.mxu0
        %v4589 = vadd.f32 %v4431, %v4588
        %v4590 = vpop.f32.mrf.mxu0
        %v4591 = vadd.f32 %v4435, %v4590
        %4592 = vmatprep.mubr.f32.mxu0 %v4214
        %4593 = vmatmul.mubr.f32.gmra.mxu0 %v3282
        %v4594 = vpop.f32.mrf.mxu0
        %v4595 = vadd.f32 %v4431, %v4594
        %v4596 = vpop.f32.mrf.mxu0
        %v4597 = vadd.f32 %v4435, %v4596
        %4598 = vmatprep.mubr.f32.mxu0 %v4284
        %4599 = vmatmul.mubr.f32.gmra.mxu0 %v3352
        %v4600 = vpop.f32.mrf.mxu0
        %v4601 = vadd.f32 %v4431, %v4600
        %v4602 = vpop.f32.mrf.mxu0
        %v4603 = vadd.f32 %v4435, %v4602
        %4604 = vmatprep.mubr.f32.mxu0 %v4289
        %4605 = vmatmul.mubr.f32.gmra.mxu0 %v3357
        %v4606 = vpop.f32.mrf.mxu0
        %v4607 = vadd.f32 %v4431, %v4606
        %v4608 = vpop.f32.mrf.mxu0
        %v4609 = vadd.f32 %v4435, %v4608
        %4610 = vmatprep.mubr.f32.mxu0 %v4294
        %4611 = vmatmul.mubr.f32.gmra.mxu0 %v3362
        %v4612 = vpop.f32.mrf.mxu0
        %v4613 = vadd.f32 %v4431, %v4612
        %v4614 = vpop.f32.mrf.mxu0
        %v4615 = vadd.f32 %v4435, %v4614
        %4616 = vmatprep.mubr.f32.mxu0 %v4299
        %4617 = vmatmul.mubr.f32.gmra.mxu0 %v3367
        %v4618 = vpop.f32.mrf.mxu0
        %v4619 = vadd.f32 %v4431, %v4618
        %v4620 = vpop.f32.mrf.mxu0
        %v4621 = vadd.f32 %v4435, %v4620
        %4622 = vmatprep.mubr.f32.mxu0 %v4304
        %4623 = vmatmul.mubr.f32.gmra.mxu0 %v3372
        %v4624 = vpop.f32.mrf.mxu0
        %v4625 = vadd.f32 %v4431, %v4624
        %v4626 = vpop.f32.mrf.mxu0
        %v4627 = vadd.f32 %v4435, %v4626
        %4628 = vmatprep.mubr.f32.mxu0 %v4309
        %4629 = vmatmul.mubr.f32.gmra.mxu0 %v3377
        %v4630 = vpop.f32.mrf.mxu0
        %v4631 = vadd.f32 %v4431, %v4630
        %v4632 = vpop.f32.mrf.mxu0
        %v4633 = vadd.f32 %v4435, %v4632
        %4634 = vmatprep.mubr.f32.mxu0 %v4314
        %4635 = vmatmul.mubr.f32.gmra.mxu0 %v3382
        %v4636 = vpop.f32.mrf.mxu0
        %v4637 = vadd.f32 %v4431, %v4636
        %v4638 = vpop.f32.mrf.mxu0
        %v4639 = vadd.f32 %v4435, %v4638
        %4640 = vmatprep.mubr.f32.mxu0 %v4319
        %4641 = vmatmul.mubr.f32.gmra.mxu0 %v3387
        %v4642 = vpop.f32.mrf.mxu0
        %v4643 = vadd.f32 %v4431, %v4642
        %v4644 = vpop.f32.mrf.mxu0
        %v4645 = vadd.f32 %v4435, %v4644
        %4646 = vmatprep.mubr.f32.mxu0 %v4324
        %4647 = vmatmul.mubr.f32.gmra.mxu0 %v3392
        %v4648 = vpop.f32.mrf.mxu0
        %v4649 = vadd.f32 %v4431, %v4648
        %v4650 = vpop.f32.mrf.mxu0
        %v4651 = vadd.f32 %v4435, %v4650
        %4652 = vmatprep.mubr.f32.mxu0 %v4329
        %4653 = vmatmul.mubr.f32.gmra.mxu0 %v3397
        %v4654 = vpop.f32.mrf.mxu0
        %v4655 = vadd.f32 %v4431, %v4654
        %v4656 = vpop.f32.mrf.mxu0
        %v4657 = vadd.f32 %v4435, %v4656
        %4658 = vmatprep.mubr.f32.mxu0 %v4334
        %4659 = vmatmul.mubr.f32.gmra.mxu0 %v3402
        %v4660 = vpop.f32.mrf.mxu0
        %v4661 = vadd.f32 %v4431, %v4660
        %v4662 = vpop.f32.mrf.mxu0
        %v4663 = vadd.f32 %v4435, %v4662
        %4664 = vmatprep.mubr.f32.mxu0 %v4339
        %4665 = vmatmul.mubr.f32.gmra.mxu0 %v3407
        %v4666 = vpop.f32.mrf.mxu0
        %v4667 = vadd.f32 %v4431, %v4666
        %v4668 = vpop.f32.mrf.mxu0
        %v4669 = vadd.f32 %v4435, %v4668
        %4670 = vmatprep.mubr.f32.mxu0 %v4344
        %4671 = vmatmul.mubr.f32.gmra.mxu0 %v3412
        %v4672 = vpop.f32.mrf.mxu0
        %v4673 = vadd.f32 %v4431, %v4672
        %v4674 = vpop.f32.mrf.mxu0
        %v4675 = vadd.f32 %v4435, %v4674
        %4676 = vmatprep.mubr.f32.mxu0 %v4349
        %4677 = vmatmul.mubr.f32.gmra.mxu0 %v3417
        %v4678 = vpop.f32.mrf.mxu0
        %v4679 = vadd.f32 %v4431, %v4678
        %v4680 = vpop.f32.mrf.mxu0
        %v4681 = vadd.f32 %v4435, %v4680
        %4682 = vmatprep.mubr.f32.mxu0 %v4354
        %4683 = vmatmul.mubr.f32.gmra.mxu0 %v3422
        %v4684 = vpop.f32.mrf.mxu0
        %v4685 = vadd.f32 %v4431, %v4684
        %v4686 = vpop.f32.mrf.mxu0
        %v4687 = vadd.f32 %v4435, %v4686
        %4688 = vmatprep.mubr.f32.mxu0 %v4359
        %4689 = vmatmul.mubr.f32.gmra.mxu0 %v3427
        %v4690 = vpop.f32.mrf.mxu0
        %v4691 = vadd.f32 %v4431, %v4690
        %v4692 = vpop.f32.mrf.mxu0
        %v4693 = vadd.f32 %v4435, %v4692
        %4694 = vdwg.mxu0
        %v4695 = vadd.f32 %v776, %v4505
        %v4696 = vadd.f32 %v777, %v4507
        %v4697 = vadd.f32 %v778, %v4511
        %v4698 = vadd.f32 %v779, %v4513
        %v4699 = vadd.f32 %v780, %v4517
        %v4700 = vadd.f32 %v781, %v4519
        %v4701 = vadd.f32 %v782, %v4523
        %v4702 = vadd.f32 %v783, %v4525
        %v4703 = vadd.f32 %v784, %v4529
        %v4704 = vadd.f32 %v785, %v4531
        %v4705 = vadd.f32 %v786, %v4535
        %v4706 = vadd.f32 %v787, %v4537
        %v4707 = vadd.f32 %v788, %v4541
        %v4708 = vadd.f32 %v789, %v4543
        %v4709 = vadd.f32 %v790, %v4547
        %v4710 = vadd.f32 %v791, %v4549
        %v4711 = vadd.f32 %v792, %v4553
        %v4712 = vadd.f32 %v793, %v4555
        %v4713 = vadd.f32 %v794, %v4559
        %v4714 = vadd.f32 %v795, %v4561
        %v4715 = vadd.f32 %v796, %v4565
        %v4716 = vadd.f32 %v797, %v4567
        %v4717 = vadd.f32 %v798, %v4571
        %v4718 = vadd.f32 %v799, %v4573
        %v4719 = vadd.f32 %v800, %v4577
        %v4720 = vadd.f32 %v801, %v4579
        %v4721 = vadd.f32 %v802, %v4583
        %v4722 = vadd.f32 %v803, %v4585
        %v4723 = vadd.f32 %v804, %v4589
        %v4724 = vadd.f32 %v805, %v4591
        %v4725 = vadd.f32 %v806, %v4595
        %v4726 = vadd.f32 %v807, %v4597
        %v4727 = vadd.f32 %v808, %v4601
        %v4728 = vadd.f32 %v809, %v4603
        %v4729 = vadd.f32 %v810, %v4607
        %v4730 = vadd.f32 %v811, %v4609
        %v4731 = vadd.f32 %v812, %v4613
        %v4732 = vadd.f32 %v813, %v4615
        %v4733 = vadd.f32 %v814, %v4619
        %v4734 = vadd.f32 %v815, %v4621
        %v4735 = vadd.f32 %v816, %v4625
        %v4736 = vadd.f32 %v817, %v4627
        %v4737 = vadd.f32 %v818, %v4631
        %v4738 = vadd.f32 %v819, %v4633
        %v4739 = vadd.f32 %v820, %v4637
        %v4740 = vadd.f32 %v821, %v4639
        %v4741 = vadd.f32 %v822, %v4643
        %v4742 = vadd.f32 %v823, %v4645
        %v4743 = vadd.f32 %v824, %v4649
        %v4744 = vadd.f32 %v825, %v4651
        %v4745 = vadd.f32 %v826, %v4655
        %v4746 = vadd.f32 %v827, %v4657
        %v4747 = vadd.f32 %v828, %v4661
        %v4748 = vadd.f32 %v829, %v4663
        %v4749 = vadd.f32 %v830, %v4667
        %v4750 = vadd.f32 %v831, %v4669
        %v4751 = vadd.f32 %v832, %v4673
        %v4752 = vadd.f32 %v833, %v4675
        %v4753 = vadd.f32 %v834, %v4679
        %v4754 = vadd.f32 %v835, %v4681
        %v4755 = vadd.f32 %v836, %v4685
        %v4756 = vadd.f32 %v837, %v4687
        %v4757 = vadd.f32 %v838, %v4691
        %v4758 = vadd.f32 %v839, %v4693
        %v4759 = vadd.f32 %v4695, %v4696
        %4760 = vadd.xlane.f32.xlu0 %v4759
        %v4761 = vpop.xlane.xlu0 %4760
        %v4762 = vadd.f32 %v4697, %v4698
        %4763 = vadd.xlane.f32.xlu0 %v4762
        %v4764 = vpop.xlane.xlu0 %4763
        %v4765 = vadd.f32 %v4699, %v4700
        %4766 = vadd.xlane.f32.xlu0 %v4765
        %v4767 = vpop.xlane.xlu0 %4766
        %v4768 = vadd.f32 %v4701, %v4702
        %4769 = vadd.xlane.f32.xlu0 %v4768
        %v4770 = vpop.xlane.xlu0 %4769
        %v4771 = vadd.f32 %v4703, %v4704
        %4772 = vadd.xlane.f32.xlu0 %v4771
        %v4773 = vpop.xlane.xlu0 %4772
        %v4774 = vadd.f32 %v4705, %v4706
        %4775 = vadd.xlane.f32.xlu0 %v4774
        %v4776 = vpop.xlane.xlu0 %4775
        %v4777 = vadd.f32 %v4707, %v4708
        %4778 = vadd.xlane.f32.xlu0 %v4777
        %v4779 = vpop.xlane.xlu0 %4778
        %v4780 = vadd.f32 %v4709, %v4710
        %4781 = vadd.xlane.f32.xlu0 %v4780
        %v4782 = vpop.xlane.xlu0 %4781
        %v4783 = vadd.f32 %v4711, %v4712
        %4784 = vadd.xlane.f32.xlu0 %v4783
        %v4785 = vpop.xlane.xlu0 %4784
        %v4786 = vadd.f32 %v4713, %v4714
        %4787 = vadd.xlane.f32.xlu0 %v4786
        %v4788 = vpop.xlane.xlu0 %4787
        %v4789 = vadd.f32 %v4715, %v4716
        %4790 = vadd.xlane.f32.xlu0 %v4789
        %v4791 = vpop.xlane.xlu0 %4790
        %v4792 = vadd.f32 %v4717, %v4718
        %4793 = vadd.xlane.f32.xlu0 %v4792
        %v4794 = vpop.xlane.xlu0 %4793
        %v4795 = vadd.f32 %v4719, %v4720
        %4796 = vadd.xlane.f32.xlu0 %v4795
        %v4797 = vpop.xlane.xlu0 %4796
        %v4798 = vadd.f32 %v4721, %v4722
        %4799 = vadd.xlane.f32.xlu0 %v4798
        %v4800 = vpop.xlane.xlu0 %4799
        %v4801 = vadd.f32 %v4723, %v4724
        %4802 = vadd.xlane.f32.xlu0 %v4801
        %v4803 = vpop.xlane.xlu0 %4802
        %v4804 = vadd.f32 %v4725, %v4726
        %4805 = vadd.xlane.f32.xlu0 %v4804
        %v4806 = vpop.xlane.xlu0 %4805
        %v4807 = vadd.f32 %v4727, %v4728
        %4808 = vadd.xlane.f32.xlu0 %v4807
        %v4809 = vpop.xlane.xlu0 %4808
        %v4810 = vadd.f32 %v4729, %v4730
        %4811 = vadd.xlane.f32.xlu0 %v4810
        %v4812 = vpop.xlane.xlu0 %4811
        %v4813 = vadd.f32 %v4731, %v4732
        %4814 = vadd.xlane.f32.xlu0 %v4813
        %v4815 = vpop.xlane.xlu0 %4814
        %v4816 = vadd.f32 %v4733, %v4734
        %4817 = vadd.xlane.f32.xlu0 %v4816
        %v4818 = vpop.xlane.xlu0 %4817
        %v4819 = vadd.f32 %v4735, %v4736
        %4820 = vadd.xlane.f32.xlu0 %v4819
        %v4821 = vpop.xlane.xlu0 %4820
        %v4822 = vadd.f32 %v4737, %v4738
        %4823 = vadd.xlane.f32.xlu0 %v4822
        %v4824 = vpop.xlane.xlu0 %4823
        %v4825 = vadd.f32 %v4739, %v4740
        %4826 = vadd.xlane.f32.xlu0 %v4825
        %v4827 = vpop.xlane.xlu0 %4826
        %v4828 = vadd.f32 %v4741, %v4742
        %4829 = vadd.xlane.f32.xlu0 %v4828
        %v4830 = vpop.xlane.xlu0 %4829
        %v4831 = vadd.f32 %v4743, %v4744
        %4832 = vadd.xlane.f32.xlu0 %v4831
        %v4833 = vpop.xlane.xlu0 %4832
        %v4834 = vadd.f32 %v4745, %v4746
        %4835 = vadd.xlane.f32.xlu0 %v4834
        %v4836 = vpop.xlane.xlu0 %4835
        %v4837 = vadd.f32 %v4747, %v4748
        %4838 = vadd.xlane.f32.xlu0 %v4837
        %v4839 = vpop.xlane.xlu0 %4838
        %v4840 = vadd.f32 %v4749, %v4750
        %4841 = vadd.xlane.f32.xlu0 %v4840
        %v4842 = vpop.xlane.xlu0 %4841
        %v4843 = vadd.f32 %v4751, %v4752
        %4844 = vadd.xlane.f32.xlu0 %v4843
        %v4845 = vpop.xlane.xlu0 %4844
        %v4846 = vadd.f32 %v4753, %v4754
        %4847 = vadd.xlane.f32.xlu0 %v4846
        %v4848 = vpop.xlane.xlu0 %4847
        %v4849 = vadd.f32 %v4755, %v4756
        %4850 = vadd.xlane.f32.xlu0 %v4849
        %v4851 = vpop.xlane.xlu0 %4850
        %v4852 = vadd.f32 %v4757, %v4758
        %4853 = vadd.xlane.f32.xlu0 %v4852
        %v4854 = vpop.xlane.xlu0 %4853
        %v4855 = vmul.f32 %v4761, %v937
        %v4856 = vmul.f32 %v4764, %v937
        %v4857 = vmul.f32 %v4767, %v937
        %v4858 = vmul.f32 %v4770, %v937
        %v4859 = vmul.f32 %v4773, %v937
        %v4860 = vmul.f32 %v4776, %v937
        %v4861 = vmul.f32 %v4779, %v937
        %v4862 = vmul.f32 %v4782, %v937
        %v4863 = vmul.f32 %v4785, %v937
        %v4864 = vmul.f32 %v4788, %v937
        %v4865 = vmul.f32 %v4791, %v937
        %v4866 = vmul.f32 %v4794, %v937
        %v4867 = vmul.f32 %v4797, %v937
        %v4868 = vmul.f32 %v4800, %v937
        %v4869 = vmul.f32 %v4803, %v937
        %v4870 = vmul.f32 %v4806, %v937
        %v4871 = vmul.f32 %v4809, %v937
        %v4872 = vmul.f32 %v4812, %v937
        %v4873 = vmul.f32 %v4815, %v937
        %v4874 = vmul.f32 %v4818, %v937
        %v4875 = vmul.f32 %v4821, %v937
        %v4876 = vmul.f32 %v4824, %v937
        %v4877 = vmul.f32 %v4827, %v937
        %v4878 = vmul.f32 %v4830, %v937
        %v4879 = vmul.f32 %v4833, %v937
        %v4880 = vmul.f32 %v4836, %v937
        %v4881 = vmul.f32 %v4839, %v937
        %v4882 = vmul.f32 %v4842, %v937
        %v4883 = vmul.f32 %v4845, %v937
        %v4884 = vmul.f32 %v4848, %v937
        %v4885 = vmul.f32 %v4851, %v937
        %v4886 = vmul.f32 %v4854, %v937
        %v4887 = vsub.f32 %v4695, %v4855
        %v4888 = vsub.f32 %v4696, %v4855
        %v4889 = vsub.f32 %v4697, %v4856
        %v4890 = vsub.f32 %v4698, %v4856
        %v4891 = vsub.f32 %v4699, %v4857
        %v4892 = vsub.f32 %v4700, %v4857
        %v4893 = vsub.f32 %v4701, %v4858
        %v4894 = vsub.f32 %v4702, %v4858
        %v4895 = vsub.f32 %v4703, %v4859
        %v4896 = vsub.f32 %v4704, %v4859
        %v4897 = vsub.f32 %v4705, %v4860
        %v4898 = vsub.f32 %v4706, %v4860
        %v4899 = vsub.f32 %v4707, %v4861
        %v4900 = vsub.f32 %v4708, %v4861
        %v4901 = vsub.f32 %v4709, %v4862
        %v4902 = vsub.f32 %v4710, %v4862
        %v4903 = vsub.f32 %v4711, %v4863
        %v4904 = vsub.f32 %v4712, %v4863
        %v4905 = vsub.f32 %v4713, %v4864
        %v4906 = vsub.f32 %v4714, %v4864
        %v4907 = vsub.f32 %v4715, %v4865
        %v4908 = vsub.f32 %v4716, %v4865
        %v4909 = vsub.f32 %v4717, %v4866
        %v4910 = vsub.f32 %v4718, %v4866
        %v4911 = vsub.f32 %v4719, %v4867
        %v4912 = vsub.f32 %v4720, %v4867
        %v4913 = vsub.f32 %v4721, %v4868
        %v4914 = vsub.f32 %v4722, %v4868
        %v4915 = vsub.f32 %v4723, %v4869
        %v4916 = vsub.f32 %v4724, %v4869
        %v4917 = vsub.f32 %v4725, %v4870
        %v4918 = vsub.f32 %v4726, %v4870
        %v4919 = vsub.f32 %v4727, %v4871
        %v4920 = vsub.f32 %v4728, %v4871
        %v4921 = vsub.f32 %v4729, %v4872
        %v4922 = vsub.f32 %v4730, %v4872
        %v4923 = vsub.f32 %v4731, %v4873
        %v4924 = vsub.f32 %v4732, %v4873
        %v4925 = vsub.f32 %v4733, %v4874
        %v4926 = vsub.f32 %v4734, %v4874
        %v4927 = vsub.f32 %v4735, %v4875
        %v4928 = vsub.f32 %v4736, %v4875
        %v4929 = vsub.f32 %v4737, %v4876
        %v4930 = vsub.f32 %v4738, %v4876
        %v4931 = vsub.f32 %v4739, %v4877
        %v4932 = vsub.f32 %v4740, %v4877
        %v4933 = vsub.f32 %v4741, %v4878
        %v4934 = vsub.f32 %v4742, %v4878
        %v4935 = vsub.f32 %v4743, %v4879
        %v4936 = vsub.f32 %v4744, %v4879
        %v4937 = vsub.f32 %v4745, %v4880
        %v4938 = vsub.f32 %v4746, %v4880
        %v4939 = vsub.f32 %v4747, %v4881
        %v4940 = vsub.f32 %v4748, %v4881
        %v4941 = vsub.f32 %v4749, %v4882
        %v4942 = vsub.f32 %v4750, %v4882
        %v4943 = vsub.f32 %v4751, %v4883
        %v4944 = vsub.f32 %v4752, %v4883
        %v4945 = vsub.f32 %v4753, %v4884
        %v4946 = vsub.f32 %v4754, %v4884
        %v4947 = vsub.f32 %v4755, %v4885
        %v4948 = vsub.f32 %v4756, %v4885
        %v4949 = vsub.f32 %v4757, %v4886
        %v4950 = vsub.f32 %v4758, %v4886
        %v4951 = vmul.f32 %v4887, %v4887
        %v4952 = vmul.f32 %v4888, %v4888
        %v4953 = vmul.f32 %v4889, %v4889
        %v4954 = vmul.f32 %v4890, %v4890
        %v4955 = vmul.f32 %v4891, %v4891
        %v4956 = vmul.f32 %v4892, %v4892
        %v4957 = vmul.f32 %v4893, %v4893
        %v4958 = vmul.f32 %v4894, %v4894
        %v4959 = vmul.f32 %v4895, %v4895
        %v4960 = vmul.f32 %v4896, %v4896
        %v4961 = vmul.f32 %v4897, %v4897
        %v4962 = vmul.f32 %v4898, %v4898
        %v4963 = vmul.f32 %v4899, %v4899
        %v4964 = vmul.f32 %v4900, %v4900
        %v4965 = vmul.f32 %v4901, %v4901
        %v4966 = vmul.f32 %v4902, %v4902
        %v4967 = vmul.f32 %v4903, %v4903
        %v4968 = vmul.f32 %v4904, %v4904
        %v4969 = vmul.f32 %v4905, %v4905
        %v4970 = vmul.f32 %v4906, %v4906
        %v4971 = vmul.f32 %v4907, %v4907
        %v4972 = vmul.f32 %v4908, %v4908
        %v4973 = vmul.f32 %v4909, %v4909
        %v4974 = vmul.f32 %v4910, %v4910
        %v4975 = vmul.f32 %v4911, %v4911
        %v4976 = vmul.f32 %v4912, %v4912
        %v4977 = vmul.f32 %v4913, %v4913
        %v4978 = vmul.f32 %v4914, %v4914
        %v4979 = vmul.f32 %v4915, %v4915
        %v4980 = vmul.f32 %v4916, %v4916
        %v4981 = vmul.f32 %v4917, %v4917
        %v4982 = vmul.f32 %v4918, %v4918
        %v4983 = vmul.f32 %v4919, %v4919
        %v4984 = vmul.f32 %v4920, %v4920
        %v4985 = vmul.f32 %v4921, %v4921
        %v4986 = vmul.f32 %v4922, %v4922
        %v4987 = vmul.f32 %v4923, %v4923
        %v4988 = vmul.f32 %v4924, %v4924
        %v4989 = vmul.f32 %v4925, %v4925
        %v4990 = vmul.f32 %v4926, %v4926
        %v4991 = vmul.f32 %v4927, %v4927
        %v4992 = vmul.f32 %v4928, %v4928
        %v4993 = vmul.f32 %v4929, %v4929
        %v4994 = vmul.f32 %v4930, %v4930
        %v4995 = vmul.f32 %v4931, %v4931
        %v4996 = vmul.f32 %v4932, %v4932
        %v4997 = vmul.f32 %v4933, %v4933
        %v4998 = vmul.f32 %v4934, %v4934
        %v4999 = vmul.f32 %v4935, %v4935
        %v5000 = vmul.f32 %v4936, %v4936
        %v5001 = vmul.f32 %v4937, %v4937
        %v5002 = vmul.f32 %v4938, %v4938
        %v5003 = vmul.f32 %v4939, %v4939
        %v5004 = vmul.f32 %v4940, %v4940
        %v5005 = vmul.f32 %v4941, %v4941
        %v5006 = vmul.f32 %v4942, %v4942
        %v5007 = vmul.f32 %v4943, %v4943
        %v5008 = vmul.f32 %v4944, %v4944
        %v5009 = vmul.f32 %v4945, %v4945
        %v5010 = vmul.f32 %v4946, %v4946
        %v5011 = vmul.f32 %v4947, %v4947
        %v5012 = vmul.f32 %v4948, %v4948
        %v5013 = vmul.f32 %v4949, %v4949
        %v5014 = vmul.f32 %v4950, %v4950
        %v5015 = vadd.f32 %v4951, %v4952
        %5016 = vadd.xlane.f32.xlu0 %v5015
        %v5017 = vpop.xlane.xlu0 %5016
        %v5018 = vadd.f32 %v4953, %v4954
        %5019 = vadd.xlane.f32.xlu0 %v5018
        %v5020 = vpop.xlane.xlu0 %5019
        %v5021 = vadd.f32 %v4955, %v4956
        %5022 = vadd.xlane.f32.xlu0 %v5021
        %v5023 = vpop.xlane.xlu0 %5022
        %v5024 = vadd.f32 %v4957, %v4958
        %5025 = vadd.xlane.f32.xlu0 %v5024
        %v5026 = vpop.xlane.xlu0 %5025
        %v5027 = vadd.f32 %v4959, %v4960
        %5028 = vadd.xlane.f32.xlu0 %v5027
        %v5029 = vpop.xlane.xlu0 %5028
        %v5030 = vadd.f32 %v4961, %v4962
        %5031 = vadd.xlane.f32.xlu0 %v5030
        %v5032 = vpop.xlane.xlu0 %5031
        %v5033 = vadd.f32 %v4963, %v4964
        %5034 = vadd.xlane.f32.xlu0 %v5033
        %v5035 = vpop.xlane.xlu0 %5034
        %v5036 = vadd.f32 %v4965, %v4966
        %5037 = vadd.xlane.f32.xlu0 %v5036
        %v5038 = vpop.xlane.xlu0 %5037
        %v5039 = vadd.f32 %v4967, %v4968
        %5040 = vadd.xlane.f32.xlu0 %v5039
        %v5041 = vpop.xlane.xlu0 %5040
        %v5042 = vadd.f32 %v4969, %v4970
        %5043 = vadd.xlane.f32.xlu0 %v5042
        %v5044 = vpop.xlane.xlu0 %5043
        %v5045 = vadd.f32 %v4971, %v4972
        %5046 = vadd.xlane.f32.xlu0 %v5045
        %v5047 = vpop.xlane.xlu0 %5046
        %v5048 = vadd.f32 %v4973, %v4974
        %5049 = vadd.xlane.f32.xlu0 %v5048
        %v5050 = vpop.xlane.xlu0 %5049
        %v5051 = vadd.f32 %v4975, %v4976
        %5052 = vadd.xlane.f32.xlu0 %v5051
        %v5053 = vpop.xlane.xlu0 %5052
        %v5054 = vadd.f32 %v4977, %v4978
        %5055 = vadd.xlane.f32.xlu0 %v5054
        %v5056 = vpop.xlane.xlu0 %5055
        %v5057 = vadd.f32 %v4979, %v4980
        %5058 = vadd.xlane.f32.xlu0 %v5057
        %v5059 = vpop.xlane.xlu0 %5058
        %v5060 = vadd.f32 %v4981, %v4982
        %5061 = vadd.xlane.f32.xlu0 %v5060
        %v5062 = vpop.xlane.xlu0 %5061
        %v5063 = vadd.f32 %v4983, %v4984
        %5064 = vadd.xlane.f32.xlu0 %v5063
        %v5065 = vpop.xlane.xlu0 %5064
        %v5066 = vadd.f32 %v4985, %v4986
        %5067 = vadd.xlane.f32.xlu0 %v5066
        %v5068 = vpop.xlane.xlu0 %5067
        %v5069 = vadd.f32 %v4987, %v4988
        %5070 = vadd.xlane.f32.xlu0 %v5069
        %v5071 = vpop.xlane.xlu0 %5070
        %v5072 = vadd.f32 %v4989, %v4990
        %5073 = vadd.xlane.f32.xlu0 %v5072
        %v5074 = vpop.xlane.xlu0 %5073
        %v5075 = vadd.f32 %v4991, %v4992
        %5076 = vadd.xlane.f32.xlu0 %v5075
        %v5077 = vpop.xlane.xlu0 %5076
        %v5078 = vadd.f32 %v4993, %v4994
        %5079 = vadd.xlane.f32.xlu0 %v5078
        %v5080 = vpop.xlane.xlu0 %5079
        %v5081 = vadd.f32 %v4995, %v4996
        %5082 = vadd.xlane.f32.xlu0 %v5081
        %v5083 = vpop.xlane.xlu0 %5082
        %v5084 = vadd.f32 %v4997, %v4998
        %5085 = vadd.xlane.f32.xlu0 %v5084
        %v5086 = vpop.xlane.xlu0 %5085
        %v5087 = vadd.f32 %v4999, %v5000
        %5088 = vadd.xlane.f32.xlu0 %v5087
        %v5089 = vpop.xlane.xlu0 %5088
        %v5090 = vadd.f32 %v5001, %v5002
        %5091 = vadd.xlane.f32.xlu0 %v5090
        %v5092 = vpop.xlane.xlu0 %5091
        %v5093 = vadd.f32 %v5003, %v5004
        %5094 = vadd.xlane.f32.xlu0 %v5093
        %v5095 = vpop.xlane.xlu0 %5094
        %v5096 = vadd.f32 %v5005, %v5006
        %5097 = vadd.xlane.f32.xlu0 %v5096
        %v5098 = vpop.xlane.xlu0 %5097
        %v5099 = vadd.f32 %v5007, %v5008
        %5100 = vadd.xlane.f32.xlu0 %v5099
        %v5101 = vpop.xlane.xlu0 %5100
        %v5102 = vadd.f32 %v5009, %v5010
        %5103 = vadd.xlane.f32.xlu0 %v5102
        %v5104 = vpop.xlane.xlu0 %5103
        %v5105 = vadd.f32 %v5011, %v5012
        %5106 = vadd.xlane.f32.xlu0 %v5105
        %v5107 = vpop.xlane.xlu0 %5106
        %v5108 = vadd.f32 %v5013, %v5014
        %5109 = vadd.xlane.f32.xlu0 %v5108
        %v5110 = vpop.xlane.xlu0 %5109
        %v5111 = vmul.f32 %v5017, %v937
        %v5112 = vmul.f32 %v5020, %v937
        %v5113 = vmul.f32 %v5023, %v937
        %v5114 = vmul.f32 %v5026, %v937
        %v5115 = vmul.f32 %v5029, %v937
        %v5116 = vmul.f32 %v5032, %v937
        %v5117 = vmul.f32 %v5035, %v937
        %v5118 = vmul.f32 %v5038, %v937
        %v5119 = vmul.f32 %v5041, %v937
        %v5120 = vmul.f32 %v5044, %v937
        %v5121 = vmul.f32 %v5047, %v937
        %v5122 = vmul.f32 %v5050, %v937
        %v5123 = vmul.f32 %v5053, %v937
        %v5124 = vmul.f32 %v5056, %v937
        %v5125 = vmul.f32 %v5059, %v937
        %v5126 = vmul.f32 %v5062, %v937
        %v5127 = vmul.f32 %v5065, %v937
        %v5128 = vmul.f32 %v5068, %v937
        %v5129 = vmul.f32 %v5071, %v937
        %v5130 = vmul.f32 %v5074, %v937
        %v5131 = vmul.f32 %v5077, %v937
        %v5132 = vmul.f32 %v5080, %v937
        %v5133 = vmul.f32 %v5083, %v937
        %v5134 = vmul.f32 %v5086, %v937
        %v5135 = vmul.f32 %v5089, %v937
        %v5136 = vmul.f32 %v5092, %v937
        %v5137 = vmul.f32 %v5095, %v937
        %v5138 = vmul.f32 %v5098, %v937
        %v5139 = vmul.f32 %v5101, %v937
        %v5140 = vmul.f32 %v5104, %v937
        %v5141 = vmul.f32 %v5107, %v937
        %v5142 = vmul.f32 %v5110, %v937
        %v5143 = vadd.f32 %v5111, 1e-05
        %v5144 = vadd.f32 %v5112, 1e-05
        %v5145 = vadd.f32 %v5113, 1e-05
        %v5146 = vadd.f32 %v5114, 1e-05
        %v5147 = vadd.f32 %v5115, 1e-05
        %v5148 = vadd.f32 %v5116, 1e-05
        %v5149 = vadd.f32 %v5117, 1e-05
        %v5150 = vadd.f32 %v5118, 1e-05
        %v5151 = vadd.f32 %v5119, 1e-05
        %v5152 = vadd.f32 %v5120, 1e-05
        %v5153 = vadd.f32 %v5121, 1e-05
        %v5154 = vadd.f32 %v5122, 1e-05
        %v5155 = vadd.f32 %v5123, 1e-05
        %v5156 = vadd.f32 %v5124, 1e-05
        %v5157 = vadd.f32 %v5125, 1e-05
        %v5158 = vadd.f32 %v5126, 1e-05
        %v5159 = vadd.f32 %v5127, 1e-05
        %v5160 = vadd.f32 %v5128, 1e-05
        %v5161 = vadd.f32 %v5129, 1e-05
        %v5162 = vadd.f32 %v5130, 1e-05
        %v5163 = vadd.f32 %v5131, 1e-05
        %v5164 = vadd.f32 %v5132, 1e-05
        %v5165 = vadd.f32 %v5133, 1e-05
        %v5166 = vadd.f32 %v5134, 1e-05
        %v5167 = vadd.f32 %v5135, 1e-05
        %v5168 = vadd.f32 %v5136, 1e-05
        %v5169 = vadd.f32 %v5137, 1e-05
        %v5170 = vadd.f32 %v5138, 1e-05
        %v5171 = vadd.f32 %v5139, 1e-05
        %v5172 = vadd.f32 %v5140, 1e-05
        %v5173 = vadd.f32 %v5141, 1e-05
        %v5174 = vadd.f32 %v5142, 1e-05
        %v5175 = vrsqrt.pop %v5143
        %v5176 = vrsqrt.pop %v5144
        %v5177 = vrsqrt.pop %v5145
        %v5178 = vrsqrt.pop %v5146
        %v5179 = vrsqrt.pop %v5147
        %v5180 = vrsqrt.pop %v5148
        %v5181 = vrsqrt.pop %v5149
        %v5182 = vrsqrt.pop %v5150
        %v5183 = vrsqrt.pop %v5151
        %v5184 = vrsqrt.pop %v5152
        %v5185 = vrsqrt.pop %v5153
        %v5186 = vrsqrt.pop %v5154
        %v5187 = vrsqrt.pop %v5155
        %v5188 = vrsqrt.pop %v5156
        %v5189 = vrsqrt.pop %v5157
        %v5190 = vrsqrt.pop %v5158
        %v5191 = vrsqrt.pop %v5159
        %v5192 = vrsqrt.pop %v5160
        %v5193 = vrsqrt.pop %v5161
        %v5194 = vrsqrt.pop %v5162
        %v5195 = vrsqrt.pop %v5163
        %v5196 = vrsqrt.pop %v5164
        %v5197 = vrsqrt.pop %v5165
        %v5198 = vrsqrt.pop %v5166
        %v5199 = vrsqrt.pop %v5167
        %v5200 = vrsqrt.pop %v5168
        %v5201 = vrsqrt.pop %v5169
        %v5202 = vrsqrt.pop %v5170
        %v5203 = vrsqrt.pop %v5171
        %v5204 = vrsqrt.pop %v5172
        %v5205 = vrsqrt.pop %v5173
        %v5206 = vrsqrt.pop %v5174
        %v5207 = vmul.f32 %v4887, %v5175
        %v5208 = vmul.f32 %v4888, %v5175
        %v5209 = vmul.f32 %v4889, %v5176
        %v5210 = vmul.f32 %v4890, %v5176
        %v5211 = vmul.f32 %v4891, %v5177
        %v5212 = vmul.f32 %v4892, %v5177
        %v5213 = vmul.f32 %v4893, %v5178
        %v5214 = vmul.f32 %v4894, %v5178
        %v5215 = vmul.f32 %v4895, %v5179
        %v5216 = vmul.f32 %v4896, %v5179
        %v5217 = vmul.f32 %v4897, %v5180
        %v5218 = vmul.f32 %v4898, %v5180
        %v5219 = vmul.f32 %v4899, %v5181
        %v5220 = vmul.f32 %v4900, %v5181
        %v5221 = vmul.f32 %v4901, %v5182
        %v5222 = vmul.f32 %v4902, %v5182
        %v5223 = vmul.f32 %v4903, %v5183
        %v5224 = vmul.f32 %v4904, %v5183
        %v5225 = vmul.f32 %v4905, %v5184
        %v5226 = vmul.f32 %v4906, %v5184
        %v5227 = vmul.f32 %v4907, %v5185
        %v5228 = vmul.f32 %v4908, %v5185
        %v5229 = vmul.f32 %v4909, %v5186
        %v5230 = vmul.f32 %v4910, %v5186
        %v5231 = vmul.f32 %v4911, %v5187
        %v5232 = vmul.f32 %v4912, %v5187
        %v5233 = vmul.f32 %v4913, %v5188
        %v5234 = vmul.f32 %v4914, %v5188
        %v5235 = vmul.f32 %v4915, %v5189
        %v5236 = vmul.f32 %v4916, %v5189
        %v5237 = vmul.f32 %v4917, %v5190
        %v5238 = vmul.f32 %v4918, %v5190
        %v5239 = vmul.f32 %v4919, %v5191
        %v5240 = vmul.f32 %v4920, %v5191
        %v5241 = vmul.f32 %v4921, %v5192
        %v5242 = vmul.f32 %v4922, %v5192
        %v5243 = vmul.f32 %v4923, %v5193
        %v5244 = vmul.f32 %v4924, %v5193
        %v5245 = vmul.f32 %v4925, %v5194
        %v5246 = vmul.f32 %v4926, %v5194
        %v5247 = vmul.f32 %v4927, %v5195
        %v5248 = vmul.f32 %v4928, %v5195
        %v5249 = vmul.f32 %v4929, %v5196
        %v5250 = vmul.f32 %v4930, %v5196
        %v5251 = vmul.f32 %v4931, %v5197
        %v5252 = vmul.f32 %v4932, %v5197
        %v5253 = vmul.f32 %v4933, %v5198
        %v5254 = vmul.f32 %v4934, %v5198
        %v5255 = vmul.f32 %v4935, %v5199
        %v5256 = vmul.f32 %v4936, %v5199
        %v5257 = vmul.f32 %v4937, %v5200
        %v5258 = vmul.f32 %v4938, %v5200
        %v5259 = vmul.f32 %v4939, %v5201
        %v5260 = vmul.f32 %v4940, %v5201
        %v5261 = vmul.f32 %v4941, %v5202
        %v5262 = vmul.f32 %v4942, %v5202
        %v5263 = vmul.f32 %v4943, %v5203
        %v5264 = vmul.f32 %v4944, %v5203
        %v5265 = vmul.f32 %v4945, %v5204
        %v5266 = vmul.f32 %v4946, %v5204
        %v5267 = vmul.f32 %v4947, %v5205
        %v5268 = vmul.f32 %v4948, %v5205
        %v5269 = vmul.f32 %v4949, %v5206
        %v5270 = vmul.f32 %v4950, %v5206
        %v5271 = vlaneseq
        %v5272 = vshrl.u32 %v5271, 7
        %v5273 = vsub.s32 2, %v5272
        %v5274 = vrot.slane %v840, %v5273
        %v5275 = vlaneseq
        %v5276 = vshrl.u32 %v5275, 7
        %v5277 = vsub.s32 6, %v5276
        %v5278 = vrot.slane %v840, %v5277
        %v5281 = vlaneseq
        %v5282 = vshrl.u32 %v5281, 7
        %v5283 = vsub.s32 2, %v5282
        %v5284 = vrot.slane %v5274, %v5283
        %v5285 = vlaneseq
        %v5286 = vshrl.u32 %v5285, 7
        %v5287 = vsub.s32 2, %v5286
        %v5288 = vrot.slane %v5278, %v5287
        %v5289 = vmul.f32 %v5207, %v5284
        %v5290 = vmul.f32 %v5208, %v5288
        %v5291 = vmul.f32 %v5209, %v5284
        %v5292 = vmul.f32 %v5210, %v5288
        %v5293 = vmul.f32 %v5211, %v5284
        %v5294 = vmul.f32 %v5212, %v5288
        %v5295 = vmul.f32 %v5213, %v5284
        %v5296 = vmul.f32 %v5214, %v5288
        %v5297 = vmul.f32 %v5215, %v5284
        %v5298 = vmul.f32 %v5216, %v5288
        %v5299 = vmul.f32 %v5217, %v5284
        %v5300 = vmul.f32 %v5218, %v5288
        %v5301 = vmul.f32 %v5219, %v5284
        %v5302 = vmul.f32 %v5220, %v5288
        %v5303 = vmul.f32 %v5221, %v5284
        %v5304 = vmul.f32 %v5222, %v5288
        %v5305 = vmul.f32 %v5223, %v5284
        %v5306 = vmul.f32 %v5224, %v5288
        %v5307 = vmul.f32 %v5225, %v5284
        %v5308 = vmul.f32 %v5226, %v5288
        %v5309 = vmul.f32 %v5227, %v5284
        %v5310 = vmul.f32 %v5228, %v5288
        %v5311 = vmul.f32 %v5229, %v5284
        %v5312 = vmul.f32 %v5230, %v5288
        %v5313 = vmul.f32 %v5231, %v5284
        %v5314 = vmul.f32 %v5232, %v5288
        %v5315 = vmul.f32 %v5233, %v5284
        %v5316 = vmul.f32 %v5234, %v5288
        %v5317 = vmul.f32 %v5235, %v5284
        %v5318 = vmul.f32 %v5236, %v5288
        %v5319 = vmul.f32 %v5237, %v5284
        %v5320 = vmul.f32 %v5238, %v5288
        %v5321 = vmul.f32 %v5239, %v5284
        %v5322 = vmul.f32 %v5240, %v5288
        %v5323 = vmul.f32 %v5241, %v5284
        %v5324 = vmul.f32 %v5242, %v5288
        %v5325 = vmul.f32 %v5243, %v5284
        %v5326 = vmul.f32 %v5244, %v5288
        %v5327 = vmul.f32 %v5245, %v5284
        %v5328 = vmul.f32 %v5246, %v5288
        %v5329 = vmul.f32 %v5247, %v5284
        %v5330 = vmul.f32 %v5248, %v5288
        %v5331 = vmul.f32 %v5249, %v5284
        %v5332 = vmul.f32 %v5250, %v5288
        %v5333 = vmul.f32 %v5251, %v5284
        %v5334 = vmul.f32 %v5252, %v5288
        %v5335 = vmul.f32 %v5253, %v5284
        %v5336 = vmul.f32 %v5254, %v5288
        %v5337 = vmul.f32 %v5255, %v5284
        %v5338 = vmul.f32 %v5256, %v5288
        %v5339 = vmul.f32 %v5257, %v5284
        %v5340 = vmul.f32 %v5258, %v5288
        %v5341 = vmul.f32 %v5259, %v5284
        %v5342 = vmul.f32 %v5260, %v5288
        %v5343 = vmul.f32 %v5261, %v5284
        %v5344 = vmul.f32 %v5262, %v5288
        %v5345 = vmul.f32 %v5263, %v5284
        %v5346 = vmul.f32 %v5264, %v5288
        %v5347 = vmul.f32 %v5265, %v5284
        %v5348 = vmul.f32 %v5266, %v5288
        %v5349 = vmul.f32 %v5267, %v5284
        %v5350 = vmul.f32 %v5268, %v5288
        %v5351 = vmul.f32 %v5269, %v5284
        %v5352 = vmul.f32 %v5270, %v5288
        %v5353 = vlaneseq
        %v5354 = vshrl.u32 %v5353, 7
        %v5355 = vsub.s32 3, %v5354
        %v5356 = vrot.slane %v840, %v5355
        %v5357 = vlaneseq
        %v5358 = vshrl.u32 %v5357, 7
        %v5359 = vsub.s32 7, %v5358
        %v5360 = vrot.slane %v840, %v5359
        %v5363 = vlaneseq
        %v5364 = vshrl.u32 %v5363, 7
        %v5365 = vsub.s32 3, %v5364
        %v5366 = vrot.slane %v5356, %v5365
        %v5367 = vlaneseq
        %v5368 = vshrl.u32 %v5367, 7
        %v5369 = vsub.s32 3, %v5368
        %v5370 = vrot.slane %v5360, %v5369
        %v5371 = vadd.f32 %v5289, %v5366
        %v5372 = vadd.f32 %v5290, %v5370
        %v5373 = vadd.f32 %v5291, %v5366
        %v5374 = vadd.f32 %v5292, %v5370
        %v5375 = vadd.f32 %v5293, %v5366
        %v5376 = vadd.f32 %v5294, %v5370
        %v5377 = vadd.f32 %v5295, %v5366
        %v5378 = vadd.f32 %v5296, %v5370
        %v5379 = vadd.f32 %v5297, %v5366
        %v5380 = vadd.f32 %v5298, %v5370
        %v5381 = vadd.f32 %v5299, %v5366
        %v5382 = vadd.f32 %v5300, %v5370
        %v5383 = vadd.f32 %v5301, %v5366
        %v5384 = vadd.f32 %v5302, %v5370
        %v5385 = vadd.f32 %v5303, %v5366
        %v5386 = vadd.f32 %v5304, %v5370
        %v5387 = vadd.f32 %v5305, %v5366
        %v5388 = vadd.f32 %v5306, %v5370
        %v5389 = vadd.f32 %v5307, %v5366
        %v5390 = vadd.f32 %v5308, %v5370
        %v5391 = vadd.f32 %v5309, %v5366
        %v5392 = vadd.f32 %v5310, %v5370
        %v5393 = vadd.f32 %v5311, %v5366
        %v5394 = vadd.f32 %v5312, %v5370
        %v5395 = vadd.f32 %v5313, %v5366
        %v5396 = vadd.f32 %v5314, %v5370
        %v5397 = vadd.f32 %v5315, %v5366
        %v5398 = vadd.f32 %v5316, %v5370
        %v5399 = vadd.f32 %v5317, %v5366
        %v5400 = vadd.f32 %v5318, %v5370
        %v5401 = vadd.f32 %v5319, %v5366
        %v5402 = vadd.f32 %v5320, %v5370
        %v5403 = vadd.f32 %v5321, %v5366
        %v5404 = vadd.f32 %v5322, %v5370
        %v5405 = vadd.f32 %v5323, %v5366
        %v5406 = vadd.f32 %v5324, %v5370
        %v5407 = vadd.f32 %v5325, %v5366
        %v5408 = vadd.f32 %v5326, %v5370
        %v5409 = vadd.f32 %v5327, %v5366
        %v5410 = vadd.f32 %v5328, %v5370
        %v5411 = vadd.f32 %v5329, %v5366
        %v5412 = vadd.f32 %v5330, %v5370
        %v5413 = vadd.f32 %v5331, %v5366
        %v5414 = vadd.f32 %v5332, %v5370
        %v5415 = vadd.f32 %v5333, %v5366
        %v5416 = vadd.f32 %v5334, %v5370
        %v5417 = vadd.f32 %v5335, %v5366
        %v5418 = vadd.f32 %v5336, %v5370
        %v5419 = vadd.f32 %v5337, %v5366
        %v5420 = vadd.f32 %v5338, %v5370
        %v5421 = vadd.f32 %v5339, %v5366
        %v5422 = vadd.f32 %v5340, %v5370
        %v5423 = vadd.f32 %v5341, %v5366
        %v5424 = vadd.f32 %v5342, %v5370
        %v5425 = vadd.f32 %v5343, %v5366
        %v5426 = vadd.f32 %v5344, %v5370
        %v5427 = vadd.f32 %v5345, %v5366
        %v5428 = vadd.f32 %v5346, %v5370
        %v5429 = vadd.f32 %v5347, %v5366
        %v5430 = vadd.f32 %v5348, %v5370
        %v5431 = vadd.f32 %v5349, %v5366
        %v5432 = vadd.f32 %v5350, %v5370
        %v5433 = vadd.f32 %v5351, %v5366
        %v5434 = vadd.f32 %v5352, %v5370
        %v5435 = vld [vmem:[%s550] sm:$0xff]
        %v5436 = vld [vmem:[%s550 + $0x8] sm:$0xff]
        %v5437 = vld [vmem:[%s550 + $0x10] sm:$0xff]
        %v5438 = vld [vmem:[%s550 + $0x18] sm:$0xff]
        %v5439 = vld [vmem:[%s550 + $0x20] sm:$0xff]
        %v5440 = vld [vmem:[%s550 + $0x28] sm:$0xff]
        %v5441 = vld [vmem:[%s550 + $0x30] sm:$0xff]
        %v5442 = vld [vmem:[%s550 + $0x38] sm:$0xff]
        %v5443 = vld [vmem:[%s550 + $0x40] sm:$0xff]
        %v5444 = vld [vmem:[%s550 + $0x48] sm:$0xff]
        %v5445 = vld [vmem:[%s550 + $0x50] sm:$0xff]
        %v5446 = vld [vmem:[%s550 + $0x58] sm:$0xff]
        %v5447 = vld [vmem:[%s550 + $0x60] sm:$0xff]
        %v5448 = vld [vmem:[%s550 + $0x68] sm:$0xff]
        %v5449 = vld [vmem:[%s550 + $0x70] sm:$0xff]
        %v5450 = vld [vmem:[%s550 + $0x78] sm:$0xff]
        %v5451 = vld [vmem:[%s550 + $0x80] sm:$0xff]
        %v5452 = vld [vmem:[%s550 + $0x88] sm:$0xff]
        %v5453 = vld [vmem:[%s550 + $0x90] sm:$0xff]
        %v5454 = vld [vmem:[%s550 + $0x98] sm:$0xff]
        %v5455 = vld [vmem:[%s550 + $0xa0] sm:$0xff]
        %v5456 = vld [vmem:[%s550 + $0xa8] sm:$0xff]
        %v5457 = vld [vmem:[%s550 + $0xb0] sm:$0xff]
        %v5458 = vld [vmem:[%s550 + $0xb8] sm:$0xff]
        %v5459 = vld [vmem:[%s550 + $0xc0] sm:$0xff]
        %v5460 = vld [vmem:[%s550 + $0xc8] sm:$0xff]
        %v5461 = vld [vmem:[%s550 + $0xd0] sm:$0xff]
        %v5462 = vld [vmem:[%s550 + $0xd8] sm:$0xff]
        %v5463 = vld [vmem:[%s550 + $0xe0] sm:$0xff]
        %v5464 = vld [vmem:[%s550 + $0xe8] sm:$0xff]
        %v5465 = vld [vmem:[%s550 + $0xf0] sm:$0xff]
        %v5466 = vld [vmem:[%s550 + $0xf8] sm:$0xff]
        %v5467 = vld [vmem:[%s550 + $0x100] sm:$0xff]
        %v5468 = vld [vmem:[%s550 + $0x108] sm:$0xff]
        %v5469 = vld [vmem:[%s550 + $0x110] sm:$0xff]
        %v5470 = vld [vmem:[%s550 + $0x118] sm:$0xff]
        %v5471 = vld [vmem:[%s550 + $0x120] sm:$0xff]
        %v5472 = vld [vmem:[%s550 + $0x128] sm:$0xff]
        %v5473 = vld [vmem:[%s550 + $0x130] sm:$0xff]
        %v5474 = vld [vmem:[%s550 + $0x138] sm:$0xff]
        %v5475 = vld [vmem:[%s550 + $0x140] sm:$0xff]
        %v5476 = vld [vmem:[%s550 + $0x148] sm:$0xff]
        %v5477 = vld [vmem:[%s550 + $0x150] sm:$0xff]
        %v5478 = vld [vmem:[%s550 + $0x158] sm:$0xff]
        %v5479 = vld [vmem:[%s550 + $0x160] sm:$0xff]
        %v5480 = vld [vmem:[%s550 + $0x168] sm:$0xff]
        %v5481 = vld [vmem:[%s550 + $0x170] sm:$0xff]
        %v5482 = vld [vmem:[%s550 + $0x178] sm:$0xff]
        %v5483 = vld [vmem:[%s550 + $0x180] sm:$0xff]
        %v5484 = vld [vmem:[%s550 + $0x188] sm:$0xff]
        %v5485 = vld [vmem:[%s550 + $0x190] sm:$0xff]
        %v5486 = vld [vmem:[%s550 + $0x198] sm:$0xff]
        %v5487 = vld [vmem:[%s550 + $0x1a0] sm:$0xff]
        %v5488 = vld [vmem:[%s550 + $0x1a8] sm:$0xff]
        %v5489 = vld [vmem:[%s550 + $0x1b0] sm:$0xff]
        %v5490 = vld [vmem:[%s550 + $0x1b8] sm:$0xff]
        %v5491 = vld [vmem:[%s550 + $0x1c0] sm:$0xff]
        %v5492 = vld [vmem:[%s550 + $0x1c8] sm:$0xff]
        %v5493 = vld [vmem:[%s550 + $0x1d0] sm:$0xff]
        %v5494 = vld [vmem:[%s550 + $0x1d8] sm:$0xff]
        %v5495 = vld [vmem:[%s550 + $0x1e0] sm:$0xff]
        %v5496 = vld [vmem:[%s550 + $0x1e8] sm:$0xff]
        %v5497 = vld [vmem:[%s550 + $0x1f0] sm:$0xff]
        %v5498 = vld [vmem:[%s550 + $0x1f8] sm:$0xff]
        %v5499 = vld [vmem:[%s550 + $0x200] sm:$0xff]
        %v5500 = vld [vmem:[%s550 + $0x208] sm:$0xff]
        %v5501 = vld [vmem:[%s550 + $0x210] sm:$0xff]
        %v5502 = vld [vmem:[%s550 + $0x218] sm:$0xff]
        %v5503 = vld [vmem:[%s550 + $0x220] sm:$0xff]
        %v5504 = vld [vmem:[%s550 + $0x228] sm:$0xff]
        %v5505 = vld [vmem:[%s550 + $0x230] sm:$0xff]
        %v5506 = vld [vmem:[%s550 + $0x238] sm:$0xff]
        %v5507 = vld [vmem:[%s550 + $0x240] sm:$0xff]
        %v5508 = vld [vmem:[%s550 + $0x248] sm:$0xff]
        %v5509 = vld [vmem:[%s550 + $0x250] sm:$0xff]
        %v5510 = vld [vmem:[%s550 + $0x258] sm:$0xff]
        %v5511 = vld [vmem:[%s550 + $0x260] sm:$0xff]
        %v5512 = vld [vmem:[%s550 + $0x268] sm:$0xff]
        %v5513 = vld [vmem:[%s550 + $0x270] sm:$0xff]
        %v5514 = vld [vmem:[%s550 + $0x278] sm:$0xff]
        %v5515 = vld [vmem:[%s550 + $0x280] sm:$0xff]
        %v5516 = vld [vmem:[%s550 + $0x288] sm:$0xff]
        %v5517 = vld [vmem:[%s550 + $0x290] sm:$0xff]
        %v5518 = vld [vmem:[%s550 + $0x298] sm:$0xff]
        %v5519 = vld [vmem:[%s550 + $0x2a0] sm:$0xff]
        %v5520 = vld [vmem:[%s550 + $0x2a8] sm:$0xff]
        %v5521 = vld [vmem:[%s550 + $0x2b0] sm:$0xff]
        %v5522 = vld [vmem:[%s550 + $0x2b8] sm:$0xff]
        %v5523 = vld [vmem:[%s550 + $0x2c0] sm:$0xff]
        %v5524 = vld [vmem:[%s550 + $0x2c8] sm:$0xff]
        %v5525 = vld [vmem:[%s550 + $0x2d0] sm:$0xff]
        %v5526 = vld [vmem:[%s550 + $0x2d8] sm:$0xff]
        %v5527 = vld [vmem:[%s550 + $0x2e0] sm:$0xff]
        %v5528 = vld [vmem:[%s550 + $0x2e8] sm:$0xff]
        %v5529 = vld [vmem:[%s550 + $0x2f0] sm:$0xff]
        %v5530 = vld [vmem:[%s550 + $0x2f8] sm:$0xff]
        %v5531 = vld [vmem:[%s550 + $0x300] sm:$0xff]
        %v5532 = vld [vmem:[%s550 + $0x308] sm:$0xff]
        %v5533 = vld [vmem:[%s550 + $0x310] sm:$0xff]
        %v5534 = vld [vmem:[%s550 + $0x318] sm:$0xff]
        %v5535 = vld [vmem:[%s550 + $0x320] sm:$0xff]
        %v5536 = vld [vmem:[%s550 + $0x328] sm:$0xff]
        %v5537 = vld [vmem:[%s550 + $0x330] sm:$0xff]
        %v5538 = vld [vmem:[%s550 + $0x338] sm:$0xff]
        %v5539 = vld [vmem:[%s550 + $0x340] sm:$0xff]
        %v5540 = vld [vmem:[%s550 + $0x348] sm:$0xff]
        %v5541 = vld [vmem:[%s550 + $0x350] sm:$0xff]
        %v5542 = vld [vmem:[%s550 + $0x358] sm:$0xff]
        %v5543 = vld [vmem:[%s550 + $0x360] sm:$0xff]
        %v5544 = vld [vmem:[%s550 + $0x368] sm:$0xff]
        %v5545 = vld [vmem:[%s550 + $0x370] sm:$0xff]
        %v5546 = vld [vmem:[%s550 + $0x378] sm:$0xff]
        %v5547 = vld [vmem:[%s550 + $0x380] sm:$0xff]
        %v5548 = vld [vmem:[%s550 + $0x388] sm:$0xff]
        %v5549 = vld [vmem:[%s550 + $0x390] sm:$0xff]
        %v5550 = vld [vmem:[%s550 + $0x398] sm:$0xff]
        %v5551 = vld [vmem:[%s550 + $0x3a0] sm:$0xff]
        %v5552 = vld [vmem:[%s550 + $0x3a8] sm:$0xff]
        %v5553 = vld [vmem:[%s550 + $0x3b0] sm:$0xff]
        %v5554 = vld [vmem:[%s550 + $0x3b8] sm:$0xff]
        %v5555 = vld [vmem:[%s550 + $0x3c0] sm:$0xff]
        %v5556 = vld [vmem:[%s550 + $0x3c8] sm:$0xff]
        %v5557 = vld [vmem:[%s550 + $0x3d0] sm:$0xff]
        %v5558 = vld [vmem:[%s550 + $0x3d8] sm:$0xff]
        %v5559 = vld [vmem:[%s550 + $0x3e0] sm:$0xff]
        %v5560 = vld [vmem:[%s550 + $0x3e8] sm:$0xff]
        %v5561 = vld [vmem:[%s550 + $0x3f0] sm:$0xff]
        %v5562 = vld [vmem:[%s550 + $0x3f8] sm:$0xff]
        %v5563 = vld [vmem:[%s550 + $0x400] sm:$0xff]
        %v5564 = vld [vmem:[%s550 + $0x408] sm:$0xff]
        %v5565 = vld [vmem:[%s550 + $0x410] sm:$0xff]
        %v5566 = vld [vmem:[%s550 + $0x418] sm:$0xff]
        %v5567 = vld [vmem:[%s550 + $0x420] sm:$0xff]
        %v5568 = vld [vmem:[%s550 + $0x428] sm:$0xff]
        %v5569 = vld [vmem:[%s550 + $0x430] sm:$0xff]
        %v5570 = vld [vmem:[%s550 + $0x438] sm:$0xff]
        %v5571 = vld [vmem:[%s550 + $0x440] sm:$0xff]
        %v5572 = vld [vmem:[%s550 + $0x448] sm:$0xff]
        %v5573 = vld [vmem:[%s550 + $0x450] sm:$0xff]
        %v5574 = vld [vmem:[%s550 + $0x458] sm:$0xff]
        %v5575 = vld [vmem:[%s550 + $0x460] sm:$0xff]
        %v5576 = vld [vmem:[%s550 + $0x468] sm:$0xff]
        %v5577 = vld [vmem:[%s550 + $0x470] sm:$0xff]
        %v5578 = vld [vmem:[%s550 + $0x478] sm:$0xff]
        %v5579 = vld [vmem:[%s550 + $0x480] sm:$0xff]
        %v5580 = vld [vmem:[%s550 + $0x488] sm:$0xff]
        %v5581 = vld [vmem:[%s550 + $0x490] sm:$0xff]
        %v5582 = vld [vmem:[%s550 + $0x498] sm:$0xff]
        %v5583 = vld [vmem:[%s550 + $0x4a0] sm:$0xff]
        %v5584 = vld [vmem:[%s550 + $0x4a8] sm:$0xff]
        %v5585 = vld [vmem:[%s550 + $0x4b0] sm:$0xff]
        %v5586 = vld [vmem:[%s550 + $0x4b8] sm:$0xff]
        %v5587 = vld [vmem:[%s550 + $0x4c0] sm:$0xff]
        %v5588 = vld [vmem:[%s550 + $0x4c8] sm:$0xff]
        %v5589 = vld [vmem:[%s550 + $0x4d0] sm:$0xff]
        %v5590 = vld [vmem:[%s550 + $0x4d8] sm:$0xff]
        %v5591 = vld [vmem:[%s550 + $0x4e0] sm:$0xff]
        %v5592 = vld [vmem:[%s550 + $0x4e8] sm:$0xff]
        %v5593 = vld [vmem:[%s550 + $0x4f0] sm:$0xff]
        %v5594 = vld [vmem:[%s550 + $0x4f8] sm:$0xff]
        %v5595 = vld [vmem:[%s550 + $0x500] sm:$0xff]
        %v5596 = vld [vmem:[%s550 + $0x508] sm:$0xff]
        %v5597 = vld [vmem:[%s550 + $0x510] sm:$0xff]
        %v5598 = vld [vmem:[%s550 + $0x518] sm:$0xff]
        %v5599 = vld [vmem:[%s550 + $0x520] sm:$0xff]
        %v5600 = vld [vmem:[%s550 + $0x528] sm:$0xff]
        %v5601 = vld [vmem:[%s550 + $0x530] sm:$0xff]
        %v5602 = vld [vmem:[%s550 + $0x538] sm:$0xff]
        %v5603 = vld [vmem:[%s550 + $0x540] sm:$0xff]
        %v5604 = vld [vmem:[%s550 + $0x548] sm:$0xff]
        %v5605 = vld [vmem:[%s550 + $0x550] sm:$0xff]
        %v5606 = vld [vmem:[%s550 + $0x558] sm:$0xff]
        %v5607 = vld [vmem:[%s550 + $0x560] sm:$0xff]
        %v5608 = vld [vmem:[%s550 + $0x568] sm:$0xff]
        %v5609 = vld [vmem:[%s550 + $0x570] sm:$0xff]
        %v5610 = vld [vmem:[%s550 + $0x578] sm:$0xff]
        %v5611 = vld [vmem:[%s550 + $0x580] sm:$0xff]
        %v5612 = vld [vmem:[%s550 + $0x588] sm:$0xff]
        %v5613 = vld [vmem:[%s550 + $0x590] sm:$0xff]
        %v5614 = vld [vmem:[%s550 + $0x598] sm:$0xff]
        %v5615 = vld [vmem:[%s550 + $0x5a0] sm:$0xff]
        %v5616 = vld [vmem:[%s550 + $0x5a8] sm:$0xff]
        %v5617 = vld [vmem:[%s550 + $0x5b0] sm:$0xff]
        %v5618 = vld [vmem:[%s550 + $0x5b8] sm:$0xff]
        %v5619 = vld [vmem:[%s550 + $0x5c0] sm:$0xff]
        %v5620 = vld [vmem:[%s550 + $0x5c8] sm:$0xff]
        %v5621 = vld [vmem:[%s550 + $0x5d0] sm:$0xff]
        %v5622 = vld [vmem:[%s550 + $0x5d8] sm:$0xff]
        %v5623 = vld [vmem:[%s550 + $0x5e0] sm:$0xff]
        %v5624 = vld [vmem:[%s550 + $0x5e8] sm:$0xff]
        %v5625 = vld [vmem:[%s550 + $0x5f0] sm:$0xff]
        %v5626 = vld [vmem:[%s550 + $0x5f8] sm:$0xff]
        %v5627 = vld [vmem:[%s550 + $0x600] sm:$0xff]
        %v5628 = vld [vmem:[%s550 + $0x608] sm:$0xff]
        %v5629 = vld [vmem:[%s550 + $0x610] sm:$0xff]
        %v5630 = vld [vmem:[%s550 + $0x618] sm:$0xff]
        %v5631 = vld [vmem:[%s550 + $0x620] sm:$0xff]
        %v5632 = vld [vmem:[%s550 + $0x628] sm:$0xff]
        %v5633 = vld [vmem:[%s550 + $0x630] sm:$0xff]
        %v5634 = vld [vmem:[%s550 + $0x638] sm:$0xff]
        %v5635 = vld [vmem:[%s550 + $0x640] sm:$0xff]
        %v5636 = vld [vmem:[%s550 + $0x648] sm:$0xff]
        %v5637 = vld [vmem:[%s550 + $0x650] sm:$0xff]
        %v5638 = vld [vmem:[%s550 + $0x658] sm:$0xff]
        %v5639 = vld [vmem:[%s550 + $0x660] sm:$0xff]
        %v5640 = vld [vmem:[%s550 + $0x668] sm:$0xff]
        %v5641 = vld [vmem:[%s550 + $0x670] sm:$0xff]
        %v5642 = vld [vmem:[%s550 + $0x678] sm:$0xff]
        %v5643 = vld [vmem:[%s550 + $0x680] sm:$0xff]
        %v5644 = vld [vmem:[%s550 + $0x688] sm:$0xff]
        %v5645 = vld [vmem:[%s550 + $0x690] sm:$0xff]
        %v5646 = vld [vmem:[%s550 + $0x698] sm:$0xff]
        %v5647 = vld [vmem:[%s550 + $0x6a0] sm:$0xff]
        %v5648 = vld [vmem:[%s550 + $0x6a8] sm:$0xff]
        %v5649 = vld [vmem:[%s550 + $0x6b0] sm:$0xff]
        %v5650 = vld [vmem:[%s550 + $0x6b8] sm:$0xff]
        %v5651 = vld [vmem:[%s550 + $0x6c0] sm:$0xff]
        %v5652 = vld [vmem:[%s550 + $0x6c8] sm:$0xff]
        %v5653 = vld [vmem:[%s550 + $0x6d0] sm:$0xff]
        %v5654 = vld [vmem:[%s550 + $0x6d8] sm:$0xff]
        %v5655 = vld [vmem:[%s550 + $0x6e0] sm:$0xff]
        %v5656 = vld [vmem:[%s550 + $0x6e8] sm:$0xff]
        %v5657 = vld [vmem:[%s550 + $0x6f0] sm:$0xff]
        %v5658 = vld [vmem:[%s550 + $0x6f8] sm:$0xff]
        %v5659 = vld [vmem:[%s550 + $0x700] sm:$0xff]
        %v5660 = vld [vmem:[%s550 + $0x708] sm:$0xff]
        %v5661 = vld [vmem:[%s550 + $0x710] sm:$0xff]
        %v5662 = vld [vmem:[%s550 + $0x718] sm:$0xff]
        %v5663 = vld [vmem:[%s550 + $0x720] sm:$0xff]
        %v5664 = vld [vmem:[%s550 + $0x728] sm:$0xff]
        %v5665 = vld [vmem:[%s550 + $0x730] sm:$0xff]
        %v5666 = vld [vmem:[%s550 + $0x738] sm:$0xff]
        %v5667 = vld [vmem:[%s550 + $0x740] sm:$0xff]
        %v5668 = vld [vmem:[%s550 + $0x748] sm:$0xff]
        %v5669 = vld [vmem:[%s550 + $0x750] sm:$0xff]
        %v5670 = vld [vmem:[%s550 + $0x758] sm:$0xff]
        %v5671 = vld [vmem:[%s550 + $0x760] sm:$0xff]
        %v5672 = vld [vmem:[%s550 + $0x768] sm:$0xff]
        %v5673 = vld [vmem:[%s550 + $0x770] sm:$0xff]
        %v5674 = vld [vmem:[%s550 + $0x778] sm:$0xff]
        %v5675 = vld [vmem:[%s550 + $0x780] sm:$0xff]
        %v5676 = vld [vmem:[%s550 + $0x788] sm:$0xff]
        %v5677 = vld [vmem:[%s550 + $0x790] sm:$0xff]
        %v5678 = vld [vmem:[%s550 + $0x798] sm:$0xff]
        %v5679 = vld [vmem:[%s550 + $0x7a0] sm:$0xff]
        %v5680 = vld [vmem:[%s550 + $0x7a8] sm:$0xff]
        %v5681 = vld [vmem:[%s550 + $0x7b0] sm:$0xff]
        %v5682 = vld [vmem:[%s550 + $0x7b8] sm:$0xff]
        %v5683 = vld [vmem:[%s550 + $0x7c0] sm:$0xff]
        %v5684 = vld [vmem:[%s550 + $0x7c8] sm:$0xff]
        %v5685 = vld [vmem:[%s550 + $0x7d0] sm:$0xff]
        %v5686 = vld [vmem:[%s550 + $0x7d8] sm:$0xff]
        %v5687 = vld [vmem:[%s550 + $0x7e0] sm:$0xff]
        %v5688 = vld [vmem:[%s550 + $0x7e8] sm:$0xff]
        %v5689 = vld [vmem:[%s550 + $0x7f0] sm:$0xff]
        %v5690 = vld [vmem:[%s550 + $0x7f8] sm:$0xff]
        %v5691 = vld [vmem:[%s559] sm:$0xff]
        %v5693 = vlaneseq
        %v5694 = vshrl.u32 %v5693, 7
        %v5695 = vsub.s32 0, %v5694
        %v5696 = vrot.slane %v5691, %v5695
        %v5697 = vlaneseq
        %v5698 = vshrl.u32 %v5697, 7
        %v5699 = vsub.s32 1, %v5698
        %v5700 = vrot.slane %v5691, %v5699
        %v5701 = vlaneseq
        %v5702 = vshrl.u32 %v5701, 7
        %v5703 = vsub.s32 2, %v5702
        %v5704 = vrot.slane %v5691, %v5703
        %v5705 = vlaneseq
        %v5706 = vshrl.u32 %v5705, 7
        %v5707 = vsub.s32 3, %v5706
        %v5708 = vrot.slane %v5691, %v5707
        %v5709 = vlaneseq
        %v5710 = vshrl.u32 %v5709, 7
        %v5711 = vsub.s32 4, %v5710
        %v5712 = vrot.slane %v5691, %v5711
        %v5713 = vlaneseq
        %v5714 = vshrl.u32 %v5713, 7
        %v5715 = vsub.s32 5, %v5714
        %v5716 = vrot.slane %v5691, %v5715
        %v5717 = vlaneseq
        %v5718 = vshrl.u32 %v5717, 7
        %v5719 = vsub.s32 6, %v5718
        %v5720 = vrot.slane %v5691, %v5719
        %v5721 = vlaneseq
        %v5722 = vshrl.u32 %v5721, 7
        %v5723 = vsub.s32 7, %v5722
        %v5724 = vrot.slane %v5691, %v5723
        %5733 = vmatprep.subr.mxu0 %v5556
        %5734 = vmatpush1.msra.mxu0 %v5555
        %5735 = vmatprep.subr.mxu0 %v5548
        %5736 = vmatpush1.msra.mxu0 %v5547
        %5737 = vmatprep.subr.mxu0 %v5540
        %5738 = vmatpush1.msra.mxu0 %v5539
        %5739 = vmatprep.subr.mxu0 %v5532
        %5740 = vmatpush1.msra.mxu0 %v5531
        %5741 = vmatprep.subr.mxu0 %v5524
        %5742 = vmatpush1.msra.mxu0 %v5523
        %5743 = vmatprep.subr.mxu0 %v5516
        %5744 = vmatpush1.msra.mxu0 %v5515
        %5745 = vmatprep.subr.mxu0 %v5508
        %5746 = vmatpush1.msra.mxu0 %v5507
        %5747 = vmatprep.subr.mxu0 %v5500
        %5748 = vmatpush1.msra.mxu0 %v5499
        %5749 = vmatprep.subr.mxu0 %v5492
        %5750 = vmatpush1.msra.mxu0 %v5491
        %5751 = vmatprep.subr.mxu0 %v5484
        %5752 = vmatpush1.msra.mxu0 %v5483
        %5753 = vmatprep.subr.mxu0 %v5476
        %5754 = vmatpush1.msra.mxu0 %v5475
        %5755 = vmatprep.subr.mxu0 %v5468
        %5756 = vmatpush1.msra.mxu0 %v5467
        %5757 = vmatprep.subr.mxu0 %v5460
        %5758 = vmatpush1.msra.mxu0 %v5459
        %5759 = vmatprep.subr.mxu0 %v5452
        %5760 = vmatpush1.msra.mxu0 %v5451
        %5761 = vmatprep.subr.mxu0 %v5444
        %5762 = vmatpush1.msra.mxu0 %v5443
        %5763 = vmatprep.subr.mxu0 %v5436
        %5764 = vmatpush1.msra.mxu0 %v5435
        %5765 = vmatprep.subr.mxu0 %v5684
        %5766 = vmatpush2.msra.mxu0 %v5683
        %5767 = vmatprep.subr.mxu0 %v5676
        %5768 = vmatpush2.msra.mxu0 %v5675
        %5769 = vmatprep.subr.mxu0 %v5668
        %5770 = vmatpush2.msra.mxu0 %v5667
        %5771 = vmatprep.subr.mxu0 %v5660
        %5772 = vmatpush2.msra.mxu0 %v5659
        %5773 = vmatprep.subr.mxu0 %v5652
        %5774 = vmatpush2.msra.mxu0 %v5651
        %5775 = vmatprep.subr.mxu0 %v5644
        %5776 = vmatpush2.msra.mxu0 %v5643
        %5777 = vmatprep.subr.mxu0 %v5636
        %5778 = vmatpush2.msra.mxu0 %v5635
        %5779 = vmatprep.subr.mxu0 %v5628
        %5780 = vmatpush2.msra.mxu0 %v5627
        %5781 = vmatprep.subr.mxu0 %v5620
        %5782 = vmatpush2.msra.mxu0 %v5619
        %5783 = vmatprep.subr.mxu0 %v5612
        %5784 = vmatpush2.msra.mxu0 %v5611
        %5785 = vmatprep.subr.mxu0 %v5604
        %5786 = vmatpush2.msra.mxu0 %v5603
        %5787 = vmatprep.subr.mxu0 %v5596
        %5788 = vmatpush2.msra.mxu0 %v5595
        %5789 = vmatprep.subr.mxu0 %v5588
        %5790 = vmatpush2.msra.mxu0 %v5587
        %5791 = vmatprep.subr.mxu0 %v5580
        %5792 = vmatpush2.msra.mxu0 %v5579
        %5793 = vmatprep.subr.mxu0 %v5572
        %5794 = vmatpush2.msra.mxu0 %v5571
        %5795 = vmatprep.subr.mxu0 %v5564
        %5796 = vmatpush2.msra.mxu0 %v5563
        %5797 = vmatprep.mubr.f32.mxu0 %v5372
        %5798 = vmatmul.mubr.f32.gmra.mxu0 %v5371
        %v5799 = vpop.f32.mrf.mxu0
        %v5800 = vadd.f32 %v5696, %v5799
        %v5801 = vpop.f32.mrf.mxu0
        %v5802 = vadd.f32 %v5700, %v5801
        %5803 = vmatprep.mubr.f32.mxu0 %v5374
        %5804 = vmatmul.mubr.f32.gmra.mxu0 %v5373
        %v5805 = vpop.f32.mrf.mxu0
        %v5806 = vadd.f32 %v5696, %v5805
        %v5807 = vpop.f32.mrf.mxu0
        %v5808 = vadd.f32 %v5700, %v5807
        %5809 = vmatprep.mubr.f32.mxu0 %v5376
        %5810 = vmatmul.mubr.f32.gmra.mxu0 %v5375
        %v5811 = vpop.f32.mrf.mxu0
        %v5812 = vadd.f32 %v5696, %v5811
        %v5813 = vpop.f32.mrf.mxu0
        %v5814 = vadd.f32 %v5700, %v5813
        %5815 = vmatprep.mubr.f32.mxu0 %v5378
        %5816 = vmatmul.mubr.f32.gmra.mxu0 %v5377
        %v5817 = vpop.f32.mrf.mxu0
        %v5818 = vadd.f32 %v5696, %v5817
        %v5819 = vpop.f32.mrf.mxu0
        %v5820 = vadd.f32 %v5700, %v5819
        %5821 = vmatprep.mubr.f32.mxu0 %v5380
        %5822 = vmatmul.mubr.f32.gmra.mxu0 %v5379
        %v5823 = vpop.f32.mrf.mxu0
        %v5824 = vadd.f32 %v5696, %v5823
        %v5825 = vpop.f32.mrf.mxu0
        %v5826 = vadd.f32 %v5700, %v5825
        %5827 = vmatprep.mubr.f32.mxu0 %v5382
        %5828 = vmatmul.mubr.f32.gmra.mxu0 %v5381
        %v5829 = vpop.f32.mrf.mxu0
        %v5830 = vadd.f32 %v5696, %v5829
        %v5831 = vpop.f32.mrf.mxu0
        %v5832 = vadd.f32 %v5700, %v5831
        %5833 = vmatprep.mubr.f32.mxu0 %v5384
        %5834 = vmatmul.mubr.f32.gmra.mxu0 %v5383
        %v5835 = vpop.f32.mrf.mxu0
        %v5836 = vadd.f32 %v5696, %v5835
        %v5837 = vpop.f32.mrf.mxu0
        %v5838 = vadd.f32 %v5700, %v5837
        %5839 = vmatprep.mubr.f32.mxu0 %v5386
        %5840 = vmatmul.mubr.f32.gmra.mxu0 %v5385
        %v5841 = vpop.f32.mrf.mxu0
        %v5842 = vadd.f32 %v5696, %v5841
        %v5843 = vpop.f32.mrf.mxu0
        %v5844 = vadd.f32 %v5700, %v5843
        %5845 = vmatprep.mubr.f32.mxu0 %v5388
        %5846 = vmatmul.mubr.f32.gmra.mxu0 %v5387
        %v5847 = vpop.f32.mrf.mxu0
        %v5848 = vadd.f32 %v5696, %v5847
        %v5849 = vpop.f32.mrf.mxu0
        %v5850 = vadd.f32 %v5700, %v5849
        %5851 = vmatprep.mubr.f32.mxu0 %v5390
        %5852 = vmatmul.mubr.f32.gmra.mxu0 %v5389
        %v5853 = vpop.f32.mrf.mxu0
        %v5854 = vadd.f32 %v5696, %v5853
        %v5855 = vpop.f32.mrf.mxu0
        %v5856 = vadd.f32 %v5700, %v5855
        %5857 = vmatprep.mubr.f32.mxu0 %v5392
        %5858 = vmatmul.mubr.f32.gmra.mxu0 %v5391
        %v5859 = vpop.f32.mrf.mxu0
        %v5860 = vadd.f32 %v5696, %v5859
        %v5861 = vpop.f32.mrf.mxu0
        %v5862 = vadd.f32 %v5700, %v5861
        %5863 = vmatprep.mubr.f32.mxu0 %v5394
        %5864 = vmatmul.mubr.f32.gmra.mxu0 %v5393
        %v5865 = vpop.f32.mrf.mxu0
        %v5866 = vadd.f32 %v5696, %v5865
        %v5867 = vpop.f32.mrf.mxu0
        %v5868 = vadd.f32 %v5700, %v5867
        %5869 = vmatprep.mubr.f32.mxu0 %v5396
        %5870 = vmatmul.mubr.f32.gmra.mxu0 %v5395
        %v5871 = vpop.f32.mrf.mxu0
        %v5872 = vadd.f32 %v5696, %v5871
        %v5873 = vpop.f32.mrf.mxu0
        %v5874 = vadd.f32 %v5700, %v5873
        %5875 = vmatprep.mubr.f32.mxu0 %v5398
        %5876 = vmatmul.mubr.f32.gmra.mxu0 %v5397
        %v5877 = vpop.f32.mrf.mxu0
        %v5878 = vadd.f32 %v5696, %v5877
        %v5879 = vpop.f32.mrf.mxu0
        %v5880 = vadd.f32 %v5700, %v5879
        %5881 = vmatprep.mubr.f32.mxu0 %v5400
        %5882 = vmatmul.mubr.f32.gmra.mxu0 %v5399
        %v5883 = vpop.f32.mrf.mxu0
        %v5884 = vadd.f32 %v5696, %v5883
        %v5885 = vpop.f32.mrf.mxu0
        %v5886 = vadd.f32 %v5700, %v5885
        %5887 = vmatprep.mubr.f32.mxu0 %v5402
        %5888 = vmatmul.mubr.f32.gmra.mxu0 %v5401
        %v5889 = vpop.f32.mrf.mxu0
        %v5890 = vadd.f32 %v5696, %v5889
        %v5891 = vpop.f32.mrf.mxu0
        %v5892 = vadd.f32 %v5700, %v5891
        %5893 = vmatprep.mubr.f32.mxu0 %v5404
        %5894 = vmatmul.mubr.f32.gmra.mxu0 %v5403
        %v5895 = vpop.f32.mrf.mxu0
        %v5896 = vadd.f32 %v5696, %v5895
        %v5897 = vpop.f32.mrf.mxu0
        %v5898 = vadd.f32 %v5700, %v5897
        %5899 = vmatprep.mubr.f32.mxu0 %v5406
        %5900 = vmatmul.mubr.f32.gmra.mxu0 %v5405
        %v5901 = vpop.f32.mrf.mxu0
        %v5902 = vadd.f32 %v5696, %v5901
        %v5903 = vpop.f32.mrf.mxu0
        %v5904 = vadd.f32 %v5700, %v5903
        %5905 = vmatprep.mubr.f32.mxu0 %v5408
        %5906 = vmatmul.mubr.f32.gmra.mxu0 %v5407
        %v5907 = vpop.f32.mrf.mxu0
        %v5908 = vadd.f32 %v5696, %v5907
        %v5909 = vpop.f32.mrf.mxu0
        %v5910 = vadd.f32 %v5700, %v5909
        %5911 = vmatprep.mubr.f32.mxu0 %v5410
        %5912 = vmatmul.mubr.f32.gmra.mxu0 %v5409
        %v5913 = vpop.f32.mrf.mxu0
        %v5914 = vadd.f32 %v5696, %v5913
        %v5915 = vpop.f32.mrf.mxu0
        %v5916 = vadd.f32 %v5700, %v5915
        %5917 = vmatprep.mubr.f32.mxu0 %v5412
        %5918 = vmatmul.mubr.f32.gmra.mxu0 %v5411
        %v5919 = vpop.f32.mrf.mxu0
        %v5920 = vadd.f32 %v5696, %v5919
        %v5921 = vpop.f32.mrf.mxu0
        %v5922 = vadd.f32 %v5700, %v5921
        %5923 = vmatprep.mubr.f32.mxu0 %v5414
        %5924 = vmatmul.mubr.f32.gmra.mxu0 %v5413
        %v5925 = vpop.f32.mrf.mxu0
        %v5926 = vadd.f32 %v5696, %v5925
        %v5927 = vpop.f32.mrf.mxu0
        %v5928 = vadd.f32 %v5700, %v5927
        %5929 = vmatprep.mubr.f32.mxu0 %v5416
        %5930 = vmatmul.mubr.f32.gmra.mxu0 %v5415
        %v5931 = vpop.f32.mrf.mxu0
        %v5932 = vadd.f32 %v5696, %v5931
        %v5933 = vpop.f32.mrf.mxu0
        %v5934 = vadd.f32 %v5700, %v5933
        %5935 = vmatprep.mubr.f32.mxu0 %v5418
        %5936 = vmatmul.mubr.f32.gmra.mxu0 %v5417
        %v5937 = vpop.f32.mrf.mxu0
        %v5938 = vadd.f32 %v5696, %v5937
        %v5939 = vpop.f32.mrf.mxu0
        %v5940 = vadd.f32 %v5700, %v5939
        %5941 = vmatprep.mubr.f32.mxu0 %v5420
        %5942 = vmatmul.mubr.f32.gmra.mxu0 %v5419
        %v5943 = vpop.f32.mrf.mxu0
        %v5944 = vadd.f32 %v5696, %v5943
        %v5945 = vpop.f32.mrf.mxu0
        %v5946 = vadd.f32 %v5700, %v5945
        %5947 = vmatprep.mubr.f32.mxu0 %v5422
        %5948 = vmatmul.mubr.f32.gmra.mxu0 %v5421
        %v5949 = vpop.f32.mrf.mxu0
        %v5950 = vadd.f32 %v5696, %v5949
        %v5951 = vpop.f32.mrf.mxu0
        %v5952 = vadd.f32 %v5700, %v5951
        %5953 = vmatprep.mubr.f32.mxu0 %v5424
        %5954 = vmatmul.mubr.f32.gmra.mxu0 %v5423
        %v5955 = vpop.f32.mrf.mxu0
        %v5956 = vadd.f32 %v5696, %v5955
        %v5957 = vpop.f32.mrf.mxu0
        %v5958 = vadd.f32 %v5700, %v5957
        %5959 = vmatprep.mubr.f32.mxu0 %v5426
        %5960 = vmatmul.mubr.f32.gmra.mxu0 %v5425
        %v5961 = vpop.f32.mrf.mxu0
        %v5962 = vadd.f32 %v5696, %v5961
        %v5963 = vpop.f32.mrf.mxu0
        %v5964 = vadd.f32 %v5700, %v5963
        %5965 = vmatprep.mubr.f32.mxu0 %v5428
        %5966 = vmatmul.mubr.f32.gmra.mxu0 %v5427
        %v5967 = vpop.f32.mrf.mxu0
        %v5968 = vadd.f32 %v5696, %v5967
        %v5969 = vpop.f32.mrf.mxu0
        %v5970 = vadd.f32 %v5700, %v5969
        %5971 = vmatprep.mubr.f32.mxu0 %v5430
        %5972 = vmatmul.mubr.f32.gmra.mxu0 %v5429
        %v5973 = vpop.f32.mrf.mxu0
        %v5974 = vadd.f32 %v5696, %v5973
        %v5975 = vpop.f32.mrf.mxu0
        %v5976 = vadd.f32 %v5700, %v5975
        %5977 = vmatprep.mubr.f32.mxu0 %v5432
        %5978 = vmatmul.mubr.f32.gmra.mxu0 %v5431
        %v5979 = vpop.f32.mrf.mxu0
        %v5980 = vadd.f32 %v5696, %v5979
        %v5981 = vpop.f32.mrf.mxu0
        %v5982 = vadd.f32 %v5700, %v5981
        %5983 = vmatprep.mubr.f32.mxu0 %v5434
        %5984 = vmatmul.mubr.f32.gmra.mxu0 %v5433
        %v5985 = vpop.f32.mrf.mxu0
        %v5986 = vadd.f32 %v5696, %v5985
        %v5987 = vpop.f32.mrf.mxu0
        %v5988 = vadd.f32 %v5700, %v5987
        %5989 = vdwg.mxu0
        %5990 = vmatprep.subr.mxu0 %v5558
        %5991 = vmatpush1.msra.mxu0 %v5557
        %5992 = vmatprep.subr.mxu0 %v5550
        %5993 = vmatpush1.msra.mxu0 %v5549
        %5994 = vmatprep.subr.mxu0 %v5542
        %5995 = vmatpush1.msra.mxu0 %v5541
        %5996 = vmatprep.subr.mxu0 %v5534
        %5997 = vmatpush1.msra.mxu0 %v5533
        %5998 = vmatprep.subr.mxu0 %v5526
        %5999 = vmatpush1.msra.mxu0 %v5525
        %6000 = vmatprep.subr.mxu0 %v5518
        %6001 = vmatpush1.msra.mxu0 %v5517
        %6002 = vmatprep.subr.mxu0 %v5510
        %6003 = vmatpush1.msra.mxu0 %v5509
        %6004 = vmatprep.subr.mxu0 %v5502
        %6005 = vmatpush1.msra.mxu0 %v5501
        %6006 = vmatprep.subr.mxu0 %v5494
        %6007 = vmatpush1.msra.mxu0 %v5493
        %6008 = vmatprep.subr.mxu0 %v5486
        %6009 = vmatpush1.msra.mxu0 %v5485
        %6010 = vmatprep.subr.mxu0 %v5478
        %6011 = vmatpush1.msra.mxu0 %v5477
        %6012 = vmatprep.subr.mxu0 %v5470
        %6013 = vmatpush1.msra.mxu0 %v5469
        %6014 = vmatprep.subr.mxu0 %v5462
        %6015 = vmatpush1.msra.mxu0 %v5461
        %6016 = vmatprep.subr.mxu0 %v5454
        %6017 = vmatpush1.msra.mxu0 %v5453
        %6018 = vmatprep.subr.mxu0 %v5446
        %6019 = vmatpush1.msra.mxu0 %v5445
        %6020 = vmatprep.subr.mxu0 %v5438
        %6021 = vmatpush1.msra.mxu0 %v5437
        %6022 = vmatprep.subr.mxu0 %v5686
        %6023 = vmatpush2.msra.mxu0 %v5685
        %6024 = vmatprep.subr.mxu0 %v5678
        %6025 = vmatpush2.msra.mxu0 %v5677
        %6026 = vmatprep.subr.mxu0 %v5670
        %6027 = vmatpush2.msra.mxu0 %v5669
        %6028 = vmatprep.subr.mxu0 %v5662
        %6029 = vmatpush2.msra.mxu0 %v5661
        %6030 = vmatprep.subr.mxu0 %v5654
        %6031 = vmatpush2.msra.mxu0 %v5653
        %6032 = vmatprep.subr.mxu0 %v5646
        %6033 = vmatpush2.msra.mxu0 %v5645
        %6034 = vmatprep.subr.mxu0 %v5638
        %6035 = vmatpush2.msra.mxu0 %v5637
        %6036 = vmatprep.subr.mxu0 %v5630
        %6037 = vmatpush2.msra.mxu0 %v5629
        %6038 = vmatprep.subr.mxu0 %v5622
        %6039 = vmatpush2.msra.mxu0 %v5621
        %6040 = vmatprep.subr.mxu0 %v5614
        %6041 = vmatpush2.msra.mxu0 %v5613
        %6042 = vmatprep.subr.mxu0 %v5606
        %6043 = vmatpush2.msra.mxu0 %v5605
        %6044 = vmatprep.subr.mxu0 %v5598
        %6045 = vmatpush2.msra.mxu0 %v5597
        %6046 = vmatprep.subr.mxu0 %v5590
        %6047 = vmatpush2.msra.mxu0 %v5589
        %6048 = vmatprep.subr.mxu0 %v5582
        %6049 = vmatpush2.msra.mxu0 %v5581
        %6050 = vmatprep.subr.mxu0 %v5574
        %6051 = vmatpush2.msra.mxu0 %v5573
        %6052 = vmatprep.subr.mxu0 %v5566
        %6053 = vmatpush2.msra.mxu0 %v5565
        %6054 = vmatprep.mubr.f32.mxu0 %v5372
        %6055 = vmatmul.mubr.f32.gmra.mxu0 %v5371
        %v6056 = vpop.f32.mrf.mxu0
        %v6057 = vadd.f32 %v5704, %v6056
        %v6058 = vpop.f32.mrf.mxu0
        %v6059 = vadd.f32 %v5708, %v6058
        %6060 = vmatprep.mubr.f32.mxu0 %v5374
        %6061 = vmatmul.mubr.f32.gmra.mxu0 %v5373
        %v6062 = vpop.f32.mrf.mxu0
        %v6063 = vadd.f32 %v5704, %v6062
        %v6064 = vpop.f32.mrf.mxu0
        %v6065 = vadd.f32 %v5708, %v6064
        %6066 = vmatprep.mubr.f32.mxu0 %v5376
        %6067 = vmatmul.mubr.f32.gmra.mxu0 %v5375
        %v6068 = vpop.f32.mrf.mxu0
        %v6069 = vadd.f32 %v5704, %v6068
        %v6070 = vpop.f32.mrf.mxu0
        %v6071 = vadd.f32 %v5708, %v6070
        %6072 = vmatprep.mubr.f32.mxu0 %v5378
        %6073 = vmatmul.mubr.f32.gmra.mxu0 %v5377
        %v6074 = vpop.f32.mrf.mxu0
        %v6075 = vadd.f32 %v5704, %v6074
        %v6076 = vpop.f32.mrf.mxu0
        %v6077 = vadd.f32 %v5708, %v6076
        %6078 = vmatprep.mubr.f32.mxu0 %v5380
        %6079 = vmatmul.mubr.f32.gmra.mxu0 %v5379
        %v6080 = vpop.f32.mrf.mxu0
        %v6081 = vadd.f32 %v5704, %v6080
        %v6082 = vpop.f32.mrf.mxu0
        %v6083 = vadd.f32 %v5708, %v6082
        %6084 = vmatprep.mubr.f32.mxu0 %v5382
        %6085 = vmatmul.mubr.f32.gmra.mxu0 %v5381
        %v6086 = vpop.f32.mrf.mxu0
        %v6087 = vadd.f32 %v5704, %v6086
        %v6088 = vpop.f32.mrf.mxu0
        %v6089 = vadd.f32 %v5708, %v6088
        %6090 = vmatprep.mubr.f32.mxu0 %v5384
        %6091 = vmatmul.mubr.f32.gmra.mxu0 %v5383
        %v6092 = vpop.f32.mrf.mxu0
        %v6093 = vadd.f32 %v5704, %v6092
        %v6094 = vpop.f32.mrf.mxu0
        %v6095 = vadd.f32 %v5708, %v6094
        %6096 = vmatprep.mubr.f32.mxu0 %v5386
        %6097 = vmatmul.mubr.f32.gmra.mxu0 %v5385
        %v6098 = vpop.f32.mrf.mxu0
        %v6099 = vadd.f32 %v5704, %v6098
        %v6100 = vpop.f32.mrf.mxu0
        %v6101 = vadd.f32 %v5708, %v6100
        %6102 = vmatprep.mubr.f32.mxu0 %v5388
        %6103 = vmatmul.mubr.f32.gmra.mxu0 %v5387
        %v6104 = vpop.f32.mrf.mxu0
        %v6105 = vadd.f32 %v5704, %v6104
        %v6106 = vpop.f32.mrf.mxu0
        %v6107 = vadd.f32 %v5708, %v6106
        %6108 = vmatprep.mubr.f32.mxu0 %v5390
        %6109 = vmatmul.mubr.f32.gmra.mxu0 %v5389
        %v6110 = vpop.f32.mrf.mxu0
        %v6111 = vadd.f32 %v5704, %v6110
        %v6112 = vpop.f32.mrf.mxu0
        %v6113 = vadd.f32 %v5708, %v6112
        %6114 = vmatprep.mubr.f32.mxu0 %v5392
        %6115 = vmatmul.mubr.f32.gmra.mxu0 %v5391
        %v6116 = vpop.f32.mrf.mxu0
        %v6117 = vadd.f32 %v5704, %v6116
        %v6118 = vpop.f32.mrf.mxu0
        %v6119 = vadd.f32 %v5708, %v6118
        %6120 = vmatprep.mubr.f32.mxu0 %v5394
        %6121 = vmatmul.mubr.f32.gmra.mxu0 %v5393
        %v6122 = vpop.f32.mrf.mxu0
        %v6123 = vadd.f32 %v5704, %v6122
        %v6124 = vpop.f32.mrf.mxu0
        %v6125 = vadd.f32 %v5708, %v6124
        %6126 = vmatprep.mubr.f32.mxu0 %v5396
        %6127 = vmatmul.mubr.f32.gmra.mxu0 %v5395
        %v6128 = vpop.f32.mrf.mxu0
        %v6129 = vadd.f32 %v5704, %v6128
        %v6130 = vpop.f32.mrf.mxu0
        %v6131 = vadd.f32 %v5708, %v6130
        %6132 = vmatprep.mubr.f32.mxu0 %v5398
        %6133 = vmatmul.mubr.f32.gmra.mxu0 %v5397
        %v6134 = vpop.f32.mrf.mxu0
        %v6135 = vadd.f32 %v5704, %v6134
        %v6136 = vpop.f32.mrf.mxu0
        %v6137 = vadd.f32 %v5708, %v6136
        %6138 = vmatprep.mubr.f32.mxu0 %v5400
        %6139 = vmatmul.mubr.f32.gmra.mxu0 %v5399
        %v6140 = vpop.f32.mrf.mxu0
        %v6141 = vadd.f32 %v5704, %v6140
        %v6142 = vpop.f32.mrf.mxu0
        %v6143 = vadd.f32 %v5708, %v6142
        %6144 = vmatprep.mubr.f32.mxu0 %v5402
        %6145 = vmatmul.mubr.f32.gmra.mxu0 %v5401
        %v6146 = vpop.f32.mrf.mxu0
        %v6147 = vadd.f32 %v5704, %v6146
        %v6148 = vpop.f32.mrf.mxu0
        %v6149 = vadd.f32 %v5708, %v6148
        %6150 = vmatprep.mubr.f32.mxu0 %v5404
        %6151 = vmatmul.mubr.f32.gmra.mxu0 %v5403
        %v6152 = vpop.f32.mrf.mxu0
        %v6153 = vadd.f32 %v5704, %v6152
        %v6154 = vpop.f32.mrf.mxu0
        %v6155 = vadd.f32 %v5708, %v6154
        %6156 = vmatprep.mubr.f32.mxu0 %v5406
        %6157 = vmatmul.mubr.f32.gmra.mxu0 %v5405
        %v6158 = vpop.f32.mrf.mxu0
        %v6159 = vadd.f32 %v5704, %v6158
        %v6160 = vpop.f32.mrf.mxu0
        %v6161 = vadd.f32 %v5708, %v6160
        %6162 = vmatprep.mubr.f32.mxu0 %v5408
        %6163 = vmatmul.mubr.f32.gmra.mxu0 %v5407
        %v6164 = vpop.f32.mrf.mxu0
        %v6165 = vadd.f32 %v5704, %v6164
        %v6166 = vpop.f32.mrf.mxu0
        %v6167 = vadd.f32 %v5708, %v6166
        %6168 = vmatprep.mubr.f32.mxu0 %v5410
        %6169 = vmatmul.mubr.f32.gmra.mxu0 %v5409
        %v6170 = vpop.f32.mrf.mxu0
        %v6171 = vadd.f32 %v5704, %v6170
        %v6172 = vpop.f32.mrf.mxu0
        %v6173 = vadd.f32 %v5708, %v6172
        %6174 = vmatprep.mubr.f32.mxu0 %v5412
        %6175 = vmatmul.mubr.f32.gmra.mxu0 %v5411
        %v6176 = vpop.f32.mrf.mxu0
        %v6177 = vadd.f32 %v5704, %v6176
        %v6178 = vpop.f32.mrf.mxu0
        %v6179 = vadd.f32 %v5708, %v6178
        %6180 = vmatprep.mubr.f32.mxu0 %v5414
        %6181 = vmatmul.mubr.f32.gmra.mxu0 %v5413
        %v6182 = vpop.f32.mrf.mxu0
        %v6183 = vadd.f32 %v5704, %v6182
        %v6184 = vpop.f32.mrf.mxu0
        %v6185 = vadd.f32 %v5708, %v6184
        %6186 = vmatprep.mubr.f32.mxu0 %v5416
        %6187 = vmatmul.mubr.f32.gmra.mxu0 %v5415
        %v6188 = vpop.f32.mrf.mxu0
        %v6189 = vadd.f32 %v5704, %v6188
        %v6190 = vpop.f32.mrf.mxu0
        %v6191 = vadd.f32 %v5708, %v6190
        %6192 = vmatprep.mubr.f32.mxu0 %v5418
        %6193 = vmatmul.mubr.f32.gmra.mxu0 %v5417
        %v6194 = vpop.f32.mrf.mxu0
        %v6195 = vadd.f32 %v5704, %v6194
        %v6196 = vpop.f32.mrf.mxu0
        %v6197 = vadd.f32 %v5708, %v6196
        %6198 = vmatprep.mubr.f32.mxu0 %v5420
        %6199 = vmatmul.mubr.f32.gmra.mxu0 %v5419
        %v6200 = vpop.f32.mrf.mxu0
        %v6201 = vadd.f32 %v5704, %v6200
        %v6202 = vpop.f32.mrf.mxu0
        %v6203 = vadd.f32 %v5708, %v6202
        %6204 = vmatprep.mubr.f32.mxu0 %v5422
        %6205 = vmatmul.mubr.f32.gmra.mxu0 %v5421
        %v6206 = vpop.f32.mrf.mxu0
        %v6207 = vadd.f32 %v5704, %v6206
        %v6208 = vpop.f32.mrf.mxu0
        %v6209 = vadd.f32 %v5708, %v6208
        %6210 = vmatprep.mubr.f32.mxu0 %v5424
        %6211 = vmatmul.mubr.f32.gmra.mxu0 %v5423
        %v6212 = vpop.f32.mrf.mxu0
        %v6213 = vadd.f32 %v5704, %v6212
        %v6214 = vpop.f32.mrf.mxu0
        %v6215 = vadd.f32 %v5708, %v6214
        %6216 = vmatprep.mubr.f32.mxu0 %v5426
        %6217 = vmatmul.mubr.f32.gmra.mxu0 %v5425
        %v6218 = vpop.f32.mrf.mxu0
        %v6219 = vadd.f32 %v5704, %v6218
        %v6220 = vpop.f32.mrf.mxu0
        %v6221 = vadd.f32 %v5708, %v6220
        %6222 = vmatprep.mubr.f32.mxu0 %v5428
        %6223 = vmatmul.mubr.f32.gmra.mxu0 %v5427
        %v6224 = vpop.f32.mrf.mxu0
        %v6225 = vadd.f32 %v5704, %v6224
        %v6226 = vpop.f32.mrf.mxu0
        %v6227 = vadd.f32 %v5708, %v6226
        %6228 = vmatprep.mubr.f32.mxu0 %v5430
        %6229 = vmatmul.mubr.f32.gmra.mxu0 %v5429
        %v6230 = vpop.f32.mrf.mxu0
        %v6231 = vadd.f32 %v5704, %v6230
        %v6232 = vpop.f32.mrf.mxu0
        %v6233 = vadd.f32 %v5708, %v6232
        %6234 = vmatprep.mubr.f32.mxu0 %v5432
        %6235 = vmatmul.mubr.f32.gmra.mxu0 %v5431
        %v6236 = vpop.f32.mrf.mxu0
        %v6237 = vadd.f32 %v5704, %v6236
        %v6238 = vpop.f32.mrf.mxu0
        %v6239 = vadd.f32 %v5708, %v6238
        %6240 = vmatprep.mubr.f32.mxu0 %v5434
        %6241 = vmatmul.mubr.f32.gmra.mxu0 %v5433
        %v6242 = vpop.f32.mrf.mxu0
        %v6243 = vadd.f32 %v5704, %v6242
        %v6244 = vpop.f32.mrf.mxu0
        %v6245 = vadd.f32 %v5708, %v6244
        %6246 = vdwg.mxu0
        %6247 = vmatprep.subr.mxu0 %v5560
        %6248 = vmatpush1.msra.mxu0 %v5559
        %6249 = vmatprep.subr.mxu0 %v5552
        %6250 = vmatpush1.msra.mxu0 %v5551
        %6251 = vmatprep.subr.mxu0 %v5544
        %6252 = vmatpush1.msra.mxu0 %v5543
        %6253 = vmatprep.subr.mxu0 %v5536
        %6254 = vmatpush1.msra.mxu0 %v5535
        %6255 = vmatprep.subr.mxu0 %v5528
        %6256 = vmatpush1.msra.mxu0 %v5527
        %6257 = vmatprep.subr.mxu0 %v5520
        %6258 = vmatpush1.msra.mxu0 %v5519
        %6259 = vmatprep.subr.mxu0 %v5512
        %6260 = vmatpush1.msra.mxu0 %v5511
        %6261 = vmatprep.subr.mxu0 %v5504
        %6262 = vmatpush1.msra.mxu0 %v5503
        %6263 = vmatprep.subr.mxu0 %v5496
        %6264 = vmatpush1.msra.mxu0 %v5495
        %6265 = vmatprep.subr.mxu0 %v5488
        %6266 = vmatpush1.msra.mxu0 %v5487
        %6267 = vmatprep.subr.mxu0 %v5480
        %6268 = vmatpush1.msra.mxu0 %v5479
        %6269 = vmatprep.subr.mxu0 %v5472
        %6270 = vmatpush1.msra.mxu0 %v5471
        %6271 = vmatprep.subr.mxu0 %v5464
        %6272 = vmatpush1.msra.mxu0 %v5463
        %6273 = vmatprep.subr.mxu0 %v5456
        %6274 = vmatpush1.msra.mxu0 %v5455
        %6275 = vmatprep.subr.mxu0 %v5448
        %6276 = vmatpush1.msra.mxu0 %v5447
        %6277 = vmatprep.subr.mxu0 %v5440
        %6278 = vmatpush1.msra.mxu0 %v5439
        %6279 = vmatprep.subr.mxu0 %v5688
        %6280 = vmatpush2.msra.mxu0 %v5687
        %6281 = vmatprep.subr.mxu0 %v5680
        %6282 = vmatpush2.msra.mxu0 %v5679
        %6283 = vmatprep.subr.mxu0 %v5672
        %6284 = vmatpush2.msra.mxu0 %v5671
        %6285 = vmatprep.subr.mxu0 %v5664
        %6286 = vmatpush2.msra.mxu0 %v5663
        %6287 = vmatprep.subr.mxu0 %v5656
        %6288 = vmatpush2.msra.mxu0 %v5655
        %6289 = vmatprep.subr.mxu0 %v5648
        %6290 = vmatpush2.msra.mxu0 %v5647
        %6291 = vmatprep.subr.mxu0 %v5640
        %6292 = vmatpush2.msra.mxu0 %v5639
        %6293 = vmatprep.subr.mxu0 %v5632
        %6294 = vmatpush2.msra.mxu0 %v5631
        %6295 = vmatprep.subr.mxu0 %v5624
        %6296 = vmatpush2.msra.mxu0 %v5623
        %6297 = vmatprep.subr.mxu0 %v5616
        %6298 = vmatpush2.msra.mxu0 %v5615
        %6299 = vmatprep.subr.mxu0 %v5608
        %6300 = vmatpush2.msra.mxu0 %v5607
        %6301 = vmatprep.subr.mxu0 %v5600
        %6302 = vmatpush2.msra.mxu0 %v5599
        %6303 = vmatprep.subr.mxu0 %v5592
        %6304 = vmatpush2.msra.mxu0 %v5591
        %6305 = vmatprep.subr.mxu0 %v5584
        %6306 = vmatpush2.msra.mxu0 %v5583
        %6307 = vmatprep.subr.mxu0 %v5576
        %6308 = vmatpush2.msra.mxu0 %v5575
        %6309 = vmatprep.subr.mxu0 %v5568
        %6310 = vmatpush2.msra.mxu0 %v5567
        %6311 = vmatprep.mubr.f32.mxu0 %v5372
        %6312 = vmatmul.mubr.f32.gmra.mxu0 %v5371
        %v6313 = vpop.f32.mrf.mxu0
        %v6314 = vadd.f32 %v5712, %v6313
        %v6315 = vpop.f32.mrf.mxu0
        %v6316 = vadd.f32 %v5716, %v6315
        %6317 = vmatprep.mubr.f32.mxu0 %v5374
        %6318 = vmatmul.mubr.f32.gmra.mxu0 %v5373
        %v6319 = vpop.f32.mrf.mxu0
        %v6320 = vadd.f32 %v5712, %v6319
        %v6321 = vpop.f32.mrf.mxu0
        %v6322 = vadd.f32 %v5716, %v6321
        %6323 = vmatprep.mubr.f32.mxu0 %v5376
        %6324 = vmatmul.mubr.f32.gmra.mxu0 %v5375
        %v6325 = vpop.f32.mrf.mxu0
        %v6326 = vadd.f32 %v5712, %v6325
        %v6327 = vpop.f32.mrf.mxu0
        %v6328 = vadd.f32 %v5716, %v6327
        %6329 = vmatprep.mubr.f32.mxu0 %v5378
        %6330 = vmatmul.mubr.f32.gmra.mxu0 %v5377
        %v6331 = vpop.f32.mrf.mxu0
        %v6332 = vadd.f32 %v5712, %v6331
        %v6333 = vpop.f32.mrf.mxu0
        %v6334 = vadd.f32 %v5716, %v6333
        %6335 = vmatprep.mubr.f32.mxu0 %v5380
        %6336 = vmatmul.mubr.f32.gmra.mxu0 %v5379
        %v6337 = vpop.f32.mrf.mxu0
        %v6338 = vadd.f32 %v5712, %v6337
        %v6339 = vpop.f32.mrf.mxu0
        %v6340 = vadd.f32 %v5716, %v6339
        %6341 = vmatprep.mubr.f32.mxu0 %v5382
        %6342 = vmatmul.mubr.f32.gmra.mxu0 %v5381
        %v6343 = vpop.f32.mrf.mxu0
        %v6344 = vadd.f32 %v5712, %v6343
        %v6345 = vpop.f32.mrf.mxu0
        %v6346 = vadd.f32 %v5716, %v6345
        %6347 = vmatprep.mubr.f32.mxu0 %v5384
        %6348 = vmatmul.mubr.f32.gmra.mxu0 %v5383
        %v6349 = vpop.f32.mrf.mxu0
        %v6350 = vadd.f32 %v5712, %v6349
        %v6351 = vpop.f32.mrf.mxu0
        %v6352 = vadd.f32 %v5716, %v6351
        %6353 = vmatprep.mubr.f32.mxu0 %v5386
        %6354 = vmatmul.mubr.f32.gmra.mxu0 %v5385
        %v6355 = vpop.f32.mrf.mxu0
        %v6356 = vadd.f32 %v5712, %v6355
        %v6357 = vpop.f32.mrf.mxu0
        %v6358 = vadd.f32 %v5716, %v6357
        %6359 = vmatprep.mubr.f32.mxu0 %v5388
        %6360 = vmatmul.mubr.f32.gmra.mxu0 %v5387
        %v6361 = vpop.f32.mrf.mxu0
        %v6362 = vadd.f32 %v5712, %v6361
        %v6363 = vpop.f32.mrf.mxu0
        %v6364 = vadd.f32 %v5716, %v6363
        %6365 = vmatprep.mubr.f32.mxu0 %v5390
        %6366 = vmatmul.mubr.f32.gmra.mxu0 %v5389
        %v6367 = vpop.f32.mrf.mxu0
        %v6368 = vadd.f32 %v5712, %v6367
        %v6369 = vpop.f32.mrf.mxu0
        %v6370 = vadd.f32 %v5716, %v6369
        %6371 = vmatprep.mubr.f32.mxu0 %v5392
        %6372 = vmatmul.mubr.f32.gmra.mxu0 %v5391
        %v6373 = vpop.f32.mrf.mxu0
        %v6374 = vadd.f32 %v5712, %v6373
        %v6375 = vpop.f32.mrf.mxu0
        %v6376 = vadd.f32 %v5716, %v6375
        %6377 = vmatprep.mubr.f32.mxu0 %v5394
        %6378 = vmatmul.mubr.f32.gmra.mxu0 %v5393
        %v6379 = vpop.f32.mrf.mxu0
        %v6380 = vadd.f32 %v5712, %v6379
        %v6381 = vpop.f32.mrf.mxu0
        %v6382 = vadd.f32 %v5716, %v6381
        %6383 = vmatprep.mubr.f32.mxu0 %v5396
        %6384 = vmatmul.mubr.f32.gmra.mxu0 %v5395
        %v6385 = vpop.f32.mrf.mxu0
        %v6386 = vadd.f32 %v5712, %v6385
        %v6387 = vpop.f32.mrf.mxu0
        %v6388 = vadd.f32 %v5716, %v6387
        %6389 = vmatprep.mubr.f32.mxu0 %v5398
        %6390 = vmatmul.mubr.f32.gmra.mxu0 %v5397
        %v6391 = vpop.f32.mrf.mxu0
        %v6392 = vadd.f32 %v5712, %v6391
        %v6393 = vpop.f32.mrf.mxu0
        %v6394 = vadd.f32 %v5716, %v6393
        %6395 = vmatprep.mubr.f32.mxu0 %v5400
        %6396 = vmatmul.mubr.f32.gmra.mxu0 %v5399
        %v6397 = vpop.f32.mrf.mxu0
        %v6398 = vadd.f32 %v5712, %v6397
        %v6399 = vpop.f32.mrf.mxu0
        %v6400 = vadd.f32 %v5716, %v6399
        %6401 = vmatprep.mubr.f32.mxu0 %v5402
        %6402 = vmatmul.mubr.f32.gmra.mxu0 %v5401
        %v6403 = vpop.f32.mrf.mxu0
        %v6404 = vadd.f32 %v5712, %v6403
        %v6405 = vpop.f32.mrf.mxu0
        %v6406 = vadd.f32 %v5716, %v6405
        %6407 = vmatprep.mubr.f32.mxu0 %v5404
        %6408 = vmatmul.mubr.f32.gmra.mxu0 %v5403
        %v6409 = vpop.f32.mrf.mxu0
        %v6410 = vadd.f32 %v5712, %v6409
        %v6411 = vpop.f32.mrf.mxu0
        %v6412 = vadd.f32 %v5716, %v6411
        %6413 = vmatprep.mubr.f32.mxu0 %v5406
        %6414 = vmatmul.mubr.f32.gmra.mxu0 %v5405
        %v6415 = vpop.f32.mrf.mxu0
        %v6416 = vadd.f32 %v5712, %v6415
        %v6417 = vpop.f32.mrf.mxu0
        %v6418 = vadd.f32 %v5716, %v6417
        %6419 = vmatprep.mubr.f32.mxu0 %v5408
        %6420 = vmatmul.mubr.f32.gmra.mxu0 %v5407
        %v6421 = vpop.f32.mrf.mxu0
        %v6422 = vadd.f32 %v5712, %v6421
        %v6423 = vpop.f32.mrf.mxu0
        %v6424 = vadd.f32 %v5716, %v6423
        %6425 = vmatprep.mubr.f32.mxu0 %v5410
        %6426 = vmatmul.mubr.f32.gmra.mxu0 %v5409
        %v6427 = vpop.f32.mrf.mxu0
        %v6428 = vadd.f32 %v5712, %v6427
        %v6429 = vpop.f32.mrf.mxu0
        %v6430 = vadd.f32 %v5716, %v6429
        %6431 = vmatprep.mubr.f32.mxu0 %v5412
        %6432 = vmatmul.mubr.f32.gmra.mxu0 %v5411
        %v6433 = vpop.f32.mrf.mxu0
        %v6434 = vadd.f32 %v5712, %v6433
        %v6435 = vpop.f32.mrf.mxu0
        %v6436 = vadd.f32 %v5716, %v6435
        %6437 = vmatprep.mubr.f32.mxu0 %v5414
        %6438 = vmatmul.mubr.f32.gmra.mxu0 %v5413
        %v6439 = vpop.f32.mrf.mxu0
        %v6440 = vadd.f32 %v5712, %v6439
        %v6441 = vpop.f32.mrf.mxu0
        %v6442 = vadd.f32 %v5716, %v6441
        %6443 = vmatprep.mubr.f32.mxu0 %v5416
        %6444 = vmatmul.mubr.f32.gmra.mxu0 %v5415
        %v6445 = vpop.f32.mrf.mxu0
        %v6446 = vadd.f32 %v5712, %v6445
        %v6447 = vpop.f32.mrf.mxu0
        %v6448 = vadd.f32 %v5716, %v6447
        %6449 = vmatprep.mubr.f32.mxu0 %v5418
        %6450 = vmatmul.mubr.f32.gmra.mxu0 %v5417
        %v6451 = vpop.f32.mrf.mxu0
        %v6452 = vadd.f32 %v5712, %v6451
        %v6453 = vpop.f32.mrf.mxu0
        %v6454 = vadd.f32 %v5716, %v6453
        %6455 = vmatprep.mubr.f32.mxu0 %v5420
        %6456 = vmatmul.mubr.f32.gmra.mxu0 %v5419
        %v6457 = vpop.f32.mrf.mxu0
        %v6458 = vadd.f32 %v5712, %v6457
        %v6459 = vpop.f32.mrf.mxu0
        %v6460 = vadd.f32 %v5716, %v6459
        %6461 = vmatprep.mubr.f32.mxu0 %v5422
        %6462 = vmatmul.mubr.f32.gmra.mxu0 %v5421
        %v6463 = vpop.f32.mrf.mxu0
        %v6464 = vadd.f32 %v5712, %v6463
        %v6465 = vpop.f32.mrf.mxu0
        %v6466 = vadd.f32 %v5716, %v6465
        %6467 = vmatprep.mubr.f32.mxu0 %v5424
        %6468 = vmatmul.mubr.f32.gmra.mxu0 %v5423
        %v6469 = vpop.f32.mrf.mxu0
        %v6470 = vadd.f32 %v5712, %v6469
        %v6471 = vpop.f32.mrf.mxu0
        %v6472 = vadd.f32 %v5716, %v6471
        %6473 = vmatprep.mubr.f32.mxu0 %v5426
        %6474 = vmatmul.mubr.f32.gmra.mxu0 %v5425
        %v6475 = vpop.f32.mrf.mxu0
        %v6476 = vadd.f32 %v5712, %v6475
        %v6477 = vpop.f32.mrf.mxu0
        %v6478 = vadd.f32 %v5716, %v6477
        %6479 = vmatprep.mubr.f32.mxu0 %v5428
        %6480 = vmatmul.mubr.f32.gmra.mxu0 %v5427
        %v6481 = vpop.f32.mrf.mxu0
        %v6482 = vadd.f32 %v5712, %v6481
        %v6483 = vpop.f32.mrf.mxu0
        %v6484 = vadd.f32 %v5716, %v6483
        %6485 = vmatprep.mubr.f32.mxu0 %v5430
        %6486 = vmatmul.mubr.f32.gmra.mxu0 %v5429
        %v6487 = vpop.f32.mrf.mxu0
        %v6488 = vadd.f32 %v5712, %v6487
        %v6489 = vpop.f32.mrf.mxu0
        %v6490 = vadd.f32 %v5716, %v6489
        %6491 = vmatprep.mubr.f32.mxu0 %v5432
        %6492 = vmatmul.mubr.f32.gmra.mxu0 %v5431
        %v6493 = vpop.f32.mrf.mxu0
        %v6494 = vadd.f32 %v5712, %v6493
        %v6495 = vpop.f32.mrf.mxu0
        %v6496 = vadd.f32 %v5716, %v6495
        %6497 = vmatprep.mubr.f32.mxu0 %v5434
        %6498 = vmatmul.mubr.f32.gmra.mxu0 %v5433
        %v6499 = vpop.f32.mrf.mxu0
        %v6500 = vadd.f32 %v5712, %v6499
        %v6501 = vpop.f32.mrf.mxu0
        %v6502 = vadd.f32 %v5716, %v6501
        %6503 = vdwg.mxu0
        %6504 = vmatprep.subr.mxu0 %v5562
        %6505 = vmatpush1.msra.mxu0 %v5561
        %6506 = vmatprep.subr.mxu0 %v5554
        %6507 = vmatpush1.msra.mxu0 %v5553
        %6508 = vmatprep.subr.mxu0 %v5546
        %6509 = vmatpush1.msra.mxu0 %v5545
        %6510 = vmatprep.subr.mxu0 %v5538
        %6511 = vmatpush1.msra.mxu0 %v5537
        %6512 = vmatprep.subr.mxu0 %v5530
        %6513 = vmatpush1.msra.mxu0 %v5529
        %6514 = vmatprep.subr.mxu0 %v5522
        %6515 = vmatpush1.msra.mxu0 %v5521
        %6516 = vmatprep.subr.mxu0 %v5514
        %6517 = vmatpush1.msra.mxu0 %v5513
        %6518 = vmatprep.subr.mxu0 %v5506
        %6519 = vmatpush1.msra.mxu0 %v5505
        %6520 = vmatprep.subr.mxu0 %v5498
        %6521 = vmatpush1.msra.mxu0 %v5497
        %6522 = vmatprep.subr.mxu0 %v5490
        %6523 = vmatpush1.msra.mxu0 %v5489
        %6524 = vmatprep.subr.mxu0 %v5482
        %6525 = vmatpush1.msra.mxu0 %v5481
        %6526 = vmatprep.subr.mxu0 %v5474
        %6527 = vmatpush1.msra.mxu0 %v5473
        %6528 = vmatprep.subr.mxu0 %v5466
        %6529 = vmatpush1.msra.mxu0 %v5465
        %6530 = vmatprep.subr.mxu0 %v5458
        %6531 = vmatpush1.msra.mxu0 %v5457
        %6532 = vmatprep.subr.mxu0 %v5450
        %6533 = vmatpush1.msra.mxu0 %v5449
        %6534 = vmatprep.subr.mxu0 %v5442
        %6535 = vmatpush1.msra.mxu0 %v5441
        %6536 = vmatprep.subr.mxu0 %v5690
        %6537 = vmatpush2.msra.mxu0 %v5689
        %6538 = vmatprep.subr.mxu0 %v5682
        %6539 = vmatpush2.msra.mxu0 %v5681
        %6540 = vmatprep.subr.mxu0 %v5674
        %6541 = vmatpush2.msra.mxu0 %v5673
        %6542 = vmatprep.subr.mxu0 %v5666
        %6543 = vmatpush2.msra.mxu0 %v5665
        %6544 = vmatprep.subr.mxu0 %v5658
        %6545 = vmatpush2.msra.mxu0 %v5657
        %6546 = vmatprep.subr.mxu0 %v5650
        %6547 = vmatpush2.msra.mxu0 %v5649
        %6548 = vmatprep.subr.mxu0 %v5642
        %6549 = vmatpush2.msra.mxu0 %v5641
        %6550 = vmatprep.subr.mxu0 %v5634
        %6551 = vmatpush2.msra.mxu0 %v5633
        %6552 = vmatprep.subr.mxu0 %v5626
        %6553 = vmatpush2.msra.mxu0 %v5625
        %6554 = vmatprep.subr.mxu0 %v5618
        %6555 = vmatpush2.msra.mxu0 %v5617
        %6556 = vmatprep.subr.mxu0 %v5610
        %6557 = vmatpush2.msra.mxu0 %v5609
        %6558 = vmatprep.subr.mxu0 %v5602
        %6559 = vmatpush2.msra.mxu0 %v5601
        %6560 = vmatprep.subr.mxu0 %v5594
        %6561 = vmatpush2.msra.mxu0 %v5593
        %6562 = vmatprep.subr.mxu0 %v5586
        %6563 = vmatpush2.msra.mxu0 %v5585
        %6564 = vmatprep.subr.mxu0 %v5578
        %6565 = vmatpush2.msra.mxu0 %v5577
        %6566 = vmatprep.subr.mxu0 %v5570
        %6567 = vmatpush2.msra.mxu0 %v5569
        %6568 = vmatprep.mubr.f32.mxu0 %v5372
        %6569 = vmatmul.mubr.f32.gmra.mxu0 %v5371
        %v6570 = vpop.f32.mrf.mxu0
        %v6571 = vadd.f32 %v5720, %v6570
        %v6572 = vpop.f32.mrf.mxu0
        %v6573 = vadd.f32 %v5724, %v6572
        %6574 = vmatprep.mubr.f32.mxu0 %v5374
        %6575 = vmatmul.mubr.f32.gmra.mxu0 %v5373
        %v6576 = vpop.f32.mrf.mxu0
        %v6577 = vadd.f32 %v5720, %v6576
        %v6578 = vpop.f32.mrf.mxu0
        %v6579 = vadd.f32 %v5724, %v6578
        %6580 = vmatprep.mubr.f32.mxu0 %v5376
        %6581 = vmatmul.mubr.f32.gmra.mxu0 %v5375
        %v6582 = vpop.f32.mrf.mxu0
        %v6583 = vadd.f32 %v5720, %v6582
        %v6584 = vpop.f32.mrf.mxu0
        %v6585 = vadd.f32 %v5724, %v6584
        %6586 = vmatprep.mubr.f32.mxu0 %v5378
        %6587 = vmatmul.mubr.f32.gmra.mxu0 %v5377
        %v6588 = vpop.f32.mrf.mxu0
        %v6589 = vadd.f32 %v5720, %v6588
        %v6590 = vpop.f32.mrf.mxu0
        %v6591 = vadd.f32 %v5724, %v6590
        %6592 = vmatprep.mubr.f32.mxu0 %v5380
        %6593 = vmatmul.mubr.f32.gmra.mxu0 %v5379
        %v6594 = vpop.f32.mrf.mxu0
        %v6595 = vadd.f32 %v5720, %v6594
        %v6596 = vpop.f32.mrf.mxu0
        %v6597 = vadd.f32 %v5724, %v6596
        %6598 = vmatprep.mubr.f32.mxu0 %v5382
        %6599 = vmatmul.mubr.f32.gmra.mxu0 %v5381
        %v6600 = vpop.f32.mrf.mxu0
        %v6601 = vadd.f32 %v5720, %v6600
        %v6602 = vpop.f32.mrf.mxu0
        %v6603 = vadd.f32 %v5724, %v6602
        %6604 = vmatprep.mubr.f32.mxu0 %v5384
        %6605 = vmatmul.mubr.f32.gmra.mxu0 %v5383
        %v6606 = vpop.f32.mrf.mxu0
        %v6607 = vadd.f32 %v5720, %v6606
        %v6608 = vpop.f32.mrf.mxu0
        %v6609 = vadd.f32 %v5724, %v6608
        %6610 = vmatprep.mubr.f32.mxu0 %v5386
        %6611 = vmatmul.mubr.f32.gmra.mxu0 %v5385
        %v6612 = vpop.f32.mrf.mxu0
        %v6613 = vadd.f32 %v5720, %v6612
        %v6614 = vpop.f32.mrf.mxu0
        %v6615 = vadd.f32 %v5724, %v6614
        %6616 = vmatprep.mubr.f32.mxu0 %v5388
        %6617 = vmatmul.mubr.f32.gmra.mxu0 %v5387
        %v6618 = vpop.f32.mrf.mxu0
        %v6619 = vadd.f32 %v5720, %v6618
        %v6620 = vpop.f32.mrf.mxu0
        %v6621 = vadd.f32 %v5724, %v6620
        %6622 = vmatprep.mubr.f32.mxu0 %v5390
        %6623 = vmatmul.mubr.f32.gmra.mxu0 %v5389
        %v6624 = vpop.f32.mrf.mxu0
        %v6625 = vadd.f32 %v5720, %v6624
        %v6626 = vpop.f32.mrf.mxu0
        %v6627 = vadd.f32 %v5724, %v6626
        %6628 = vmatprep.mubr.f32.mxu0 %v5392
        %6629 = vmatmul.mubr.f32.gmra.mxu0 %v5391
        %v6630 = vpop.f32.mrf.mxu0
        %v6631 = vadd.f32 %v5720, %v6630
        %v6632 = vpop.f32.mrf.mxu0
        %v6633 = vadd.f32 %v5724, %v6632
        %6634 = vmatprep.mubr.f32.mxu0 %v5394
        %6635 = vmatmul.mubr.f32.gmra.mxu0 %v5393
        %v6636 = vpop.f32.mrf.mxu0
        %v6637 = vadd.f32 %v5720, %v6636
        %v6638 = vpop.f32.mrf.mxu0
        %v6639 = vadd.f32 %v5724, %v6638
        %6640 = vmatprep.mubr.f32.mxu0 %v5396
        %6641 = vmatmul.mubr.f32.gmra.mxu0 %v5395
        %v6642 = vpop.f32.mrf.mxu0
        %v6643 = vadd.f32 %v5720, %v6642
        %v6644 = vpop.f32.mrf.mxu0
        %v6645 = vadd.f32 %v5724, %v6644
        %6646 = vmatprep.mubr.f32.mxu0 %v5398
        %6647 = vmatmul.mubr.f32.gmra.mxu0 %v5397
        %v6648 = vpop.f32.mrf.mxu0
        %v6649 = vadd.f32 %v5720, %v6648
        %v6650 = vpop.f32.mrf.mxu0
        %v6651 = vadd.f32 %v5724, %v6650
        %6652 = vmatprep.mubr.f32.mxu0 %v5400
        %6653 = vmatmul.mubr.f32.gmra.mxu0 %v5399
        %v6654 = vpop.f32.mrf.mxu0
        %v6655 = vadd.f32 %v5720, %v6654
        %v6656 = vpop.f32.mrf.mxu0
        %v6657 = vadd.f32 %v5724, %v6656
        %6658 = vmatprep.mubr.f32.mxu0 %v5402
        %6659 = vmatmul.mubr.f32.gmra.mxu0 %v5401
        %v6660 = vpop.f32.mrf.mxu0
        %v6661 = vadd.f32 %v5720, %v6660
        %v6662 = vpop.f32.mrf.mxu0
        %v6663 = vadd.f32 %v5724, %v6662
        %6664 = vmatprep.mubr.f32.mxu0 %v5404
        %6665 = vmatmul.mubr.f32.gmra.mxu0 %v5403
        %v6666 = vpop.f32.mrf.mxu0
        %v6667 = vadd.f32 %v5720, %v6666
        %v6668 = vpop.f32.mrf.mxu0
        %v6669 = vadd.f32 %v5724, %v6668
        %6670 = vmatprep.mubr.f32.mxu0 %v5406
        %6671 = vmatmul.mubr.f32.gmra.mxu0 %v5405
        %v6672 = vpop.f32.mrf.mxu0
        %v6673 = vadd.f32 %v5720, %v6672
        %v6674 = vpop.f32.mrf.mxu0
        %v6675 = vadd.f32 %v5724, %v6674
        %6676 = vmatprep.mubr.f32.mxu0 %v5408
        %6677 = vmatmul.mubr.f32.gmra.mxu0 %v5407
        %v6678 = vpop.f32.mrf.mxu0
        %v6679 = vadd.f32 %v5720, %v6678
        %v6680 = vpop.f32.mrf.mxu0
        %v6681 = vadd.f32 %v5724, %v6680
        %6682 = vmatprep.mubr.f32.mxu0 %v5410
        %6683 = vmatmul.mubr.f32.gmra.mxu0 %v5409
        %v6684 = vpop.f32.mrf.mxu0
        %v6685 = vadd.f32 %v5720, %v6684
        %v6686 = vpop.f32.mrf.mxu0
        %v6687 = vadd.f32 %v5724, %v6686
        %6688 = vmatprep.mubr.f32.mxu0 %v5412
        %6689 = vmatmul.mubr.f32.gmra.mxu0 %v5411
        %v6690 = vpop.f32.mrf.mxu0
        %v6691 = vadd.f32 %v5720, %v6690
        %v6692 = vpop.f32.mrf.mxu0
        %v6693 = vadd.f32 %v5724, %v6692
        %6694 = vmatprep.mubr.f32.mxu0 %v5414
        %6695 = vmatmul.mubr.f32.gmra.mxu0 %v5413
        %v6696 = vpop.f32.mrf.mxu0
        %v6697 = vadd.f32 %v5720, %v6696
        %v6698 = vpop.f32.mrf.mxu0
        %v6699 = vadd.f32 %v5724, %v6698
        %6700 = vmatprep.mubr.f32.mxu0 %v5416
        %6701 = vmatmul.mubr.f32.gmra.mxu0 %v5415
        %v6702 = vpop.f32.mrf.mxu0
        %v6703 = vadd.f32 %v5720, %v6702
        %v6704 = vpop.f32.mrf.mxu0
        %v6705 = vadd.f32 %v5724, %v6704
        %6706 = vmatprep.mubr.f32.mxu0 %v5418
        %6707 = vmatmul.mubr.f32.gmra.mxu0 %v5417
        %v6708 = vpop.f32.mrf.mxu0
        %v6709 = vadd.f32 %v5720, %v6708
        %v6710 = vpop.f32.mrf.mxu0
        %v6711 = vadd.f32 %v5724, %v6710
        %6712 = vmatprep.mubr.f32.mxu0 %v5420
        %6713 = vmatmul.mubr.f32.gmra.mxu0 %v5419
        %v6714 = vpop.f32.mrf.mxu0
        %v6715 = vadd.f32 %v5720, %v6714
        %v6716 = vpop.f32.mrf.mxu0
        %v6717 = vadd.f32 %v5724, %v6716
        %6718 = vmatprep.mubr.f32.mxu0 %v5422
        %6719 = vmatmul.mubr.f32.gmra.mxu0 %v5421
        %v6720 = vpop.f32.mrf.mxu0
        %v6721 = vadd.f32 %v5720, %v6720
        %v6722 = vpop.f32.mrf.mxu0
        %v6723 = vadd.f32 %v5724, %v6722
        %6724 = vmatprep.mubr.f32.mxu0 %v5424
        %6725 = vmatmul.mubr.f32.gmra.mxu0 %v5423
        %v6726 = vpop.f32.mrf.mxu0
        %v6727 = vadd.f32 %v5720, %v6726
        %v6728 = vpop.f32.mrf.mxu0
        %v6729 = vadd.f32 %v5724, %v6728
        %6730 = vmatprep.mubr.f32.mxu0 %v5426
        %6731 = vmatmul.mubr.f32.gmra.mxu0 %v5425
        %v6732 = vpop.f32.mrf.mxu0
        %v6733 = vadd.f32 %v5720, %v6732
        %v6734 = vpop.f32.mrf.mxu0
        %v6735 = vadd.f32 %v5724, %v6734
        %6736 = vmatprep.mubr.f32.mxu0 %v5428
        %6737 = vmatmul.mubr.f32.gmra.mxu0 %v5427
        %v6738 = vpop.f32.mrf.mxu0
        %v6739 = vadd.f32 %v5720, %v6738
        %v6740 = vpop.f32.mrf.mxu0
        %v6741 = vadd.f32 %v5724, %v6740
        %6742 = vmatprep.mubr.f32.mxu0 %v5430
        %6743 = vmatmul.mubr.f32.gmra.mxu0 %v5429
        %v6744 = vpop.f32.mrf.mxu0
        %v6745 = vadd.f32 %v5720, %v6744
        %v6746 = vpop.f32.mrf.mxu0
        %v6747 = vadd.f32 %v5724, %v6746
        %6748 = vmatprep.mubr.f32.mxu0 %v5432
        %6749 = vmatmul.mubr.f32.gmra.mxu0 %v5431
        %v6750 = vpop.f32.mrf.mxu0
        %v6751 = vadd.f32 %v5720, %v6750
        %v6752 = vpop.f32.mrf.mxu0
        %v6753 = vadd.f32 %v5724, %v6752
        %6754 = vmatprep.mubr.f32.mxu0 %v5434
        %6755 = vmatmul.mubr.f32.gmra.mxu0 %v5433
        %v6756 = vpop.f32.mrf.mxu0
        %v6757 = vadd.f32 %v5720, %v6756
        %v6758 = vpop.f32.mrf.mxu0
        %v6759 = vadd.f32 %v5724, %v6758
        %6760 = vdwg.mxu0
        %v6761 = vmul.f32 %v5800, %v5800
        %v6762 = vmul.f32 %v5802, %v5802
        %v6763 = vmul.f32 %v6057, %v6057
        %v6764 = vmul.f32 %v6059, %v6059
        %v6765 = vmul.f32 %v6314, %v6314
        %v6766 = vmul.f32 %v6316, %v6316
        %v6767 = vmul.f32 %v6571, %v6571
        %v6768 = vmul.f32 %v6573, %v6573
        %v6769 = vmul.f32 %v5806, %v5806
        %v6770 = vmul.f32 %v5808, %v5808
        %v6771 = vmul.f32 %v6063, %v6063
        %v6772 = vmul.f32 %v6065, %v6065
        %v6773 = vmul.f32 %v6320, %v6320
        %v6774 = vmul.f32 %v6322, %v6322
        %v6775 = vmul.f32 %v6577, %v6577
        %v6776 = vmul.f32 %v6579, %v6579
        %v6777 = vmul.f32 %v5812, %v5812
        %v6778 = vmul.f32 %v5814, %v5814
        %v6779 = vmul.f32 %v6069, %v6069
        %v6780 = vmul.f32 %v6071, %v6071
        %v6781 = vmul.f32 %v6326, %v6326
        %v6782 = vmul.f32 %v6328, %v6328
        %v6783 = vmul.f32 %v6583, %v6583
        %v6784 = vmul.f32 %v6585, %v6585
        %v6785 = vmul.f32 %v5818, %v5818
        %v6786 = vmul.f32 %v5820, %v5820
        %v6787 = vmul.f32 %v6075, %v6075
        %v6788 = vmul.f32 %v6077, %v6077
        %v6789 = vmul.f32 %v6332, %v6332
        %v6790 = vmul.f32 %v6334, %v6334
        %v6791 = vmul.f32 %v6589, %v6589
        %v6792 = vmul.f32 %v6591, %v6591
        %v6793 = vmul.f32 %v5824, %v5824
        %v6794 = vmul.f32 %v5826, %v5826
        %v6795 = vmul.f32 %v6081, %v6081
        %v6796 = vmul.f32 %v6083, %v6083
        %v6797 = vmul.f32 %v6338, %v6338
        %v6798 = vmul.f32 %v6340, %v6340
        %v6799 = vmul.f32 %v6595, %v6595
        %v6800 = vmul.f32 %v6597, %v6597
        %v6801 = vmul.f32 %v5830, %v5830
        %v6802 = vmul.f32 %v5832, %v5832
        %v6803 = vmul.f32 %v6087, %v6087
        %v6804 = vmul.f32 %v6089, %v6089
        %v6805 = vmul.f32 %v6344, %v6344
        %v6806 = vmul.f32 %v6346, %v6346
        %v6807 = vmul.f32 %v6601, %v6601
        %v6808 = vmul.f32 %v6603, %v6603
        %v6809 = vmul.f32 %v5836, %v5836
        %v6810 = vmul.f32 %v5838, %v5838
        %v6811 = vmul.f32 %v6093, %v6093
        %v6812 = vmul.f32 %v6095, %v6095
        %v6813 = vmul.f32 %v6350, %v6350
        %v6814 = vmul.f32 %v6352, %v6352
        %v6815 = vmul.f32 %v6607, %v6607
        %v6816 = vmul.f32 %v6609, %v6609
        %v6817 = vmul.f32 %v5842, %v5842
        %v6818 = vmul.f32 %v5844, %v5844
        %v6819 = vmul.f32 %v6099, %v6099
        %v6820 = vmul.f32 %v6101, %v6101
        %v6821 = vmul.f32 %v6356, %v6356
        %v6822 = vmul.f32 %v6358, %v6358
        %v6823 = vmul.f32 %v6613, %v6613
        %v6824 = vmul.f32 %v6615, %v6615
        %v6825 = vmul.f32 %v5848, %v5848
        %v6826 = vmul.f32 %v5850, %v5850
        %v6827 = vmul.f32 %v6105, %v6105
        %v6828 = vmul.f32 %v6107, %v6107
        %v6829 = vmul.f32 %v6362, %v6362
        %v6830 = vmul.f32 %v6364, %v6364
        %v6831 = vmul.f32 %v6619, %v6619
        %v6832 = vmul.f32 %v6621, %v6621
        %v6833 = vmul.f32 %v5854, %v5854
        %v6834 = vmul.f32 %v5856, %v5856
        %v6835 = vmul.f32 %v6111, %v6111
        %v6836 = vmul.f32 %v6113, %v6113
        %v6837 = vmul.f32 %v6368, %v6368
        %v6838 = vmul.f32 %v6370, %v6370
        %v6839 = vmul.f32 %v6625, %v6625
        %v6840 = vmul.f32 %v6627, %v6627
        %v6841 = vmul.f32 %v5860, %v5860
        %v6842 = vmul.f32 %v5862, %v5862
        %v6843 = vmul.f32 %v6117, %v6117
        %v6844 = vmul.f32 %v6119, %v6119
        %v6845 = vmul.f32 %v6374, %v6374
        %v6846 = vmul.f32 %v6376, %v6376
        %v6847 = vmul.f32 %v6631, %v6631
        %v6848 = vmul.f32 %v6633, %v6633
        %v6849 = vmul.f32 %v5866, %v5866
        %v6850 = vmul.f32 %v5868, %v5868
        %v6851 = vmul.f32 %v6123, %v6123
        %v6852 = vmul.f32 %v6125, %v6125
        %v6853 = vmul.f32 %v6380, %v6380
        %v6854 = vmul.f32 %v6382, %v6382
        %v6855 = vmul.f32 %v6637, %v6637
        %v6856 = vmul.f32 %v6639, %v6639
        %v6857 = vmul.f32 %v5872, %v5872
        %v6858 = vmul.f32 %v5874, %v5874
        %v6859 = vmul.f32 %v6129, %v6129
        %v6860 = vmul.f32 %v6131, %v6131
        %v6861 = vmul.f32 %v6386, %v6386
        %v6862 = vmul.f32 %v6388, %v6388
        %v6863 = vmul.f32 %v6643, %v6643
        %v6864 = vmul.f32 %v6645, %v6645
        %v6865 = vmul.f32 %v5878, %v5878
        %v6866 = vmul.f32 %v5880, %v5880
        %v6867 = vmul.f32 %v6135, %v6135
        %v6868 = vmul.f32 %v6137, %v6137
        %v6869 = vmul.f32 %v6392, %v6392
        %v6870 = vmul.f32 %v6394, %v6394
        %v6871 = vmul.f32 %v6649, %v6649
        %v6872 = vmul.f32 %v6651, %v6651
        %v6873 = vmul.f32 %v5884, %v5884
        %v6874 = vmul.f32 %v5886, %v5886
        %v6875 = vmul.f32 %v6141, %v6141
        %v6876 = vmul.f32 %v6143, %v6143
        %v6877 = vmul.f32 %v6398, %v6398
        %v6878 = vmul.f32 %v6400, %v6400
        %v6879 = vmul.f32 %v6655, %v6655
        %v6880 = vmul.f32 %v6657, %v6657
        %v6881 = vmul.f32 %v5890, %v5890
        %v6882 = vmul.f32 %v5892, %v5892
        %v6883 = vmul.f32 %v6147, %v6147
        %v6884 = vmul.f32 %v6149, %v6149
        %v6885 = vmul.f32 %v6404, %v6404
        %v6886 = vmul.f32 %v6406, %v6406
        %v6887 = vmul.f32 %v6661, %v6661
        %v6888 = vmul.f32 %v6663, %v6663
        %v6889 = vmul.f32 %v5896, %v5896
        %v6890 = vmul.f32 %v5898, %v5898
        %v6891 = vmul.f32 %v6153, %v6153
        %v6892 = vmul.f32 %v6155, %v6155
        %v6893 = vmul.f32 %v6410, %v6410
        %v6894 = vmul.f32 %v6412, %v6412
        %v6895 = vmul.f32 %v6667, %v6667
        %v6896 = vmul.f32 %v6669, %v6669
        %v6897 = vmul.f32 %v5902, %v5902
        %v6898 = vmul.f32 %v5904, %v5904
        %v6899 = vmul.f32 %v6159, %v6159
        %v6900 = vmul.f32 %v6161, %v6161
        %v6901 = vmul.f32 %v6416, %v6416
        %v6902 = vmul.f32 %v6418, %v6418
        %v6903 = vmul.f32 %v6673, %v6673
        %v6904 = vmul.f32 %v6675, %v6675
        %v6905 = vmul.f32 %v5908, %v5908
        %v6906 = vmul.f32 %v5910, %v5910
        %v6907 = vmul.f32 %v6165, %v6165
        %v6908 = vmul.f32 %v6167, %v6167
        %v6909 = vmul.f32 %v6422, %v6422
        %v6910 = vmul.f32 %v6424, %v6424
        %v6911 = vmul.f32 %v6679, %v6679
        %v6912 = vmul.f32 %v6681, %v6681
        %v6913 = vmul.f32 %v5914, %v5914
        %v6914 = vmul.f32 %v5916, %v5916
        %v6915 = vmul.f32 %v6171, %v6171
        %v6916 = vmul.f32 %v6173, %v6173
        %v6917 = vmul.f32 %v6428, %v6428
        %v6918 = vmul.f32 %v6430, %v6430
        %v6919 = vmul.f32 %v6685, %v6685
        %v6920 = vmul.f32 %v6687, %v6687
        %v6921 = vmul.f32 %v5920, %v5920
        %v6922 = vmul.f32 %v5922, %v5922
        %v6923 = vmul.f32 %v6177, %v6177
        %v6924 = vmul.f32 %v6179, %v6179
        %v6925 = vmul.f32 %v6434, %v6434
        %v6926 = vmul.f32 %v6436, %v6436
        %v6927 = vmul.f32 %v6691, %v6691
        %v6928 = vmul.f32 %v6693, %v6693
        %v6929 = vmul.f32 %v5926, %v5926
        %v6930 = vmul.f32 %v5928, %v5928
        %v6931 = vmul.f32 %v6183, %v6183
        %v6932 = vmul.f32 %v6185, %v6185
        %v6933 = vmul.f32 %v6440, %v6440
        %v6934 = vmul.f32 %v6442, %v6442
        %v6935 = vmul.f32 %v6697, %v6697
        %v6936 = vmul.f32 %v6699, %v6699
        %v6937 = vmul.f32 %v5932, %v5932
        %v6938 = vmul.f32 %v5934, %v5934
        %v6939 = vmul.f32 %v6189, %v6189
        %v6940 = vmul.f32 %v6191, %v6191
        %v6941 = vmul.f32 %v6446, %v6446
        %v6942 = vmul.f32 %v6448, %v6448
        %v6943 = vmul.f32 %v6703, %v6703
        %v6944 = vmul.f32 %v6705, %v6705
        %v6945 = vmul.f32 %v5938, %v5938
        %v6946 = vmul.f32 %v5940, %v5940
        %v6947 = vmul.f32 %v6195, %v6195
        %v6948 = vmul.f32 %v6197, %v6197
        %v6949 = vmul.f32 %v6452, %v6452
        %v6950 = vmul.f32 %v6454, %v6454
        %v6951 = vmul.f32 %v6709, %v6709
        %v6952 = vmul.f32 %v6711, %v6711
        %v6953 = vmul.f32 %v5944, %v5944
        %v6954 = vmul.f32 %v5946, %v5946
        %v6955 = vmul.f32 %v6201, %v6201
        %v6956 = vmul.f32 %v6203, %v6203
        %v6957 = vmul.f32 %v6458, %v6458
        %v6958 = vmul.f32 %v6460, %v6460
        %v6959 = vmul.f32 %v6715, %v6715
        %v6960 = vmul.f32 %v6717, %v6717
        %v6961 = vmul.f32 %v5950, %v5950
        %v6962 = vmul.f32 %v5952, %v5952
        %v6963 = vmul.f32 %v6207, %v6207
        %v6964 = vmul.f32 %v6209, %v6209
        %v6965 = vmul.f32 %v6464, %v6464
        %v6966 = vmul.f32 %v6466, %v6466
        %v6967 = vmul.f32 %v6721, %v6721
        %v6968 = vmul.f32 %v6723, %v6723
        %v6969 = vmul.f32 %v5956, %v5956
        %v6970 = vmul.f32 %v5958, %v5958
        %v6971 = vmul.f32 %v6213, %v6213
        %v6972 = vmul.f32 %v6215, %v6215
        %v6973 = vmul.f32 %v6470, %v6470
        %v6974 = vmul.f32 %v6472, %v6472
        %v6975 = vmul.f32 %v6727, %v6727
        %v6976 = vmul.f32 %v6729, %v6729
        %v6977 = vmul.f32 %v5962, %v5962
        %v6978 = vmul.f32 %v5964, %v5964
        %v6979 = vmul.f32 %v6219, %v6219
        %v6980 = vmul.f32 %v6221, %v6221
        %v6981 = vmul.f32 %v6476, %v6476
        %v6982 = vmul.f32 %v6478, %v6478
        %v6983 = vmul.f32 %v6733, %v6733
        %v6984 = vmul.f32 %v6735, %v6735
        %v6985 = vmul.f32 %v5968, %v5968
        %v6986 = vmul.f32 %v5970, %v5970
        %v6987 = vmul.f32 %v6225, %v6225
        %v6988 = vmul.f32 %v6227, %v6227
        %v6989 = vmul.f32 %v6482, %v6482
        %v6990 = vmul.f32 %v6484, %v6484
        %v6991 = vmul.f32 %v6739, %v6739
        %v6992 = vmul.f32 %v6741, %v6741
        %v6993 = vmul.f32 %v5974, %v5974
        %v6994 = vmul.f32 %v5976, %v5976
        %v6995 = vmul.f32 %v6231, %v6231
        %v6996 = vmul.f32 %v6233, %v6233
        %v6997 = vmul.f32 %v6488, %v6488
        %v6998 = vmul.f32 %v6490, %v6490
        %v6999 = vmul.f32 %v6745, %v6745
        %v7000 = vmul.f32 %v6747, %v6747
        %v7001 = vmul.f32 %v5980, %v5980
        %v7002 = vmul.f32 %v5982, %v5982
        %v7003 = vmul.f32 %v6237, %v6237
        %v7004 = vmul.f32 %v6239, %v6239
        %v7005 = vmul.f32 %v6494, %v6494
        %v7006 = vmul.f32 %v6496, %v6496
        %v7007 = vmul.f32 %v6751, %v6751
        %v7008 = vmul.f32 %v6753, %v6753
        %v7009 = vmul.f32 %v5986, %v5986
        %v7010 = vmul.f32 %v5988, %v5988
        %v7011 = vmul.f32 %v6243, %v6243
        %v7012 = vmul.f32 %v6245, %v6245
        %v7013 = vmul.f32 %v6500, %v6500
        %v7014 = vmul.f32 %v6502, %v6502
        %v7015 = vmul.f32 %v6757, %v6757
        %v7016 = vmul.f32 %v6759, %v6759
        %v7017 = vmul.f32 %v5800, %v6761
        %v7018 = vmul.f32 %v5802, %v6762
        %v7019 = vmul.f32 %v6057, %v6763
        %v7020 = vmul.f32 %v6059, %v6764
        %v7021 = vmul.f32 %v6314, %v6765
        %v7022 = vmul.f32 %v6316, %v6766
        %v7023 = vmul.f32 %v6571, %v6767
        %v7024 = vmul.f32 %v6573, %v6768
        %v7025 = vmul.f32 %v5806, %v6769
        %v7026 = vmul.f32 %v5808, %v6770
        %v7027 = vmul.f32 %v6063, %v6771
        %v7028 = vmul.f32 %v6065, %v6772
        %v7029 = vmul.f32 %v6320, %v6773
        %v7030 = vmul.f32 %v6322, %v6774
        %v7031 = vmul.f32 %v6577, %v6775
        %v7032 = vmul.f32 %v6579, %v6776
        %v7033 = vmul.f32 %v5812, %v6777
        %v7034 = vmul.f32 %v5814, %v6778
        %v7035 = vmul.f32 %v6069, %v6779
        %v7036 = vmul.f32 %v6071, %v6780
        %v7037 = vmul.f32 %v6326, %v6781
        %v7038 = vmul.f32 %v6328, %v6782
        %v7039 = vmul.f32 %v6583, %v6783
        %v7040 = vmul.f32 %v6585, %v6784
        %v7041 = vmul.f32 %v5818, %v6785
        %v7042 = vmul.f32 %v5820, %v6786
        %v7043 = vmul.f32 %v6075, %v6787
        %v7044 = vmul.f32 %v6077, %v6788
        %v7045 = vmul.f32 %v6332, %v6789
        %v7046 = vmul.f32 %v6334, %v6790
        %v7047 = vmul.f32 %v6589, %v6791
        %v7048 = vmul.f32 %v6591, %v6792
        %v7049 = vmul.f32 %v5824, %v6793
        %v7050 = vmul.f32 %v5826, %v6794
        %v7051 = vmul.f32 %v6081, %v6795
        %v7052 = vmul.f32 %v6083, %v6796
        %v7053 = vmul.f32 %v6338, %v6797
        %v7054 = vmul.f32 %v6340, %v6798
        %v7055 = vmul.f32 %v6595, %v6799
        %v7056 = vmul.f32 %v6597, %v6800
        %v7057 = vmul.f32 %v5830, %v6801
        %v7058 = vmul.f32 %v5832, %v6802
        %v7059 = vmul.f32 %v6087, %v6803
        %v7060 = vmul.f32 %v6089, %v6804
        %v7061 = vmul.f32 %v6344, %v6805
        %v7062 = vmul.f32 %v6346, %v6806
        %v7063 = vmul.f32 %v6601, %v6807
        %v7064 = vmul.f32 %v6603, %v6808
        %v7065 = vmul.f32 %v5836, %v6809
        %v7066 = vmul.f32 %v5838, %v6810
        %v7067 = vmul.f32 %v6093, %v6811
        %v7068 = vmul.f32 %v6095, %v6812
        %v7069 = vmul.f32 %v6350, %v6813
        %v7070 = vmul.f32 %v6352, %v6814
        %v7071 = vmul.f32 %v6607, %v6815
        %v7072 = vmul.f32 %v6609, %v6816
        %v7073 = vmul.f32 %v5842, %v6817
        %v7074 = vmul.f32 %v5844, %v6818
        %v7075 = vmul.f32 %v6099, %v6819
        %v7076 = vmul.f32 %v6101, %v6820
        %v7077 = vmul.f32 %v6356, %v6821
        %v7078 = vmul.f32 %v6358, %v6822
        %v7079 = vmul.f32 %v6613, %v6823
        %v7080 = vmul.f32 %v6615, %v6824
        %v7081 = vmul.f32 %v5848, %v6825
        %v7082 = vmul.f32 %v5850, %v6826
        %v7083 = vmul.f32 %v6105, %v6827
        %v7084 = vmul.f32 %v6107, %v6828
        %v7085 = vmul.f32 %v6362, %v6829
        %v7086 = vmul.f32 %v6364, %v6830
        %v7087 = vmul.f32 %v6619, %v6831
        %v7088 = vmul.f32 %v6621, %v6832
        %v7089 = vmul.f32 %v5854, %v6833
        %v7090 = vmul.f32 %v5856, %v6834
        %v7091 = vmul.f32 %v6111, %v6835
        %v7092 = vmul.f32 %v6113, %v6836
        %v7093 = vmul.f32 %v6368, %v6837
        %v7094 = vmul.f32 %v6370, %v6838
        %v7095 = vmul.f32 %v6625, %v6839
        %v7096 = vmul.f32 %v6627, %v6840
        %v7097 = vmul.f32 %v5860, %v6841
        %v7098 = vmul.f32 %v5862, %v6842
        %v7099 = vmul.f32 %v6117, %v6843
        %v7100 = vmul.f32 %v6119, %v6844
        %v7101 = vmul.f32 %v6374, %v6845
        %v7102 = vmul.f32 %v6376, %v6846
        %v7103 = vmul.f32 %v6631, %v6847
        %v7104 = vmul.f32 %v6633, %v6848
        %v7105 = vmul.f32 %v5866, %v6849
        %v7106 = vmul.f32 %v5868, %v6850
        %v7107 = vmul.f32 %v6123, %v6851
        %v7108 = vmul.f32 %v6125, %v6852
        %v7109 = vmul.f32 %v6380, %v6853
        %v7110 = vmul.f32 %v6382, %v6854
        %v7111 = vmul.f32 %v6637, %v6855
        %v7112 = vmul.f32 %v6639, %v6856
        %v7113 = vmul.f32 %v5872, %v6857
        %v7114 = vmul.f32 %v5874, %v6858
        %v7115 = vmul.f32 %v6129, %v6859
        %v7116 = vmul.f32 %v6131, %v6860
        %v7117 = vmul.f32 %v6386, %v6861
        %v7118 = vmul.f32 %v6388, %v6862
        %v7119 = vmul.f32 %v6643, %v6863
        %v7120 = vmul.f32 %v6645, %v6864
        %v7121 = vmul.f32 %v5878, %v6865
        %v7122 = vmul.f32 %v5880, %v6866
        %v7123 = vmul.f32 %v6135, %v6867
        %v7124 = vmul.f32 %v6137, %v6868
        %v7125 = vmul.f32 %v6392, %v6869
        %v7126 = vmul.f32 %v6394, %v6870
        %v7127 = vmul.f32 %v6649, %v6871
        %v7128 = vmul.f32 %v6651, %v6872
        %v7129 = vmul.f32 %v5884, %v6873
        %v7130 = vmul.f32 %v5886, %v6874
        %v7131 = vmul.f32 %v6141, %v6875
        %v7132 = vmul.f32 %v6143, %v6876
        %v7133 = vmul.f32 %v6398, %v6877
        %v7134 = vmul.f32 %v6400, %v6878
        %v7135 = vmul.f32 %v6655, %v6879
        %v7136 = vmul.f32 %v6657, %v6880
        %v7137 = vmul.f32 %v5890, %v6881
        %v7138 = vmul.f32 %v5892, %v6882
        %v7139 = vmul.f32 %v6147, %v6883
        %v7140 = vmul.f32 %v6149, %v6884
        %v7141 = vmul.f32 %v6404, %v6885
        %v7142 = vmul.f32 %v6406, %v6886
        %v7143 = vmul.f32 %v6661, %v6887
        %v7144 = vmul.f32 %v6663, %v6888
        %v7145 = vmul.f32 %v5896, %v6889
        %v7146 = vmul.f32 %v5898, %v6890
        %v7147 = vmul.f32 %v6153, %v6891
        %v7148 = vmul.f32 %v6155, %v6892
        %v7149 = vmul.f32 %v6410, %v6893
        %v7150 = vmul.f32 %v6412, %v6894
        %v7151 = vmul.f32 %v6667, %v6895
        %v7152 = vmul.f32 %v6669, %v6896
        %v7153 = vmul.f32 %v5902, %v6897
        %v7154 = vmul.f32 %v5904, %v6898
        %v7155 = vmul.f32 %v6159, %v6899
        %v7156 = vmul.f32 %v6161, %v6900
        %v7157 = vmul.f32 %v6416, %v6901
        %v7158 = vmul.f32 %v6418, %v6902
        %v7159 = vmul.f32 %v6673, %v6903
        %v7160 = vmul.f32 %v6675, %v6904
        %v7161 = vmul.f32 %v5908, %v6905
        %v7162 = vmul.f32 %v5910, %v6906
        %v7163 = vmul.f32 %v6165, %v6907
        %v7164 = vmul.f32 %v6167, %v6908
        %v7165 = vmul.f32 %v6422, %v6909
        %v7166 = vmul.f32 %v6424, %v6910
        %v7167 = vmul.f32 %v6679, %v6911
        %v7168 = vmul.f32 %v6681, %v6912
        %v7169 = vmul.f32 %v5914, %v6913
        %v7170 = vmul.f32 %v5916, %v6914
        %v7171 = vmul.f32 %v6171, %v6915
        %v7172 = vmul.f32 %v6173, %v6916
        %v7173 = vmul.f32 %v6428, %v6917
        %v7174 = vmul.f32 %v6430, %v6918
        %v7175 = vmul.f32 %v6685, %v6919
        %v7176 = vmul.f32 %v6687, %v6920
        %v7177 = vmul.f32 %v5920, %v6921
        %v7178 = vmul.f32 %v5922, %v6922
        %v7179 = vmul.f32 %v6177, %v6923
        %v7180 = vmul.f32 %v6179, %v6924
        %v7181 = vmul.f32 %v6434, %v6925
        %v7182 = vmul.f32 %v6436, %v6926
        %v7183 = vmul.f32 %v6691, %v6927
        %v7184 = vmul.f32 %v6693, %v6928
        %v7185 = vmul.f32 %v5926, %v6929
        %v7186 = vmul.f32 %v5928, %v6930
        %v7187 = vmul.f32 %v6183, %v6931
        %v7188 = vmul.f32 %v6185, %v6932
        %v7189 = vmul.f32 %v6440, %v6933
        %v7190 = vmul.f32 %v6442, %v6934
        %v7191 = vmul.f32 %v6697, %v6935
        %v7192 = vmul.f32 %v6699, %v6936
        %v7193 = vmul.f32 %v5932, %v6937
        %v7194 = vmul.f32 %v5934, %v6938
        %v7195 = vmul.f32 %v6189, %v6939
        %v7196 = vmul.f32 %v6191, %v6940
        %v7197 = vmul.f32 %v6446, %v6941
        %v7198 = vmul.f32 %v6448, %v6942
        %v7199 = vmul.f32 %v6703, %v6943
        %v7200 = vmul.f32 %v6705, %v6944
        %v7201 = vmul.f32 %v5938, %v6945
        %v7202 = vmul.f32 %v5940, %v6946
        %v7203 = vmul.f32 %v6195, %v6947
        %v7204 = vmul.f32 %v6197, %v6948
        %v7205 = vmul.f32 %v6452, %v6949
        %v7206 = vmul.f32 %v6454, %v6950
        %v7207 = vmul.f32 %v6709, %v6951
        %v7208 = vmul.f32 %v6711, %v6952
        %v7209 = vmul.f32 %v5944, %v6953
        %v7210 = vmul.f32 %v5946, %v6954
        %v7211 = vmul.f32 %v6201, %v6955
        %v7212 = vmul.f32 %v6203, %v6956
        %v7213 = vmul.f32 %v6458, %v6957
        %v7214 = vmul.f32 %v6460, %v6958
        %v7215 = vmul.f32 %v6715, %v6959
        %v7216 = vmul.f32 %v6717, %v6960
        %v7217 = vmul.f32 %v5950, %v6961
        %v7218 = vmul.f32 %v5952, %v6962
        %v7219 = vmul.f32 %v6207, %v6963
        %v7220 = vmul.f32 %v6209, %v6964
        %v7221 = vmul.f32 %v6464, %v6965
        %v7222 = vmul.f32 %v6466, %v6966
        %v7223 = vmul.f32 %v6721, %v6967
        %v7224 = vmul.f32 %v6723, %v6968
        %v7225 = vmul.f32 %v5956, %v6969
        %v7226 = vmul.f32 %v5958, %v6970
        %v7227 = vmul.f32 %v6213, %v6971
        %v7228 = vmul.f32 %v6215, %v6972
        %v7229 = vmul.f32 %v6470, %v6973
        %v7230 = vmul.f32 %v6472, %v6974
        %v7231 = vmul.f32 %v6727, %v6975
        %v7232 = vmul.f32 %v6729, %v6976
        %v7233 = vmul.f32 %v5962, %v6977
        %v7234 = vmul.f32 %v5964, %v6978
        %v7235 = vmul.f32 %v6219, %v6979
        %v7236 = vmul.f32 %v6221, %v6980
        %v7237 = vmul.f32 %v6476, %v6981
        %v7238 = vmul.f32 %v6478, %v6982
        %v7239 = vmul.f32 %v6733, %v6983
        %v7240 = vmul.f32 %v6735, %v6984
        %v7241 = vmul.f32 %v5968, %v6985
        %v7242 = vmul.f32 %v5970, %v6986
        %v7243 = vmul.f32 %v6225, %v6987
        %v7244 = vmul.f32 %v6227, %v6988
        %v7245 = vmul.f32 %v6482, %v6989
        %v7246 = vmul.f32 %v6484, %v6990
        %v7247 = vmul.f32 %v6739, %v6991
        %v7248 = vmul.f32 %v6741, %v6992
        %v7249 = vmul.f32 %v5974, %v6993
        %v7250 = vmul.f32 %v5976, %v6994
        %v7251 = vmul.f32 %v6231, %v6995
        %v7252 = vmul.f32 %v6233, %v6996
        %v7253 = vmul.f32 %v6488, %v6997
        %v7254 = vmul.f32 %v6490, %v6998
        %v7255 = vmul.f32 %v6745, %v6999
        %v7256 = vmul.f32 %v6747, %v7000
        %v7257 = vmul.f32 %v5980, %v7001
        %v7258 = vmul.f32 %v5982, %v7002
        %v7259 = vmul.f32 %v6237, %v7003
        %v7260 = vmul.f32 %v6239, %v7004
        %v7261 = vmul.f32 %v6494, %v7005
        %v7262 = vmul.f32 %v6496, %v7006
        %v7263 = vmul.f32 %v6751, %v7007
        %v7264 = vmul.f32 %v6753, %v7008
        %v7265 = vmul.f32 %v5986, %v7009
        %v7266 = vmul.f32 %v5988, %v7010
        %v7267 = vmul.f32 %v6243, %v7011
        %v7268 = vmul.f32 %v6245, %v7012
        %v7269 = vmul.f32 %v6500, %v7013
        %v7270 = vmul.f32 %v6502, %v7014
        %v7271 = vmul.f32 %v6757, %v7015
        %v7272 = vmul.f32 %v6759, %v7016
        %v7273 = vmul.f32 %v7017, 0.044715
        %v7274 = vmul.f32 %v7018, 0.044715
        %v7275 = vmul.f32 %v7019, 0.044715
        %v7276 = vmul.f32 %v7020, 0.044715
        %v7277 = vmul.f32 %v7021, 0.044715
        %v7278 = vmul.f32 %v7022, 0.044715
        %v7279 = vmul.f32 %v7023, 0.044715
        %v7280 = vmul.f32 %v7024, 0.044715
        %v7281 = vmul.f32 %v7025, 0.044715
        %v7282 = vmul.f32 %v7026, 0.044715
        %v7283 = vmul.f32 %v7027, 0.044715
        %v7284 = vmul.f32 %v7028, 0.044715
        %v7285 = vmul.f32 %v7029, 0.044715
        %v7286 = vmul.f32 %v7030, 0.044715
        %v7287 = vmul.f32 %v7031, 0.044715
        %v7288 = vmul.f32 %v7032, 0.044715
        %v7289 = vmul.f32 %v7033, 0.044715
        %v7290 = vmul.f32 %v7034, 0.044715
        %v7291 = vmul.f32 %v7035, 0.044715
        %v7292 = vmul.f32 %v7036, 0.044715
        %v7293 = vmul.f32 %v7037, 0.044715
        %v7294 = vmul.f32 %v7038, 0.044715
        %v7295 = vmul.f32 %v7039, 0.044715
        %v7296 = vmul.f32 %v7040, 0.044715
        %v7297 = vmul.f32 %v7041, 0.044715
        %v7298 = vmul.f32 %v7042, 0.044715
        %v7299 = vmul.f32 %v7043, 0.044715
        %v7300 = vmul.f32 %v7044, 0.044715
        %v7301 = vmul.f32 %v7045, 0.044715
        %v7302 = vmul.f32 %v7046, 0.044715
        %v7303 = vmul.f32 %v7047, 0.044715
        %v7304 = vmul.f32 %v7048, 0.044715
        %v7305 = vmul.f32 %v7049, 0.044715
        %v7306 = vmul.f32 %v7050, 0.044715
        %v7307 = vmul.f32 %v7051, 0.044715
        %v7308 = vmul.f32 %v7052, 0.044715
        %v7309 = vmul.f32 %v7053, 0.044715
        %v7310 = vmul.f32 %v7054, 0.044715
        %v7311 = vmul.f32 %v7055, 0.044715
        %v7312 = vmul.f32 %v7056, 0.044715
        %v7313 = vmul.f32 %v7057, 0.044715
        %v7314 = vmul.f32 %v7058, 0.044715
        %v7315 = vmul.f32 %v7059, 0.044715
        %v7316 = vmul.f32 %v7060, 0.044715
        %v7317 = vmul.f32 %v7061, 0.044715
        %v7318 = vmul.f32 %v7062, 0.044715
        %v7319 = vmul.f32 %v7063, 0.044715
        %v7320 = vmul.f32 %v7064, 0.044715
        %v7321 = vmul.f32 %v7065, 0.044715
        %v7322 = vmul.f32 %v7066, 0.044715
        %v7323 = vmul.f32 %v7067, 0.044715
        %v7324 = vmul.f32 %v7068, 0.044715
        %v7325 = vmul.f32 %v7069, 0.044715
        %v7326 = vmul.f32 %v7070, 0.044715
        %v7327 = vmul.f32 %v7071, 0.044715
        %v7328 = vmul.f32 %v7072, 0.044715
        %v7329 = vmul.f32 %v7073, 0.044715
        %v7330 = vmul.f32 %v7074, 0.044715
        %v7331 = vmul.f32 %v7075, 0.044715
        %v7332 = vmul.f32 %v7076, 0.044715
        %v7333 = vmul.f32 %v7077, 0.044715
        %v7334 = vmul.f32 %v7078, 0.044715
        %v7335 = vmul.f32 %v7079, 0.044715
        %v7336 = vmul.f32 %v7080, 0.044715
        %v7337 = vmul.f32 %v7081, 0.044715
        %v7338 = vmul.f32 %v7082, 0.044715
        %v7339 = vmul.f32 %v7083, 0.044715
        %v7340 = vmul.f32 %v7084, 0.044715
        %v7341 = vmul.f32 %v7085, 0.044715
        %v7342 = vmul.f32 %v7086, 0.044715
        %v7343 = vmul.f32 %v7087, 0.044715
        %v7344 = vmul.f32 %v7088, 0.044715
        %v7345 = vmul.f32 %v7089, 0.044715
        %v7346 = vmul.f32 %v7090, 0.044715
        %v7347 = vmul.f32 %v7091, 0.044715
        %v7348 = vmul.f32 %v7092, 0.044715
        %v7349 = vmul.f32 %v7093, 0.044715
        %v7350 = vmul.f32 %v7094, 0.044715
        %v7351 = vmul.f32 %v7095, 0.044715
        %v7352 = vmul.f32 %v7096, 0.044715
        %v7353 = vmul.f32 %v7097, 0.044715
        %v7354 = vmul.f32 %v7098, 0.044715
        %v7355 = vmul.f32 %v7099, 0.044715
        %v7356 = vmul.f32 %v7100, 0.044715
        %v7357 = vmul.f32 %v7101, 0.044715
        %v7358 = vmul.f32 %v7102, 0.044715
        %v7359 = vmul.f32 %v7103, 0.044715
        %v7360 = vmul.f32 %v7104, 0.044715
        %v7361 = vmul.f32 %v7105, 0.044715
        %v7362 = vmul.f32 %v7106, 0.044715
        %v7363 = vmul.f32 %v7107, 0.044715
        %v7364 = vmul.f32 %v7108, 0.044715
        %v7365 = vmul.f32 %v7109, 0.044715
        %v7366 = vmul.f32 %v7110, 0.044715
        %v7367 = vmul.f32 %v7111, 0.044715
        %v7368 = vmul.f32 %v7112, 0.044715
        %v7369 = vmul.f32 %v7113, 0.044715
        %v7370 = vmul.f32 %v7114, 0.044715
        %v7371 = vmul.f32 %v7115, 0.044715
        %v7372 = vmul.f32 %v7116, 0.044715
        %v7373 = vmul.f32 %v7117, 0.044715
        %v7374 = vmul.f32 %v7118, 0.044715
        %v7375 = vmul.f32 %v7119, 0.044715
        %v7376 = vmul.f32 %v7120, 0.044715
        %v7377 = vmul.f32 %v7121, 0.044715
        %v7378 = vmul.f32 %v7122, 0.044715
        %v7379 = vmul.f32 %v7123, 0.044715
        %v7380 = vmul.f32 %v7124, 0.044715
        %v7381 = vmul.f32 %v7125, 0.044715
        %v7382 = vmul.f32 %v7126, 0.044715
        %v7383 = vmul.f32 %v7127, 0.044715
        %v7384 = vmul.f32 %v7128, 0.044715
        %v7385 = vmul.f32 %v7129, 0.044715
        %v7386 = vmul.f32 %v7130, 0.044715
        %v7387 = vmul.f32 %v7131, 0.044715
        %v7388 = vmul.f32 %v7132, 0.044715
        %v7389 = vmul.f32 %v7133, 0.044715
        %v7390 = vmul.f32 %v7134, 0.044715
        %v7391 = vmul.f32 %v7135, 0.044715
        %v7392 = vmul.f32 %v7136, 0.044715
        %v7393 = vmul.f32 %v7137, 0.044715
        %v7394 = vmul.f32 %v7138, 0.044715
        %v7395 = vmul.f32 %v7139, 0.044715
        %v7396 = vmul.f32 %v7140, 0.044715
        %v7397 = vmul.f32 %v7141, 0.044715
        %v7398 = vmul.f32 %v7142, 0.044715
        %v7399 = vmul.f32 %v7143, 0.044715
        %v7400 = vmul.f32 %v7144, 0.044715
        %v7401 = vmul.f32 %v7145, 0.044715
        %v7402 = vmul.f32 %v7146, 0.044715
        %v7403 = vmul.f32 %v7147, 0.044715
        %v7404 = vmul.f32 %v7148, 0.044715
        %v7405 = vmul.f32 %v7149, 0.044715
        %v7406 = vmul.f32 %v7150, 0.044715
        %v7407 = vmul.f32 %v7151, 0.044715
        %v7408 = vmul.f32 %v7152, 0.044715
        %v7409 = vmul.f32 %v7153, 0.044715
        %v7410 = vmul.f32 %v7154, 0.044715
        %v7411 = vmul.f32 %v7155, 0.044715
        %v7412 = vmul.f32 %v7156, 0.044715
        %v7413 = vmul.f32 %v7157, 0.044715
        %v7414 = vmul.f32 %v7158, 0.044715
        %v7415 = vmul.f32 %v7159, 0.044715
        %v7416 = vmul.f32 %v7160, 0.044715
        %v7417 = vmul.f32 %v7161, 0.044715
        %v7418 = vmul.f32 %v7162, 0.044715
        %v7419 = vmul.f32 %v7163, 0.044715
        %v7420 = vmul.f32 %v7164, 0.044715
        %v7421 = vmul.f32 %v7165, 0.044715
        %v7422 = vmul.f32 %v7166, 0.044715
        %v7423 = vmul.f32 %v7167, 0.044715
        %v7424 = vmul.f32 %v7168, 0.044715
        %v7425 = vmul.f32 %v7169, 0.044715
        %v7426 = vmul.f32 %v7170, 0.044715
        %v7427 = vmul.f32 %v7171, 0.044715
        %v7428 = vmul.f32 %v7172, 0.044715
        %v7429 = vmul.f32 %v7173, 0.044715
        %v7430 = vmul.f32 %v7174, 0.044715
        %v7431 = vmul.f32 %v7175, 0.044715
        %v7432 = vmul.f32 %v7176, 0.044715
        %v7433 = vmul.f32 %v7177, 0.044715
        %v7434 = vmul.f32 %v7178, 0.044715
        %v7435 = vmul.f32 %v7179, 0.044715
        %v7436 = vmul.f32 %v7180, 0.044715
        %v7437 = vmul.f32 %v7181, 0.044715
        %v7438 = vmul.f32 %v7182, 0.044715
        %v7439 = vmul.f32 %v7183, 0.044715
        %v7440 = vmul.f32 %v7184, 0.044715
        %v7441 = vmul.f32 %v7185, 0.044715
        %v7442 = vmul.f32 %v7186, 0.044715
        %v7443 = vmul.f32 %v7187, 0.044715
        %v7444 = vmul.f32 %v7188, 0.044715
        %v7445 = vmul.f32 %v7189, 0.044715
        %v7446 = vmul.f32 %v7190, 0.044715
        %v7447 = vmul.f32 %v7191, 0.044715
        %v7448 = vmul.f32 %v7192, 0.044715
        %v7449 = vmul.f32 %v7193, 0.044715
        %v7450 = vmul.f32 %v7194, 0.044715
        %v7451 = vmul.f32 %v7195, 0.044715
        %v7452 = vmul.f32 %v7196, 0.044715
        %v7453 = vmul.f32 %v7197, 0.044715
        %v7454 = vmul.f32 %v7198, 0.044715
        %v7455 = vmul.f32 %v7199, 0.044715
        %v7456 = vmul.f32 %v7200, 0.044715
        %v7457 = vmul.f32 %v7201, 0.044715
        %v7458 = vmul.f32 %v7202, 0.044715
        %v7459 = vmul.f32 %v7203, 0.044715
        %v7460 = vmul.f32 %v7204, 0.044715
        %v7461 = vmul.f32 %v7205, 0.044715
        %v7462 = vmul.f32 %v7206, 0.044715
        %v7463 = vmul.f32 %v7207, 0.044715
        %v7464 = vmul.f32 %v7208, 0.044715
        %v7465 = vmul.f32 %v7209, 0.044715
        %v7466 = vmul.f32 %v7210, 0.044715
        %v7467 = vmul.f32 %v7211, 0.044715
        %v7468 = vmul.f32 %v7212, 0.044715
        %v7469 = vmul.f32 %v7213, 0.044715
        %v7470 = vmul.f32 %v7214, 0.044715
        %v7471 = vmul.f32 %v7215, 0.044715
        %v7472 = vmul.f32 %v7216, 0.044715
        %v7473 = vmul.f32 %v7217, 0.044715
        %v7474 = vmul.f32 %v7218, 0.044715
        %v7475 = vmul.f32 %v7219, 0.044715
        %v7476 = vmul.f32 %v7220, 0.044715
        %v7477 = vmul.f32 %v7221, 0.044715
        %v7478 = vmul.f32 %v7222, 0.044715
        %v7479 = vmul.f32 %v7223, 0.044715
        %v7480 = vmul.f32 %v7224, 0.044715
        %v7481 = vmul.f32 %v7225, 0.044715
        %v7482 = vmul.f32 %v7226, 0.044715
        %v7483 = vmul.f32 %v7227, 0.044715
        %v7484 = vmul.f32 %v7228, 0.044715
        %v7485 = vmul.f32 %v7229, 0.044715
        %v7486 = vmul.f32 %v7230, 0.044715
        %v7487 = vmul.f32 %v7231, 0.044715
        %v7488 = vmul.f32 %v7232, 0.044715
        %v7489 = vmul.f32 %v7233, 0.044715
        %v7490 = vmul.f32 %v7234, 0.044715
        %v7491 = vmul.f32 %v7235, 0.044715
        %v7492 = vmul.f32 %v7236, 0.044715
        %v7493 = vmul.f32 %v7237, 0.044715
        %v7494 = vmul.f32 %v7238, 0.044715
        %v7495 = vmul.f32 %v7239, 0.044715
        %v7496 = vmul.f32 %v7240, 0.044715
        %v7497 = vmul.f32 %v7241, 0.044715
        %v7498 = vmul.f32 %v7242, 0.044715
        %v7499 = vmul.f32 %v7243, 0.044715
        %v7500 = vmul.f32 %v7244, 0.044715
        %v7501 = vmul.f32 %v7245, 0.044715
        %v7502 = vmul.f32 %v7246, 0.044715
        %v7503 = vmul.f32 %v7247, 0.044715
        %v7504 = vmul.f32 %v7248, 0.044715
        %v7505 = vmul.f32 %v7249, 0.044715
        %v7506 = vmul.f32 %v7250, 0.044715
        %v7507 = vmul.f32 %v7251, 0.044715
        %v7508 = vmul.f32 %v7252, 0.044715
        %v7509 = vmul.f32 %v7253, 0.044715
        %v7510 = vmul.f32 %v7254, 0.044715
        %v7511 = vmul.f32 %v7255, 0.044715
        %v7512 = vmul.f32 %v7256, 0.044715
        %v7513 = vmul.f32 %v7257, 0.044715
        %v7514 = vmul.f32 %v7258, 0.044715
        %v7515 = vmul.f32 %v7259, 0.044715
        %v7516 = vmul.f32 %v7260, 0.044715
        %v7517 = vmul.f32 %v7261, 0.044715
        %v7518 = vmul.f32 %v7262, 0.044715
        %v7519 = vmul.f32 %v7263, 0.044715
        %v7520 = vmul.f32 %v7264, 0.044715
        %v7521 = vmul.f32 %v7265, 0.044715
        %v7522 = vmul.f32 %v7266, 0.044715
        %v7523 = vmul.f32 %v7267, 0.044715
        %v7524 = vmul.f32 %v7268, 0.044715
        %v7525 = vmul.f32 %v7269, 0.044715
        %v7526 = vmul.f32 %v7270, 0.044715
        %v7527 = vmul.f32 %v7271, 0.044715
        %v7528 = vmul.f32 %v7272, 0.044715
        %v7529 = vadd.f32 %v5800, %v7273
        %v7530 = vadd.f32 %v5802, %v7274
        %v7531 = vadd.f32 %v6057, %v7275
        %v7532 = vadd.f32 %v6059, %v7276
        %v7533 = vadd.f32 %v6314, %v7277
        %v7534 = vadd.f32 %v6316, %v7278
        %v7535 = vadd.f32 %v6571, %v7279
        %v7536 = vadd.f32 %v6573, %v7280
        %v7537 = vadd.f32 %v5806, %v7281
        %v7538 = vadd.f32 %v5808, %v7282
        %v7539 = vadd.f32 %v6063, %v7283
        %v7540 = vadd.f32 %v6065, %v7284
        %v7541 = vadd.f32 %v6320, %v7285
        %v7542 = vadd.f32 %v6322, %v7286
        %v7543 = vadd.f32 %v6577, %v7287
        %v7544 = vadd.f32 %v6579, %v7288
        %v7545 = vadd.f32 %v5812, %v7289
        %v7546 = vadd.f32 %v5814, %v7290
        %v7547 = vadd.f32 %v6069, %v7291
        %v7548 = vadd.f32 %v6071, %v7292
        %v7549 = vadd.f32 %v6326, %v7293
        %v7550 = vadd.f32 %v6328, %v7294
        %v7551 = vadd.f32 %v6583, %v7295
        %v7552 = vadd.f32 %v6585, %v7296
        %v7553 = vadd.f32 %v5818, %v7297
        %v7554 = vadd.f32 %v5820, %v7298
        %v7555 = vadd.f32 %v6075, %v7299
        %v7556 = vadd.f32 %v6077, %v7300
        %v7557 = vadd.f32 %v6332, %v7301
        %v7558 = vadd.f32 %v6334, %v7302
        %v7559 = vadd.f32 %v6589, %v7303
        %v7560 = vadd.f32 %v6591, %v7304
        %v7561 = vadd.f32 %v5824, %v7305
        %v7562 = vadd.f32 %v5826, %v7306
        %v7563 = vadd.f32 %v6081, %v7307
        %v7564 = vadd.f32 %v6083, %v7308
        %v7565 = vadd.f32 %v6338, %v7309
        %v7566 = vadd.f32 %v6340, %v7310
        %v7567 = vadd.f32 %v6595, %v7311
        %v7568 = vadd.f32 %v6597, %v7312
        %v7569 = vadd.f32 %v5830, %v7313
        %v7570 = vadd.f32 %v5832, %v7314
        %v7571 = vadd.f32 %v6087, %v7315
        %v7572 = vadd.f32 %v6089, %v7316
        %v7573 = vadd.f32 %v6344, %v7317
        %v7574 = vadd.f32 %v6346, %v7318
        %v7575 = vadd.f32 %v6601, %v7319
        %v7576 = vadd.f32 %v6603, %v7320
        %v7577 = vadd.f32 %v5836, %v7321
        %v7578 = vadd.f32 %v5838, %v7322
        %v7579 = vadd.f32 %v6093, %v7323
        %v7580 = vadd.f32 %v6095, %v7324
        %v7581 = vadd.f32 %v6350, %v7325
        %v7582 = vadd.f32 %v6352, %v7326
        %v7583 = vadd.f32 %v6607, %v7327
        %v7584 = vadd.f32 %v6609, %v7328
        %v7585 = vadd.f32 %v5842, %v7329
        %v7586 = vadd.f32 %v5844, %v7330
        %v7587 = vadd.f32 %v6099, %v7331
        %v7588 = vadd.f32 %v6101, %v7332
        %v7589 = vadd.f32 %v6356, %v7333
        %v7590 = vadd.f32 %v6358, %v7334
        %v7591 = vadd.f32 %v6613, %v7335
        %v7592 = vadd.f32 %v6615, %v7336
        %v7593 = vadd.f32 %v5848, %v7337
        %v7594 = vadd.f32 %v5850, %v7338
        %v7595 = vadd.f32 %v6105, %v7339
        %v7596 = vadd.f32 %v6107, %v7340
        %v7597 = vadd.f32 %v6362, %v7341
        %v7598 = vadd.f32 %v6364, %v7342
        %v7599 = vadd.f32 %v6619, %v7343
        %v7600 = vadd.f32 %v6621, %v7344
        %v7601 = vadd.f32 %v5854, %v7345
        %v7602 = vadd.f32 %v5856, %v7346
        %v7603 = vadd.f32 %v6111, %v7347
        %v7604 = vadd.f32 %v6113, %v7348
        %v7605 = vadd.f32 %v6368, %v7349
        %v7606 = vadd.f32 %v6370, %v7350
        %v7607 = vadd.f32 %v6625, %v7351
        %v7608 = vadd.f32 %v6627, %v7352
        %v7609 = vadd.f32 %v5860, %v7353
        %v7610 = vadd.f32 %v5862, %v7354
        %v7611 = vadd.f32 %v6117, %v7355
        %v7612 = vadd.f32 %v6119, %v7356
        %v7613 = vadd.f32 %v6374, %v7357
        %v7614 = vadd.f32 %v6376, %v7358
        %v7615 = vadd.f32 %v6631, %v7359
        %v7616 = vadd.f32 %v6633, %v7360
        %v7617 = vadd.f32 %v5866, %v7361
        %v7618 = vadd.f32 %v5868, %v7362
        %v7619 = vadd.f32 %v6123, %v7363
        %v7620 = vadd.f32 %v6125, %v7364
        %v7621 = vadd.f32 %v6380, %v7365
        %v7622 = vadd.f32 %v6382, %v7366
        %v7623 = vadd.f32 %v6637, %v7367
        %v7624 = vadd.f32 %v6639, %v7368
        %v7625 = vadd.f32 %v5872, %v7369
        %v7626 = vadd.f32 %v5874, %v7370
        %v7627 = vadd.f32 %v6129, %v7371
        %v7628 = vadd.f32 %v6131, %v7372
        %v7629 = vadd.f32 %v6386, %v7373
        %v7630 = vadd.f32 %v6388, %v7374
        %v7631 = vadd.f32 %v6643, %v7375
        %v7632 = vadd.f32 %v6645, %v7376
        %v7633 = vadd.f32 %v5878, %v7377
        %v7634 = vadd.f32 %v5880, %v7378
        %v7635 = vadd.f32 %v6135, %v7379
        %v7636 = vadd.f32 %v6137, %v7380
        %v7637 = vadd.f32 %v6392, %v7381
        %v7638 = vadd.f32 %v6394, %v7382
        %v7639 = vadd.f32 %v6649, %v7383
        %v7640 = vadd.f32 %v6651, %v7384
        %v7641 = vadd.f32 %v5884, %v7385
        %v7642 = vadd.f32 %v5886, %v7386
        %v7643 = vadd.f32 %v6141, %v7387
        %v7644 = vadd.f32 %v6143, %v7388
        %v7645 = vadd.f32 %v6398, %v7389
        %v7646 = vadd.f32 %v6400, %v7390
        %v7647 = vadd.f32 %v6655, %v7391
        %v7648 = vadd.f32 %v6657, %v7392
        %v7649 = vadd.f32 %v5890, %v7393
        %v7650 = vadd.f32 %v5892, %v7394
        %v7651 = vadd.f32 %v6147, %v7395
        %v7652 = vadd.f32 %v6149, %v7396
        %v7653 = vadd.f32 %v6404, %v7397
        %v7654 = vadd.f32 %v6406, %v7398
        %v7655 = vadd.f32 %v6661, %v7399
        %v7656 = vadd.f32 %v6663, %v7400
        %v7657 = vadd.f32 %v5896, %v7401
        %v7658 = vadd.f32 %v5898, %v7402
        %v7659 = vadd.f32 %v6153, %v7403
        %v7660 = vadd.f32 %v6155, %v7404
        %v7661 = vadd.f32 %v6410, %v7405
        %v7662 = vadd.f32 %v6412, %v7406
        %v7663 = vadd.f32 %v6667, %v7407
        %v7664 = vadd.f32 %v6669, %v7408
        %v7665 = vadd.f32 %v5902, %v7409
        %v7666 = vadd.f32 %v5904, %v7410
        %v7667 = vadd.f32 %v6159, %v7411
        %v7668 = vadd.f32 %v6161, %v7412
        %v7669 = vadd.f32 %v6416, %v7413
        %v7670 = vadd.f32 %v6418, %v7414
        %v7671 = vadd.f32 %v6673, %v7415
        %v7672 = vadd.f32 %v6675, %v7416
        %v7673 = vadd.f32 %v5908, %v7417
        %v7674 = vadd.f32 %v5910, %v7418
        %v7675 = vadd.f32 %v6165, %v7419
        %v7676 = vadd.f32 %v6167, %v7420
        %v7677 = vadd.f32 %v6422, %v7421
        %v7678 = vadd.f32 %v6424, %v7422
        %v7679 = vadd.f32 %v6679, %v7423
        %v7680 = vadd.f32 %v6681, %v7424
        %v7681 = vadd.f32 %v5914, %v7425
        %v7682 = vadd.f32 %v5916, %v7426
        %v7683 = vadd.f32 %v6171, %v7427
        %v7684 = vadd.f32 %v6173, %v7428
        %v7685 = vadd.f32 %v6428, %v7429
        %v7686 = vadd.f32 %v6430, %v7430
        %v7687 = vadd.f32 %v6685, %v7431
        %v7688 = vadd.f32 %v6687, %v7432
        %v7689 = vadd.f32 %v5920, %v7433
        %v7690 = vadd.f32 %v5922, %v7434
        %v7691 = vadd.f32 %v6177, %v7435
        %v7692 = vadd.f32 %v6179, %v7436
        %v7693 = vadd.f32 %v6434, %v7437
        %v7694 = vadd.f32 %v6436, %v7438
        %v7695 = vadd.f32 %v6691, %v7439
        %v7696 = vadd.f32 %v6693, %v7440
        %v7697 = vadd.f32 %v5926, %v7441
        %v7698 = vadd.f32 %v5928, %v7442
        %v7699 = vadd.f32 %v6183, %v7443
        %v7700 = vadd.f32 %v6185, %v7444
        %v7701 = vadd.f32 %v6440, %v7445
        %v7702 = vadd.f32 %v6442, %v7446
        %v7703 = vadd.f32 %v6697, %v7447
        %v7704 = vadd.f32 %v6699, %v7448
        %v7705 = vadd.f32 %v5932, %v7449
        %v7706 = vadd.f32 %v5934, %v7450
        %v7707 = vadd.f32 %v6189, %v7451
        %v7708 = vadd.f32 %v6191, %v7452
        %v7709 = vadd.f32 %v6446, %v7453
        %v7710 = vadd.f32 %v6448, %v7454
        %v7711 = vadd.f32 %v6703, %v7455
        %v7712 = vadd.f32 %v6705, %v7456
        %v7713 = vadd.f32 %v5938, %v7457
        %v7714 = vadd.f32 %v5940, %v7458
        %v7715 = vadd.f32 %v6195, %v7459
        %v7716 = vadd.f32 %v6197, %v7460
        %v7717 = vadd.f32 %v6452, %v7461
        %v7718 = vadd.f32 %v6454, %v7462
        %v7719 = vadd.f32 %v6709, %v7463
        %v7720 = vadd.f32 %v6711, %v7464
        %v7721 = vadd.f32 %v5944, %v7465
        %v7722 = vadd.f32 %v5946, %v7466
        %v7723 = vadd.f32 %v6201, %v7467
        %v7724 = vadd.f32 %v6203, %v7468
        %v7725 = vadd.f32 %v6458, %v7469
        %v7726 = vadd.f32 %v6460, %v7470
        %v7727 = vadd.f32 %v6715, %v7471
        %v7728 = vadd.f32 %v6717, %v7472
        %v7729 = vadd.f32 %v5950, %v7473
        %v7730 = vadd.f32 %v5952, %v7474
        %v7731 = vadd.f32 %v6207, %v7475
        %v7732 = vadd.f32 %v6209, %v7476
        %v7733 = vadd.f32 %v6464, %v7477
        %v7734 = vadd.f32 %v6466, %v7478
        %v7735 = vadd.f32 %v6721, %v7479
        %v7736 = vadd.f32 %v6723, %v7480
        %v7737 = vadd.f32 %v5956, %v7481
        %v7738 = vadd.f32 %v5958, %v7482
        %v7739 = vadd.f32 %v6213, %v7483
        %v7740 = vadd.f32 %v6215, %v7484
        %v7741 = vadd.f32 %v6470, %v7485
        %v7742 = vadd.f32 %v6472, %v7486
        %v7743 = vadd.f32 %v6727, %v7487
        %v7744 = vadd.f32 %v6729, %v7488
        %v7745 = vadd.f32 %v5962, %v7489
        %v7746 = vadd.f32 %v5964, %v7490
        %v7747 = vadd.f32 %v6219, %v7491
        %v7748 = vadd.f32 %v6221, %v7492
        %v7749 = vadd.f32 %v6476, %v7493
        %v7750 = vadd.f32 %v6478, %v7494
        %v7751 = vadd.f32 %v6733, %v7495
        %v7752 = vadd.f32 %v6735, %v7496
        %v7753 = vadd.f32 %v5968, %v7497
        %v7754 = vadd.f32 %v5970, %v7498
        %v7755 = vadd.f32 %v6225, %v7499
        %v7756 = vadd.f32 %v6227, %v7500
        %v7757 = vadd.f32 %v6482, %v7501
        %v7758 = vadd.f32 %v6484, %v7502
        %v7759 = vadd.f32 %v6739, %v7503
        %v7760 = vadd.f32 %v6741, %v7504
        %v7761 = vadd.f32 %v5974, %v7505
        %v7762 = vadd.f32 %v5976, %v7506
        %v7763 = vadd.f32 %v6231, %v7507
        %v7764 = vadd.f32 %v6233, %v7508
        %v7765 = vadd.f32 %v6488, %v7509
        %v7766 = vadd.f32 %v6490, %v7510
        %v7767 = vadd.f32 %v6745, %v7511
        %v7768 = vadd.f32 %v6747, %v7512
        %v7769 = vadd.f32 %v5980, %v7513
        %v7770 = vadd.f32 %v5982, %v7514
        %v7771 = vadd.f32 %v6237, %v7515
        %v7772 = vadd.f32 %v6239, %v7516
        %v7773 = vadd.f32 %v6494, %v7517
        %v7774 = vadd.f32 %v6496, %v7518
        %v7775 = vadd.f32 %v6751, %v7519
        %v7776 = vadd.f32 %v6753, %v7520
        %v7777 = vadd.f32 %v5986, %v7521
        %v7778 = vadd.f32 %v5988, %v7522
        %v7779 = vadd.f32 %v6243, %v7523
        %v7780 = vadd.f32 %v6245, %v7524
        %v7781 = vadd.f32 %v6500, %v7525
        %v7782 = vadd.f32 %v6502, %v7526
        %v7783 = vadd.f32 %v6757, %v7527
        %v7784 = vadd.f32 %v6759, %v7528
        %v7785 = vmul.f32 %v7529, 0.7978846
        %v7786 = vmul.f32 %v7530, 0.7978846
        %v7787 = vmul.f32 %v7531, 0.7978846
        %v7788 = vmul.f32 %v7532, 0.7978846
        %v7789 = vmul.f32 %v7533, 0.7978846
        %v7790 = vmul.f32 %v7534, 0.7978846
        %v7791 = vmul.f32 %v7535, 0.7978846
        %v7792 = vmul.f32 %v7536, 0.7978846
        %v7793 = vmul.f32 %v7537, 0.7978846
        %v7794 = vmul.f32 %v7538, 0.7978846
        %v7795 = vmul.f32 %v7539, 0.7978846
        %v7796 = vmul.f32 %v7540, 0.7978846
        %v7797 = vmul.f32 %v7541, 0.7978846
        %v7798 = vmul.f32 %v7542, 0.7978846
        %v7799 = vmul.f32 %v7543, 0.7978846
        %v7800 = vmul.f32 %v7544, 0.7978846
        %v7801 = vmul.f32 %v7545, 0.7978846
        %v7802 = vmul.f32 %v7546, 0.7978846
        %v7803 = vmul.f32 %v7547, 0.7978846
        %v7804 = vmul.f32 %v7548, 0.7978846
        %v7805 = vmul.f32 %v7549, 0.7978846
        %v7806 = vmul.f32 %v7550, 0.7978846
        %v7807 = vmul.f32 %v7551, 0.7978846
        %v7808 = vmul.f32 %v7552, 0.7978846
        %v7809 = vmul.f32 %v7553, 0.7978846
        %v7810 = vmul.f32 %v7554, 0.7978846
        %v7811 = vmul.f32 %v7555, 0.7978846
        %v7812 = vmul.f32 %v7556, 0.7978846
        %v7813 = vmul.f32 %v7557, 0.7978846
        %v7814 = vmul.f32 %v7558, 0.7978846
        %v7815 = vmul.f32 %v7559, 0.7978846
        %v7816 = vmul.f32 %v7560, 0.7978846
        %v7817 = vmul.f32 %v7561, 0.7978846
        %v7818 = vmul.f32 %v7562, 0.7978846
        %v7819 = vmul.f32 %v7563, 0.7978846
        %v7820 = vmul.f32 %v7564, 0.7978846
        %v7821 = vmul.f32 %v7565, 0.7978846
        %v7822 = vmul.f32 %v7566, 0.7978846
        %v7823 = vmul.f32 %v7567, 0.7978846
        %v7824 = vmul.f32 %v7568, 0.7978846
        %v7825 = vmul.f32 %v7569, 0.7978846
        %v7826 = vmul.f32 %v7570, 0.7978846
        %v7827 = vmul.f32 %v7571, 0.7978846
        %v7828 = vmul.f32 %v7572, 0.7978846
        %v7829 = vmul.f32 %v7573, 0.7978846
        %v7830 = vmul.f32 %v7574, 0.7978846
        %v7831 = vmul.f32 %v7575, 0.7978846
        %v7832 = vmul.f32 %v7576, 0.7978846
        %v7833 = vmul.f32 %v7577, 0.7978846
        %v7834 = vmul.f32 %v7578, 0.7978846
        %v7835 = vmul.f32 %v7579, 0.7978846
        %v7836 = vmul.f32 %v7580, 0.7978846
        %v7837 = vmul.f32 %v7581, 0.7978846
        %v7838 = vmul.f32 %v7582, 0.7978846
        %v7839 = vmul.f32 %v7583, 0.7978846
        %v7840 = vmul.f32 %v7584, 0.7978846
        %v7841 = vmul.f32 %v7585, 0.7978846
        %v7842 = vmul.f32 %v7586, 0.7978846
        %v7843 = vmul.f32 %v7587, 0.7978846
        %v7844 = vmul.f32 %v7588, 0.7978846
        %v7845 = vmul.f32 %v7589, 0.7978846
        %v7846 = vmul.f32 %v7590, 0.7978846
        %v7847 = vmul.f32 %v7591, 0.7978846
        %v7848 = vmul.f32 %v7592, 0.7978846
        %v7849 = vmul.f32 %v7593, 0.7978846
        %v7850 = vmul.f32 %v7594, 0.7978846
        %v7851 = vmul.f32 %v7595, 0.7978846
        %v7852 = vmul.f32 %v7596, 0.7978846
        %v7853 = vmul.f32 %v7597, 0.7978846
        %v7854 = vmul.f32 %v7598, 0.7978846
        %v7855 = vmul.f32 %v7599, 0.7978846
        %v7856 = vmul.f32 %v7600, 0.7978846
        %v7857 = vmul.f32 %v7601, 0.7978846
        %v7858 = vmul.f32 %v7602, 0.7978846
        %v7859 = vmul.f32 %v7603, 0.7978846
        %v7860 = vmul.f32 %v7604, 0.7978846
        %v7861 = vmul.f32 %v7605, 0.7978846
        %v7862 = vmul.f32 %v7606, 0.7978846
        %v7863 = vmul.f32 %v7607, 0.7978846
        %v7864 = vmul.f32 %v7608, 0.7978846
        %v7865 = vmul.f32 %v7609, 0.7978846
        %v7866 = vmul.f32 %v7610, 0.7978846
        %v7867 = vmul.f32 %v7611, 0.7978846
        %v7868 = vmul.f32 %v7612, 0.7978846
        %v7869 = vmul.f32 %v7613, 0.7978846
        %v7870 = vmul.f32 %v7614, 0.7978846
        %v7871 = vmul.f32 %v7615, 0.7978846
        %v7872 = vmul.f32 %v7616, 0.7978846
        %v7873 = vmul.f32 %v7617, 0.7978846
        %v7874 = vmul.f32 %v7618, 0.7978846
        %v7875 = vmul.f32 %v7619, 0.7978846
        %v7876 = vmul.f32 %v7620, 0.7978846
        %v7877 = vmul.f32 %v7621, 0.7978846
        %v7878 = vmul.f32 %v7622, 0.7978846
        %v7879 = vmul.f32 %v7623, 0.7978846
        %v7880 = vmul.f32 %v7624, 0.7978846
        %v7881 = vmul.f32 %v7625, 0.7978846
        %v7882 = vmul.f32 %v7626, 0.7978846
        %v7883 = vmul.f32 %v7627, 0.7978846
        %v7884 = vmul.f32 %v7628, 0.7978846
        %v7885 = vmul.f32 %v7629, 0.7978846
        %v7886 = vmul.f32 %v7630, 0.7978846
        %v7887 = vmul.f32 %v7631, 0.7978846
        %v7888 = vmul.f32 %v7632, 0.7978846
        %v7889 = vmul.f32 %v7633, 0.7978846
        %v7890 = vmul.f32 %v7634, 0.7978846
        %v7891 = vmul.f32 %v7635, 0.7978846
        %v7892 = vmul.f32 %v7636, 0.7978846
        %v7893 = vmul.f32 %v7637, 0.7978846
        %v7894 = vmul.f32 %v7638, 0.7978846
        %v7895 = vmul.f32 %v7639, 0.7978846
        %v7896 = vmul.f32 %v7640, 0.7978846
        %v7897 = vmul.f32 %v7641, 0.7978846
        %v7898 = vmul.f32 %v7642, 0.7978846
        %v7899 = vmul.f32 %v7643, 0.7978846
        %v7900 = vmul.f32 %v7644, 0.7978846
        %v7901 = vmul.f32 %v7645, 0.7978846
        %v7902 = vmul.f32 %v7646, 0.7978846
        %v7903 = vmul.f32 %v7647, 0.7978846
        %v7904 = vmul.f32 %v7648, 0.7978846
        %v7905 = vmul.f32 %v7649, 0.7978846
        %v7906 = vmul.f32 %v7650, 0.7978846
        %v7907 = vmul.f32 %v7651, 0.7978846
        %v7908 = vmul.f32 %v7652, 0.7978846
        %v7909 = vmul.f32 %v7653, 0.7978846
        %v7910 = vmul.f32 %v7654, 0.7978846
        %v7911 = vmul.f32 %v7655, 0.7978846
        %v7912 = vmul.f32 %v7656, 0.7978846
        %v7913 = vmul.f32 %v7657, 0.7978846
        %v7914 = vmul.f32 %v7658, 0.7978846
        %v7915 = vmul.f32 %v7659, 0.7978846
        %v7916 = vmul.f32 %v7660, 0.7978846
        %v7917 = vmul.f32 %v7661, 0.7978846
        %v7918 = vmul.f32 %v7662, 0.7978846
        %v7919 = vmul.f32 %v7663, 0.7978846
        %v7920 = vmul.f32 %v7664, 0.7978846
        %v7921 = vmul.f32 %v7665, 0.7978846
        %v7922 = vmul.f32 %v7666, 0.7978846
        %v7923 = vmul.f32 %v7667, 0.7978846
        %v7924 = vmul.f32 %v7668, 0.7978846
        %v7925 = vmul.f32 %v7669, 0.7978846
        %v7926 = vmul.f32 %v7670, 0.7978846
        %v7927 = vmul.f32 %v7671, 0.7978846
        %v7928 = vmul.f32 %v7672, 0.7978846
        %v7929 = vmul.f32 %v7673, 0.7978846
        %v7930 = vmul.f32 %v7674, 0.7978846
        %v7931 = vmul.f32 %v7675, 0.7978846
        %v7932 = vmul.f32 %v7676, 0.7978846
        %v7933 = vmul.f32 %v7677, 0.7978846
        %v7934 = vmul.f32 %v7678, 0.7978846
        %v7935 = vmul.f32 %v7679, 0.7978846
        %v7936 = vmul.f32 %v7680, 0.7978846
        %v7937 = vmul.f32 %v7681, 0.7978846
        %v7938 = vmul.f32 %v7682, 0.7978846
        %v7939 = vmul.f32 %v7683, 0.7978846
        %v7940 = vmul.f32 %v7684, 0.7978846
        %v7941 = vmul.f32 %v7685, 0.7978846
        %v7942 = vmul.f32 %v7686, 0.7978846
        %v7943 = vmul.f32 %v7687, 0.7978846
        %v7944 = vmul.f32 %v7688, 0.7978846
        %v7945 = vmul.f32 %v7689, 0.7978846
        %v7946 = vmul.f32 %v7690, 0.7978846
        %v7947 = vmul.f32 %v7691, 0.7978846
        %v7948 = vmul.f32 %v7692, 0.7978846
        %v7949 = vmul.f32 %v7693, 0.7978846
        %v7950 = vmul.f32 %v7694, 0.7978846
        %v7951 = vmul.f32 %v7695, 0.7978846
        %v7952 = vmul.f32 %v7696, 0.7978846
        %v7953 = vmul.f32 %v7697, 0.7978846
        %v7954 = vmul.f32 %v7698, 0.7978846
        %v7955 = vmul.f32 %v7699, 0.7978846
        %v7956 = vmul.f32 %v7700, 0.7978846
        %v7957 = vmul.f32 %v7701, 0.7978846
        %v7958 = vmul.f32 %v7702, 0.7978846
        %v7959 = vmul.f32 %v7703, 0.7978846
        %v7960 = vmul.f32 %v7704, 0.7978846
        %v7961 = vmul.f32 %v7705, 0.7978846
        %v7962 = vmul.f32 %v7706, 0.7978846
        %v7963 = vmul.f32 %v7707, 0.7978846
        %v7964 = vmul.f32 %v7708, 0.7978846
        %v7965 = vmul.f32 %v7709, 0.7978846
        %v7966 = vmul.f32 %v7710, 0.7978846
        %v7967 = vmul.f32 %v7711, 0.7978846
        %v7968 = vmul.f32 %v7712, 0.7978846
        %v7969 = vmul.f32 %v7713, 0.7978846
        %v7970 = vmul.f32 %v7714, 0.7978846
        %v7971 = vmul.f32 %v7715, 0.7978846
        %v7972 = vmul.f32 %v7716, 0.7978846
        %v7973 = vmul.f32 %v7717, 0.7978846
        %v7974 = vmul.f32 %v7718, 0.7978846
        %v7975 = vmul.f32 %v7719, 0.7978846
        %v7976 = vmul.f32 %v7720, 0.7978846
        %v7977 = vmul.f32 %v7721, 0.7978846
        %v7978 = vmul.f32 %v7722, 0.7978846
        %v7979 = vmul.f32 %v7723, 0.7978846
        %v7980 = vmul.f32 %v7724, 0.7978846
        %v7981 = vmul.f32 %v7725, 0.7978846
        %v7982 = vmul.f32 %v7726, 0.7978846
        %v7983 = vmul.f32 %v7727, 0.7978846
        %v7984 = vmul.f32 %v7728, 0.7978846
        %v7985 = vmul.f32 %v7729, 0.7978846
        %v7986 = vmul.f32 %v7730, 0.7978846
        %v7987 = vmul.f32 %v7731, 0.7978846
        %v7988 = vmul.f32 %v7732, 0.7978846
        %v7989 = vmul.f32 %v7733, 0.7978846
        %v7990 = vmul.f32 %v7734, 0.7978846
        %v7991 = vmul.f32 %v7735, 0.7978846
        %v7992 = vmul.f32 %v7736, 0.7978846
        %v7993 = vmul.f32 %v7737, 0.7978846
        %v7994 = vmul.f32 %v7738, 0.7978846
        %v7995 = vmul.f32 %v7739, 0.7978846
        %v7996 = vmul.f32 %v7740, 0.7978846
        %v7997 = vmul.f32 %v7741, 0.7978846
        %v7998 = vmul.f32 %v7742, 0.7978846
        %v7999 = vmul.f32 %v7743, 0.7978846
        %v8000 = vmul.f32 %v7744, 0.7978846
        %v8001 = vmul.f32 %v7745, 0.7978846
        %v8002 = vmul.f32 %v7746, 0.7978846
        %v8003 = vmul.f32 %v7747, 0.7978846
        %v8004 = vmul.f32 %v7748, 0.7978846
        %v8005 = vmul.f32 %v7749, 0.7978846
        %v8006 = vmul.f32 %v7750, 0.7978846
        %v8007 = vmul.f32 %v7751, 0.7978846
        %v8008 = vmul.f32 %v7752, 0.7978846
        %v8009 = vmul.f32 %v7753, 0.7978846
        %v8010 = vmul.f32 %v7754, 0.7978846
        %v8011 = vmul.f32 %v7755, 0.7978846
        %v8012 = vmul.f32 %v7756, 0.7978846
        %v8013 = vmul.f32 %v7757, 0.7978846
        %v8014 = vmul.f32 %v7758, 0.7978846
        %v8015 = vmul.f32 %v7759, 0.7978846
        %v8016 = vmul.f32 %v7760, 0.7978846
        %v8017 = vmul.f32 %v7761, 0.7978846
        %v8018 = vmul.f32 %v7762, 0.7978846
        %v8019 = vmul.f32 %v7763, 0.7978846
        %v8020 = vmul.f32 %v7764, 0.7978846
        %v8021 = vmul.f32 %v7765, 0.7978846
        %v8022 = vmul.f32 %v7766, 0.7978846
        %v8023 = vmul.f32 %v7767, 0.7978846
        %v8024 = vmul.f32 %v7768, 0.7978846
        %v8025 = vmul.f32 %v7769, 0.7978846
        %v8026 = vmul.f32 %v7770, 0.7978846
        %v8027 = vmul.f32 %v7771, 0.7978846
        %v8028 = vmul.f32 %v7772, 0.7978846
        %v8029 = vmul.f32 %v7773, 0.7978846
        %v8030 = vmul.f32 %v7774, 0.7978846
        %v8031 = vmul.f32 %v7775, 0.7978846
        %v8032 = vmul.f32 %v7776, 0.7978846
        %v8033 = vmul.f32 %v7777, 0.7978846
        %v8034 = vmul.f32 %v7778, 0.7978846
        %v8035 = vmul.f32 %v7779, 0.7978846
        %v8036 = vmul.f32 %v7780, 0.7978846
        %v8037 = vmul.f32 %v7781, 0.7978846
        %v8038 = vmul.f32 %v7782, 0.7978846
        %v8039 = vmul.f32 %v7783, 0.7978846
        %v8040 = vmul.f32 %v7784, 0.7978846
        %v8041 = vtanh.pop %v7785
        %v8042 = vtanh.pop %v7786
        %v8043 = vtanh.pop %v7787
        %v8044 = vtanh.pop %v7788
        %v8045 = vtanh.pop %v7789
        %v8046 = vtanh.pop %v7790
        %v8047 = vtanh.pop %v7791
        %v8048 = vtanh.pop %v7792
        %v8049 = vtanh.pop %v7793
        %v8050 = vtanh.pop %v7794
        %v8051 = vtanh.pop %v7795
        %v8052 = vtanh.pop %v7796
        %v8053 = vtanh.pop %v7797
        %v8054 = vtanh.pop %v7798
        %v8055 = vtanh.pop %v7799
        %v8056 = vtanh.pop %v7800
        %v8057 = vtanh.pop %v7801
        %v8058 = vtanh.pop %v7802
        %v8059 = vtanh.pop %v7803
        %v8060 = vtanh.pop %v7804
        %v8061 = vtanh.pop %v7805
        %v8062 = vtanh.pop %v7806
        %v8063 = vtanh.pop %v7807
        %v8064 = vtanh.pop %v7808
        %v8065 = vtanh.pop %v7809
        %v8066 = vtanh.pop %v7810
        %v8067 = vtanh.pop %v7811
        %v8068 = vtanh.pop %v7812
        %v8069 = vtanh.pop %v7813
        %v8070 = vtanh.pop %v7814
        %v8071 = vtanh.pop %v7815
        %v8072 = vtanh.pop %v7816
        %v8073 = vtanh.pop %v7817
        %v8074 = vtanh.pop %v7818
        %v8075 = vtanh.pop %v7819
        %v8076 = vtanh.pop %v7820
        %v8077 = vtanh.pop %v7821
        %v8078 = vtanh.pop %v7822
        %v8079 = vtanh.pop %v7823
        %v8080 = vtanh.pop %v7824
        %v8081 = vtanh.pop %v7825
        %v8082 = vtanh.pop %v7826
        %v8083 = vtanh.pop %v7827
        %v8084 = vtanh.pop %v7828
        %v8085 = vtanh.pop %v7829
        %v8086 = vtanh.pop %v7830
        %v8087 = vtanh.pop %v7831
        %v8088 = vtanh.pop %v7832
        %v8089 = vtanh.pop %v7833
        %v8090 = vtanh.pop %v7834
        %v8091 = vtanh.pop %v7835
        %v8092 = vtanh.pop %v7836
        %v8093 = vtanh.pop %v7837
        %v8094 = vtanh.pop %v7838
        %v8095 = vtanh.pop %v7839
        %v8096 = vtanh.pop %v7840
        %v8097 = vtanh.pop %v7841
        %v8098 = vtanh.pop %v7842
        %v8099 = vtanh.pop %v7843
        %v8100 = vtanh.pop %v7844
        %v8101 = vtanh.pop %v7845
        %v8102 = vtanh.pop %v7846
        %v8103 = vtanh.pop %v7847
        %v8104 = vtanh.pop %v7848
        %v8105 = vtanh.pop %v7849
        %v8106 = vtanh.pop %v7850
        %v8107 = vtanh.pop %v7851
        %v8108 = vtanh.pop %v7852
        %v8109 = vtanh.pop %v7853
        %v8110 = vtanh.pop %v7854
        %v8111 = vtanh.pop %v7855
        %v8112 = vtanh.pop %v7856
        %v8113 = vtanh.pop %v7857
        %v8114 = vtanh.pop %v7858
        %v8115 = vtanh.pop %v7859
        %v8116 = vtanh.pop %v7860
        %v8117 = vtanh.pop %v7861
        %v8118 = vtanh.pop %v7862
        %v8119 = vtanh.pop %v7863
        %v8120 = vtanh.pop %v7864
        %v8121 = vtanh.pop %v7865
        %v8122 = vtanh.pop %v7866
        %v8123 = vtanh.pop %v7867
        %v8124 = vtanh.pop %v7868
        %v8125 = vtanh.pop %v7869
        %v8126 = vtanh.pop %v7870
        %v8127 = vtanh.pop %v7871
        %v8128 = vtanh.pop %v7872
        %v8129 = vtanh.pop %v7873
        %v8130 = vtanh.pop %v7874
        %v8131 = vtanh.pop %v7875
        %v8132 = vtanh.pop %v7876
        %v8133 = vtanh.pop %v7877
        %v8134 = vtanh.pop %v7878
        %v8135 = vtanh.pop %v7879
        %v8136 = vtanh.pop %v7880
        %v8137 = vtanh.pop %v7881
        %v8138 = vtanh.pop %v7882
        %v8139 = vtanh.pop %v7883
        %v8140 = vtanh.pop %v7884
        %v8141 = vtanh.pop %v7885
        %v8142 = vtanh.pop %v7886
        %v8143 = vtanh.pop %v7887
        %v8144 = vtanh.pop %v7888
        %v8145 = vtanh.pop %v7889
        %v8146 = vtanh.pop %v7890
        %v8147 = vtanh.pop %v7891
        %v8148 = vtanh.pop %v7892
        %v8149 = vtanh.pop %v7893
        %v8150 = vtanh.pop %v7894
        %v8151 = vtanh.pop %v7895
        %v8152 = vtanh.pop %v7896
        %v8153 = vtanh.pop %v7897
        %v8154 = vtanh.pop %v7898
        %v8155 = vtanh.pop %v7899
        %v8156 = vtanh.pop %v7900
        %v8157 = vtanh.pop %v7901
        %v8158 = vtanh.pop %v7902
        %v8159 = vtanh.pop %v7903
        %v8160 = vtanh.pop %v7904
        %v8161 = vtanh.pop %v7905
        %v8162 = vtanh.pop %v7906
        %v8163 = vtanh.pop %v7907
        %v8164 = vtanh.pop %v7908
        %v8165 = vtanh.pop %v7909
        %v8166 = vtanh.pop %v7910
        %v8167 = vtanh.pop %v7911
        %v8168 = vtanh.pop %v7912
        %v8169 = vtanh.pop %v7913
        %v8170 = vtanh.pop %v7914
        %v8171 = vtanh.pop %v7915
        %v8172 = vtanh.pop %v7916
        %v8173 = vtanh.pop %v7917
        %v8174 = vtanh.pop %v7918
        %v8175 = vtanh.pop %v7919
        %v8176 = vtanh.pop %v7920
        %v8177 = vtanh.pop %v7921
        %v8178 = vtanh.pop %v7922
        %v8179 = vtanh.pop %v7923
        %v8180 = vtanh.pop %v7924
        %v8181 = vtanh.pop %v7925
        %v8182 = vtanh.pop %v7926
        %v8183 = vtanh.pop %v7927
        %v8184 = vtanh.pop %v7928
        %v8185 = vtanh.pop %v7929
        %v8186 = vtanh.pop %v7930
        %v8187 = vtanh.pop %v7931
        %v8188 = vtanh.pop %v7932
        %v8189 = vtanh.pop %v7933
        %v8190 = vtanh.pop %v7934
        %v8191 = vtanh.pop %v7935
        %v8192 = vtanh.pop %v7936
        %v8193 = vtanh.pop %v7937
        %v8194 = vtanh.pop %v7938
        %v8195 = vtanh.pop %v7939
        %v8196 = vtanh.pop %v7940
        %v8197 = vtanh.pop %v7941
        %v8198 = vtanh.pop %v7942
        %v8199 = vtanh.pop %v7943
        %v8200 = vtanh.pop %v7944
        %v8201 = vtanh.pop %v7945
        %v8202 = vtanh.pop %v7946
        %v8203 = vtanh.pop %v7947
        %v8204 = vtanh.pop %v7948
        %v8205 = vtanh.pop %v7949
        %v8206 = vtanh.pop %v7950
        %v8207 = vtanh.pop %v7951
        %v8208 = vtanh.pop %v7952
        %v8209 = vtanh.pop %v7953
        %v8210 = vtanh.pop %v7954
        %v8211 = vtanh.pop %v7955
        %v8212 = vtanh.pop %v7956
        %v8213 = vtanh.pop %v7957
        %v8214 = vtanh.pop %v7958
        %v8215 = vtanh.pop %v7959
        %v8216 = vtanh.pop %v7960
        %v8217 = vtanh.pop %v7961
        %v8218 = vtanh.pop %v7962
        %v8219 = vtanh.pop %v7963
        %v8220 = vtanh.pop %v7964
        %v8221 = vtanh.pop %v7965
        %v8222 = vtanh.pop %v7966
        %v8223 = vtanh.pop %v7967
        %v8224 = vtanh.pop %v7968
        %v8225 = vtanh.pop %v7969
        %v8226 = vtanh.pop %v7970
        %v8227 = vtanh.pop %v7971
        %v8228 = vtanh.pop %v7972
        %v8229 = vtanh.pop %v7973
        %v8230 = vtanh.pop %v7974
        %v8231 = vtanh.pop %v7975
        %v8232 = vtanh.pop %v7976
        %v8233 = vtanh.pop %v7977
        %v8234 = vtanh.pop %v7978
        %v8235 = vtanh.pop %v7979
        %v8236 = vtanh.pop %v7980
        %v8237 = vtanh.pop %v7981
        %v8238 = vtanh.pop %v7982
        %v8239 = vtanh.pop %v7983
        %v8240 = vtanh.pop %v7984
        %v8241 = vtanh.pop %v7985
        %v8242 = vtanh.pop %v7986
        %v8243 = vtanh.pop %v7987
        %v8244 = vtanh.pop %v7988
        %v8245 = vtanh.pop %v7989
        %v8246 = vtanh.pop %v7990
        %v8247 = vtanh.pop %v7991
        %v8248 = vtanh.pop %v7992
        %v8249 = vtanh.pop %v7993
        %v8250 = vtanh.pop %v7994
        %v8251 = vtanh.pop %v7995
        %v8252 = vtanh.pop %v7996
        %v8253 = vtanh.pop %v7997
        %v8254 = vtanh.pop %v7998
        %v8255 = vtanh.pop %v7999
        %v8256 = vtanh.pop %v8000
        %v8257 = vtanh.pop %v8001
        %v8258 = vtanh.pop %v8002
        %v8259 = vtanh.pop %v8003
        %v8260 = vtanh.pop %v8004
        %v8261 = vtanh.pop %v8005
        %v8262 = vtanh.pop %v8006
        %v8263 = vtanh.pop %v8007
        %v8264 = vtanh.pop %v8008
        %v8265 = vtanh.pop %v8009
        %v8266 = vtanh.pop %v8010
        %v8267 = vtanh.pop %v8011
        %v8268 = vtanh.pop %v8012
        %v8269 = vtanh.pop %v8013
        %v8270 = vtanh.pop %v8014
        %v8271 = vtanh.pop %v8015
        %v8272 = vtanh.pop %v8016
        %v8273 = vtanh.pop %v8017
        %v8274 = vtanh.pop %v8018
        %v8275 = vtanh.pop %v8019
        %v8276 = vtanh.pop %v8020
        %v8277 = vtanh.pop %v8021
        %v8278 = vtanh.pop %v8022
        %v8279 = vtanh.pop %v8023
        %v8280 = vtanh.pop %v8024
        %v8281 = vtanh.pop %v8025
        %v8282 = vtanh.pop %v8026
        %v8283 = vtanh.pop %v8027
        %v8284 = vtanh.pop %v8028
        %v8285 = vtanh.pop %v8029
        %v8286 = vtanh.pop %v8030
        %v8287 = vtanh.pop %v8031
        %v8288 = vtanh.pop %v8032
        %v8289 = vtanh.pop %v8033
        %v8290 = vtanh.pop %v8034
        %v8291 = vtanh.pop %v8035
        %v8292 = vtanh.pop %v8036
        %v8293 = vtanh.pop %v8037
        %v8294 = vtanh.pop %v8038
        %v8295 = vtanh.pop %v8039
        %v8296 = vtanh.pop %v8040
        %v8297 = vadd.f32 %v8041, 1.0
        %v8298 = vadd.f32 %v8042, 1.0
        %v8299 = vadd.f32 %v8043, 1.0
        %v8300 = vadd.f32 %v8044, 1.0
        %v8301 = vadd.f32 %v8045, 1.0
        %v8302 = vadd.f32 %v8046, 1.0
        %v8303 = vadd.f32 %v8047, 1.0
        %v8304 = vadd.f32 %v8048, 1.0
        %v8305 = vadd.f32 %v8049, 1.0
        %v8306 = vadd.f32 %v8050, 1.0
        %v8307 = vadd.f32 %v8051, 1.0
        %v8308 = vadd.f32 %v8052, 1.0
        %v8309 = vadd.f32 %v8053, 1.0
        %v8310 = vadd.f32 %v8054, 1.0
        %v8311 = vadd.f32 %v8055, 1.0
        %v8312 = vadd.f32 %v8056, 1.0
        %v8313 = vadd.f32 %v8057, 1.0
        %v8314 = vadd.f32 %v8058, 1.0
        %v8315 = vadd.f32 %v8059, 1.0
        %v8316 = vadd.f32 %v8060, 1.0
        %v8317 = vadd.f32 %v8061, 1.0
        %v8318 = vadd.f32 %v8062, 1.0
        %v8319 = vadd.f32 %v8063, 1.0
        %v8320 = vadd.f32 %v8064, 1.0
        %v8321 = vadd.f32 %v8065, 1.0
        %v8322 = vadd.f32 %v8066, 1.0
        %v8323 = vadd.f32 %v8067, 1.0
        %v8324 = vadd.f32 %v8068, 1.0
        %v8325 = vadd.f32 %v8069, 1.0
        %v8326 = vadd.f32 %v8070, 1.0
        %v8327 = vadd.f32 %v8071, 1.0
        %v8328 = vadd.f32 %v8072, 1.0
        %v8329 = vadd.f32 %v8073, 1.0
        %v8330 = vadd.f32 %v8074, 1.0
        %v8331 = vadd.f32 %v8075, 1.0
        %v8332 = vadd.f32 %v8076, 1.0
        %v8333 = vadd.f32 %v8077, 1.0
        %v8334 = vadd.f32 %v8078, 1.0
        %v8335 = vadd.f32 %v8079, 1.0
        %v8336 = vadd.f32 %v8080, 1.0
        %v8337 = vadd.f32 %v8081, 1.0
        %v8338 = vadd.f32 %v8082, 1.0
        %v8339 = vadd.f32 %v8083, 1.0
        %v8340 = vadd.f32 %v8084, 1.0
        %v8341 = vadd.f32 %v8085, 1.0
        %v8342 = vadd.f32 %v8086, 1.0
        %v8343 = vadd.f32 %v8087, 1.0
        %v8344 = vadd.f32 %v8088, 1.0
        %v8345 = vadd.f32 %v8089, 1.0
        %v8346 = vadd.f32 %v8090, 1.0
        %v8347 = vadd.f32 %v8091, 1.0
        %v8348 = vadd.f32 %v8092, 1.0
        %v8349 = vadd.f32 %v8093, 1.0
        %v8350 = vadd.f32 %v8094, 1.0
        %v8351 = vadd.f32 %v8095, 1.0
        %v8352 = vadd.f32 %v8096, 1.0
        %v8353 = vadd.f32 %v8097, 1.0
        %v8354 = vadd.f32 %v8098, 1.0
        %v8355 = vadd.f32 %v8099, 1.0
        %v8356 = vadd.f32 %v8100, 1.0
        %v8357 = vadd.f32 %v8101, 1.0
        %v8358 = vadd.f32 %v8102, 1.0
        %v8359 = vadd.f32 %v8103, 1.0
        %v8360 = vadd.f32 %v8104, 1.0
        %v8361 = vadd.f32 %v8105, 1.0
        %v8362 = vadd.f32 %v8106, 1.0
        %v8363 = vadd.f32 %v8107, 1.0
        %v8364 = vadd.f32 %v8108, 1.0
        %v8365 = vadd.f32 %v8109, 1.0
        %v8366 = vadd.f32 %v8110, 1.0
        %v8367 = vadd.f32 %v8111, 1.0
        %v8368 = vadd.f32 %v8112, 1.0
        %v8369 = vadd.f32 %v8113, 1.0
        %v8370 = vadd.f32 %v8114, 1.0
        %v8371 = vadd.f32 %v8115, 1.0
        %v8372 = vadd.f32 %v8116, 1.0
        %v8373 = vadd.f32 %v8117, 1.0
        %v8374 = vadd.f32 %v8118, 1.0
        %v8375 = vadd.f32 %v8119, 1.0
        %v8376 = vadd.f32 %v8120, 1.0
        %v8377 = vadd.f32 %v8121, 1.0
        %v8378 = vadd.f32 %v8122, 1.0
        %v8379 = vadd.f32 %v8123, 1.0
        %v8380 = vadd.f32 %v8124, 1.0
        %v8381 = vadd.f32 %v8125, 1.0
        %v8382 = vadd.f32 %v8126, 1.0
        %v8383 = vadd.f32 %v8127, 1.0
        %v8384 = vadd.f32 %v8128, 1.0
        %v8385 = vadd.f32 %v8129, 1.0
        %v8386 = vadd.f32 %v8130, 1.0
        %v8387 = vadd.f32 %v8131, 1.0
        %v8388 = vadd.f32 %v8132, 1.0
        %v8389 = vadd.f32 %v8133, 1.0
        %v8390 = vadd.f32 %v8134, 1.0
        %v8391 = vadd.f32 %v8135, 1.0
        %v8392 = vadd.f32 %v8136, 1.0
        %v8393 = vadd.f32 %v8137, 1.0
        %v8394 = vadd.f32 %v8138, 1.0
        %v8395 = vadd.f32 %v8139, 1.0
        %v8396 = vadd.f32 %v8140, 1.0
        %v8397 = vadd.f32 %v8141, 1.0
        %v8398 = vadd.f32 %v8142, 1.0
        %v8399 = vadd.f32 %v8143, 1.0
        %v8400 = vadd.f32 %v8144, 1.0
        %v8401 = vadd.f32 %v8145, 1.0
        %v8402 = vadd.f32 %v8146, 1.0
        %v8403 = vadd.f32 %v8147, 1.0
        %v8404 = vadd.f32 %v8148, 1.0
        %v8405 = vadd.f32 %v8149, 1.0
        %v8406 = vadd.f32 %v8150, 1.0
        %v8407 = vadd.f32 %v8151, 1.0
        %v8408 = vadd.f32 %v8152, 1.0
        %v8409 = vadd.f32 %v8153, 1.0
        %v8410 = vadd.f32 %v8154, 1.0
        %v8411 = vadd.f32 %v8155, 1.0
        %v8412 = vadd.f32 %v8156, 1.0
        %v8413 = vadd.f32 %v8157, 1.0
        %v8414 = vadd.f32 %v8158, 1.0
        %v8415 = vadd.f32 %v8159, 1.0
        %v8416 = vadd.f32 %v8160, 1.0
        %v8417 = vadd.f32 %v8161, 1.0
        %v8418 = vadd.f32 %v8162, 1.0
        %v8419 = vadd.f32 %v8163, 1.0
        %v8420 = vadd.f32 %v8164, 1.0
        %v8421 = vadd.f32 %v8165, 1.0
        %v8422 = vadd.f32 %v8166, 1.0
        %v8423 = vadd.f32 %v8167, 1.0
        %v8424 = vadd.f32 %v8168, 1.0
        %v8425 = vadd.f32 %v8169, 1.0
        %v8426 = vadd.f32 %v8170, 1.0
        %v8427 = vadd.f32 %v8171, 1.0
        %v8428 = vadd.f32 %v8172, 1.0
        %v8429 = vadd.f32 %v8173, 1.0
        %v8430 = vadd.f32 %v8174, 1.0
        %v8431 = vadd.f32 %v8175, 1.0
        %v8432 = vadd.f32 %v8176, 1.0
        %v8433 = vadd.f32 %v8177, 1.0
        %v8434 = vadd.f32 %v8178, 1.0
        %v8435 = vadd.f32 %v8179, 1.0
        %v8436 = vadd.f32 %v8180, 1.0
        %v8437 = vadd.f32 %v8181, 1.0
        %v8438 = vadd.f32 %v8182, 1.0
        %v8439 = vadd.f32 %v8183, 1.0
        %v8440 = vadd.f32 %v8184, 1.0
        %v8441 = vadd.f32 %v8185, 1.0
        %v8442 = vadd.f32 %v8186, 1.0
        %v8443 = vadd.f32 %v8187, 1.0
        %v8444 = vadd.f32 %v8188, 1.0
        %v8445 = vadd.f32 %v8189, 1.0
        %v8446 = vadd.f32 %v8190, 1.0
        %v8447 = vadd.f32 %v8191, 1.0
        %v8448 = vadd.f32 %v8192, 1.0
        %v8449 = vadd.f32 %v8193, 1.0
        %v8450 = vadd.f32 %v8194, 1.0
        %v8451 = vadd.f32 %v8195, 1.0
        %v8452 = vadd.f32 %v8196, 1.0
        %v8453 = vadd.f32 %v8197, 1.0
        %v8454 = vadd.f32 %v8198, 1.0
        %v8455 = vadd.f32 %v8199, 1.0
        %v8456 = vadd.f32 %v8200, 1.0
        %v8457 = vadd.f32 %v8201, 1.0
        %v8458 = vadd.f32 %v8202, 1.0
        %v8459 = vadd.f32 %v8203, 1.0
        %v8460 = vadd.f32 %v8204, 1.0
        %v8461 = vadd.f32 %v8205, 1.0
        %v8462 = vadd.f32 %v8206, 1.0
        %v8463 = vadd.f32 %v8207, 1.0
        %v8464 = vadd.f32 %v8208, 1.0
        %v8465 = vadd.f32 %v8209, 1.0
        %v8466 = vadd.f32 %v8210, 1.0
        %v8467 = vadd.f32 %v8211, 1.0
        %v8468 = vadd.f32 %v8212, 1.0
        %v8469 = vadd.f32 %v8213, 1.0
        %v8470 = vadd.f32 %v8214, 1.0
        %v8471 = vadd.f32 %v8215, 1.0
        %v8472 = vadd.f32 %v8216, 1.0
        %v8473 = vadd.f32 %v8217, 1.0
        %v8474 = vadd.f32 %v8218, 1.0
        %v8475 = vadd.f32 %v8219, 1.0
        %v8476 = vadd.f32 %v8220, 1.0
        %v8477 = vadd.f32 %v8221, 1.0
        %v8478 = vadd.f32 %v8222, 1.0
        %v8479 = vadd.f32 %v8223, 1.0
        %v8480 = vadd.f32 %v8224, 1.0
        %v8481 = vadd.f32 %v8225, 1.0
        %v8482 = vadd.f32 %v8226, 1.0
        %v8483 = vadd.f32 %v8227, 1.0
        %v8484 = vadd.f32 %v8228, 1.0
        %v8485 = vadd.f32 %v8229, 1.0
        %v8486 = vadd.f32 %v8230, 1.0
        %v8487 = vadd.f32 %v8231, 1.0
        %v8488 = vadd.f32 %v8232, 1.0
        %v8489 = vadd.f32 %v8233, 1.0
        %v8490 = vadd.f32 %v8234, 1.0
        %v8491 = vadd.f32 %v8235, 1.0
        %v8492 = vadd.f32 %v8236, 1.0
        %v8493 = vadd.f32 %v8237, 1.0
        %v8494 = vadd.f32 %v8238, 1.0
        %v8495 = vadd.f32 %v8239, 1.0
        %v8496 = vadd.f32 %v8240, 1.0
        %v8497 = vadd.f32 %v8241, 1.0
        %v8498 = vadd.f32 %v8242, 1.0
        %v8499 = vadd.f32 %v8243, 1.0
        %v8500 = vadd.f32 %v8244, 1.0
        %v8501 = vadd.f32 %v8245, 1.0
        %v8502 = vadd.f32 %v8246, 1.0
        %v8503 = vadd.f32 %v8247, 1.0
        %v8504 = vadd.f32 %v8248, 1.0
        %v8505 = vadd.f32 %v8249, 1.0
        %v8506 = vadd.f32 %v8250, 1.0
        %v8507 = vadd.f32 %v8251, 1.0
        %v8508 = vadd.f32 %v8252, 1.0
        %v8509 = vadd.f32 %v8253, 1.0
        %v8510 = vadd.f32 %v8254, 1.0
        %v8511 = vadd.f32 %v8255, 1.0
        %v8512 = vadd.f32 %v8256, 1.0
        %v8513 = vadd.f32 %v8257, 1.0
        %v8514 = vadd.f32 %v8258, 1.0
        %v8515 = vadd.f32 %v8259, 1.0
        %v8516 = vadd.f32 %v8260, 1.0
        %v8517 = vadd.f32 %v8261, 1.0
        %v8518 = vadd.f32 %v8262, 1.0
        %v8519 = vadd.f32 %v8263, 1.0
        %v8520 = vadd.f32 %v8264, 1.0
        %v8521 = vadd.f32 %v8265, 1.0
        %v8522 = vadd.f32 %v8266, 1.0
        %v8523 = vadd.f32 %v8267, 1.0
        %v8524 = vadd.f32 %v8268, 1.0
        %v8525 = vadd.f32 %v8269, 1.0
        %v8526 = vadd.f32 %v8270, 1.0
        %v8527 = vadd.f32 %v8271, 1.0
        %v8528 = vadd.f32 %v8272, 1.0
        %v8529 = vadd.f32 %v8273, 1.0
        %v8530 = vadd.f32 %v8274, 1.0
        %v8531 = vadd.f32 %v8275, 1.0
        %v8532 = vadd.f32 %v8276, 1.0
        %v8533 = vadd.f32 %v8277, 1.0
        %v8534 = vadd.f32 %v8278, 1.0
        %v8535 = vadd.f32 %v8279, 1.0
        %v8536 = vadd.f32 %v8280, 1.0
        %v8537 = vadd.f32 %v8281, 1.0
        %v8538 = vadd.f32 %v8282, 1.0
        %v8539 = vadd.f32 %v8283, 1.0
        %v8540 = vadd.f32 %v8284, 1.0
        %v8541 = vadd.f32 %v8285, 1.0
        %v8542 = vadd.f32 %v8286, 1.0
        %v8543 = vadd.f32 %v8287, 1.0
        %v8544 = vadd.f32 %v8288, 1.0
        %v8545 = vadd.f32 %v8289, 1.0
        %v8546 = vadd.f32 %v8290, 1.0
        %v8547 = vadd.f32 %v8291, 1.0
        %v8548 = vadd.f32 %v8292, 1.0
        %v8549 = vadd.f32 %v8293, 1.0
        %v8550 = vadd.f32 %v8294, 1.0
        %v8551 = vadd.f32 %v8295, 1.0
        %v8552 = vadd.f32 %v8296, 1.0
        %v8553 = vmul.f32 %v8297, 0.5
        %v8554 = vmul.f32 %v8298, 0.5
        %v8555 = vmul.f32 %v8299, 0.5
        %v8556 = vmul.f32 %v8300, 0.5
        %v8557 = vmul.f32 %v8301, 0.5
        %v8558 = vmul.f32 %v8302, 0.5
        %v8559 = vmul.f32 %v8303, 0.5
        %v8560 = vmul.f32 %v8304, 0.5
        %v8561 = vmul.f32 %v8305, 0.5
        %v8562 = vmul.f32 %v8306, 0.5
        %v8563 = vmul.f32 %v8307, 0.5
        %v8564 = vmul.f32 %v8308, 0.5
        %v8565 = vmul.f32 %v8309, 0.5
        %v8566 = vmul.f32 %v8310, 0.5
        %v8567 = vmul.f32 %v8311, 0.5
        %v8568 = vmul.f32 %v8312, 0.5
        %v8569 = vmul.f32 %v8313, 0.5
        %v8570 = vmul.f32 %v8314, 0.5
        %v8571 = vmul.f32 %v8315, 0.5
        %v8572 = vmul.f32 %v8316, 0.5
        %v8573 = vmul.f32 %v8317, 0.5
        %v8574 = vmul.f32 %v8318, 0.5
        %v8575 = vmul.f32 %v8319, 0.5
        %v8576 = vmul.f32 %v8320, 0.5
        %v8577 = vmul.f32 %v8321, 0.5
        %v8578 = vmul.f32 %v8322, 0.5
        %v8579 = vmul.f32 %v8323, 0.5
        %v8580 = vmul.f32 %v8324, 0.5
        %v8581 = vmul.f32 %v8325, 0.5
        %v8582 = vmul.f32 %v8326, 0.5
        %v8583 = vmul.f32 %v8327, 0.5
        %v8584 = vmul.f32 %v8328, 0.5
        %v8585 = vmul.f32 %v8329, 0.5
        %v8586 = vmul.f32 %v8330, 0.5
        %v8587 = vmul.f32 %v8331, 0.5
        %v8588 = vmul.f32 %v8332, 0.5
        %v8589 = vmul.f32 %v8333, 0.5
        %v8590 = vmul.f32 %v8334, 0.5
        %v8591 = vmul.f32 %v8335, 0.5
        %v8592 = vmul.f32 %v8336, 0.5
        %v8593 = vmul.f32 %v8337, 0.5
        %v8594 = vmul.f32 %v8338, 0.5
        %v8595 = vmul.f32 %v8339, 0.5
        %v8596 = vmul.f32 %v8340, 0.5
        %v8597 = vmul.f32 %v8341, 0.5
        %v8598 = vmul.f32 %v8342, 0.5
        %v8599 = vmul.f32 %v8343, 0.5
        %v8600 = vmul.f32 %v8344, 0.5
        %v8601 = vmul.f32 %v8345, 0.5
        %v8602 = vmul.f32 %v8346, 0.5
        %v8603 = vmul.f32 %v8347, 0.5
        %v8604 = vmul.f32 %v8348, 0.5
        %v8605 = vmul.f32 %v8349, 0.5
        %v8606 = vmul.f32 %v8350, 0.5
        %v8607 = vmul.f32 %v8351, 0.5
        %v8608 = vmul.f32 %v8352, 0.5
        %v8609 = vmul.f32 %v8353, 0.5
        %v8610 = vmul.f32 %v8354, 0.5
        %v8611 = vmul.f32 %v8355, 0.5
        %v8612 = vmul.f32 %v8356, 0.5
        %v8613 = vmul.f32 %v8357, 0.5
        %v8614 = vmul.f32 %v8358, 0.5
        %v8615 = vmul.f32 %v8359, 0.5
        %v8616 = vmul.f32 %v8360, 0.5
        %v8617 = vmul.f32 %v8361, 0.5
        %v8618 = vmul.f32 %v8362, 0.5
        %v8619 = vmul.f32 %v8363, 0.5
        %v8620 = vmul.f32 %v8364, 0.5
        %v8621 = vmul.f32 %v8365, 0.5
        %v8622 = vmul.f32 %v8366, 0.5
        %v8623 = vmul.f32 %v8367, 0.5
        %v8624 = vmul.f32 %v8368, 0.5
        %v8625 = vmul.f32 %v8369, 0.5
        %v8626 = vmul.f32 %v8370, 0.5
        %v8627 = vmul.f32 %v8371, 0.5
        %v8628 = vmul.f32 %v8372, 0.5
        %v8629 = vmul.f32 %v8373, 0.5
        %v8630 = vmul.f32 %v8374, 0.5
        %v8631 = vmul.f32 %v8375, 0.5
        %v8632 = vmul.f32 %v8376, 0.5
        %v8633 = vmul.f32 %v8377, 0.5
        %v8634 = vmul.f32 %v8378, 0.5
        %v8635 = vmul.f32 %v8379, 0.5
        %v8636 = vmul.f32 %v8380, 0.5
        %v8637 = vmul.f32 %v8381, 0.5
        %v8638 = vmul.f32 %v8382, 0.5
        %v8639 = vmul.f32 %v8383, 0.5
        %v8640 = vmul.f32 %v8384, 0.5
        %v8641 = vmul.f32 %v8385, 0.5
        %v8642 = vmul.f32 %v8386, 0.5
        %v8643 = vmul.f32 %v8387, 0.5
        %v8644 = vmul.f32 %v8388, 0.5
        %v8645 = vmul.f32 %v8389, 0.5
        %v8646 = vmul.f32 %v8390, 0.5
        %v8647 = vmul.f32 %v8391, 0.5
        %v8648 = vmul.f32 %v8392, 0.5
        %v8649 = vmul.f32 %v8393, 0.5
        %v8650 = vmul.f32 %v8394, 0.5
        %v8651 = vmul.f32 %v8395, 0.5
        %v8652 = vmul.f32 %v8396, 0.5
        %v8653 = vmul.f32 %v8397, 0.5
        %v8654 = vmul.f32 %v8398, 0.5
        %v8655 = vmul.f32 %v8399, 0.5
        %v8656 = vmul.f32 %v8400, 0.5
        %v8657 = vmul.f32 %v8401, 0.5
        %v8658 = vmul.f32 %v8402, 0.5
        %v8659 = vmul.f32 %v8403, 0.5
        %v8660 = vmul.f32 %v8404, 0.5
        %v8661 = vmul.f32 %v8405, 0.5
        %v8662 = vmul.f32 %v8406, 0.5
        %v8663 = vmul.f32 %v8407, 0.5
        %v8664 = vmul.f32 %v8408, 0.5
        %v8665 = vmul.f32 %v8409, 0.5
        %v8666 = vmul.f32 %v8410, 0.5
        %v8667 = vmul.f32 %v8411, 0.5
        %v8668 = vmul.f32 %v8412, 0.5
        %v8669 = vmul.f32 %v8413, 0.5
        %v8670 = vmul.f32 %v8414, 0.5
        %v8671 = vmul.f32 %v8415, 0.5
        %v8672 = vmul.f32 %v8416, 0.5
        %v8673 = vmul.f32 %v8417, 0.5
        %v8674 = vmul.f32 %v8418, 0.5
        %v8675 = vmul.f32 %v8419, 0.5
        %v8676 = vmul.f32 %v8420, 0.5
        %v8677 = vmul.f32 %v8421, 0.5
        %v8678 = vmul.f32 %v8422, 0.5
        %v8679 = vmul.f32 %v8423, 0.5
        %v8680 = vmul.f32 %v8424, 0.5
        %v8681 = vmul.f32 %v8425, 0.5
        %v8682 = vmul.f32 %v8426, 0.5
        %v8683 = vmul.f32 %v8427, 0.5
        %v8684 = vmul.f32 %v8428, 0.5
        %v8685 = vmul.f32 %v8429, 0.5
        %v8686 = vmul.f32 %v8430, 0.5
        %v8687 = vmul.f32 %v8431, 0.5
        %v8688 = vmul.f32 %v8432, 0.5
        %v8689 = vmul.f32 %v8433, 0.5
        %v8690 = vmul.f32 %v8434, 0.5
        %v8691 = vmul.f32 %v8435, 0.5
        %v8692 = vmul.f32 %v8436, 0.5
        %v8693 = vmul.f32 %v8437, 0.5
        %v8694 = vmul.f32 %v8438, 0.5
        %v8695 = vmul.f32 %v8439, 0.5
        %v8696 = vmul.f32 %v8440, 0.5
        %v8697 = vmul.f32 %v8441, 0.5
        %v8698 = vmul.f32 %v8442, 0.5
        %v8699 = vmul.f32 %v8443, 0.5
        %v8700 = vmul.f32 %v8444, 0.5
        %v8701 = vmul.f32 %v8445, 0.5
        %v8702 = vmul.f32 %v8446, 0.5
        %v8703 = vmul.f32 %v8447, 0.5
        %v8704 = vmul.f32 %v8448, 0.5
        %v8705 = vmul.f32 %v8449, 0.5
        %v8706 = vmul.f32 %v8450, 0.5
        %v8707 = vmul.f32 %v8451, 0.5
        %v8708 = vmul.f32 %v8452, 0.5
        %v8709 = vmul.f32 %v8453, 0.5
        %v8710 = vmul.f32 %v8454, 0.5
        %v8711 = vmul.f32 %v8455, 0.5
        %v8712 = vmul.f32 %v8456, 0.5
        %v8713 = vmul.f32 %v8457, 0.5
        %v8714 = vmul.f32 %v8458, 0.5
        %v8715 = vmul.f32 %v8459, 0.5
        %v8716 = vmul.f32 %v8460, 0.5
        %v8717 = vmul.f32 %v8461, 0.5
        %v8718 = vmul.f32 %v8462, 0.5
        %v8719 = vmul.f32 %v8463, 0.5
        %v8720 = vmul.f32 %v8464, 0.5
        %v8721 = vmul.f32 %v8465, 0.5
        %v8722 = vmul.f32 %v8466, 0.5
        %v8723 = vmul.f32 %v8467, 0.5
        %v8724 = vmul.f32 %v8468, 0.5
        %v8725 = vmul.f32 %v8469, 0.5
        %v8726 = vmul.f32 %v8470, 0.5
        %v8727 = vmul.f32 %v8471, 0.5
        %v8728 = vmul.f32 %v8472, 0.5
        %v8729 = vmul.f32 %v8473, 0.5
        %v8730 = vmul.f32 %v8474, 0.5
        %v8731 = vmul.f32 %v8475, 0.5
        %v8732 = vmul.f32 %v8476, 0.5
        %v8733 = vmul.f32 %v8477, 0.5
        %v8734 = vmul.f32 %v8478, 0.5
        %v8735 = vmul.f32 %v8479, 0.5
        %v8736 = vmul.f32 %v8480, 0.5
        %v8737 = vmul.f32 %v8481, 0.5
        %v8738 = vmul.f32 %v8482, 0.5
        %v8739 = vmul.f32 %v8483, 0.5
        %v8740 = vmul.f32 %v8484, 0.5
        %v8741 = vmul.f32 %v8485, 0.5
        %v8742 = vmul.f32 %v8486, 0.5
        %v8743 = vmul.f32 %v8487, 0.5
        %v8744 = vmul.f32 %v8488, 0.5
        %v8745 = vmul.f32 %v8489, 0.5
        %v8746 = vmul.f32 %v8490, 0.5
        %v8747 = vmul.f32 %v8491, 0.5
        %v8748 = vmul.f32 %v8492, 0.5
        %v8749 = vmul.f32 %v8493, 0.5
        %v8750 = vmul.f32 %v8494, 0.5
        %v8751 = vmul.f32 %v8495, 0.5
        %v8752 = vmul.f32 %v8496, 0.5
        %v8753 = vmul.f32 %v8497, 0.5
        %v8754 = vmul.f32 %v8498, 0.5
        %v8755 = vmul.f32 %v8499, 0.5
        %v8756 = vmul.f32 %v8500, 0.5
        %v8757 = vmul.f32 %v8501, 0.5
        %v8758 = vmul.f32 %v8502, 0.5
        %v8759 = vmul.f32 %v8503, 0.5
        %v8760 = vmul.f32 %v8504, 0.5
        %v8761 = vmul.f32 %v8505, 0.5
        %v8762 = vmul.f32 %v8506, 0.5
        %v8763 = vmul.f32 %v8507, 0.5
        %v8764 = vmul.f32 %v8508, 0.5
        %v8765 = vmul.f32 %v8509, 0.5
        %v8766 = vmul.f32 %v8510, 0.5
        %v8767 = vmul.f32 %v8511, 0.5
        %v8768 = vmul.f32 %v8512, 0.5
        %v8769 = vmul.f32 %v8513, 0.5
        %v8770 = vmul.f32 %v8514, 0.5
        %v8771 = vmul.f32 %v8515, 0.5
        %v8772 = vmul.f32 %v8516, 0.5
        %v8773 = vmul.f32 %v8517, 0.5
        %v8774 = vmul.f32 %v8518, 0.5
        %v8775 = vmul.f32 %v8519, 0.5
        %v8776 = vmul.f32 %v8520, 0.5
        %v8777 = vmul.f32 %v8521, 0.5
        %v8778 = vmul.f32 %v8522, 0.5
        %v8779 = vmul.f32 %v8523, 0.5
        %v8780 = vmul.f32 %v8524, 0.5
        %v8781 = vmul.f32 %v8525, 0.5
        %v8782 = vmul.f32 %v8526, 0.5
        %v8783 = vmul.f32 %v8527, 0.5
        %v8784 = vmul.f32 %v8528, 0.5
        %v8785 = vmul.f32 %v8529, 0.5
        %v8786 = vmul.f32 %v8530, 0.5
        %v8787 = vmul.f32 %v8531, 0.5
        %v8788 = vmul.f32 %v8532, 0.5
        %v8789 = vmul.f32 %v8533, 0.5
        %v8790 = vmul.f32 %v8534, 0.5
        %v8791 = vmul.f32 %v8535, 0.5
        %v8792 = vmul.f32 %v8536, 0.5
        %v8793 = vmul.f32 %v8537, 0.5
        %v8794 = vmul.f32 %v8538, 0.5
        %v8795 = vmul.f32 %v8539, 0.5
        %v8796 = vmul.f32 %v8540, 0.5
        %v8797 = vmul.f32 %v8541, 0.5
        %v8798 = vmul.f32 %v8542, 0.5
        %v8799 = vmul.f32 %v8543, 0.5
        %v8800 = vmul.f32 %v8544, 0.5
        %v8801 = vmul.f32 %v8545, 0.5
        %v8802 = vmul.f32 %v8546, 0.5
        %v8803 = vmul.f32 %v8547, 0.5
        %v8804 = vmul.f32 %v8548, 0.5
        %v8805 = vmul.f32 %v8549, 0.5
        %v8806 = vmul.f32 %v8550, 0.5
        %v8807 = vmul.f32 %v8551, 0.5
        %v8808 = vmul.f32 %v8552, 0.5
        %v8809 = vmul.f32 %v5800, %v8553
        %v8810 = vmul.f32 %v5802, %v8554
        %v8811 = vmul.f32 %v6057, %v8555
        %v8812 = vmul.f32 %v6059, %v8556
        %v8813 = vmul.f32 %v6314, %v8557
        %v8814 = vmul.f32 %v6316, %v8558
        %v8815 = vmul.f32 %v6571, %v8559
        %v8816 = vmul.f32 %v6573, %v8560
        %v8817 = vmul.f32 %v5806, %v8561
        %v8818 = vmul.f32 %v5808, %v8562
        %v8819 = vmul.f32 %v6063, %v8563
        %v8820 = vmul.f32 %v6065, %v8564
        %v8821 = vmul.f32 %v6320, %v8565
        %v8822 = vmul.f32 %v6322, %v8566
        %v8823 = vmul.f32 %v6577, %v8567
        %v8824 = vmul.f32 %v6579, %v8568
        %v8825 = vmul.f32 %v5812, %v8569
        %v8826 = vmul.f32 %v5814, %v8570
        %v8827 = vmul.f32 %v6069, %v8571
        %v8828 = vmul.f32 %v6071, %v8572
        %v8829 = vmul.f32 %v6326, %v8573
        %v8830 = vmul.f32 %v6328, %v8574
        %v8831 = vmul.f32 %v6583, %v8575
        %v8832 = vmul.f32 %v6585, %v8576
        %v8833 = vmul.f32 %v5818, %v8577
        %v8834 = vmul.f32 %v5820, %v8578
        %v8835 = vmul.f32 %v6075, %v8579
        %v8836 = vmul.f32 %v6077, %v8580
        %v8837 = vmul.f32 %v6332, %v8581
        %v8838 = vmul.f32 %v6334, %v8582
        %v8839 = vmul.f32 %v6589, %v8583
        %v8840 = vmul.f32 %v6591, %v8584
        %v8841 = vmul.f32 %v5824, %v8585
        %v8842 = vmul.f32 %v5826, %v8586
        %v8843 = vmul.f32 %v6081, %v8587
        %v8844 = vmul.f32 %v6083, %v8588
        %v8845 = vmul.f32 %v6338, %v8589
        %v8846 = vmul.f32 %v6340, %v8590
        %v8847 = vmul.f32 %v6595, %v8591
        %v8848 = vmul.f32 %v6597, %v8592
        %v8849 = vmul.f32 %v5830, %v8593
        %v8850 = vmul.f32 %v5832, %v8594
        %v8851 = vmul.f32 %v6087, %v8595
        %v8852 = vmul.f32 %v6089, %v8596
        %v8853 = vmul.f32 %v6344, %v8597
        %v8854 = vmul.f32 %v6346, %v8598
        %v8855 = vmul.f32 %v6601, %v8599
        %v8856 = vmul.f32 %v6603, %v8600
        %v8857 = vmul.f32 %v5836, %v8601
        %v8858 = vmul.f32 %v5838, %v8602
        %v8859 = vmul.f32 %v6093, %v8603
        %v8860 = vmul.f32 %v6095, %v8604
        %v8861 = vmul.f32 %v6350, %v8605
        %v8862 = vmul.f32 %v6352, %v8606
        %v8863 = vmul.f32 %v6607, %v8607
        %v8864 = vmul.f32 %v6609, %v8608
        %v8865 = vmul.f32 %v5842, %v8609
        %v8866 = vmul.f32 %v5844, %v8610
        %v8867 = vmul.f32 %v6099, %v8611
        %v8868 = vmul.f32 %v6101, %v8612
        %v8869 = vmul.f32 %v6356, %v8613
        %v8870 = vmul.f32 %v6358, %v8614
        %v8871 = vmul.f32 %v6613, %v8615
        %v8872 = vmul.f32 %v6615, %v8616
        %v8873 = vmul.f32 %v5848, %v8617
        %v8874 = vmul.f32 %v5850, %v8618
        %v8875 = vmul.f32 %v6105, %v8619
        %v8876 = vmul.f32 %v6107, %v8620
        %v8877 = vmul.f32 %v6362, %v8621
        %v8878 = vmul.f32 %v6364, %v8622
        %v8879 = vmul.f32 %v6619, %v8623
        %v8880 = vmul.f32 %v6621, %v8624
        %v8881 = vmul.f32 %v5854, %v8625
        %v8882 = vmul.f32 %v5856, %v8626
        %v8883 = vmul.f32 %v6111, %v8627
        %v8884 = vmul.f32 %v6113, %v8628
        %v8885 = vmul.f32 %v6368, %v8629
        %v8886 = vmul.f32 %v6370, %v8630
        %v8887 = vmul.f32 %v6625, %v8631
        %v8888 = vmul.f32 %v6627, %v8632
        %v8889 = vmul.f32 %v5860, %v8633
        %v8890 = vmul.f32 %v5862, %v8634
        %v8891 = vmul.f32 %v6117, %v8635
        %v8892 = vmul.f32 %v6119, %v8636
        %v8893 = vmul.f32 %v6374, %v8637
        %v8894 = vmul.f32 %v6376, %v8638
        %v8895 = vmul.f32 %v6631, %v8639
        %v8896 = vmul.f32 %v6633, %v8640
        %v8897 = vmul.f32 %v5866, %v8641
        %v8898 = vmul.f32 %v5868, %v8642
        %v8899 = vmul.f32 %v6123, %v8643
        %v8900 = vmul.f32 %v6125, %v8644
        %v8901 = vmul.f32 %v6380, %v8645
        %v8902 = vmul.f32 %v6382, %v8646
        %v8903 = vmul.f32 %v6637, %v8647
        %v8904 = vmul.f32 %v6639, %v8648
        %v8905 = vmul.f32 %v5872, %v8649
        %v8906 = vmul.f32 %v5874, %v8650
        %v8907 = vmul.f32 %v6129, %v8651
        %v8908 = vmul.f32 %v6131, %v8652
        %v8909 = vmul.f32 %v6386, %v8653
        %v8910 = vmul.f32 %v6388, %v8654
        %v8911 = vmul.f32 %v6643, %v8655
        %v8912 = vmul.f32 %v6645, %v8656
        %v8913 = vmul.f32 %v5878, %v8657
        %v8914 = vmul.f32 %v5880, %v8658
        %v8915 = vmul.f32 %v6135, %v8659
        %v8916 = vmul.f32 %v6137, %v8660
        %v8917 = vmul.f32 %v6392, %v8661
        %v8918 = vmul.f32 %v6394, %v8662
        %v8919 = vmul.f32 %v6649, %v8663
        %v8920 = vmul.f32 %v6651, %v8664
        %v8921 = vmul.f32 %v5884, %v8665
        %v8922 = vmul.f32 %v5886, %v8666
        %v8923 = vmul.f32 %v6141, %v8667
        %v8924 = vmul.f32 %v6143, %v8668
        %v8925 = vmul.f32 %v6398, %v8669
        %v8926 = vmul.f32 %v6400, %v8670
        %v8927 = vmul.f32 %v6655, %v8671
        %v8928 = vmul.f32 %v6657, %v8672
        %v8929 = vmul.f32 %v5890, %v8673
        %v8930 = vmul.f32 %v5892, %v8674
        %v8931 = vmul.f32 %v6147, %v8675
        %v8932 = vmul.f32 %v6149, %v8676
        %v8933 = vmul.f32 %v6404, %v8677
        %v8934 = vmul.f32 %v6406, %v8678
        %v8935 = vmul.f32 %v6661, %v8679
        %v8936 = vmul.f32 %v6663, %v8680
        %v8937 = vmul.f32 %v5896, %v8681
        %v8938 = vmul.f32 %v5898, %v8682
        %v8939 = vmul.f32 %v6153, %v8683
        %v8940 = vmul.f32 %v6155, %v8684
        %v8941 = vmul.f32 %v6410, %v8685
        %v8942 = vmul.f32 %v6412, %v8686
        %v8943 = vmul.f32 %v6667, %v8687
        %v8944 = vmul.f32 %v6669, %v8688
        %v8945 = vmul.f32 %v5902, %v8689
        %v8946 = vmul.f32 %v5904, %v8690
        %v8947 = vmul.f32 %v6159, %v8691
        %v8948 = vmul.f32 %v6161, %v8692
        %v8949 = vmul.f32 %v6416, %v8693
        %v8950 = vmul.f32 %v6418, %v8694
        %v8951 = vmul.f32 %v6673, %v8695
        %v8952 = vmul.f32 %v6675, %v8696
        %v8953 = vmul.f32 %v5908, %v8697
        %v8954 = vmul.f32 %v5910, %v8698
        %v8955 = vmul.f32 %v6165, %v8699
        %v8956 = vmul.f32 %v6167, %v8700
        %v8957 = vmul.f32 %v6422, %v8701
        %v8958 = vmul.f32 %v6424, %v8702
        %v8959 = vmul.f32 %v6679, %v8703
        %v8960 = vmul.f32 %v6681, %v8704
        %v8961 = vmul.f32 %v5914, %v8705
        %v8962 = vmul.f32 %v5916, %v8706
        %v8963 = vmul.f32 %v6171, %v8707
        %v8964 = vmul.f32 %v6173, %v8708
        %v8965 = vmul.f32 %v6428, %v8709
        %v8966 = vmul.f32 %v6430, %v8710
        %v8967 = vmul.f32 %v6685, %v8711
        %v8968 = vmul.f32 %v6687, %v8712
        %v8969 = vmul.f32 %v5920, %v8713
        %v8970 = vmul.f32 %v5922, %v8714
        %v8971 = vmul.f32 %v6177, %v8715
        %v8972 = vmul.f32 %v6179, %v8716
        %v8973 = vmul.f32 %v6434, %v8717
        %v8974 = vmul.f32 %v6436, %v8718
        %v8975 = vmul.f32 %v6691, %v8719
        %v8976 = vmul.f32 %v6693, %v8720
        %v8977 = vmul.f32 %v5926, %v8721
        %v8978 = vmul.f32 %v5928, %v8722
        %v8979 = vmul.f32 %v6183, %v8723
        %v8980 = vmul.f32 %v6185, %v8724
        %v8981 = vmul.f32 %v6440, %v8725
        %v8982 = vmul.f32 %v6442, %v8726
        %v8983 = vmul.f32 %v6697, %v8727
        %v8984 = vmul.f32 %v6699, %v8728
        %v8985 = vmul.f32 %v5932, %v8729
        %v8986 = vmul.f32 %v5934, %v8730
        %v8987 = vmul.f32 %v6189, %v8731
        %v8988 = vmul.f32 %v6191, %v8732
        %v8989 = vmul.f32 %v6446, %v8733
        %v8990 = vmul.f32 %v6448, %v8734
        %v8991 = vmul.f32 %v6703, %v8735
        %v8992 = vmul.f32 %v6705, %v8736
        %v8993 = vmul.f32 %v5938, %v8737
        %v8994 = vmul.f32 %v5940, %v8738
        %v8995 = vmul.f32 %v6195, %v8739
        %v8996 = vmul.f32 %v6197, %v8740
        %v8997 = vmul.f32 %v6452, %v8741
        %v8998 = vmul.f32 %v6454, %v8742
        %v8999 = vmul.f32 %v6709, %v8743
        %v9000 = vmul.f32 %v6711, %v8744
        %v9001 = vmul.f32 %v5944, %v8745
        %v9002 = vmul.f32 %v5946, %v8746
        %v9003 = vmul.f32 %v6201, %v8747
        %v9004 = vmul.f32 %v6203, %v8748
        %v9005 = vmul.f32 %v6458, %v8749
        %v9006 = vmul.f32 %v6460, %v8750
        %v9007 = vmul.f32 %v6715, %v8751
        %v9008 = vmul.f32 %v6717, %v8752
        %v9009 = vmul.f32 %v5950, %v8753
        %v9010 = vmul.f32 %v5952, %v8754
        %v9011 = vmul.f32 %v6207, %v8755
        %v9012 = vmul.f32 %v6209, %v8756
        %v9013 = vmul.f32 %v6464, %v8757
        %v9014 = vmul.f32 %v6466, %v8758
        %v9015 = vmul.f32 %v6721, %v8759
        %v9016 = vmul.f32 %v6723, %v8760
        %v9017 = vmul.f32 %v5956, %v8761
        %v9018 = vmul.f32 %v5958, %v8762
        %v9019 = vmul.f32 %v6213, %v8763
        %v9020 = vmul.f32 %v6215, %v8764
        %v9021 = vmul.f32 %v6470, %v8765
        %v9022 = vmul.f32 %v6472, %v8766
        %v9023 = vmul.f32 %v6727, %v8767
        %v9024 = vmul.f32 %v6729, %v8768
        %v9025 = vmul.f32 %v5962, %v8769
        %v9026 = vmul.f32 %v5964, %v8770
        %v9027 = vmul.f32 %v6219, %v8771
        %v9028 = vmul.f32 %v6221, %v8772
        %v9029 = vmul.f32 %v6476, %v8773
        %v9030 = vmul.f32 %v6478, %v8774
        %v9031 = vmul.f32 %v6733, %v8775
        %v9032 = vmul.f32 %v6735, %v8776
        %v9033 = vmul.f32 %v5968, %v8777
        %v9034 = vmul.f32 %v5970, %v8778
        %v9035 = vmul.f32 %v6225, %v8779
        %v9036 = vmul.f32 %v6227, %v8780
        %v9037 = vmul.f32 %v6482, %v8781
        %v9038 = vmul.f32 %v6484, %v8782
        %v9039 = vmul.f32 %v6739, %v8783
        %v9040 = vmul.f32 %v6741, %v8784
        %v9041 = vmul.f32 %v5974, %v8785
        %v9042 = vmul.f32 %v5976, %v8786
        %v9043 = vmul.f32 %v6231, %v8787
        %v9044 = vmul.f32 %v6233, %v8788
        %v9045 = vmul.f32 %v6488, %v8789
        %v9046 = vmul.f32 %v6490, %v8790
        %v9047 = vmul.f32 %v6745, %v8791
        %v9048 = vmul.f32 %v6747, %v8792
        %v9049 = vmul.f32 %v5980, %v8793
        %v9050 = vmul.f32 %v5982, %v8794
        %v9051 = vmul.f32 %v6237, %v8795
        %v9052 = vmul.f32 %v6239, %v8796
        %v9053 = vmul.f32 %v6494, %v8797
        %v9054 = vmul.f32 %v6496, %v8798
        %v9055 = vmul.f32 %v6751, %v8799
        %v9056 = vmul.f32 %v6753, %v8800
        %v9057 = vmul.f32 %v5986, %v8801
        %v9058 = vmul.f32 %v5988, %v8802
        %v9059 = vmul.f32 %v6243, %v8803
        %v9060 = vmul.f32 %v6245, %v8804
        %v9061 = vmul.f32 %v6500, %v8805
        %v9062 = vmul.f32 %v6502, %v8806
        %v9063 = vmul.f32 %v6757, %v8807
        %v9064 = vmul.f32 %v6759, %v8808
        %v9065 = vld [vmem:[%s568] sm:$0xff]
        %v9066 = vld [vmem:[%s568 + $0x8] sm:$0xff]
        %v9067 = vld [vmem:[%s568 + $0x10] sm:$0xff]
        %v9068 = vld [vmem:[%s568 + $0x18] sm:$0xff]
        %v9069 = vld [vmem:[%s568 + $0x20] sm:$0xff]
        %v9070 = vld [vmem:[%s568 + $0x28] sm:$0xff]
        %v9071 = vld [vmem:[%s568 + $0x30] sm:$0xff]
        %v9072 = vld [vmem:[%s568 + $0x38] sm:$0xff]
        %v9073 = vld [vmem:[%s568 + $0x40] sm:$0xff]
        %v9074 = vld [vmem:[%s568 + $0x48] sm:$0xff]
        %v9075 = vld [vmem:[%s568 + $0x50] sm:$0xff]
        %v9076 = vld [vmem:[%s568 + $0x58] sm:$0xff]
        %v9077 = vld [vmem:[%s568 + $0x60] sm:$0xff]
        %v9078 = vld [vmem:[%s568 + $0x68] sm:$0xff]
        %v9079 = vld [vmem:[%s568 + $0x70] sm:$0xff]
        %v9080 = vld [vmem:[%s568 + $0x78] sm:$0xff]
        %v9081 = vld [vmem:[%s568 + $0x80] sm:$0xff]
        %v9082 = vld [vmem:[%s568 + $0x88] sm:$0xff]
        %v9083 = vld [vmem:[%s568 + $0x90] sm:$0xff]
        %v9084 = vld [vmem:[%s568 + $0x98] sm:$0xff]
        %v9085 = vld [vmem:[%s568 + $0xa0] sm:$0xff]
        %v9086 = vld [vmem:[%s568 + $0xa8] sm:$0xff]
        %v9087 = vld [vmem:[%s568 + $0xb0] sm:$0xff]
        %v9088 = vld [vmem:[%s568 + $0xb8] sm:$0xff]
        %v9089 = vld [vmem:[%s568 + $0xc0] sm:$0xff]
        %v9090 = vld [vmem:[%s568 + $0xc8] sm:$0xff]
        %v9091 = vld [vmem:[%s568 + $0xd0] sm:$0xff]
        %v9092 = vld [vmem:[%s568 + $0xd8] sm:$0xff]
        %v9093 = vld [vmem:[%s568 + $0xe0] sm:$0xff]
        %v9094 = vld [vmem:[%s568 + $0xe8] sm:$0xff]
        %v9095 = vld [vmem:[%s568 + $0xf0] sm:$0xff]
        %v9096 = vld [vmem:[%s568 + $0xf8] sm:$0xff]
        %v9097 = vld [vmem:[%s568 + $0x100] sm:$0xff]
        %v9098 = vld [vmem:[%s568 + $0x108] sm:$0xff]
        %v9099 = vld [vmem:[%s568 + $0x110] sm:$0xff]
        %v9100 = vld [vmem:[%s568 + $0x118] sm:$0xff]
        %v9101 = vld [vmem:[%s568 + $0x120] sm:$0xff]
        %v9102 = vld [vmem:[%s568 + $0x128] sm:$0xff]
        %v9103 = vld [vmem:[%s568 + $0x130] sm:$0xff]
        %v9104 = vld [vmem:[%s568 + $0x138] sm:$0xff]
        %v9105 = vld [vmem:[%s568 + $0x140] sm:$0xff]
        %v9106 = vld [vmem:[%s568 + $0x148] sm:$0xff]
        %v9107 = vld [vmem:[%s568 + $0x150] sm:$0xff]
        %v9108 = vld [vmem:[%s568 + $0x158] sm:$0xff]
        %v9109 = vld [vmem:[%s568 + $0x160] sm:$0xff]
        %v9110 = vld [vmem:[%s568 + $0x168] sm:$0xff]
        %v9111 = vld [vmem:[%s568 + $0x170] sm:$0xff]
        %v9112 = vld [vmem:[%s568 + $0x178] sm:$0xff]
        %v9113 = vld [vmem:[%s568 + $0x180] sm:$0xff]
        %v9114 = vld [vmem:[%s568 + $0x188] sm:$0xff]
        %v9115 = vld [vmem:[%s568 + $0x190] sm:$0xff]
        %v9116 = vld [vmem:[%s568 + $0x198] sm:$0xff]
        %v9117 = vld [vmem:[%s568 + $0x1a0] sm:$0xff]
        %v9118 = vld [vmem:[%s568 + $0x1a8] sm:$0xff]
        %v9119 = vld [vmem:[%s568 + $0x1b0] sm:$0xff]
        %v9120 = vld [vmem:[%s568 + $0x1b8] sm:$0xff]
        %v9121 = vld [vmem:[%s568 + $0x1c0] sm:$0xff]
        %v9122 = vld [vmem:[%s568 + $0x1c8] sm:$0xff]
        %v9123 = vld [vmem:[%s568 + $0x1d0] sm:$0xff]
        %v9124 = vld [vmem:[%s568 + $0x1d8] sm:$0xff]
        %v9125 = vld [vmem:[%s568 + $0x1e0] sm:$0xff]
        %v9126 = vld [vmem:[%s568 + $0x1e8] sm:$0xff]
        %v9127 = vld [vmem:[%s568 + $0x1f0] sm:$0xff]
        %v9128 = vld [vmem:[%s568 + $0x1f8] sm:$0xff]
        %v9129 = vld [vmem:[%s568 + $0x200] sm:$0xff]
        %v9130 = vld [vmem:[%s568 + $0x208] sm:$0xff]
        %v9131 = vld [vmem:[%s568 + $0x210] sm:$0xff]
        %v9132 = vld [vmem:[%s568 + $0x218] sm:$0xff]
        %v9133 = vld [vmem:[%s568 + $0x220] sm:$0xff]
        %v9134 = vld [vmem:[%s568 + $0x228] sm:$0xff]
        %v9135 = vld [vmem:[%s568 + $0x230] sm:$0xff]
        %v9136 = vld [vmem:[%s568 + $0x238] sm:$0xff]
        %v9137 = vld [vmem:[%s568 + $0x240] sm:$0xff]
        %v9138 = vld [vmem:[%s568 + $0x248] sm:$0xff]
        %v9139 = vld [vmem:[%s568 + $0x250] sm:$0xff]
        %v9140 = vld [vmem:[%s568 + $0x258] sm:$0xff]
        %v9141 = vld [vmem:[%s568 + $0x260] sm:$0xff]
        %v9142 = vld [vmem:[%s568 + $0x268] sm:$0xff]
        %v9143 = vld [vmem:[%s568 + $0x270] sm:$0xff]
        %v9144 = vld [vmem:[%s568 + $0x278] sm:$0xff]
        %v9145 = vld [vmem:[%s568 + $0x280] sm:$0xff]
        %v9146 = vld [vmem:[%s568 + $0x288] sm:$0xff]
        %v9147 = vld [vmem:[%s568 + $0x290] sm:$0xff]
        %v9148 = vld [vmem:[%s568 + $0x298] sm:$0xff]
        %v9149 = vld [vmem:[%s568 + $0x2a0] sm:$0xff]
        %v9150 = vld [vmem:[%s568 + $0x2a8] sm:$0xff]
        %v9151 = vld [vmem:[%s568 + $0x2b0] sm:$0xff]
        %v9152 = vld [vmem:[%s568 + $0x2b8] sm:$0xff]
        %v9153 = vld [vmem:[%s568 + $0x2c0] sm:$0xff]
        %v9154 = vld [vmem:[%s568 + $0x2c8] sm:$0xff]
        %v9155 = vld [vmem:[%s568 + $0x2d0] sm:$0xff]
        %v9156 = vld [vmem:[%s568 + $0x2d8] sm:$0xff]
        %v9157 = vld [vmem:[%s568 + $0x2e0] sm:$0xff]
        %v9158 = vld [vmem:[%s568 + $0x2e8] sm:$0xff]
        %v9159 = vld [vmem:[%s568 + $0x2f0] sm:$0xff]
        %v9160 = vld [vmem:[%s568 + $0x2f8] sm:$0xff]
        %v9161 = vld [vmem:[%s568 + $0x300] sm:$0xff]
        %v9162 = vld [vmem:[%s568 + $0x308] sm:$0xff]
        %v9163 = vld [vmem:[%s568 + $0x310] sm:$0xff]
        %v9164 = vld [vmem:[%s568 + $0x318] sm:$0xff]
        %v9165 = vld [vmem:[%s568 + $0x320] sm:$0xff]
        %v9166 = vld [vmem:[%s568 + $0x328] sm:$0xff]
        %v9167 = vld [vmem:[%s568 + $0x330] sm:$0xff]
        %v9168 = vld [vmem:[%s568 + $0x338] sm:$0xff]
        %v9169 = vld [vmem:[%s568 + $0x340] sm:$0xff]
        %v9170 = vld [vmem:[%s568 + $0x348] sm:$0xff]
        %v9171 = vld [vmem:[%s568 + $0x350] sm:$0xff]
        %v9172 = vld [vmem:[%s568 + $0x358] sm:$0xff]
        %v9173 = vld [vmem:[%s568 + $0x360] sm:$0xff]
        %v9174 = vld [vmem:[%s568 + $0x368] sm:$0xff]
        %v9175 = vld [vmem:[%s568 + $0x370] sm:$0xff]
        %v9176 = vld [vmem:[%s568 + $0x378] sm:$0xff]
        %v9177 = vld [vmem:[%s568 + $0x380] sm:$0xff]
        %v9178 = vld [vmem:[%s568 + $0x388] sm:$0xff]
        %v9179 = vld [vmem:[%s568 + $0x390] sm:$0xff]
        %v9180 = vld [vmem:[%s568 + $0x398] sm:$0xff]
        %v9181 = vld [vmem:[%s568 + $0x3a0] sm:$0xff]
        %v9182 = vld [vmem:[%s568 + $0x3a8] sm:$0xff]
        %v9183 = vld [vmem:[%s568 + $0x3b0] sm:$0xff]
        %v9184 = vld [vmem:[%s568 + $0x3b8] sm:$0xff]
        %v9185 = vld [vmem:[%s568 + $0x3c0] sm:$0xff]
        %v9186 = vld [vmem:[%s568 + $0x3c8] sm:$0xff]
        %v9187 = vld [vmem:[%s568 + $0x3d0] sm:$0xff]
        %v9188 = vld [vmem:[%s568 + $0x3d8] sm:$0xff]
        %v9189 = vld [vmem:[%s568 + $0x3e0] sm:$0xff]
        %v9190 = vld [vmem:[%s568 + $0x3e8] sm:$0xff]
        %v9191 = vld [vmem:[%s568 + $0x3f0] sm:$0xff]
        %v9192 = vld [vmem:[%s568 + $0x3f8] sm:$0xff]
        %v9193 = vld [vmem:[%s568 + $0x400] sm:$0xff]
        %v9194 = vld [vmem:[%s568 + $0x408] sm:$0xff]
        %v9195 = vld [vmem:[%s568 + $0x410] sm:$0xff]
        %v9196 = vld [vmem:[%s568 + $0x418] sm:$0xff]
        %v9197 = vld [vmem:[%s568 + $0x420] sm:$0xff]
        %v9198 = vld [vmem:[%s568 + $0x428] sm:$0xff]
        %v9199 = vld [vmem:[%s568 + $0x430] sm:$0xff]
        %v9200 = vld [vmem:[%s568 + $0x438] sm:$0xff]
        %v9201 = vld [vmem:[%s568 + $0x440] sm:$0xff]
        %v9202 = vld [vmem:[%s568 + $0x448] sm:$0xff]
        %v9203 = vld [vmem:[%s568 + $0x450] sm:$0xff]
        %v9204 = vld [vmem:[%s568 + $0x458] sm:$0xff]
        %v9205 = vld [vmem:[%s568 + $0x460] sm:$0xff]
        %v9206 = vld [vmem:[%s568 + $0x468] sm:$0xff]
        %v9207 = vld [vmem:[%s568 + $0x470] sm:$0xff]
        %v9208 = vld [vmem:[%s568 + $0x478] sm:$0xff]
        %v9209 = vld [vmem:[%s568 + $0x480] sm:$0xff]
        %v9210 = vld [vmem:[%s568 + $0x488] sm:$0xff]
        %v9211 = vld [vmem:[%s568 + $0x490] sm:$0xff]
        %v9212 = vld [vmem:[%s568 + $0x498] sm:$0xff]
        %v9213 = vld [vmem:[%s568 + $0x4a0] sm:$0xff]
        %v9214 = vld [vmem:[%s568 + $0x4a8] sm:$0xff]
        %v9215 = vld [vmem:[%s568 + $0x4b0] sm:$0xff]
        %v9216 = vld [vmem:[%s568 + $0x4b8] sm:$0xff]
        %v9217 = vld [vmem:[%s568 + $0x4c0] sm:$0xff]
        %v9218 = vld [vmem:[%s568 + $0x4c8] sm:$0xff]
        %v9219 = vld [vmem:[%s568 + $0x4d0] sm:$0xff]
        %v9220 = vld [vmem:[%s568 + $0x4d8] sm:$0xff]
        %v9221 = vld [vmem:[%s568 + $0x4e0] sm:$0xff]
        %v9222 = vld [vmem:[%s568 + $0x4e8] sm:$0xff]
        %v9223 = vld [vmem:[%s568 + $0x4f0] sm:$0xff]
        %v9224 = vld [vmem:[%s568 + $0x4f8] sm:$0xff]
        %v9225 = vld [vmem:[%s568 + $0x500] sm:$0xff]
        %v9226 = vld [vmem:[%s568 + $0x508] sm:$0xff]
        %v9227 = vld [vmem:[%s568 + $0x510] sm:$0xff]
        %v9228 = vld [vmem:[%s568 + $0x518] sm:$0xff]
        %v9229 = vld [vmem:[%s568 + $0x520] sm:$0xff]
        %v9230 = vld [vmem:[%s568 + $0x528] sm:$0xff]
        %v9231 = vld [vmem:[%s568 + $0x530] sm:$0xff]
        %v9232 = vld [vmem:[%s568 + $0x538] sm:$0xff]
        %v9233 = vld [vmem:[%s568 + $0x540] sm:$0xff]
        %v9234 = vld [vmem:[%s568 + $0x548] sm:$0xff]
        %v9235 = vld [vmem:[%s568 + $0x550] sm:$0xff]
        %v9236 = vld [vmem:[%s568 + $0x558] sm:$0xff]
        %v9237 = vld [vmem:[%s568 + $0x560] sm:$0xff]
        %v9238 = vld [vmem:[%s568 + $0x568] sm:$0xff]
        %v9239 = vld [vmem:[%s568 + $0x570] sm:$0xff]
        %v9240 = vld [vmem:[%s568 + $0x578] sm:$0xff]
        %v9241 = vld [vmem:[%s568 + $0x580] sm:$0xff]
        %v9242 = vld [vmem:[%s568 + $0x588] sm:$0xff]
        %v9243 = vld [vmem:[%s568 + $0x590] sm:$0xff]
        %v9244 = vld [vmem:[%s568 + $0x598] sm:$0xff]
        %v9245 = vld [vmem:[%s568 + $0x5a0] sm:$0xff]
        %v9246 = vld [vmem:[%s568 + $0x5a8] sm:$0xff]
        %v9247 = vld [vmem:[%s568 + $0x5b0] sm:$0xff]
        %v9248 = vld [vmem:[%s568 + $0x5b8] sm:$0xff]
        %v9249 = vld [vmem:[%s568 + $0x5c0] sm:$0xff]
        %v9250 = vld [vmem:[%s568 + $0x5c8] sm:$0xff]
        %v9251 = vld [vmem:[%s568 + $0x5d0] sm:$0xff]
        %v9252 = vld [vmem:[%s568 + $0x5d8] sm:$0xff]
        %v9253 = vld [vmem:[%s568 + $0x5e0] sm:$0xff]
        %v9254 = vld [vmem:[%s568 + $0x5e8] sm:$0xff]
        %v9255 = vld [vmem:[%s568 + $0x5f0] sm:$0xff]
        %v9256 = vld [vmem:[%s568 + $0x5f8] sm:$0xff]
        %v9257 = vld [vmem:[%s568 + $0x600] sm:$0xff]
        %v9258 = vld [vmem:[%s568 + $0x608] sm:$0xff]
        %v9259 = vld [vmem:[%s568 + $0x610] sm:$0xff]
        %v9260 = vld [vmem:[%s568 + $0x618] sm:$0xff]
        %v9261 = vld [vmem:[%s568 + $0x620] sm:$0xff]
        %v9262 = vld [vmem:[%s568 + $0x628] sm:$0xff]
        %v9263 = vld [vmem:[%s568 + $0x630] sm:$0xff]
        %v9264 = vld [vmem:[%s568 + $0x638] sm:$0xff]
        %v9265 = vld [vmem:[%s568 + $0x640] sm:$0xff]
        %v9266 = vld [vmem:[%s568 + $0x648] sm:$0xff]
        %v9267 = vld [vmem:[%s568 + $0x650] sm:$0xff]
        %v9268 = vld [vmem:[%s568 + $0x658] sm:$0xff]
        %v9269 = vld [vmem:[%s568 + $0x660] sm:$0xff]
        %v9270 = vld [vmem:[%s568 + $0x668] sm:$0xff]
        %v9271 = vld [vmem:[%s568 + $0x670] sm:$0xff]
        %v9272 = vld [vmem:[%s568 + $0x678] sm:$0xff]
        %v9273 = vld [vmem:[%s568 + $0x680] sm:$0xff]
        %v9274 = vld [vmem:[%s568 + $0x688] sm:$0xff]
        %v9275 = vld [vmem:[%s568 + $0x690] sm:$0xff]
        %v9276 = vld [vmem:[%s568 + $0x698] sm:$0xff]
        %v9277 = vld [vmem:[%s568 + $0x6a0] sm:$0xff]
        %v9278 = vld [vmem:[%s568 + $0x6a8] sm:$0xff]
        %v9279 = vld [vmem:[%s568 + $0x6b0] sm:$0xff]
        %v9280 = vld [vmem:[%s568 + $0x6b8] sm:$0xff]
        %v9281 = vld [vmem:[%s568 + $0x6c0] sm:$0xff]
        %v9282 = vld [vmem:[%s568 + $0x6c8] sm:$0xff]
        %v9283 = vld [vmem:[%s568 + $0x6d0] sm:$0xff]
        %v9284 = vld [vmem:[%s568 + $0x6d8] sm:$0xff]
        %v9285 = vld [vmem:[%s568 + $0x6e0] sm:$0xff]
        %v9286 = vld [vmem:[%s568 + $0x6e8] sm:$0xff]
        %v9287 = vld [vmem:[%s568 + $0x6f0] sm:$0xff]
        %v9288 = vld [vmem:[%s568 + $0x6f8] sm:$0xff]
        %v9289 = vld [vmem:[%s568 + $0x700] sm:$0xff]
        %v9290 = vld [vmem:[%s568 + $0x708] sm:$0xff]
        %v9291 = vld [vmem:[%s568 + $0x710] sm:$0xff]
        %v9292 = vld [vmem:[%s568 + $0x718] sm:$0xff]
        %v9293 = vld [vmem:[%s568 + $0x720] sm:$0xff]
        %v9294 = vld [vmem:[%s568 + $0x728] sm:$0xff]
        %v9295 = vld [vmem:[%s568 + $0x730] sm:$0xff]
        %v9296 = vld [vmem:[%s568 + $0x738] sm:$0xff]
        %v9297 = vld [vmem:[%s568 + $0x740] sm:$0xff]
        %v9298 = vld [vmem:[%s568 + $0x748] sm:$0xff]
        %v9299 = vld [vmem:[%s568 + $0x750] sm:$0xff]
        %v9300 = vld [vmem:[%s568 + $0x758] sm:$0xff]
        %v9301 = vld [vmem:[%s568 + $0x760] sm:$0xff]
        %v9302 = vld [vmem:[%s568 + $0x768] sm:$0xff]
        %v9303 = vld [vmem:[%s568 + $0x770] sm:$0xff]
        %v9304 = vld [vmem:[%s568 + $0x778] sm:$0xff]
        %v9305 = vld [vmem:[%s568 + $0x780] sm:$0xff]
        %v9306 = vld [vmem:[%s568 + $0x788] sm:$0xff]
        %v9307 = vld [vmem:[%s568 + $0x790] sm:$0xff]
        %v9308 = vld [vmem:[%s568 + $0x798] sm:$0xff]
        %v9309 = vld [vmem:[%s568 + $0x7a0] sm:$0xff]
        %v9310 = vld [vmem:[%s568 + $0x7a8] sm:$0xff]
        %v9311 = vld [vmem:[%s568 + $0x7b0] sm:$0xff]
        %v9312 = vld [vmem:[%s568 + $0x7b8] sm:$0xff]
        %v9313 = vld [vmem:[%s568 + $0x7c0] sm:$0xff]
        %v9314 = vld [vmem:[%s568 + $0x7c8] sm:$0xff]
        %v9315 = vld [vmem:[%s568 + $0x7d0] sm:$0xff]
        %v9316 = vld [vmem:[%s568 + $0x7d8] sm:$0xff]
        %v9317 = vld [vmem:[%s568 + $0x7e0] sm:$0xff]
        %v9318 = vld [vmem:[%s568 + $0x7e8] sm:$0xff]
        %v9319 = vld [vmem:[%s568 + $0x7f0] sm:$0xff]
        %v9320 = vld [vmem:[%s568 + $0x7f8] sm:$0xff]
        %v9321 = vld [vmem:[%s577] sm:$0x3]
        %v9323 = vlaneseq
        %v9324 = vshrl.u32 %v9323, 7
        %v9325 = vsub.s32 0, %v9324
        %v9326 = vrot.slane %v9321, %v9325
        %v9327 = vlaneseq
        %v9328 = vshrl.u32 %v9327, 7
        %v9329 = vsub.s32 1, %v9328
        %v9330 = vrot.slane %v9321, %v9329
        %9333 = vmatprep.subr.mxu0 %v9096
        %9334 = vmatpush1.msra.mxu0 %v9095
        %9335 = vmatprep.subr.mxu0 %v9094
        %9336 = vmatpush1.msra.mxu0 %v9093
        %9337 = vmatprep.subr.mxu0 %v9092
        %9338 = vmatpush1.msra.mxu0 %v9091
        %9339 = vmatprep.subr.mxu0 %v9090
        %9340 = vmatpush1.msra.mxu0 %v9089
        %9341 = vmatprep.subr.mxu0 %v9088
        %9342 = vmatpush1.msra.mxu0 %v9087
        %9343 = vmatprep.subr.mxu0 %v9086
        %9344 = vmatpush1.msra.mxu0 %v9085
        %9345 = vmatprep.subr.mxu0 %v9084
        %9346 = vmatpush1.msra.mxu0 %v9083
        %9347 = vmatprep.subr.mxu0 %v9082
        %9348 = vmatpush1.msra.mxu0 %v9081
        %9349 = vmatprep.subr.mxu0 %v9080
        %9350 = vmatpush1.msra.mxu0 %v9079
        %9351 = vmatprep.subr.mxu0 %v9078
        %9352 = vmatpush1.msra.mxu0 %v9077
        %9353 = vmatprep.subr.mxu0 %v9076
        %9354 = vmatpush1.msra.mxu0 %v9075
        %9355 = vmatprep.subr.mxu0 %v9074
        %9356 = vmatpush1.msra.mxu0 %v9073
        %9357 = vmatprep.subr.mxu0 %v9072
        %9358 = vmatpush1.msra.mxu0 %v9071
        %9359 = vmatprep.subr.mxu0 %v9070
        %9360 = vmatpush1.msra.mxu0 %v9069
        %9361 = vmatprep.subr.mxu0 %v9068
        %9362 = vmatpush1.msra.mxu0 %v9067
        %9363 = vmatprep.subr.mxu0 %v9066
        %9364 = vmatpush1.msra.mxu0 %v9065
        %9365 = vmatprep.subr.mxu0 %v9128
        %9366 = vmatpush2.msra.mxu0 %v9127
        %9367 = vmatprep.subr.mxu0 %v9126
        %9368 = vmatpush2.msra.mxu0 %v9125
        %9369 = vmatprep.subr.mxu0 %v9124
        %9370 = vmatpush2.msra.mxu0 %v9123
        %9371 = vmatprep.subr.mxu0 %v9122
        %9372 = vmatpush2.msra.mxu0 %v9121
        %9373 = vmatprep.subr.mxu0 %v9120
        %9374 = vmatpush2.msra.mxu0 %v9119
        %9375 = vmatprep.subr.mxu0 %v9118
        %9376 = vmatpush2.msra.mxu0 %v9117
        %9377 = vmatprep.subr.mxu0 %v9116
        %9378 = vmatpush2.msra.mxu0 %v9115
        %9379 = vmatprep.subr.mxu0 %v9114
        %9380 = vmatpush2.msra.mxu0 %v9113
        %9381 = vmatprep.subr.mxu0 %v9112
        %9382 = vmatpush2.msra.mxu0 %v9111
        %9383 = vmatprep.subr.mxu0 %v9110
        %9384 = vmatpush2.msra.mxu0 %v9109
        %9385 = vmatprep.subr.mxu0 %v9108
        %9386 = vmatpush2.msra.mxu0 %v9107
        %9387 = vmatprep.subr.mxu0 %v9106
        %9388 = vmatpush2.msra.mxu0 %v9105
        %9389 = vmatprep.subr.mxu0 %v9104
        %9390 = vmatpush2.msra.mxu0 %v9103
        %9391 = vmatprep.subr.mxu0 %v9102
        %9392 = vmatpush2.msra.mxu0 %v9101
        %9393 = vmatprep.subr.mxu0 %v9100
        %9394 = vmatpush2.msra.mxu0 %v9099
        %9395 = vmatprep.subr.mxu0 %v9098
        %9396 = vmatpush2.msra.mxu0 %v9097
        %9397 = vmatprep.mubr.f32.mxu0 %v8810
        %9398 = vmatmul.mubr.f32.gmra.mxu0 %v8809
        %v9399 = vpop.f32.mrf.mxu0
        %v9400 = vadd.f32 %v9326, %v9399
        %v9401 = vpop.f32.mrf.mxu0
        %v9402 = vadd.f32 %v9330, %v9401
        %9403 = vmatprep.mubr.f32.mxu0 %v8818
        %9404 = vmatmul.mubr.f32.gmra.mxu0 %v8817
        %v9405 = vpop.f32.mrf.mxu0
        %v9406 = vadd.f32 %v9326, %v9405
        %v9407 = vpop.f32.mrf.mxu0
        %v9408 = vadd.f32 %v9330, %v9407
        %9409 = vmatprep.mubr.f32.mxu0 %v8826
        %9410 = vmatmul.mubr.f32.gmra.mxu0 %v8825
        %v9411 = vpop.f32.mrf.mxu0
        %v9412 = vadd.f32 %v9326, %v9411
        %v9413 = vpop.f32.mrf.mxu0
        %v9414 = vadd.f32 %v9330, %v9413
        %9415 = vmatprep.mubr.f32.mxu0 %v8834
        %9416 = vmatmul.mubr.f32.gmra.mxu0 %v8833
        %v9417 = vpop.f32.mrf.mxu0
        %v9418 = vadd.f32 %v9326, %v9417
        %v9419 = vpop.f32.mrf.mxu0
        %v9420 = vadd.f32 %v9330, %v9419
        %9421 = vmatprep.mubr.f32.mxu0 %v8842
        %9422 = vmatmul.mubr.f32.gmra.mxu0 %v8841
        %v9423 = vpop.f32.mrf.mxu0
        %v9424 = vadd.f32 %v9326, %v9423
        %v9425 = vpop.f32.mrf.mxu0
        %v9426 = vadd.f32 %v9330, %v9425
        %9427 = vmatprep.mubr.f32.mxu0 %v8850
        %9428 = vmatmul.mubr.f32.gmra.mxu0 %v8849
        %v9429 = vpop.f32.mrf.mxu0
        %v9430 = vadd.f32 %v9326, %v9429
        %v9431 = vpop.f32.mrf.mxu0
        %v9432 = vadd.f32 %v9330, %v9431
        %9433 = vmatprep.mubr.f32.mxu0 %v8858
        %9434 = vmatmul.mubr.f32.gmra.mxu0 %v8857
        %v9435 = vpop.f32.mrf.mxu0
        %v9436 = vadd.f32 %v9326, %v9435
        %v9437 = vpop.f32.mrf.mxu0
        %v9438 = vadd.f32 %v9330, %v9437
        %9439 = vmatprep.mubr.f32.mxu0 %v8866
        %9440 = vmatmul.mubr.f32.gmra.mxu0 %v8865
        %v9441 = vpop.f32.mrf.mxu0
        %v9442 = vadd.f32 %v9326, %v9441
        %v9443 = vpop.f32.mrf.mxu0
        %v9444 = vadd.f32 %v9330, %v9443
        %9445 = vmatprep.mubr.f32.mxu0 %v8874
        %9446 = vmatmul.mubr.f32.gmra.mxu0 %v8873
        %v9447 = vpop.f32.mrf.mxu0
        %v9448 = vadd.f32 %v9326, %v9447
        %v9449 = vpop.f32.mrf.mxu0
        %v9450 = vadd.f32 %v9330, %v9449
        %9451 = vmatprep.mubr.f32.mxu0 %v8882
        %9452 = vmatmul.mubr.f32.gmra.mxu0 %v8881
        %v9453 = vpop.f32.mrf.mxu0
        %v9454 = vadd.f32 %v9326, %v9453
        %v9455 = vpop.f32.mrf.mxu0
        %v9456 = vadd.f32 %v9330, %v9455
        %9457 = vmatprep.mubr.f32.mxu0 %v8890
        %9458 = vmatmul.mubr.f32.gmra.mxu0 %v8889
        %v9459 = vpop.f32.mrf.mxu0
        %v9460 = vadd.f32 %v9326, %v9459
        %v9461 = vpop.f32.mrf.mxu0
        %v9462 = vadd.f32 %v9330, %v9461
        %9463 = vmatprep.mubr.f32.mxu0 %v8898
        %9464 = vmatmul.mubr.f32.gmra.mxu0 %v8897
        %v9465 = vpop.f32.mrf.mxu0
        %v9466 = vadd.f32 %v9326, %v9465
        %v9467 = vpop.f32.mrf.mxu0
        %v9468 = vadd.f32 %v9330, %v9467
        %9469 = vmatprep.mubr.f32.mxu0 %v8906
        %9470 = vmatmul.mubr.f32.gmra.mxu0 %v8905
        %v9471 = vpop.f32.mrf.mxu0
        %v9472 = vadd.f32 %v9326, %v9471
        %v9473 = vpop.f32.mrf.mxu0
        %v9474 = vadd.f32 %v9330, %v9473
        %9475 = vmatprep.mubr.f32.mxu0 %v8914
        %9476 = vmatmul.mubr.f32.gmra.mxu0 %v8913
        %v9477 = vpop.f32.mrf.mxu0
        %v9478 = vadd.f32 %v9326, %v9477
        %v9479 = vpop.f32.mrf.mxu0
        %v9480 = vadd.f32 %v9330, %v9479
        %9481 = vmatprep.mubr.f32.mxu0 %v8922
        %9482 = vmatmul.mubr.f32.gmra.mxu0 %v8921
        %v9483 = vpop.f32.mrf.mxu0
        %v9484 = vadd.f32 %v9326, %v9483
        %v9485 = vpop.f32.mrf.mxu0
        %v9486 = vadd.f32 %v9330, %v9485
        %9487 = vmatprep.mubr.f32.mxu0 %v8930
        %9488 = vmatmul.mubr.f32.gmra.mxu0 %v8929
        %v9489 = vpop.f32.mrf.mxu0
        %v9490 = vadd.f32 %v9326, %v9489
        %v9491 = vpop.f32.mrf.mxu0
        %v9492 = vadd.f32 %v9330, %v9491
        %9493 = vmatprep.mubr.f32.mxu0 %v8938
        %9494 = vmatmul.mubr.f32.gmra.mxu0 %v8937
        %v9495 = vpop.f32.mrf.mxu0
        %v9496 = vadd.f32 %v9326, %v9495
        %v9497 = vpop.f32.mrf.mxu0
        %v9498 = vadd.f32 %v9330, %v9497
        %9499 = vmatprep.mubr.f32.mxu0 %v8946
        %9500 = vmatmul.mubr.f32.gmra.mxu0 %v8945
        %v9501 = vpop.f32.mrf.mxu0
        %v9502 = vadd.f32 %v9326, %v9501
        %v9503 = vpop.f32.mrf.mxu0
        %v9504 = vadd.f32 %v9330, %v9503
        %9505 = vmatprep.mubr.f32.mxu0 %v8954
        %9506 = vmatmul.mubr.f32.gmra.mxu0 %v8953
        %v9507 = vpop.f32.mrf.mxu0
        %v9508 = vadd.f32 %v9326, %v9507
        %v9509 = vpop.f32.mrf.mxu0
        %v9510 = vadd.f32 %v9330, %v9509
        %9511 = vmatprep.mubr.f32.mxu0 %v8962
        %9512 = vmatmul.mubr.f32.gmra.mxu0 %v8961
        %v9513 = vpop.f32.mrf.mxu0
        %v9514 = vadd.f32 %v9326, %v9513
        %v9515 = vpop.f32.mrf.mxu0
        %v9516 = vadd.f32 %v9330, %v9515
        %9517 = vmatprep.mubr.f32.mxu0 %v8970
        %9518 = vmatmul.mubr.f32.gmra.mxu0 %v8969
        %v9519 = vpop.f32.mrf.mxu0
        %v9520 = vadd.f32 %v9326, %v9519
        %v9521 = vpop.f32.mrf.mxu0
        %v9522 = vadd.f32 %v9330, %v9521
        %9523 = vmatprep.mubr.f32.mxu0 %v8978
        %9524 = vmatmul.mubr.f32.gmra.mxu0 %v8977
        %v9525 = vpop.f32.mrf.mxu0
        %v9526 = vadd.f32 %v9326, %v9525
        %v9527 = vpop.f32.mrf.mxu0
        %v9528 = vadd.f32 %v9330, %v9527
        %9529 = vmatprep.mubr.f32.mxu0 %v8986
        %9530 = vmatmul.mubr.f32.gmra.mxu0 %v8985
        %v9531 = vpop.f32.mrf.mxu0
        %v9532 = vadd.f32 %v9326, %v9531
        %v9533 = vpop.f32.mrf.mxu0
        %v9534 = vadd.f32 %v9330, %v9533
        %9535 = vmatprep.mubr.f32.mxu0 %v8994
        %9536 = vmatmul.mubr.f32.gmra.mxu0 %v8993
        %v9537 = vpop.f32.mrf.mxu0
        %v9538 = vadd.f32 %v9326, %v9537
        %v9539 = vpop.f32.mrf.mxu0
        %v9540 = vadd.f32 %v9330, %v9539
        %9541 = vmatprep.mubr.f32.mxu0 %v9002
        %9542 = vmatmul.mubr.f32.gmra.mxu0 %v9001
        %v9543 = vpop.f32.mrf.mxu0
        %v9544 = vadd.f32 %v9326, %v9543
        %v9545 = vpop.f32.mrf.mxu0
        %v9546 = vadd.f32 %v9330, %v9545
        %9547 = vmatprep.mubr.f32.mxu0 %v9010
        %9548 = vmatmul.mubr.f32.gmra.mxu0 %v9009
        %v9549 = vpop.f32.mrf.mxu0
        %v9550 = vadd.f32 %v9326, %v9549
        %v9551 = vpop.f32.mrf.mxu0
        %v9552 = vadd.f32 %v9330, %v9551
        %9553 = vmatprep.mubr.f32.mxu0 %v9018
        %9554 = vmatmul.mubr.f32.gmra.mxu0 %v9017
        %v9555 = vpop.f32.mrf.mxu0
        %v9556 = vadd.f32 %v9326, %v9555
        %v9557 = vpop.f32.mrf.mxu0
        %v9558 = vadd.f32 %v9330, %v9557
        %9559 = vmatprep.mubr.f32.mxu0 %v9026
        %9560 = vmatmul.mubr.f32.gmra.mxu0 %v9025
        %v9561 = vpop.f32.mrf.mxu0
        %v9562 = vadd.f32 %v9326, %v9561
        %v9563 = vpop.f32.mrf.mxu0
        %v9564 = vadd.f32 %v9330, %v9563
        %9565 = vmatprep.mubr.f32.mxu0 %v9034
        %9566 = vmatmul.mubr.f32.gmra.mxu0 %v9033
        %v9567 = vpop.f32.mrf.mxu0
        %v9568 = vadd.f32 %v9326, %v9567
        %v9569 = vpop.f32.mrf.mxu0
        %v9570 = vadd.f32 %v9330, %v9569
        %9571 = vmatprep.mubr.f32.mxu0 %v9042
        %9572 = vmatmul.mubr.f32.gmra.mxu0 %v9041
        %v9573 = vpop.f32.mrf.mxu0
        %v9574 = vadd.f32 %v9326, %v9573
        %v9575 = vpop.f32.mrf.mxu0
        %v9576 = vadd.f32 %v9330, %v9575
        %9577 = vmatprep.mubr.f32.mxu0 %v9050
        %9578 = vmatmul.mubr.f32.gmra.mxu0 %v9049
        %v9579 = vpop.f32.mrf.mxu0
        %v9580 = vadd.f32 %v9326, %v9579
        %v9581 = vpop.f32.mrf.mxu0
        %v9582 = vadd.f32 %v9330, %v9581
        %9583 = vmatprep.mubr.f32.mxu0 %v9058
        %9584 = vmatmul.mubr.f32.gmra.mxu0 %v9057
        %v9585 = vpop.f32.mrf.mxu0
        %v9586 = vadd.f32 %v9326, %v9585
        %v9587 = vpop.f32.mrf.mxu0
        %v9588 = vadd.f32 %v9330, %v9587
        %9589 = vdwg.mxu0
        %9590 = vmatprep.subr.mxu0 %v9160
        %9591 = vmatpush1.msra.mxu0 %v9159
        %9592 = vmatprep.subr.mxu0 %v9158
        %9593 = vmatpush1.msra.mxu0 %v9157
        %9594 = vmatprep.subr.mxu0 %v9156
        %9595 = vmatpush1.msra.mxu0 %v9155
        %9596 = vmatprep.subr.mxu0 %v9154
        %9597 = vmatpush1.msra.mxu0 %v9153
        %9598 = vmatprep.subr.mxu0 %v9152
        %9599 = vmatpush1.msra.mxu0 %v9151
        %9600 = vmatprep.subr.mxu0 %v9150
        %9601 = vmatpush1.msra.mxu0 %v9149
        %9602 = vmatprep.subr.mxu0 %v9148
        %9603 = vmatpush1.msra.mxu0 %v9147
        %9604 = vmatprep.subr.mxu0 %v9146
        %9605 = vmatpush1.msra.mxu0 %v9145
        %9606 = vmatprep.subr.mxu0 %v9144
        %9607 = vmatpush1.msra.mxu0 %v9143
        %9608 = vmatprep.subr.mxu0 %v9142
        %9609 = vmatpush1.msra.mxu0 %v9141
        %9610 = vmatprep.subr.mxu0 %v9140
        %9611 = vmatpush1.msra.mxu0 %v9139
        %9612 = vmatprep.subr.mxu0 %v9138
        %9613 = vmatpush1.msra.mxu0 %v9137
        %9614 = vmatprep.subr.mxu0 %v9136
        %9615 = vmatpush1.msra.mxu0 %v9135
        %9616 = vmatprep.subr.mxu0 %v9134
        %9617 = vmatpush1.msra.mxu0 %v9133
        %9618 = vmatprep.subr.mxu0 %v9132
        %9619 = vmatpush1.msra.mxu0 %v9131
        %9620 = vmatprep.subr.mxu0 %v9130
        %9621 = vmatpush1.msra.mxu0 %v9129
        %9622 = vmatprep.subr.mxu0 %v9192
        %9623 = vmatpush2.msra.mxu0 %v9191
        %9624 = vmatprep.subr.mxu0 %v9190
        %9625 = vmatpush2.msra.mxu0 %v9189
        %9626 = vmatprep.subr.mxu0 %v9188
        %9627 = vmatpush2.msra.mxu0 %v9187
        %9628 = vmatprep.subr.mxu0 %v9186
        %9629 = vmatpush2.msra.mxu0 %v9185
        %9630 = vmatprep.subr.mxu0 %v9184
        %9631 = vmatpush2.msra.mxu0 %v9183
        %9632 = vmatprep.subr.mxu0 %v9182
        %9633 = vmatpush2.msra.mxu0 %v9181
        %9634 = vmatprep.subr.mxu0 %v9180
        %9635 = vmatpush2.msra.mxu0 %v9179
        %9636 = vmatprep.subr.mxu0 %v9178
        %9637 = vmatpush2.msra.mxu0 %v9177
        %9638 = vmatprep.subr.mxu0 %v9176
        %9639 = vmatpush2.msra.mxu0 %v9175
        %9640 = vmatprep.subr.mxu0 %v9174
        %9641 = vmatpush2.msra.mxu0 %v9173
        %9642 = vmatprep.subr.mxu0 %v9172
        %9643 = vmatpush2.msra.mxu0 %v9171
        %9644 = vmatprep.subr.mxu0 %v9170
        %9645 = vmatpush2.msra.mxu0 %v9169
        %9646 = vmatprep.subr.mxu0 %v9168
        %9647 = vmatpush2.msra.mxu0 %v9167
        %9648 = vmatprep.subr.mxu0 %v9166
        %9649 = vmatpush2.msra.mxu0 %v9165
        %9650 = vmatprep.subr.mxu0 %v9164
        %9651 = vmatpush2.msra.mxu0 %v9163
        %9652 = vmatprep.subr.mxu0 %v9162
        %9653 = vmatpush2.msra.mxu0 %v9161
        %9654 = vmatprep.mubr.f32.mxu0 %v8812
        %9655 = vmatmul.mubr.f32.gmra.mxu0 %v8811
        %v9656 = vpop.f32.mrf.mxu0
        %v9657 = vadd.f32 %v9400, %v9656
        %v9658 = vpop.f32.mrf.mxu0
        %v9659 = vadd.f32 %v9402, %v9658
        %9660 = vmatprep.mubr.f32.mxu0 %v8820
        %9661 = vmatmul.mubr.f32.gmra.mxu0 %v8819
        %v9662 = vpop.f32.mrf.mxu0
        %v9663 = vadd.f32 %v9406, %v9662
        %v9664 = vpop.f32.mrf.mxu0
        %v9665 = vadd.f32 %v9408, %v9664
        %9666 = vmatprep.mubr.f32.mxu0 %v8828
        %9667 = vmatmul.mubr.f32.gmra.mxu0 %v8827
        %v9668 = vpop.f32.mrf.mxu0
        %v9669 = vadd.f32 %v9412, %v9668
        %v9670 = vpop.f32.mrf.mxu0
        %v9671 = vadd.f32 %v9414, %v9670
        %9672 = vmatprep.mubr.f32.mxu0 %v8836
        %9673 = vmatmul.mubr.f32.gmra.mxu0 %v8835
        %v9674 = vpop.f32.mrf.mxu0
        %v9675 = vadd.f32 %v9418, %v9674
        %v9676 = vpop.f32.mrf.mxu0
        %v9677 = vadd.f32 %v9420, %v9676
        %9678 = vmatprep.mubr.f32.mxu0 %v8844
        %9679 = vmatmul.mubr.f32.gmra.mxu0 %v8843
        %v9680 = vpop.f32.mrf.mxu0
        %v9681 = vadd.f32 %v9424, %v9680
        %v9682 = vpop.f32.mrf.mxu0
        %v9683 = vadd.f32 %v9426, %v9682
        %9684 = vmatprep.mubr.f32.mxu0 %v8852
        %9685 = vmatmul.mubr.f32.gmra.mxu0 %v8851
        %v9686 = vpop.f32.mrf.mxu0
        %v9687 = vadd.f32 %v9430, %v9686
        %v9688 = vpop.f32.mrf.mxu0
        %v9689 = vadd.f32 %v9432, %v9688
        %9690 = vmatprep.mubr.f32.mxu0 %v8860
        %9691 = vmatmul.mubr.f32.gmra.mxu0 %v8859
        %v9692 = vpop.f32.mrf.mxu0
        %v9693 = vadd.f32 %v9436, %v9692
        %v9694 = vpop.f32.mrf.mxu0
        %v9695 = vadd.f32 %v9438, %v9694
        %9696 = vmatprep.mubr.f32.mxu0 %v8868
        %9697 = vmatmul.mubr.f32.gmra.mxu0 %v8867
        %v9698 = vpop.f32.mrf.mxu0
        %v9699 = vadd.f32 %v9442, %v9698
        %v9700 = vpop.f32.mrf.mxu0
        %v9701 = vadd.f32 %v9444, %v9700
        %9702 = vmatprep.mubr.f32.mxu0 %v8876
        %9703 = vmatmul.mubr.f32.gmra.mxu0 %v8875
        %v9704 = vpop.f32.mrf.mxu0
        %v9705 = vadd.f32 %v9448, %v9704
        %v9706 = vpop.f32.mrf.mxu0
        %v9707 = vadd.f32 %v9450, %v9706
        %9708 = vmatprep.mubr.f32.mxu0 %v8884
        %9709 = vmatmul.mubr.f32.gmra.mxu0 %v8883
        %v9710 = vpop.f32.mrf.mxu0
        %v9711 = vadd.f32 %v9454, %v9710
        %v9712 = vpop.f32.mrf.mxu0
        %v9713 = vadd.f32 %v9456, %v9712
        %9714 = vmatprep.mubr.f32.mxu0 %v8892
        %9715 = vmatmul.mubr.f32.gmra.mxu0 %v8891
        %v9716 = vpop.f32.mrf.mxu0
        %v9717 = vadd.f32 %v9460, %v9716
        %v9718 = vpop.f32.mrf.mxu0
        %v9719 = vadd.f32 %v9462, %v9718
        %9720 = vmatprep.mubr.f32.mxu0 %v8900
        %9721 = vmatmul.mubr.f32.gmra.mxu0 %v8899
        %v9722 = vpop.f32.mrf.mxu0
        %v9723 = vadd.f32 %v9466, %v9722
        %v9724 = vpop.f32.mrf.mxu0
        %v9725 = vadd.f32 %v9468, %v9724
        %9726 = vmatprep.mubr.f32.mxu0 %v8908
        %9727 = vmatmul.mubr.f32.gmra.mxu0 %v8907
        %v9728 = vpop.f32.mrf.mxu0
        %v9729 = vadd.f32 %v9472, %v9728
        %v9730 = vpop.f32.mrf.mxu0
        %v9731 = vadd.f32 %v9474, %v9730
        %9732 = vmatprep.mubr.f32.mxu0 %v8916
        %9733 = vmatmul.mubr.f32.gmra.mxu0 %v8915
        %v9734 = vpop.f32.mrf.mxu0
        %v9735 = vadd.f32 %v9478, %v9734
        %v9736 = vpop.f32.mrf.mxu0
        %v9737 = vadd.f32 %v9480, %v9736
        %9738 = vmatprep.mubr.f32.mxu0 %v8924
        %9739 = vmatmul.mubr.f32.gmra.mxu0 %v8923
        %v9740 = vpop.f32.mrf.mxu0
        %v9741 = vadd.f32 %v9484, %v9740
        %v9742 = vpop.f32.mrf.mxu0
        %v9743 = vadd.f32 %v9486, %v9742
        %9744 = vmatprep.mubr.f32.mxu0 %v8932
        %9745 = vmatmul.mubr.f32.gmra.mxu0 %v8931
        %v9746 = vpop.f32.mrf.mxu0
        %v9747 = vadd.f32 %v9490, %v9746
        %v9748 = vpop.f32.mrf.mxu0
        %v9749 = vadd.f32 %v9492, %v9748
        %9750 = vmatprep.mubr.f32.mxu0 %v8940
        %9751 = vmatmul.mubr.f32.gmra.mxu0 %v8939
        %v9752 = vpop.f32.mrf.mxu0
        %v9753 = vadd.f32 %v9496, %v9752
        %v9754 = vpop.f32.mrf.mxu0
        %v9755 = vadd.f32 %v9498, %v9754
        %9756 = vmatprep.mubr.f32.mxu0 %v8948
        %9757 = vmatmul.mubr.f32.gmra.mxu0 %v8947
        %v9758 = vpop.f32.mrf.mxu0
        %v9759 = vadd.f32 %v9502, %v9758
        %v9760 = vpop.f32.mrf.mxu0
        %v9761 = vadd.f32 %v9504, %v9760
        %9762 = vmatprep.mubr.f32.mxu0 %v8956
        %9763 = vmatmul.mubr.f32.gmra.mxu0 %v8955
        %v9764 = vpop.f32.mrf.mxu0
        %v9765 = vadd.f32 %v9508, %v9764
        %v9766 = vpop.f32.mrf.mxu0
        %v9767 = vadd.f32 %v9510, %v9766
        %9768 = vmatprep.mubr.f32.mxu0 %v8964
        %9769 = vmatmul.mubr.f32.gmra.mxu0 %v8963
        %v9770 = vpop.f32.mrf.mxu0
        %v9771 = vadd.f32 %v9514, %v9770
        %v9772 = vpop.f32.mrf.mxu0
        %v9773 = vadd.f32 %v9516, %v9772
        %9774 = vmatprep.mubr.f32.mxu0 %v8972
        %9775 = vmatmul.mubr.f32.gmra.mxu0 %v8971
        %v9776 = vpop.f32.mrf.mxu0
        %v9777 = vadd.f32 %v9520, %v9776
        %v9778 = vpop.f32.mrf.mxu0
        %v9779 = vadd.f32 %v9522, %v9778
        %9780 = vmatprep.mubr.f32.mxu0 %v8980
        %9781 = vmatmul.mubr.f32.gmra.mxu0 %v8979
        %v9782 = vpop.f32.mrf.mxu0
        %v9783 = vadd.f32 %v9526, %v9782
        %v9784 = vpop.f32.mrf.mxu0
        %v9785 = vadd.f32 %v9528, %v9784
        %9786 = vmatprep.mubr.f32.mxu0 %v8988
        %9787 = vmatmul.mubr.f32.gmra.mxu0 %v8987
        %v9788 = vpop.f32.mrf.mxu0
        %v9789 = vadd.f32 %v9532, %v9788
        %v9790 = vpop.f32.mrf.mxu0
        %v9791 = vadd.f32 %v9534, %v9790
        %9792 = vmatprep.mubr.f32.mxu0 %v8996
        %9793 = vmatmul.mubr.f32.gmra.mxu0 %v8995
        %v9794 = vpop.f32.mrf.mxu0
        %v9795 = vadd.f32 %v9538, %v9794
        %v9796 = vpop.f32.mrf.mxu0
        %v9797 = vadd.f32 %v9540, %v9796
        %9798 = vmatprep.mubr.f32.mxu0 %v9004
        %9799 = vmatmul.mubr.f32.gmra.mxu0 %v9003
        %v9800 = vpop.f32.mrf.mxu0
        %v9801 = vadd.f32 %v9544, %v9800
        %v9802 = vpop.f32.mrf.mxu0
        %v9803 = vadd.f32 %v9546, %v9802
        %9804 = vmatprep.mubr.f32.mxu0 %v9012
        %9805 = vmatmul.mubr.f32.gmra.mxu0 %v9011
        %v9806 = vpop.f32.mrf.mxu0
        %v9807 = vadd.f32 %v9550, %v9806
        %v9808 = vpop.f32.mrf.mxu0
        %v9809 = vadd.f32 %v9552, %v9808
        %9810 = vmatprep.mubr.f32.mxu0 %v9020
        %9811 = vmatmul.mubr.f32.gmra.mxu0 %v9019
        %v9812 = vpop.f32.mrf.mxu0
        %v9813 = vadd.f32 %v9556, %v9812
        %v9814 = vpop.f32.mrf.mxu0
        %v9815 = vadd.f32 %v9558, %v9814
        %9816 = vmatprep.mubr.f32.mxu0 %v9028
        %9817 = vmatmul.mubr.f32.gmra.mxu0 %v9027
        %v9818 = vpop.f32.mrf.mxu0
        %v9819 = vadd.f32 %v9562, %v9818
        %v9820 = vpop.f32.mrf.mxu0
        %v9821 = vadd.f32 %v9564, %v9820
        %9822 = vmatprep.mubr.f32.mxu0 %v9036
        %9823 = vmatmul.mubr.f32.gmra.mxu0 %v9035
        %v9824 = vpop.f32.mrf.mxu0
        %v9825 = vadd.f32 %v9568, %v9824
        %v9826 = vpop.f32.mrf.mxu0
        %v9827 = vadd.f32 %v9570, %v9826
        %9828 = vmatprep.mubr.f32.mxu0 %v9044
        %9829 = vmatmul.mubr.f32.gmra.mxu0 %v9043
        %v9830 = vpop.f32.mrf.mxu0
        %v9831 = vadd.f32 %v9574, %v9830
        %v9832 = vpop.f32.mrf.mxu0
        %v9833 = vadd.f32 %v9576, %v9832
        %9834 = vmatprep.mubr.f32.mxu0 %v9052
        %9835 = vmatmul.mubr.f32.gmra.mxu0 %v9051
        %v9836 = vpop.f32.mrf.mxu0
        %v9837 = vadd.f32 %v9580, %v9836
        %v9838 = vpop.f32.mrf.mxu0
        %v9839 = vadd.f32 %v9582, %v9838
        %9840 = vmatprep.mubr.f32.mxu0 %v9060
        %9841 = vmatmul.mubr.f32.gmra.mxu0 %v9059
        %v9842 = vpop.f32.mrf.mxu0
        %v9843 = vadd.f32 %v9586, %v9842
        %v9844 = vpop.f32.mrf.mxu0
        %v9845 = vadd.f32 %v9588, %v9844
        %9846 = vdwg.mxu0
        %9847 = vmatprep.subr.mxu0 %v9224
        %9848 = vmatpush1.msra.mxu0 %v9223
        %9849 = vmatprep.subr.mxu0 %v9222
        %9850 = vmatpush1.msra.mxu0 %v9221
        %9851 = vmatprep.subr.mxu0 %v9220
        %9852 = vmatpush1.msra.mxu0 %v9219
        %9853 = vmatprep.subr.mxu0 %v9218
        %9854 = vmatpush1.msra.mxu0 %v9217
        %9855 = vmatprep.subr.mxu0 %v9216
        %9856 = vmatpush1.msra.mxu0 %v9215
        %9857 = vmatprep.subr.mxu0 %v9214
        %9858 = vmatpush1.msra.mxu0 %v9213
        %9859 = vmatprep.subr.mxu0 %v9212
        %9860 = vmatpush1.msra.mxu0 %v9211
        %9861 = vmatprep.subr.mxu0 %v9210
        %9862 = vmatpush1.msra.mxu0 %v9209
        %9863 = vmatprep.subr.mxu0 %v9208
        %9864 = vmatpush1.msra.mxu0 %v9207
        %9865 = vmatprep.subr.mxu0 %v9206
        %9866 = vmatpush1.msra.mxu0 %v9205
        %9867 = vmatprep.subr.mxu0 %v9204
        %9868 = vmatpush1.msra.mxu0 %v9203
        %9869 = vmatprep.subr.mxu0 %v9202
        %9870 = vmatpush1.msra.mxu0 %v9201
        %9871 = vmatprep.subr.mxu0 %v9200
        %9872 = vmatpush1.msra.mxu0 %v9199
        %9873 = vmatprep.subr.mxu0 %v9198
        %9874 = vmatpush1.msra.mxu0 %v9197
        %9875 = vmatprep.subr.mxu0 %v9196
        %9876 = vmatpush1.msra.mxu0 %v9195
        %9877 = vmatprep.subr.mxu0 %v9194
        %9878 = vmatpush1.msra.mxu0 %v9193
        %9879 = vmatprep.subr.mxu0 %v9256
        %9880 = vmatpush2.msra.mxu0 %v9255
        %9881 = vmatprep.subr.mxu0 %v9254
        %9882 = vmatpush2.msra.mxu0 %v9253
        %9883 = vmatprep.subr.mxu0 %v9252
        %9884 = vmatpush2.msra.mxu0 %v9251
        %9885 = vmatprep.subr.mxu0 %v9250
        %9886 = vmatpush2.msra.mxu0 %v9249
        %9887 = vmatprep.subr.mxu0 %v9248
        %9888 = vmatpush2.msra.mxu0 %v9247
        %9889 = vmatprep.subr.mxu0 %v9246
        %9890 = vmatpush2.msra.mxu0 %v9245
        %9891 = vmatprep.subr.mxu0 %v9244
        %9892 = vmatpush2.msra.mxu0 %v9243
        %9893 = vmatprep.subr.mxu0 %v9242
        %9894 = vmatpush2.msra.mxu0 %v9241
        %9895 = vmatprep.subr.mxu0 %v9240
        %9896 = vmatpush2.msra.mxu0 %v9239
        %9897 = vmatprep.subr.mxu0 %v9238
        %9898 = vmatpush2.msra.mxu0 %v9237
        %9899 = vmatprep.subr.mxu0 %v9236
        %9900 = vmatpush2.msra.mxu0 %v9235
        %9901 = vmatprep.subr.mxu0 %v9234
        %9902 = vmatpush2.msra.mxu0 %v9233
        %9903 = vmatprep.subr.mxu0 %v9232
        %9904 = vmatpush2.msra.mxu0 %v9231
        %9905 = vmatprep.subr.mxu0 %v9230
        %9906 = vmatpush2.msra.mxu0 %v9229
        %9907 = vmatprep.subr.mxu0 %v9228
        %9908 = vmatpush2.msra.mxu0 %v9227
        %9909 = vmatprep.subr.mxu0 %v9226
        %9910 = vmatpush2.msra.mxu0 %v9225
        %9911 = vmatprep.mubr.f32.mxu0 %v8814
        %9912 = vmatmul.mubr.f32.gmra.mxu0 %v8813
        %v9913 = vpop.f32.mrf.mxu0
        %v9914 = vadd.f32 %v9657, %v9913
        %v9915 = vpop.f32.mrf.mxu0
        %v9916 = vadd.f32 %v9659, %v9915
        %9917 = vmatprep.mubr.f32.mxu0 %v8822
        %9918 = vmatmul.mubr.f32.gmra.mxu0 %v8821
        %v9919 = vpop.f32.mrf.mxu0
        %v9920 = vadd.f32 %v9663, %v9919
        %v9921 = vpop.f32.mrf.mxu0
        %v9922 = vadd.f32 %v9665, %v9921
        %9923 = vmatprep.mubr.f32.mxu0 %v8830
        %9924 = vmatmul.mubr.f32.gmra.mxu0 %v8829
        %v9925 = vpop.f32.mrf.mxu0
        %v9926 = vadd.f32 %v9669, %v9925
        %v9927 = vpop.f32.mrf.mxu0
        %v9928 = vadd.f32 %v9671, %v9927
        %9929 = vmatprep.mubr.f32.mxu0 %v8838
        %9930 = vmatmul.mubr.f32.gmra.mxu0 %v8837
        %v9931 = vpop.f32.mrf.mxu0
        %v9932 = vadd.f32 %v9675, %v9931
        %v9933 = vpop.f32.mrf.mxu0
        %v9934 = vadd.f32 %v9677, %v9933
        %9935 = vmatprep.mubr.f32.mxu0 %v8846
        %9936 = vmatmul.mubr.f32.gmra.mxu0 %v8845
        %v9937 = vpop.f32.mrf.mxu0
        %v9938 = vadd.f32 %v9681, %v9937
        %v9939 = vpop.f32.mrf.mxu0
        %v9940 = vadd.f32 %v9683, %v9939
        %9941 = vmatprep.mubr.f32.mxu0 %v8854
        %9942 = vmatmul.mubr.f32.gmra.mxu0 %v8853
        %v9943 = vpop.f32.mrf.mxu0
        %v9944 = vadd.f32 %v9687, %v9943
        %v9945 = vpop.f32.mrf.mxu0
        %v9946 = vadd.f32 %v9689, %v9945
        %9947 = vmatprep.mubr.f32.mxu0 %v8862
        %9948 = vmatmul.mubr.f32.gmra.mxu0 %v8861
        %v9949 = vpop.f32.mrf.mxu0
        %v9950 = vadd.f32 %v9693, %v9949
        %v9951 = vpop.f32.mrf.mxu0
        %v9952 = vadd.f32 %v9695, %v9951
        %9953 = vmatprep.mubr.f32.mxu0 %v8870
        %9954 = vmatmul.mubr.f32.gmra.mxu0 %v8869
        %v9955 = vpop.f32.mrf.mxu0
        %v9956 = vadd.f32 %v9699, %v9955
        %v9957 = vpop.f32.mrf.mxu0
        %v9958 = vadd.f32 %v9701, %v9957
        %9959 = vmatprep.mubr.f32.mxu0 %v8878
        %9960 = vmatmul.mubr.f32.gmra.mxu0 %v8877
        %v9961 = vpop.f32.mrf.mxu0
        %v9962 = vadd.f32 %v9705, %v9961
        %v9963 = vpop.f32.mrf.mxu0
        %v9964 = vadd.f32 %v9707, %v9963
        %9965 = vmatprep.mubr.f32.mxu0 %v8886
        %9966 = vmatmul.mubr.f32.gmra.mxu0 %v8885
        %v9967 = vpop.f32.mrf.mxu0
        %v9968 = vadd.f32 %v9711, %v9967
        %v9969 = vpop.f32.mrf.mxu0
        %v9970 = vadd.f32 %v9713, %v9969
        %9971 = vmatprep.mubr.f32.mxu0 %v8894
        %9972 = vmatmul.mubr.f32.gmra.mxu0 %v8893
        %v9973 = vpop.f32.mrf.mxu0
        %v9974 = vadd.f32 %v9717, %v9973
        %v9975 = vpop.f32.mrf.mxu0
        %v9976 = vadd.f32 %v9719, %v9975
        %9977 = vmatprep.mubr.f32.mxu0 %v8902
        %9978 = vmatmul.mubr.f32.gmra.mxu0 %v8901
        %v9979 = vpop.f32.mrf.mxu0
        %v9980 = vadd.f32 %v9723, %v9979
        %v9981 = vpop.f32.mrf.mxu0
        %v9982 = vadd.f32 %v9725, %v9981
        %9983 = vmatprep.mubr.f32.mxu0 %v8910
        %9984 = vmatmul.mubr.f32.gmra.mxu0 %v8909
        %v9985 = vpop.f32.mrf.mxu0
        %v9986 = vadd.f32 %v9729, %v9985
        %v9987 = vpop.f32.mrf.mxu0
        %v9988 = vadd.f32 %v9731, %v9987
        %9989 = vmatprep.mubr.f32.mxu0 %v8918
        %9990 = vmatmul.mubr.f32.gmra.mxu0 %v8917
        %v9991 = vpop.f32.mrf.mxu0
        %v9992 = vadd.f32 %v9735, %v9991
        %v9993 = vpop.f32.mrf.mxu0
        %v9994 = vadd.f32 %v9737, %v9993
        %9995 = vmatprep.mubr.f32.mxu0 %v8926
        %9996 = vmatmul.mubr.f32.gmra.mxu0 %v8925
        %v9997 = vpop.f32.mrf.mxu0
        %v9998 = vadd.f32 %v9741, %v9997
        %v9999 = vpop.f32.mrf.mxu0
        %v10000 = vadd.f32 %v9743, %v9999
        %10001 = vmatprep.mubr.f32.mxu0 %v8934
        %10002 = vmatmul.mubr.f32.gmra.mxu0 %v8933
        %v10003 = vpop.f32.mrf.mxu0
        %v10004 = vadd.f32 %v9747, %v10003
        %v10005 = vpop.f32.mrf.mxu0
        %v10006 = vadd.f32 %v9749, %v10005
        %10007 = vmatprep.mubr.f32.mxu0 %v8942
        %10008 = vmatmul.mubr.f32.gmra.mxu0 %v8941
        %v10009 = vpop.f32.mrf.mxu0
        %v10010 = vadd.f32 %v9753, %v10009
        %v10011 = vpop.f32.mrf.mxu0
        %v10012 = vadd.f32 %v9755, %v10011
        %10013 = vmatprep.mubr.f32.mxu0 %v8950
        %10014 = vmatmul.mubr.f32.gmra.mxu0 %v8949
        %v10015 = vpop.f32.mrf.mxu0
        %v10016 = vadd.f32 %v9759, %v10015
        %v10017 = vpop.f32.mrf.mxu0
        %v10018 = vadd.f32 %v9761, %v10017
        %10019 = vmatprep.mubr.f32.mxu0 %v8958
        %10020 = vmatmul.mubr.f32.gmra.mxu0 %v8957
        %v10021 = vpop.f32.mrf.mxu0
        %v10022 = vadd.f32 %v9765, %v10021
        %v10023 = vpop.f32.mrf.mxu0
        %v10024 = vadd.f32 %v9767, %v10023
        %10025 = vmatprep.mubr.f32.mxu0 %v8966
        %10026 = vmatmul.mubr.f32.gmra.mxu0 %v8965
        %v10027 = vpop.f32.mrf.mxu0
        %v10028 = vadd.f32 %v9771, %v10027
        %v10029 = vpop.f32.mrf.mxu0
        %v10030 = vadd.f32 %v9773, %v10029
        %10031 = vmatprep.mubr.f32.mxu0 %v8974
        %10032 = vmatmul.mubr.f32.gmra.mxu0 %v8973
        %v10033 = vpop.f32.mrf.mxu0
        %v10034 = vadd.f32 %v9777, %v10033
        %v10035 = vpop.f32.mrf.mxu0
        %v10036 = vadd.f32 %v9779, %v10035
        %10037 = vmatprep.mubr.f32.mxu0 %v8982
        %10038 = vmatmul.mubr.f32.gmra.mxu0 %v8981
        %v10039 = vpop.f32.mrf.mxu0
        %v10040 = vadd.f32 %v9783, %v10039
        %v10041 = vpop.f32.mrf.mxu0
        %v10042 = vadd.f32 %v9785, %v10041
        %10043 = vmatprep.mubr.f32.mxu0 %v8990
        %10044 = vmatmul.mubr.f32.gmra.mxu0 %v8989
        %v10045 = vpop.f32.mrf.mxu0
        %v10046 = vadd.f32 %v9789, %v10045
        %v10047 = vpop.f32.mrf.mxu0
        %v10048 = vadd.f32 %v9791, %v10047
        %10049 = vmatprep.mubr.f32.mxu0 %v8998
        %10050 = vmatmul.mubr.f32.gmra.mxu0 %v8997
        %v10051 = vpop.f32.mrf.mxu0
        %v10052 = vadd.f32 %v9795, %v10051
        %v10053 = vpop.f32.mrf.mxu0
        %v10054 = vadd.f32 %v9797, %v10053
        %10055 = vmatprep.mubr.f32.mxu0 %v9006
        %10056 = vmatmul.mubr.f32.gmra.mxu0 %v9005
        %v10057 = vpop.f32.mrf.mxu0
        %v10058 = vadd.f32 %v9801, %v10057
        %v10059 = vpop.f32.mrf.mxu0
        %v10060 = vadd.f32 %v9803, %v10059
        %10061 = vmatprep.mubr.f32.mxu0 %v9014
        %10062 = vmatmul.mubr.f32.gmra.mxu0 %v9013
        %v10063 = vpop.f32.mrf.mxu0
        %v10064 = vadd.f32 %v9807, %v10063
        %v10065 = vpop.f32.mrf.mxu0
        %v10066 = vadd.f32 %v9809, %v10065
        %10067 = vmatprep.mubr.f32.mxu0 %v9022
        %10068 = vmatmul.mubr.f32.gmra.mxu0 %v9021
        %v10069 = vpop.f32.mrf.mxu0
        %v10070 = vadd.f32 %v9813, %v10069
        %v10071 = vpop.f32.mrf.mxu0
        %v10072 = vadd.f32 %v9815, %v10071
        %10073 = vmatprep.mubr.f32.mxu0 %v9030
        %10074 = vmatmul.mubr.f32.gmra.mxu0 %v9029
        %v10075 = vpop.f32.mrf.mxu0
        %v10076 = vadd.f32 %v9819, %v10075
        %v10077 = vpop.f32.mrf.mxu0
        %v10078 = vadd.f32 %v9821, %v10077
        %10079 = vmatprep.mubr.f32.mxu0 %v9038
        %10080 = vmatmul.mubr.f32.gmra.mxu0 %v9037
        %v10081 = vpop.f32.mrf.mxu0
        %v10082 = vadd.f32 %v9825, %v10081
        %v10083 = vpop.f32.mrf.mxu0
        %v10084 = vadd.f32 %v9827, %v10083
        %10085 = vmatprep.mubr.f32.mxu0 %v9046
        %10086 = vmatmul.mubr.f32.gmra.mxu0 %v9045
        %v10087 = vpop.f32.mrf.mxu0
        %v10088 = vadd.f32 %v9831, %v10087
        %v10089 = vpop.f32.mrf.mxu0
        %v10090 = vadd.f32 %v9833, %v10089
        %10091 = vmatprep.mubr.f32.mxu0 %v9054
        %10092 = vmatmul.mubr.f32.gmra.mxu0 %v9053
        %v10093 = vpop.f32.mrf.mxu0
        %v10094 = vadd.f32 %v9837, %v10093
        %v10095 = vpop.f32.mrf.mxu0
        %v10096 = vadd.f32 %v9839, %v10095
        %10097 = vmatprep.mubr.f32.mxu0 %v9062
        %10098 = vmatmul.mubr.f32.gmra.mxu0 %v9061
        %v10099 = vpop.f32.mrf.mxu0
        %v10100 = vadd.f32 %v9843, %v10099
        %v10101 = vpop.f32.mrf.mxu0
        %v10102 = vadd.f32 %v9845, %v10101
        %10103 = vdwg.mxu0
        %10104 = vmatprep.subr.mxu0 %v9288
        %10105 = vmatpush1.msra.mxu0 %v9287
        %10106 = vmatprep.subr.mxu0 %v9286
        %10107 = vmatpush1.msra.mxu0 %v9285
        %10108 = vmatprep.subr.mxu0 %v9284
        %10109 = vmatpush1.msra.mxu0 %v9283
        %10110 = vmatprep.subr.mxu0 %v9282
        %10111 = vmatpush1.msra.mxu0 %v9281
        %10112 = vmatprep.subr.mxu0 %v9280
        %10113 = vmatpush1.msra.mxu0 %v9279
        %10114 = vmatprep.subr.mxu0 %v9278
        %10115 = vmatpush1.msra.mxu0 %v9277
        %10116 = vmatprep.subr.mxu0 %v9276
        %10117 = vmatpush1.msra.mxu0 %v9275
        %10118 = vmatprep.subr.mxu0 %v9274
        %10119 = vmatpush1.msra.mxu0 %v9273
        %10120 = vmatprep.subr.mxu0 %v9272
        %10121 = vmatpush1.msra.mxu0 %v9271
        %10122 = vmatprep.subr.mxu0 %v9270
        %10123 = vmatpush1.msra.mxu0 %v9269
        %10124 = vmatprep.subr.mxu0 %v9268
        %10125 = vmatpush1.msra.mxu0 %v9267
        %10126 = vmatprep.subr.mxu0 %v9266
        %10127 = vmatpush1.msra.mxu0 %v9265
        %10128 = vmatprep.subr.mxu0 %v9264
        %10129 = vmatpush1.msra.mxu0 %v9263
        %10130 = vmatprep.subr.mxu0 %v9262
        %10131 = vmatpush1.msra.mxu0 %v9261
        %10132 = vmatprep.subr.mxu0 %v9260
        %10133 = vmatpush1.msra.mxu0 %v9259
        %10134 = vmatprep.subr.mxu0 %v9258
        %10135 = vmatpush1.msra.mxu0 %v9257
        %10136 = vmatprep.subr.mxu0 %v9320
        %10137 = vmatpush2.msra.mxu0 %v9319
        %10138 = vmatprep.subr.mxu0 %v9318
        %10139 = vmatpush2.msra.mxu0 %v9317
        %10140 = vmatprep.subr.mxu0 %v9316
        %10141 = vmatpush2.msra.mxu0 %v9315
        %10142 = vmatprep.subr.mxu0 %v9314
        %10143 = vmatpush2.msra.mxu0 %v9313
        %10144 = vmatprep.subr.mxu0 %v9312
        %10145 = vmatpush2.msra.mxu0 %v9311
        %10146 = vmatprep.subr.mxu0 %v9310
        %10147 = vmatpush2.msra.mxu0 %v9309
        %10148 = vmatprep.subr.mxu0 %v9308
        %10149 = vmatpush2.msra.mxu0 %v9307
        %10150 = vmatprep.subr.mxu0 %v9306
        %10151 = vmatpush2.msra.mxu0 %v9305
        %10152 = vmatprep.subr.mxu0 %v9304
        %10153 = vmatpush2.msra.mxu0 %v9303
        %10154 = vmatprep.subr.mxu0 %v9302
        %10155 = vmatpush2.msra.mxu0 %v9301
        %10156 = vmatprep.subr.mxu0 %v9300
        %10157 = vmatpush2.msra.mxu0 %v9299
        %10158 = vmatprep.subr.mxu0 %v9298
        %10159 = vmatpush2.msra.mxu0 %v9297
        %10160 = vmatprep.subr.mxu0 %v9296
        %10161 = vmatpush2.msra.mxu0 %v9295
        %10162 = vmatprep.subr.mxu0 %v9294
        %10163 = vmatpush2.msra.mxu0 %v9293
        %10164 = vmatprep.subr.mxu0 %v9292
        %10165 = vmatpush2.msra.mxu0 %v9291
        %10166 = vmatprep.subr.mxu0 %v9290
        %10167 = vmatpush2.msra.mxu0 %v9289
        %10168 = vmatprep.mubr.f32.mxu0 %v8816
        %10169 = vmatmul.mubr.f32.gmra.mxu0 %v8815
        %v10170 = vpop.f32.mrf.mxu0
        %v10171 = vadd.f32 %v9914, %v10170
        %v10172 = vpop.f32.mrf.mxu0
        %v10173 = vadd.f32 %v9916, %v10172
        %10174 = vmatprep.mubr.f32.mxu0 %v8824
        %10175 = vmatmul.mubr.f32.gmra.mxu0 %v8823
        %v10176 = vpop.f32.mrf.mxu0
        %v10177 = vadd.f32 %v9920, %v10176
        %v10178 = vpop.f32.mrf.mxu0
        %v10179 = vadd.f32 %v9922, %v10178
        %10180 = vmatprep.mubr.f32.mxu0 %v8832
        %10181 = vmatmul.mubr.f32.gmra.mxu0 %v8831
        %v10182 = vpop.f32.mrf.mxu0
        %v10183 = vadd.f32 %v9926, %v10182
        %v10184 = vpop.f32.mrf.mxu0
        %v10185 = vadd.f32 %v9928, %v10184
        %10186 = vmatprep.mubr.f32.mxu0 %v8840
        %10187 = vmatmul.mubr.f32.gmra.mxu0 %v8839
        %v10188 = vpop.f32.mrf.mxu0
        %v10189 = vadd.f32 %v9932, %v10188
        %v10190 = vpop.f32.mrf.mxu0
        %v10191 = vadd.f32 %v9934, %v10190
        %10192 = vmatprep.mubr.f32.mxu0 %v8848
        %10193 = vmatmul.mubr.f32.gmra.mxu0 %v8847
        %v10194 = vpop.f32.mrf.mxu0
        %v10195 = vadd.f32 %v9938, %v10194
        %v10196 = vpop.f32.mrf.mxu0
        %v10197 = vadd.f32 %v9940, %v10196
        %10198 = vmatprep.mubr.f32.mxu0 %v8856
        %10199 = vmatmul.mubr.f32.gmra.mxu0 %v8855
        %v10200 = vpop.f32.mrf.mxu0
        %v10201 = vadd.f32 %v9944, %v10200
        %v10202 = vpop.f32.mrf.mxu0
        %v10203 = vadd.f32 %v9946, %v10202
        %10204 = vmatprep.mubr.f32.mxu0 %v8864
        %10205 = vmatmul.mubr.f32.gmra.mxu0 %v8863
        %v10206 = vpop.f32.mrf.mxu0
        %v10207 = vadd.f32 %v9950, %v10206
        %v10208 = vpop.f32.mrf.mxu0
        %v10209 = vadd.f32 %v9952, %v10208
        %10210 = vmatprep.mubr.f32.mxu0 %v8872
        %10211 = vmatmul.mubr.f32.gmra.mxu0 %v8871
        %v10212 = vpop.f32.mrf.mxu0
        %v10213 = vadd.f32 %v9956, %v10212
        %v10214 = vpop.f32.mrf.mxu0
        %v10215 = vadd.f32 %v9958, %v10214
        %10216 = vmatprep.mubr.f32.mxu0 %v8880
        %10217 = vmatmul.mubr.f32.gmra.mxu0 %v8879
        %v10218 = vpop.f32.mrf.mxu0
        %v10219 = vadd.f32 %v9962, %v10218
        %v10220 = vpop.f32.mrf.mxu0
        %v10221 = vadd.f32 %v9964, %v10220
        %10222 = vmatprep.mubr.f32.mxu0 %v8888
        %10223 = vmatmul.mubr.f32.gmra.mxu0 %v8887
        %v10224 = vpop.f32.mrf.mxu0
        %v10225 = vadd.f32 %v9968, %v10224
        %v10226 = vpop.f32.mrf.mxu0
        %v10227 = vadd.f32 %v9970, %v10226
        %10228 = vmatprep.mubr.f32.mxu0 %v8896
        %10229 = vmatmul.mubr.f32.gmra.mxu0 %v8895
        %v10230 = vpop.f32.mrf.mxu0
        %v10231 = vadd.f32 %v9974, %v10230
        %v10232 = vpop.f32.mrf.mxu0
        %v10233 = vadd.f32 %v9976, %v10232
        %10234 = vmatprep.mubr.f32.mxu0 %v8904
        %10235 = vmatmul.mubr.f32.gmra.mxu0 %v8903
        %v10236 = vpop.f32.mrf.mxu0
        %v10237 = vadd.f32 %v9980, %v10236
        %v10238 = vpop.f32.mrf.mxu0
        %v10239 = vadd.f32 %v9982, %v10238
        %10240 = vmatprep.mubr.f32.mxu0 %v8912
        %10241 = vmatmul.mubr.f32.gmra.mxu0 %v8911
        %v10242 = vpop.f32.mrf.mxu0
        %v10243 = vadd.f32 %v9986, %v10242
        %v10244 = vpop.f32.mrf.mxu0
        %v10245 = vadd.f32 %v9988, %v10244
        %10246 = vmatprep.mubr.f32.mxu0 %v8920
        %10247 = vmatmul.mubr.f32.gmra.mxu0 %v8919
        %v10248 = vpop.f32.mrf.mxu0
        %v10249 = vadd.f32 %v9992, %v10248
        %v10250 = vpop.f32.mrf.mxu0
        %v10251 = vadd.f32 %v9994, %v10250
        %10252 = vmatprep.mubr.f32.mxu0 %v8928
        %10253 = vmatmul.mubr.f32.gmra.mxu0 %v8927
        %v10254 = vpop.f32.mrf.mxu0
        %v10255 = vadd.f32 %v9998, %v10254
        %v10256 = vpop.f32.mrf.mxu0
        %v10257 = vadd.f32 %v10000, %v10256
        %10258 = vmatprep.mubr.f32.mxu0 %v8936
        %10259 = vmatmul.mubr.f32.gmra.mxu0 %v8935
        %v10260 = vpop.f32.mrf.mxu0
        %v10261 = vadd.f32 %v10004, %v10260
        %v10262 = vpop.f32.mrf.mxu0
        %v10263 = vadd.f32 %v10006, %v10262
        %10264 = vmatprep.mubr.f32.mxu0 %v8944
        %10265 = vmatmul.mubr.f32.gmra.mxu0 %v8943
        %v10266 = vpop.f32.mrf.mxu0
        %v10267 = vadd.f32 %v10010, %v10266
        %v10268 = vpop.f32.mrf.mxu0
        %v10269 = vadd.f32 %v10012, %v10268
        %10270 = vmatprep.mubr.f32.mxu0 %v8952
        %10271 = vmatmul.mubr.f32.gmra.mxu0 %v8951
        %v10272 = vpop.f32.mrf.mxu0
        %v10273 = vadd.f32 %v10016, %v10272
        %v10274 = vpop.f32.mrf.mxu0
        %v10275 = vadd.f32 %v10018, %v10274
        %10276 = vmatprep.mubr.f32.mxu0 %v8960
        %10277 = vmatmul.mubr.f32.gmra.mxu0 %v8959
        %v10278 = vpop.f32.mrf.mxu0
        %v10279 = vadd.f32 %v10022, %v10278
        %v10280 = vpop.f32.mrf.mxu0
        %v10281 = vadd.f32 %v10024, %v10280
        %10282 = vmatprep.mubr.f32.mxu0 %v8968
        %10283 = vmatmul.mubr.f32.gmra.mxu0 %v8967
        %v10284 = vpop.f32.mrf.mxu0
        %v10285 = vadd.f32 %v10028, %v10284
        %v10286 = vpop.f32.mrf.mxu0
        %v10287 = vadd.f32 %v10030, %v10286
        %10288 = vmatprep.mubr.f32.mxu0 %v8976
        %10289 = vmatmul.mubr.f32.gmra.mxu0 %v8975
        %v10290 = vpop.f32.mrf.mxu0
        %v10291 = vadd.f32 %v10034, %v10290
        %v10292 = vpop.f32.mrf.mxu0
        %v10293 = vadd.f32 %v10036, %v10292
        %10294 = vmatprep.mubr.f32.mxu0 %v8984
        %10295 = vmatmul.mubr.f32.gmra.mxu0 %v8983
        %v10296 = vpop.f32.mrf.mxu0
        %v10297 = vadd.f32 %v10040, %v10296
        %v10298 = vpop.f32.mrf.mxu0
        %v10299 = vadd.f32 %v10042, %v10298
        %10300 = vmatprep.mubr.f32.mxu0 %v8992
        %10301 = vmatmul.mubr.f32.gmra.mxu0 %v8991
        %v10302 = vpop.f32.mrf.mxu0
        %v10303 = vadd.f32 %v10046, %v10302
        %v10304 = vpop.f32.mrf.mxu0
        %v10305 = vadd.f32 %v10048, %v10304
        %10306 = vmatprep.mubr.f32.mxu0 %v9000
        %10307 = vmatmul.mubr.f32.gmra.mxu0 %v8999
        %v10308 = vpop.f32.mrf.mxu0
        %v10309 = vadd.f32 %v10052, %v10308
        %v10310 = vpop.f32.mrf.mxu0
        %v10311 = vadd.f32 %v10054, %v10310
        %10312 = vmatprep.mubr.f32.mxu0 %v9008
        %10313 = vmatmul.mubr.f32.gmra.mxu0 %v9007
        %v10314 = vpop.f32.mrf.mxu0
        %v10315 = vadd.f32 %v10058, %v10314
        %v10316 = vpop.f32.mrf.mxu0
        %v10317 = vadd.f32 %v10060, %v10316
        %10318 = vmatprep.mubr.f32.mxu0 %v9016
        %10319 = vmatmul.mubr.f32.gmra.mxu0 %v9015
        %v10320 = vpop.f32.mrf.mxu0
        %v10321 = vadd.f32 %v10064, %v10320
        %v10322 = vpop.f32.mrf.mxu0
        %v10323 = vadd.f32 %v10066, %v10322
        %10324 = vmatprep.mubr.f32.mxu0 %v9024
        %10325 = vmatmul.mubr.f32.gmra.mxu0 %v9023
        %v10326 = vpop.f32.mrf.mxu0
        %v10327 = vadd.f32 %v10070, %v10326
        %v10328 = vpop.f32.mrf.mxu0
        %v10329 = vadd.f32 %v10072, %v10328
        %10330 = vmatprep.mubr.f32.mxu0 %v9032
        %10331 = vmatmul.mubr.f32.gmra.mxu0 %v9031
        %v10332 = vpop.f32.mrf.mxu0
        %v10333 = vadd.f32 %v10076, %v10332
        %v10334 = vpop.f32.mrf.mxu0
        %v10335 = vadd.f32 %v10078, %v10334
        %10336 = vmatprep.mubr.f32.mxu0 %v9040
        %10337 = vmatmul.mubr.f32.gmra.mxu0 %v9039
        %v10338 = vpop.f32.mrf.mxu0
        %v10339 = vadd.f32 %v10082, %v10338
        %v10340 = vpop.f32.mrf.mxu0
        %v10341 = vadd.f32 %v10084, %v10340
        %10342 = vmatprep.mubr.f32.mxu0 %v9048
        %10343 = vmatmul.mubr.f32.gmra.mxu0 %v9047
        %v10344 = vpop.f32.mrf.mxu0
        %v10345 = vadd.f32 %v10088, %v10344
        %v10346 = vpop.f32.mrf.mxu0
        %v10347 = vadd.f32 %v10090, %v10346
        %10348 = vmatprep.mubr.f32.mxu0 %v9056
        %10349 = vmatmul.mubr.f32.gmra.mxu0 %v9055
        %v10350 = vpop.f32.mrf.mxu0
        %v10351 = vadd.f32 %v10094, %v10350
        %v10352 = vpop.f32.mrf.mxu0
        %v10353 = vadd.f32 %v10096, %v10352
        %10354 = vmatprep.mubr.f32.mxu0 %v9064
        %10355 = vmatmul.mubr.f32.gmra.mxu0 %v9063
        %v10356 = vpop.f32.mrf.mxu0
        %v10357 = vadd.f32 %v10100, %v10356
        %v10358 = vpop.f32.mrf.mxu0
        %v10359 = vadd.f32 %v10102, %v10358
        %10360 = vdwg.mxu0
        %v10361 = vadd.f32 %v4695, %v10171
        %v10362 = vadd.f32 %v4696, %v10173
        %v10363 = vadd.f32 %v4697, %v10177
        %v10364 = vadd.f32 %v4698, %v10179
        %v10365 = vadd.f32 %v4699, %v10183
        %v10366 = vadd.f32 %v4700, %v10185
        %v10367 = vadd.f32 %v4701, %v10189
        %v10368 = vadd.f32 %v4702, %v10191
        %v10369 = vadd.f32 %v4703, %v10195
        %v10370 = vadd.f32 %v4704, %v10197
        %v10371 = vadd.f32 %v4705, %v10201
        %v10372 = vadd.f32 %v4706, %v10203
        %v10373 = vadd.f32 %v4707, %v10207
        %v10374 = vadd.f32 %v4708, %v10209
        %v10375 = vadd.f32 %v4709, %v10213
        %v10376 = vadd.f32 %v4710, %v10215
        %v10377 = vadd.f32 %v4711, %v10219
        %v10378 = vadd.f32 %v4712, %v10221
        %v10379 = vadd.f32 %v4713, %v10225
        %v10380 = vadd.f32 %v4714, %v10227
        %v10381 = vadd.f32 %v4715, %v10231
        %v10382 = vadd.f32 %v4716, %v10233
        %v10383 = vadd.f32 %v4717, %v10237
        %v10384 = vadd.f32 %v4718, %v10239
        %v10385 = vadd.f32 %v4719, %v10243
        %v10386 = vadd.f32 %v4720, %v10245
        %v10387 = vadd.f32 %v4721, %v10249
        %v10388 = vadd.f32 %v4722, %v10251
        %v10389 = vadd.f32 %v4723, %v10255
        %v10390 = vadd.f32 %v4724, %v10257
        %v10391 = vadd.f32 %v4725, %v10261
        %v10392 = vadd.f32 %v4726, %v10263
        %v10393 = vadd.f32 %v4727, %v10267
        %v10394 = vadd.f32 %v4728, %v10269
        %v10395 = vadd.f32 %v4729, %v10273
        %v10396 = vadd.f32 %v4730, %v10275
        %v10397 = vadd.f32 %v4731, %v10279
        %v10398 = vadd.f32 %v4732, %v10281
        %v10399 = vadd.f32 %v4733, %v10285
        %v10400 = vadd.f32 %v4734, %v10287
        %v10401 = vadd.f32 %v4735, %v10291
        %v10402 = vadd.f32 %v4736, %v10293
        %v10403 = vadd.f32 %v4737, %v10297
        %v10404 = vadd.f32 %v4738, %v10299
        %v10405 = vadd.f32 %v4739, %v10303
        %v10406 = vadd.f32 %v4740, %v10305
        %v10407 = vadd.f32 %v4741, %v10309
        %v10408 = vadd.f32 %v4742, %v10311
        %v10409 = vadd.f32 %v4743, %v10315
        %v10410 = vadd.f32 %v4744, %v10317
        %v10411 = vadd.f32 %v4745, %v10321
        %v10412 = vadd.f32 %v4746, %v10323
        %v10413 = vadd.f32 %v4747, %v10327
        %v10414 = vadd.f32 %v4748, %v10329
        %v10415 = vadd.f32 %v4749, %v10333
        %v10416 = vadd.f32 %v4750, %v10335
        %v10417 = vadd.f32 %v4751, %v10339
        %v10418 = vadd.f32 %v4752, %v10341
        %v10419 = vadd.f32 %v4753, %v10345
        %v10420 = vadd.f32 %v4754, %v10347
        %v10421 = vadd.f32 %v4755, %v10351
        %v10422 = vadd.f32 %v4756, %v10353
        %v10423 = vadd.f32 %v4757, %v10357
        %v10424 = vadd.f32 %v4758, %v10359
        %10425 = vst [vmem:[#allocation15] sm:$0xff] %v10361
        %10426 = vst [vmem:[#allocation15 + $0x8] sm:$0xff] %v10362
        %10427 = vst [vmem:[#allocation15 + $0x10] sm:$0xff] %v10363
        %10428 = vst [vmem:[#allocation15 + $0x18] sm:$0xff] %v10364
        %10429 = vst [vmem:[#allocation15 + $0x20] sm:$0xff] %v10365
        %10430 = vst [vmem:[#allocation15 + $0x28] sm:$0xff] %v10366
        %10431 = vst [vmem:[#allocation15 + $0x30] sm:$0xff] %v10367
        %10432 = vst [vmem:[#allocation15 + $0x38] sm:$0xff] %v10368
        %10433 = vst [vmem:[#allocation15 + $0x40] sm:$0xff] %v10369
        %10434 = vst [vmem:[#allocation15 + $0x48] sm:$0xff] %v10370
        %10435 = vst [vmem:[#allocation15 + $0x50] sm:$0xff] %v10371
        %10436 = vst [vmem:[#allocation15 + $0x58] sm:$0xff] %v10372
        %10437 = vst [vmem:[#allocation15 + $0x60] sm:$0xff] %v10373
        %10438 = vst [vmem:[#allocation15 + $0x68] sm:$0xff] %v10374
        %10439 = vst [vmem:[#allocation15 + $0x70] sm:$0xff] %v10375
        %10440 = vst [vmem:[#allocation15 + $0x78] sm:$0xff] %v10376
        %10441 = vst [vmem:[#allocation15 + $0x80] sm:$0xff] %v10377
        %10442 = vst [vmem:[#allocation15 + $0x88] sm:$0xff] %v10378
        %10443 = vst [vmem:[#allocation15 + $0x90] sm:$0xff] %v10379
        %10444 = vst [vmem:[#allocation15 + $0x98] sm:$0xff] %v10380
        %10445 = vst [vmem:[#allocation15 + $0xa0] sm:$0xff] %v10381
        %10446 = vst [vmem:[#allocation15 + $0xa8] sm:$0xff] %v10382
        %10447 = vst [vmem:[#allocation15 + $0xb0] sm:$0xff] %v10383
        %10448 = vst [vmem:[#allocation15 + $0xb8] sm:$0xff] %v10384
        %10449 = vst [vmem:[#allocation15 + $0xc0] sm:$0xff] %v10385
        %10450 = vst [vmem:[#allocation15 + $0xc8] sm:$0xff] %v10386
        %10451 = vst [vmem:[#allocation15 + $0xd0] sm:$0xff] %v10387
        %10452 = vst [vmem:[#allocation15 + $0xd8] sm:$0xff] %v10388
        %10453 = vst [vmem:[#allocation15 + $0xe0] sm:$0xff] %v10389
        %10454 = vst [vmem:[#allocation15 + $0xe8] sm:$0xff] %v10390
        %10455 = vst [vmem:[#allocation15 + $0xf0] sm:$0xff] %v10391
        %10456 = vst [vmem:[#allocation15 + $0xf8] sm:$0xff] %v10392
        %10457 = vst [vmem:[#allocation15 + $0x100] sm:$0xff] %v10393
        %10458 = vst [vmem:[#allocation15 + $0x108] sm:$0xff] %v10394
        %10459 = vst [vmem:[#allocation15 + $0x110] sm:$0xff] %v10395
        %10460 = vst [vmem:[#allocation15 + $0x118] sm:$0xff] %v10396
        %10461 = vst [vmem:[#allocation15 + $0x120] sm:$0xff] %v10397
        %10462 = vst [vmem:[#allocation15 + $0x128] sm:$0xff] %v10398
        %10463 = vst [vmem:[#allocation15 + $0x130] sm:$0xff] %v10399
        %10464 = vst [vmem:[#allocation15 + $0x138] sm:$0xff] %v10400
        %10465 = vst [vmem:[#allocation15 + $0x140] sm:$0xff] %v10401
        %10466 = vst [vmem:[#allocation15 + $0x148] sm:$0xff] %v10402
        %10467 = vst [vmem:[#allocation15 + $0x150] sm:$0xff] %v10403
        %10468 = vst [vmem:[#allocation15 + $0x158] sm:$0xff] %v10404
        %10469 = vst [vmem:[#allocation15 + $0x160] sm:$0xff] %v10405
        %10470 = vst [vmem:[#allocation15 + $0x168] sm:$0xff] %v10406
        %10471 = vst [vmem:[#allocation15 + $0x170] sm:$0xff] %v10407
        %10472 = vst [vmem:[#allocation15 + $0x178] sm:$0xff] %v10408
        %10473 = vst [vmem:[#allocation15 + $0x180] sm:$0xff] %v10409
        %10474 = vst [vmem:[#allocation15 + $0x188] sm:$0xff] %v10410
        %10475 = vst [vmem:[#allocation15 + $0x190] sm:$0xff] %v10411
        %10476 = vst [vmem:[#allocation15 + $0x198] sm:$0xff] %v10412
        %10477 = vst [vmem:[#allocation15 + $0x1a0] sm:$0xff] %v10413
        %10478 = vst [vmem:[#allocation15 + $0x1a8] sm:$0xff] %v10414
        %10479 = vst [vmem:[#allocation15 + $0x1b0] sm:$0xff] %v10415
        %10480 = vst [vmem:[#allocation15 + $0x1b8] sm:$0xff] %v10416
        %10481 = vst [vmem:[#allocation15 + $0x1c0] sm:$0xff] %v10417
        %10482 = vst [vmem:[#allocation15 + $0x1c8] sm:$0xff] %v10418
        %10483 = vst [vmem:[#allocation15 + $0x1d0] sm:$0xff] %v10419
        %10484 = vst [vmem:[#allocation15 + $0x1d8] sm:$0xff] %v10420
        %10485 = vst [vmem:[#allocation15 + $0x1e0] sm:$0xff] %v10421
        %10486 = vst [vmem:[#allocation15 + $0x1e8] sm:$0xff] %v10422
        %10487 = vst [vmem:[#allocation15 + $0x1f0] sm:$0xff] %v10423
        %10488 = vst [vmem:[#allocation15 + $0x1f8] sm:$0xff] %v10424
        // Predicated region
        $region105: #{tpu_custom_call.1} parent=59 // pred_check
          %p10489 = pneg %p287
        $region106: #{tpu_custom_call.1} parent=59 // pred_check_branch
          %10491 = sbr.rel (%p10489) target = $region108
        $region107: #{tpu_custom_call.1} parent=59 // pred_region
          %s10493 = ssub.s32 8192, 8192
          %10494 = vsyncadd [#allocation4], %s10493
          %s10495 = sshll.u32 [#allocation15], 4
          %s10496 = int_to_ptr.vmem [resolvable:$true] %s10495
          %10501 = dma.vmem_to_hbm [thread:$0]  %s10496, 8192, %s10, [#allocation4], 256, 256, 16
        $region108: #{tpu_custom_call.1} parent=59 // pred_fallthru
          _
        // Predicated region
        $region109: #{tpu_custom_call.1} parent=59 // pred_check
          %p10502 = pneg %p287
        $region110: #{tpu_custom_call.1} parent=59 // pred_check_branch
          %10504 = sbr.rel (%p10502) target = $region112
        $region111: #{tpu_custom_call.1} parent=59 // pred_region
          %10505 = dma.done [#allocation4], 8192
        $region112: #{tpu_custom_call.1} parent=59 // pred_fallthru
          _
      $region60: #{tpu_custom_call.1} parent=5 // pred_fallthru
        _
      %p10506 = scmp.le.s32.totalorder 2, %s19
      // Predicated region
      $region113: #{tpu_custom_call.1} parent=5 // pred_check
        %p10507 = pneg %p10506
      $region114: #{tpu_custom_call.1} parent=5 // pred_check_branch
        %10509 = sbr.rel (%p10507) target = $region116
      $region115: #{tpu_custom_call.1} parent=5 // pred_region
        %s10510 = ssub.s32 %s19, 2
      $region116: #{tpu_custom_call.1} parent=5 // pred_fallthru
        _
    $region6: #{tpu_custom_call.1} parent=1 // loop_footer
      %s23 = sadd.s32 1, %s19
    $region7: #{tpu_custom_call.1} parent=1 // loop_footer_branch
      %18 = sbr.rel target = $region3
    $region8: #{tpu_custom_call.1} parent=1 // loop_exit
      _
    %10511 = vsyncpa [#allocation3], 1
    %s10512 = scalar_lea.sflag [#allocation3], 1
    %10513 = vsyncpa %s10512, 1
    %10514 = vsyncpa [#allocation6], 1
    %10515 = vsyncpa [#allocation4], 1
    %s10516 = scalar_lea.sflag [#allocation4], 1
    %10517 = vsyncpa %s10516, 1

</llo_original>
